<compile_context>
chip_gen: v6e
topology: v6e:2x2x1
jax: 0.10.0
libtpu: 0.0.40
codegen_flags: <defaults>
</compile_context>

<pallas_src>
import functools
import itertools

import numpy as np
import jax
import jax.numpy as jnp
from jax.experimental import pallas as pl
from jax.experimental.pallas import tpu as pltpu


# ----------------------------------------------------------------------------
# LeNet geometry constants (28x28x1 input, 5x5 'same' convs, 2x2/2 pools).
# ----------------------------------------------------------------------------
_QH, _QW = 9, 9          # conv1 quarter-pixel grid (padded 36x36 input / 4)
_R1 = 7 * _QW            # 63: conv1 output rows (7 valid quarter rows x 9 cols)
_H2, _W2 = 10, 9         # conv2 padded 2x2 space-to-depth grid (rows x cols)
_R2 = 7 * _W2            # 63: conv2 output rows
_C1, _C2 = 32, 64        # conv channel counts

# Garbage-column mask for the conv1 pooled result: quarter columns 7 and 8 of
# each 9-wide row alias conv2's zero-padding ring and must be zeroed.
_GMASK_NP = np.ones((_R1, 4 * _C1), np.float32)
_GMASK_NP[np.arange(_R1) % _QW >= 7, :] = 0.0


# ----------------------------------------------------------------------------
# Kernel 1: fused conv1(+bias+ReLU+pool) -> conv2(+bias+ReLU+pool).
# ----------------------------------------------------------------------------
def _conv_stack_kernel(xq_ref, g1_ref, b1_ref, g2_ref, b2_ref, gm_ref, o_ref,
                       *, bblk):
    b1 = b1_ref[...]                       # (1, 512) f32, conv1 bias tiled x16
    b2 = b2_ref[...]                       # (1, 256) f32, conv2 bias tiled x4
    gmask = gm_ref[...]                    # (63, 128) f32 garbage-column mask

    for b in range(bblk):
        xq = xq_ref[b]                     # (81, 16) bf16: quarter-grid s2d image

        # conv1: 4 shifted dots, N = 512 = 16 output-pixel classes x 32 cout.
        acc1 = jnp.zeros((_R1, 16 * _C1), jnp.float32)
        for uy in range(2):
            for ux in range(2):
                off = uy * _QW + ux
                k0 = (uy * 2 + ux) * 16
                acc1 = acc1 + jnp.dot(xq[off:off + _R1, :],
                                      g1_ref[k0:k0 + 16, :],
                                      preferred_element_type=jnp.float32)
        acc1 = jnp.maximum(acc1 + b1, 0.0)

        # 2x2 max-pool == max over the 4 conv-parity 128-lane blocks; the
        # result is already conv2's 2x2 space-to-depth channel layout.
        c1 = jnp.maximum(jnp.maximum(acc1[:, 0:128], acc1[:, 128:256]),
                         jnp.maximum(acc1[:, 256:384], acc1[:, 384:512]))
        c1 = c1 * gmask                    # zero columns that hit conv2 padding

        # conv2 s2d input = c1 placed at rows [10, 73) of a (90, 128) zero
        # frame (a pure row shift: the +1 quarter-cell pad in y and x).
        xs2 = jnp.concatenate(
            [jnp.zeros((_W2 + 1, 4 * _C1), jnp.float32),
             c1,
             jnp.zeros((_H2 * _W2 - (_W2 + 1) - _R1, 4 * _C1), jnp.float32)],
            axis=0).astype(jnp.bfloat16)   # (90, 128)

        # conv2: 9 shifted dots, N = 256 = 4 conv parities x 64 cout.
        acc2 = jnp.zeros((_R2, 4 * _C2), jnp.float32)
        for u in range(3):
            for v in range(3):
                off = u * _W2 + v
                k0 = (u * 3 + v) * (4 * _C1)
                acc2 = acc2 + jnp.dot(xs2[off:off + _R2, :],
                                      g2_ref[k0:k0 + 4 * _C1, :],
                                      preferred_element_type=jnp.float32)
        acc2 = jnp.maximum(acc2 + b2, 0.0)
        p2 = jnp.maximum(jnp.maximum(acc2[:, 0:64], acc2[:, 64:128]),
                         jnp.maximum(acc2[:, 128:192], acc2[:, 192:256]))

        # Drop the 2 garbage columns (x2 = 7, 8) -> (49, 64); single store in
        # the NHWC-flatten order matched by the fc1 weight permutation.
        p2c = jnp.concatenate(
            [p2[_W2 * y2:_W2 * y2 + 7, :] for y2 in range(7)], axis=0)
        o_ref[b] = p2c.astype(o_ref.dtype)


def _pick_batch_block(batch):
    for d in (4, 2, 1):
        if batch % d == 0:
            return d
    return 1


def conv_stack(xq, g1, b1t, g2, b2t):
    """xq: (B, 81, 16) bf16 quarter-grid image  ->  (B, 49, 64) bf16 features."""
    B = xq.shape[0]
    bblk = _pick_batch_block(B)
    gmask = jnp.asarray(_GMASK_NP)
    return pl.pallas_call(
        functools.partial(_conv_stack_kernel, bblk=bblk),
        out_shape=jax.ShapeDtypeStruct((B, 49, _C2), jnp.bfloat16),
        grid_spec=pltpu.PrefetchScalarGridSpec(
            num_scalar_prefetch=0,
            grid=(B // bblk,),
            in_specs=[
                pl.BlockSpec((bblk, _QH * _QW, 16), lambda i: (i, 0, 0)),
                pl.BlockSpec((4 * 16, 16 * _C1), lambda i: (0, 0)),
                pl.BlockSpec((1, 16 * _C1), lambda i: (0, 0)),
                pl.BlockSpec((9 * 4 * _C1, 4 * _C2), lambda i: (0, 0)),
                pl.BlockSpec((1, 4 * _C2), lambda i: (0, 0)),
                pl.BlockSpec((_R1, 4 * _C1), lambda i: (0, 0)),
            ],
            out_specs=pl.BlockSpec((bblk, 49, _C2), lambda i: (i, 0, 0)),
        ),
        # NOTE(v7x): "parallel" on the batch-block axis is intended to let the
        # two TensorCores split the conv work; verify with a trace.
        compiler_params=pltpu.CompilerParams(
            dimension_semantics=("parallel",)),
    )(xq, g1, b1t, g2, b2t, gmask)


# ----------------------------------------------------------------------------
# Kernel 2: fused fc1(+ReLU) + fc2 + log_softmax (fc1 weights streamed bf16,
# fc2 padded to 128 lane-dense output columns with -1e30 bias on pad columns).
# ----------------------------------------------------------------------------
def _fc_head_kernel(x_ref, w1_ref, b1_ref, w2_ref, b2_ref, o_ref, acc_ref):
    j = pl.program_id(0)

    @pl.when(j == 0)
    def _init():
        acc_ref[...] = jnp.zeros_like(acc_ref)

    h = jnp.dot(x_ref[...], w1_ref[...], preferred_element_type=jnp.float32)
    h = jnp.maximum(h + b1_ref[...], 0.0)
    acc_ref[...] += jnp.dot(h, w2_ref[...].astype(jnp.float32),
                            preferred_element_type=jnp.float32)

    @pl.when(j == pl.num_programs(0) - 1)
    def _finish():
        z = acc_ref[...] + b2_ref[...]       # padded logits sit at -1e30
        m = jnp.max(z, axis=-1, keepdims=True)
        lse = jnp.log(jnp.sum(jnp.exp(z - m), axis=-1, keepdims=True)) + m
        o_ref[...] = (z - lse)[:, :o_ref.shape[-1]]


def fc_head(x, w1, b1, w2, b2, *, tile_n=512):
    B, K = x.shape
    N1 = w1.shape[1]
    NP = w2.shape[1]                         # 128 (padded)
    assert N1 % tile_n == 0
    return pl.pallas_call(
        _fc_head_kernel,
        out_shape=jax.ShapeDtypeStruct((B, 10), jnp.float32),
        grid_spec=pltpu.PrefetchScalarGridSpec(
            num_scalar_prefetch=0,
            grid=(N1 // tile_n,),
            in_specs=[
                pl.BlockSpec((B, K), lambda j: (0, 0)),        # activations resident
                pl.BlockSpec((K, tile_n), lambda j: (0, j)),   # fc1 weight tile (bf16)
                pl.BlockSpec((1, tile_n), lambda j: (0, j)),   # fc1 bias tile
                pl.BlockSpec((tile_n, NP), lambda j: (j, 0)),  # fc2 weight tile (padded)
                pl.BlockSpec((1, NP), lambda j: (0, 0)),       # fc2 bias (padded, -1e30)
            ],
            out_specs=pl.BlockSpec((B, 10), lambda j: (0, 0)),
            scratch_shapes=[pltpu.VMEM((B, NP), jnp.float32)],
        ),
        compiler_params=pltpu.CompilerParams(
            dimension_semantics=("arbitrary",),   # grid carries fc2 accumulator
            vmem_limit_bytes=32 * 1024 * 1024),
    )(x, w1, b1, w2, b2)


# ----------------------------------------------------------------------------
# One-time weight re-layout (outside the jitted forward).
# ----------------------------------------------------------------------------
def _pack_conv1(w_oihw):
    """5x5 'same' conv1 (Cin=1) -> (64, 512) quarter-grid blocks: rows =
    4 shifts x 16 s2d taps, cols = (conv parity major, pool parity, cout)."""
    w = np.asarray(w_oihw, np.float32)
    cout, cin, kh, kw = w.shape
    assert cin == 1 and kh == 5 and kw == 5
    g = np.zeros((2, 2, 16, 4, 4, cout), np.float32)
    for uy, ux, sy, sx in itertools.product(range(2), range(2), range(4), range(4)):
        for a, e, p, q in itertools.product(range(2), repeat=4):
            ky = 4 * uy + sy - (2 * a + p)
            kx = 4 * ux + sx - (2 * e + q)
            if 0 <= ky < kh and 0 <= kx < kw:
                g[uy, ux, sy * 4 + sx, p * 2 + q, a * 2 + e, :] = w[:, 0, ky, kx]
    return jnp.asarray(g.reshape(4 * 16, 16 * cout)).astype(jnp.bfloat16)


def _pack_conv2(w_oihw):
    """5x5 'same' conv2 -> (9*4*Cin, 4*Cout) blocks: rows = 9 shifts x
    (2x2 s2d slot, Cin), cols = 4 conv parities x Cout."""
    w = np.asarray(w_oihw, np.float32)
    cout, cin, kh, kw = w.shape
    assert kh == 5 and kw == 5
    g = np.zeros((3, 3, 4, cin, 4, cout), np.float32)
    for u, v, al, be, p, q in itertools.product(range(3), range(3), range(2),
                                                range(2), range(2), range(2)):
        ky = 2 * u + al - p
        kx = 2 * v + be - q
        if 0 <= ky < kh and 0 <= kx < kw:
            g[u, v, al * 2 + be, :, p * 2 + q, :] = w[:, :, ky, kx].T
    return jnp.asarray(g.reshape(9 * 4 * cin, 4 * cout)).astype(jnp.bfloat16)


def prepare_params(params):
    """Pack weights once: conv weights into shift/parity blocks (bf16), fc1
    rows permuted to the NHWC flatten emitted by the conv kernel (bf16), fc2
    padded to 128 lane-dense columns (pad bias = -1e30 masks the log_softmax)."""
    w1 = np.asarray(params["fc1_w"], np.float32).reshape(1024, 64, 7, 7)
    w1 = np.transpose(w1, (2, 3, 1, 0)).reshape(7 * 7 * 64, 1024)
    n2 = params["fc2_w"].shape[0]
    w2 = np.zeros((1024, 128), np.float32)
    w2[:, :n2] = np.asarray(params["fc2_w"], np.float32).T
    b2 = np.full((1, 128), -1e30, np.float32)
    b2[0, :n2] = np.asarray(params["fc2_b"], np.float32)
    # TODO(synk): generation-specific fc1 weight quantization (int8 on v5e/v6e,
    # fp8 on v7x) and cross-call prefetch of the fc1 stream are deferred.
    return {
        "conv1_g": _pack_conv1(params["conv1_w"]),
        "conv1_bt": jnp.asarray(
            np.tile(np.asarray(params["conv1_b"], np.float32), 16).reshape(1, 16 * _C1)),
        "conv2_g": _pack_conv2(params["conv2_w"]),
        "conv2_bt": jnp.asarray(
            np.tile(np.asarray(params["conv2_b"], np.float32), 4).reshape(1, 4 * _C2)),
        "fc1_w": jnp.asarray(w1).astype(jnp.bfloat16),
        "fc1_b": jnp.asarray(np.asarray(params["fc1_b"], np.float32).reshape(1, -1)),
        "fc2_w": jnp.asarray(w2).astype(jnp.bfloat16),
        "fc2_b": jnp.asarray(b2),
    }


# ----------------------------------------------------------------------------
# LeNet forward (Pallas) and pure-JAX reference
# ----------------------------------------------------------------------------
def _quarter_s2d_input(x_nchw):
    """(B,1,28,28) -> zero-padded 4x4 space-to-depth (B, 81, 16) bf16."""
    B = x_nchw.shape[0]
    x = x_nchw.reshape(B, 28, 28)
    xp = jnp.pad(x, ((0, 0), (2, 4 * _QH - 28 - 2), (2, 4 * _QW - 28 - 2)))
    xq = xp.reshape(B, _QH, 4, _QW, 4).transpose(0, 1, 3, 2, 4)
    return xq.reshape(B, _QH * _QW, 16).astype(jnp.bfloat16)


def lenet_forward(prep, x_nchw):
    B = x_nchw.shape[0]
    xq = _quarter_s2d_input(x_nchw)                                   # (B, 81, 16)
    feats = conv_stack(xq, prep["conv1_g"], prep["conv1_bt"],
                       prep["conv2_g"], prep["conv2_bt"])             # (B, 49, 64)
    x = feats.reshape(B, 49 * _C2)          # contiguous -> free reshape
    return fc_head(x, prep["fc1_w"], prep["fc1_b"],
                   prep["fc2_w"], prep["fc2_b"])


def lenet_ref(params, x_nchw):
    dn = ("NCHW", "OIHW", "NCHW")
    x = jax.lax.conv_general_dilated(x_nchw, params["conv1_w"], (1, 1),
                                     ((2, 2), (2, 2)), dimension_numbers=dn)
    x = jax.nn.relu(x + params["conv1_b"][None, :, None, None])
    x = jax.lax.reduce_window(x, -jnp.inf, jax.lax.max, (1, 1, 2, 2), (1, 1, 2, 2), "VALID")
    x = jax.lax.conv_general_dilated(x, params["conv2_w"], (1, 1),
                                     ((2, 2), (2, 2)), dimension_numbers=dn)
    x = jax.nn.relu(x + params["conv2_b"][None, :, None, None])
    x = jax.lax.reduce_window(x, -jnp.inf, jax.lax.max, (1, 1, 2, 2), (1, 1, 2, 2), "VALID")
    x = x.reshape(x.shape[0], -1)
    x = jax.nn.relu(x @ params["fc1_w"].T + params["fc1_b"])
    x = x @ params["fc2_w"].T + params["fc2_b"]
    return jax.nn.log_softmax(x, axis=1)


def init_params(key):
    ks = jax.random.split(key, 8)

    def w(k, shape, fan_in):
        return (jax.random.normal(k, shape, jnp.float32) / jnp.sqrt(fan_in)).astype(jnp.float32)

    return {
        "conv1_w": w(ks[0], (32, 1, 5, 5), 25),
        "conv1_b": w(ks[1], (32,), 25),
        "conv2_w": w(ks[2], (64, 32, 5, 5), 800),
        "conv2_b": w(ks[3], (64,), 800),
        "fc1_w": w(ks[4], (1024, 3136), 3136),   # PyTorch Linear: (out, in)
        "fc1_b": w(ks[5], (1024,), 3136),
        "fc2_w": w(ks[6], (10, 1024), 1024),
        "fc2_b": w(ks[7], (10,), 1024),
    }


if __name__ == "__main__":
    key = jax.random.PRNGKey(0)
    pkey, xkey = jax.random.split(key)
    params = init_params(pkey)
    # LeNet's fc1 (7*7*64) implies 28x28 single-channel inputs; batch=2.
    x = jax.random.normal(xkey, (2, 1, 28, 28), jnp.float32)

    prep = prepare_params(params)
    out = jax.jit(lenet_forward)(prep, x)
    out = jax.block_until_ready(out)

    ref = lenet_ref(params, x)
    assert out.shape == (2, 10), out.shape
    # Conv + fc1 weights and activations run in bf16 (per the perf review,
    # with f32 MXU accumulation), so compare against the pure-f32 reference
    # with a correspondingly relaxed tolerance on the log-probs.
    err = float(jnp.max(jnp.abs(out - ref)))
    assert err < 1e-1, err
    print("KERNEL_OK")
</pallas_src>

<mosaic_0001>
module attributes {stable_mosaic.version = 11 : i64} {
  func.func @_fc_head_kernel(%arg0: i32, %arg1: memref<2x3136xbf16, #tpu.memory_space<vmem>>, %arg2: memref<3136x512xbf16, #tpu.memory_space<vmem>>, %arg3: memref<1x512xf32, #tpu.memory_space<vmem>>, %arg4: memref<512x128xbf16, #tpu.memory_space<vmem>>, %arg5: memref<1x128xf32, #tpu.memory_space<vmem>>, %arg6: memref<2x10xf32, #tpu.memory_space<vmem>>, %arg7: memref<2x128xf32, #tpu.memory_space<vmem>>) attributes {dimension_semantics = [#tpu.dimension_semantics<arbitrary>], iteration_bounds = array<i64: 2>, scalar_prefetch = 0 : i64, scratch_operands = 1 : i64, tpu.core_type = #tpu.core_type<tc>, window_params = [{pipeline_mode = #tpu.pipeline_mode<synchronous>, transform_indices = @transform_0, window_bounds = array<i64: 2, 3136>}, {transform_indices = @transform_1, window_bounds = array<i64: 3136, 512>}, {transform_indices = @transform_2, window_bounds = array<i64: 1, 512>}, {transform_indices = @transform_3, window_bounds = array<i64: 512, 128>}, {pipeline_mode = #tpu.pipeline_mode<synchronous>, transform_indices = @transform_4, window_bounds = array<i64: 1, 128>}, {pipeline_mode = #tpu.pipeline_mode<synchronous>, transform_indices = @transform_5, window_bounds = array<i64: 2, 10>}]} {
    %c0_i32 = arith.constant 0 : i32
    %0 = arith.cmpi eq, %arg0, %c0_i32 : i32
    %1 = arith.extui %0 : i1 to i32
    %c0_i32_0 = arith.constant 0 : i32
    %2 = arith.cmpi ne, %1, %c0_i32_0 : i32
    scf.if %2 {
      %cst_15 = arith.constant 0.000000e+00 : f32
      %20 = vector.broadcast %cst_15 : f32 to vector<2x128xf32>
      %c0_16 = arith.constant 0 : index
      %c0_17 = arith.constant 0 : index
      %21 = vector.load %arg7[%c0_16, %c0_17] : memref<2x128xf32, #tpu.memory_space<vmem>>, vector<2x128xf32>
      tpu.vector_store %arg7[%c0_16, %c0_17], %20 {strides = array<i32>} : memref<2x128xf32, #tpu.memory_space<vmem>>, vector<2x128xf32>,
    } else {
    }
    %c0 = arith.constant 0 : index
    %c0_1 = arith.constant 0 : index
    %3 = vector.load %arg1[%c0, %c0_1] : memref<2x3136xbf16, #tpu.memory_space<vmem>>, vector<2x3136xbf16>
    %c0_2 = arith.constant 0 : index
    %c0_3 = arith.constant 0 : index
    %4 = vector.load %arg2[%c0_2, %c0_3] : memref<3136x512xbf16, #tpu.memory_space<vmem>>, vector<3136x512xbf16>
    %cst = arith.constant dense<0.000000e+00> : vector<2x512xf32>
    %5 = tpu.matmul %3, %4, %cst {dimension_numbers = #tpu.dot_dimension_numbers<[1], [0], [0], [1], [0, 0, 1, 1], [], []>} : vector<2x3136xbf16>, vector<3136x512xbf16>, vector<2x512xf32> -> vector<2x512xf32>
    %c0_4 = arith.constant 0 : index
    %c0_5 = arith.constant 0 : index
    %6 = vector.load %arg3[%c0_4, %c0_5] : memref<1x512xf32, #tpu.memory_space<vmem>>, vector<1x512xf32>
    %7 = vector.broadcast %6 : vector<1x512xf32> to vector<2x512xf32>
    %8 = arith.addf %5, %7 : vector<2x512xf32>
    %cst_6 = arith.constant 0.000000e+00 : f32
    %9 = vector.broadcast %cst_6 : f32 to vector<2x512xf32>
    %10 = arith.maximumf %8, %9 : vector<2x512xf32>
    %c0_7 = arith.constant 0 : index
    %c0_8 = arith.constant 0 : index
    %11 = vector.load %arg7[%c0_7, %c0_8] : memref<2x128xf32, #tpu.memory_space<vmem>>, vector<2x128xf32>
    %c0_9 = arith.constant 0 : index
    %c0_10 = arith.constant 0 : index
    %12 = vector.load %arg4[%c0_9, %c0_10] : memref<512x128xbf16, #tpu.memory_space<vmem>>, vector<512x128xbf16>
    %13 = arith.extf %12 : vector<512x128xbf16> to vector<512x128xf32>
    %cst_11 = arith.constant dense<0.000000e+00> : vector<2x128xf32>
    %14 = tpu.matmul %10, %13, %cst_11 {dimension_numbers = #tpu.dot_dimension_numbers<[1], [0], [0], [1], [0, 0, 1, 1], [], []>} : vector<2x512xf32>, vector<512x128xf32>, vector<2x128xf32> -> vector<2x128xf32>
    %15 = arith.addf %11, %14 : vector<2x128xf32>
    %c0_12 = arith.constant 0 : index
    %c0_13 = arith.constant 0 : index
    %16 = vector.load %arg7[%c0_12, %c0_13] : memref<2x128xf32, #tpu.memory_space<vmem>>, vector<2x128xf32>
    tpu.vector_store %arg7[%c0_12, %c0_13], %15 {strides = array<i32>} : memref<2x128xf32, #tpu.memory_space<vmem>>, vector<2x128xf32>,
    %c1_i32 = arith.constant 1 : i32
    %17 = arith.cmpi eq, %arg0, %c1_i32 : i32
    %18 = arith.extui %17 : i1 to i32
    %c0_i32_14 = arith.constant 0 : i32
    %19 = arith.cmpi ne, %18, %c0_i32_14 : i32
    scf.if %19 {
      %c0_15 = arith.constant 0 : index
      %c0_16 = arith.constant 0 : index
      %20 = vector.load %arg7[%c0_15, %c0_16] : memref<2x128xf32, #tpu.memory_space<vmem>>, vector<2x128xf32>
      %c0_17 = arith.constant 0 : index
      %c0_18 = arith.constant 0 : index
      %21 = vector.load %arg5[%c0_17, %c0_18] : memref<1x128xf32, #tpu.memory_space<vmem>>, vector<1x128xf32>
      %22 = vector.broadcast %21 : vector<1x128xf32> to vector<2x128xf32>
      %23 = arith.addf %20, %22 : vector<2x128xf32>
      %cst_19 = arith.constant dense<0xFF800000> : vector<2xf32>
      %24 = vector.multi_reduction <maximumf>, %23, %cst_19 [1] : vector<2x128xf32> to vector<2xf32>
      %25 = vector.shape_cast %24 : vector<2xf32> to vector<2x1xf32>
      %26 = vector.broadcast %25 : vector<2x1xf32> to vector<2x128xf32>
      %27 = arith.subf %23, %26 : vector<2x128xf32>
      %28 = math.exp %27 : vector<2x128xf32>
      %cst_20 = arith.constant dense<0.000000e+00> : vector<2xf32>
      %29 = vector.multi_reduction <add>, %28, %cst_20 [1] : vector<2x128xf32> to vector<2xf32>
      %30 = vector.shape_cast %29 : vector<2xf32> to vector<2x1xf32>
      %31 = math.log %30 : vector<2x1xf32>
      %32 = arith.addf %31, %25 : vector<2x1xf32>
      %33 = vector.broadcast %32 : vector<2x1xf32> to vector<2x128xf32>
      %34 = arith.subf %23, %33 : vector<2x128xf32>
      %35 = vector.extract_strided_slice %34 {offsets = [0, 0], sizes = [2, 10], strides = [1, 1]} : vector<2x128xf32> to vector<2x10xf32>
      %c0_21 = arith.constant 0 : index
      %c0_22 = arith.constant 0 : index
      %36 = vector.load %arg6[%c0_21, %c0_22] : memref<2x10xf32, #tpu.memory_space<vmem>>, vector<2x10xf32>
      tpu.vector_store %arg6[%c0_21, %c0_22], %35 {strides = array<i32>} : memref<2x10xf32, #tpu.memory_space<vmem>>, vector<2x10xf32>,
    } else {
    }
    return
  }
  func.func @transform_0(%arg0: i32) -> (i32, i32) {
    %c0_i32 = arith.constant 0 : i32
    %c0_i32_0 = arith.constant 0 : i32
    %c0_i32_1 = arith.constant 0 : i32
    return %c0_i32, %c0_i32_0 : i32, i32
  }
  func.func @transform_1(%arg0: i32) -> (i32, i32) {
    %c0_i32 = arith.constant 0 : i32
    %c0_i32_0 = arith.constant 0 : i32
    return %c0_i32, %arg0 : i32, i32
  }
  func.func @transform_2(%arg0: i32) -> (i32, i32) {
    %c0_i32 = arith.constant 0 : i32
    %c0_i32_0 = arith.constant 0 : i32
    return %c0_i32, %arg0 : i32, i32
  }
  func.func @transform_3(%arg0: i32) -> (i32, i32) {
    %c0_i32 = arith.constant 0 : i32
    %c0_i32_0 = arith.constant 0 : i32
    return %arg0, %c0_i32 : i32, i32
  }
  func.func @transform_4(%arg0: i32) -> (i32, i32) {
    %c0_i32 = arith.constant 0 : i32
    %c0_i32_0 = arith.constant 0 : i32
    %c0_i32_1 = arith.constant 0 : i32
    return %c0_i32, %c0_i32_0 : i32, i32
  }
  func.func @transform_5(%arg0: i32) -> (i32, i32) {
    %c0_i32 = arith.constant 0 : i32
    %c0_i32_0 = arith.constant 0 : i32
    %c0_i32_1 = arith.constant 0 : i32
    return %c0_i32, %c0_i32_0 : i32, i32
  }
}

module attributes {stable_mosaic.version = 11 : i64} {
  func.func @_conv_stack_kernel(%arg0: i32, %arg1: memref<2x81x16xbf16, #tpu.memory_space<vmem>>, %arg2: memref<64x512xbf16, #tpu.memory_space<vmem>>, %arg3: memref<1x512xf32, #tpu.memory_space<vmem>>, %arg4: memref<1152x256xbf16, #tpu.memory_space<vmem>>, %arg5: memref<1x256xf32, #tpu.memory_space<vmem>>, %arg6: memref<63x128xf32, #tpu.memory_space<vmem>>, %arg7: memref<2x49x64xbf16, #tpu.memory_space<vmem>>) attributes {dimension_semantics = [#tpu.dimension_semantics<parallel>], iteration_bounds = array<i64: 1>, scalar_prefetch = 0 : i64, scratch_operands = 0 : i64, tpu.core_type = #tpu.core_type<tc>, window_params = [{transform_indices = @transform_0, window_bounds = array<i64: 2, 81, 16>}, {pipeline_mode = #tpu.pipeline_mode<synchronous>, transform_indices = @transform_1, window_bounds = array<i64: 64, 512>}, {pipeline_mode = #tpu.pipeline_mode<synchronous>, transform_indices = @transform_2, window_bounds = array<i64: 1, 512>}, {pipeline_mode = #tpu.pipeline_mode<synchronous>, transform_indices = @transform_3, window_bounds = array<i64: 1152, 256>}, {pipeline_mode = #tpu.pipeline_mode<synchronous>, transform_indices = @transform_4, window_bounds = array<i64: 1, 256>}, {pipeline_mode = #tpu.pipeline_mode<synchronous>, transform_indices = @transform_5, window_bounds = array<i64: 63, 128>}, {transform_indices = @transform_6, window_bounds = array<i64: 2, 49, 64>}]} {
    %c0 = arith.constant 0 : index
    %c0_0 = arith.constant 0 : index
    %0 = vector.load %arg3[%c0, %c0_0] : memref<1x512xf32, #tpu.memory_space<vmem>>, vector<1x512xf32>
    %c0_1 = arith.constant 0 : index
    %c0_2 = arith.constant 0 : index
    %1 = vector.load %arg5[%c0_1, %c0_2] : memref<1x256xf32, #tpu.memory_space<vmem>>, vector<1x256xf32>
    %c0_3 = arith.constant 0 : index
    %c0_4 = arith.constant 0 : index
    %2 = vector.load %arg6[%c0_3, %c0_4] : memref<63x128xf32, #tpu.memory_space<vmem>>, vector<63x128xf32>
    %c0_5 = arith.constant 0 : index
    %c0_6 = arith.constant 0 : index
    %c0_7 = arith.constant 0 : index
    %3 = vector.load %arg1[%c0_5, %c0_6, %c0_7] : memref<2x81x16xbf16, #tpu.memory_space<vmem>>, vector<1x81x16xbf16>
    %4 = vector.shape_cast %3 : vector<1x81x16xbf16> to vector<81x16xbf16>
    %cst = arith.constant 0.000000e+00 : f32
    %5 = vector.broadcast %cst : f32 to vector<63x512xf32>
    %6 = vector.extract_strided_slice %4 {offsets = [0, 0], sizes = [63, 16], strides = [1, 1]} : vector<81x16xbf16> to vector<63x16xbf16>
    %c0_8 = arith.constant 0 : index
    %c0_9 = arith.constant 0 : index
    %7 = vector.load %arg2[%c0_8, %c0_9] : memref<64x512xbf16, #tpu.memory_space<vmem>>, vector<16x512xbf16>
    %cst_10 = arith.constant dense<0.000000e+00> : vector<63x512xf32>
    %8 = tpu.matmul %6, %7, %cst_10 {dimension_numbers = #tpu.dot_dimension_numbers<[1], [0], [0], [1], [0, 0, 1, 1], [], []>} : vector<63x16xbf16>, vector<16x512xbf16>, vector<63x512xf32> -> vector<63x512xf32>
    %9 = arith.addf %5, %8 : vector<63x512xf32>
    %10 = vector.extract_strided_slice %4 {offsets = [1, 0], sizes = [63, 16], strides = [1, 1]} : vector<81x16xbf16> to vector<63x16xbf16>
    %c16 = arith.constant 16 : index
    %c0_11 = arith.constant 0 : index
    %11 = vector.load %arg2[%c16, %c0_11] : memref<64x512xbf16, #tpu.memory_space<vmem>>, vector<16x512xbf16>
    %cst_12 = arith.constant dense<0.000000e+00> : vector<63x512xf32>
    %12 = tpu.matmul %10, %11, %cst_12 {dimension_numbers = #tpu.dot_dimension_numbers<[1], [0], [0], [1], [0, 0, 1, 1], [], []>} : vector<63x16xbf16>, vector<16x512xbf16>, vector<63x512xf32> -> vector<63x512xf32>
    %13 = arith.addf %9, %12 : vector<63x512xf32>
    %14 = vector.extract_strided_slice %4 {offsets = [9, 0], sizes = [63, 16], strides = [1, 1]} : vector<81x16xbf16> to vector<63x16xbf16>
    %c32 = arith.constant 32 : index
    %c0_13 = arith.constant 0 : index
    %15 = vector.load %arg2[%c32, %c0_13] : memref<64x512xbf16, #tpu.memory_space<vmem>>, vector<16x512xbf16>
    %cst_14 = arith.constant dense<0.000000e+00> : vector<63x512xf32>
    %16 = tpu.matmul %14, %15, %cst_14 {dimension_numbers = #tpu.dot_dimension_numbers<[1], [0], [0], [1], [0, 0, 1, 1], [], []>} : vector<63x16xbf16>, vector<16x512xbf16>, vector<63x512xf32> -> vector<63x512xf32>
    %17 = arith.addf %13, %16 : vector<63x512xf32>
    %18 = vector.extract_strided_slice %4 {offsets = [10, 0], sizes = [63, 16], strides = [1, 1]} : vector<81x16xbf16> to vector<63x16xbf16>
    %c48 = arith.constant 48 : index
    %c0_15 = arith.constant 0 : index
    %19 = vector.load %arg2[%c48, %c0_15] : memref<64x512xbf16, #tpu.memory_space<vmem>>, vector<16x512xbf16>
    %cst_16 = arith.constant dense<0.000000e+00> : vector<63x512xf32>
    %20 = tpu.matmul %18, %19, %cst_16 {dimension_numbers = #tpu.dot_dimension_numbers<[1], [0], [0], [1], [0, 0, 1, 1], [], []>} : vector<63x16xbf16>, vector<16x512xbf16>, vector<63x512xf32> -> vector<63x512xf32>
    %21 = arith.addf %17, %20 : vector<63x512xf32>
    %22 = vector.broadcast %0 : vector<1x512xf32> to vector<63x512xf32>
    %23 = arith.addf %21, %22 : vector<63x512xf32>
    %cst_17 = arith.constant 0.000000e+00 : f32
    %24 = vector.broadcast %cst_17 : f32 to vector<63x512xf32>
    %25 = arith.maximumf %23, %24 : vector<63x512xf32>
    %26 = vector.extract_strided_slice %25 {offsets = [0, 0], sizes = [63, 128], strides = [1, 1]} : vector<63x512xf32> to vector<63x128xf32>
    %27 = vector.extract_strided_slice %25 {offsets = [0, 128], sizes = [63, 128], strides = [1, 1]} : vector<63x512xf32> to vector<63x128xf32>
    %28 = arith.maximumf %26, %27 : vector<63x128xf32>
    %29 = vector.extract_strided_slice %25 {offsets = [0, 256], sizes = [63, 128], strides = [1, 1]} : vector<63x512xf32> to vector<63x128xf32>
    %30 = vector.extract_strided_slice %25 {offsets = [0, 384], sizes = [63, 128], strides = [1, 1]} : vector<63x512xf32> to vector<63x128xf32>
    %31 = arith.maximumf %29, %30 : vector<63x128xf32>
    %32 = arith.maximumf %28, %31 : vector<63x128xf32>
    %33 = arith.mulf %32, %2 : vector<63x128xf32>
    %cst_18 = arith.constant 0.000000e+00 : f32
    %34 = vector.broadcast %cst_18 : f32 to vector<10x128xf32>
    %cst_19 = arith.constant 0.000000e+00 : f32
    %35 = vector.broadcast %cst_19 : f32 to vector<17x128xf32>
    %36 = tpu.concatenate %34, %33, %35 in 0 : vector<10x128xf32>, vector<63x128xf32>, vector<17x128xf32> -> vector<90x128xf32>
    %37 = arith.truncf %36 : vector<90x128xf32> to vector<90x128xbf16>
    %cst_20 = arith.constant 0.000000e+00 : f32
    %38 = vector.broadcast %cst_20 : f32 to vector<63x256xf32>
    %39 = vector.extract_strided_slice %37 {offsets = [0, 0], sizes = [63, 128], strides = [1, 1]} : vector<90x128xbf16> to vector<63x128xbf16>
    %c0_21 = arith.constant 0 : index
    %c0_22 = arith.constant 0 : index
    %40 = vector.load %arg4[%c0_21, %c0_22] : memref<1152x256xbf16, #tpu.memory_space<vmem>>, vector<128x256xbf16>
    %cst_23 = arith.constant dense<0.000000e+00> : vector<63x256xf32>
    %41 = tpu.matmul %39, %40, %cst_23 {dimension_numbers = #tpu.dot_dimension_numbers<[1], [0], [0], [1], [0, 0, 1, 1], [], []>} : vector<63x128xbf16>, vector<128x256xbf16>, vector<63x256xf32> -> vector<63x256xf32>
    %42 = arith.addf %38, %41 : vector<63x256xf32>
    %43 = vector.extract_strided_slice %37 {offsets = [1, 0], sizes = [63, 128], strides = [1, 1]} : vector<90x128xbf16> to vector<63x128xbf16>
    %c128 = arith.constant 128 : index
    %c0_24 = arith.constant 0 : index
    %44 = vector.load %arg4[%c128, %c0_24] : memref<1152x256xbf16, #tpu.memory_space<vmem>>, vector<128x256xbf16>
    %cst_25 = arith.constant dense<0.000000e+00> : vector<63x256xf32>
    %45 = tpu.matmul %43, %44, %cst_25 {dimension_numbers = #tpu.dot_dimension_numbers<[1], [0], [0], [1], [0, 0, 1, 1], [], []>} : vector<63x128xbf16>, vector<128x256xbf16>, vector<63x256xf32> -> vector<63x256xf32>
    %46 = arith.addf %42, %45 : vector<63x256xf32>
    %47 = vector.extract_strided_slice %37 {offsets = [2, 0], sizes = [63, 128], strides = [1, 1]} : vector<90x128xbf16> to vector<63x128xbf16>
    %c256 = arith.constant 256 : index
    %c0_26 = arith.constant 0 : index
    %48 = vector.load %arg4[%c256, %c0_26] : memref<1152x256xbf16, #tpu.memory_space<vmem>>, vector<128x256xbf16>
    %cst_27 = arith.constant dense<0.000000e+00> : vector<63x256xf32>
    %49 = tpu.matmul %47, %48, %cst_27 {dimension_numbers = #tpu.dot_dimension_numbers<[1], [0], [0], [1], [0, 0, 1, 1], [], []>} : vector<63x128xbf16>, vector<128x256xbf16>, vector<63x256xf32> -> vector<63x256xf32>
    %50 = arith.addf %46, %49 : vector<63x256xf32>
    %51 = vector.extract_strided_slice %37 {offsets = [9, 0], sizes = [63, 128], strides = [1, 1]} : vector<90x128xbf16> to vector<63x128xbf16>
    %c384 = arith.constant 384 : index
    %c0_28 = arith.constant 0 : index
    %52 = vector.load %arg4[%c384, %c0_28] : memref<1152x256xbf16, #tpu.memory_space<vmem>>, vector<128x256xbf16>
    %cst_29 = arith.constant dense<0.000000e+00> : vector<63x256xf32>
    %53 = tpu.matmul %51, %52, %cst_29 {dimension_numbers = #tpu.dot_dimension_numbers<[1], [0], [0], [1], [0, 0, 1, 1], [], []>} : vector<63x128xbf16>, vector<128x256xbf16>, vector<63x256xf32> -> vector<63x256xf32>
    %54 = arith.addf %50, %53 : vector<63x256xf32>
    %55 = vector.extract_strided_slice %37 {offsets = [10, 0], sizes = [63, 128], strides = [1, 1]} : vector<90x128xbf16> to vector<63x128xbf16>
    %c512 = arith.constant 512 : index
    %c0_30 = arith.constant 0 : index
    %56 = vector.load %arg4[%c512, %c0_30] : memref<1152x256xbf16, #tpu.memory_space<vmem>>, vector<128x256xbf16>
    %cst_31 = arith.constant dense<0.000000e+00> : vector<63x256xf32>
    %57 = tpu.matmul %55, %56, %cst_31 {dimension_numbers = #tpu.dot_dimension_numbers<[1], [0], [0], [1], [0, 0, 1, 1], [], []>} : vector<63x128xbf16>, vector<128x256xbf16>, vector<63x256xf32> -> vector<63x256xf32>
    %58 = arith.addf %54, %57 : vector<63x256xf32>
    %59 = vector.extract_strided_slice %37 {offsets = [11, 0], sizes = [63, 128], strides = [1, 1]} : vector<90x128xbf16> to vector<63x128xbf16>
    %c640 = arith.constant 640 : index
    %c0_32 = arith.constant 0 : index
    %60 = vector.load %arg4[%c640, %c0_32] : memref<1152x256xbf16, #tpu.memory_space<vmem>>, vector<128x256xbf16>
    %cst_33 = arith.constant dense<0.000000e+00> : vector<63x256xf32>
    %61 = tpu.matmul %59, %60, %cst_33 {dimension_numbers = #tpu.dot_dimension_numbers<[1], [0], [0], [1], [0, 0, 1, 1], [], []>} : vector<63x128xbf16>, vector<128x256xbf16>, vector<63x256xf32> -> vector<63x256xf32>
    %62 = arith.addf %58, %61 : vector<63x256xf32>
    %63 = vector.extract_strided_slice %37 {offsets = [18, 0], sizes = [63, 128], strides = [1, 1]} : vector<90x128xbf16> to vector<63x128xbf16>
    %c768 = arith.constant 768 : index
    %c0_34 = arith.constant 0 : index
    %64 = vector.load %arg4[%c768, %c0_34] : memref<1152x256xbf16, #tpu.memory_space<vmem>>, vector<128x256xbf16>
    %cst_35 = arith.constant dense<0.000000e+00> : vector<63x256xf32>
    %65 = tpu.matmul %63, %64, %cst_35 {dimension_numbers = #tpu.dot_dimension_numbers<[1], [0], [0], [1], [0, 0, 1, 1], [], []>} : vector<63x128xbf16>, vector<128x256xbf16>, vector<63x256xf32> -> vector<63x256xf32>
    %66 = arith.addf %62, %65 : vector<63x256xf32>
    %67 = vector.extract_strided_slice %37 {offsets = [19, 0], sizes = [63, 128], strides = [1, 1]} : vector<90x128xbf16> to vector<63x128xbf16>
    %c896 = arith.constant 896 : index
    %c0_36 = arith.constant 0 : index
    %68 = vector.load %arg4[%c896, %c0_36] : memref<1152x256xbf16, #tpu.memory_space<vmem>>, vector<128x256xbf16>
    %cst_37 = arith.constant dense<0.000000e+00> : vector<63x256xf32>
    %69 = tpu.matmul %67, %68, %cst_37 {dimension_numbers = #tpu.dot_dimension_numbers<[1], [0], [0], [1], [0, 0, 1, 1], [], []>} : vector<63x128xbf16>, vector<128x256xbf16>, vector<63x256xf32> -> vector<63x256xf32>
    %70 = arith.addf %66, %69 : vector<63x256xf32>
    %71 = vector.extract_strided_slice %37 {offsets = [20, 0], sizes = [63, 128], strides = [1, 1]} : vector<90x128xbf16> to vector<63x128xbf16>
    %c1024 = arith.constant 1024 : index
    %c0_38 = arith.constant 0 : index
    %72 = vector.load %arg4[%c1024, %c0_38] : memref<1152x256xbf16, #tpu.memory_space<vmem>>, vector<128x256xbf16>
    %cst_39 = arith.constant dense<0.000000e+00> : vector<63x256xf32>
    %73 = tpu.matmul %71, %72, %cst_39 {dimension_numbers = #tpu.dot_dimension_numbers<[1], [0], [0], [1], [0, 0, 1, 1], [], []>} : vector<63x128xbf16>, vector<128x256xbf16>, vector<63x256xf32> -> vector<63x256xf32>
    %74 = arith.addf %70, %73 : vector<63x256xf32>
    %75 = vector.broadcast %1 : vector<1x256xf32> to vector<63x256xf32>
    %76 = arith.addf %74, %75 : vector<63x256xf32>
    %cst_40 = arith.constant 0.000000e+00 : f32
    %77 = vector.broadcast %cst_40 : f32 to vector<63x256xf32>
    %78 = arith.maximumf %76, %77 : vector<63x256xf32>
    %79 = vector.extract_strided_slice %78 {offsets = [0, 0], sizes = [63, 64], strides = [1, 1]} : vector<63x256xf32> to vector<63x64xf32>
    %80 = vector.extract_strided_slice %78 {offsets = [0, 64], sizes = [63, 64], strides = [1, 1]} : vector<63x256xf32> to vector<63x64xf32>
    %81 = arith.maximumf %79, %80 : vector<63x64xf32>
    %82 = vector.extract_strided_slice %78 {offsets = [0, 128], sizes = [63, 64], strides = [1, 1]} : vector<63x256xf32> to vector<63x64xf32>
    %83 = vector.extract_strided_slice %78 {offsets = [0, 192], sizes = [63, 64], strides = [1, 1]} : vector<63x256xf32> to vector<63x64xf32>
    %84 = arith.maximumf %82, %83 : vector<63x64xf32>
    %85 = arith.maximumf %81, %84 : vector<63x64xf32>
    %86 = vector.extract_strided_slice %85 {offsets = [0, 0], sizes = [7, 64], strides = [1, 1]} : vector<63x64xf32> to vector<7x64xf32>
    %87 = vector.extract_strided_slice %85 {offsets = [9, 0], sizes = [7, 64], strides = [1, 1]} : vector<63x64xf32> to vector<7x64xf32>
    %88 = vector.extract_strided_slice %85 {offsets = [18, 0], sizes = [7, 64], strides = [1, 1]} : vector<63x64xf32> to vector<7x64xf32>
    %89 = vector.extract_strided_slice %85 {offsets = [27, 0], sizes = [7, 64], strides = [1, 1]} : vector<63x64xf32> to vector<7x64xf32>
    %90 = vector.extract_strided_slice %85 {offsets = [36, 0], sizes = [7, 64], strides = [1, 1]} : vector<63x64xf32> to vector<7x64xf32>
    %91 = vector.extract_strided_slice %85 {offsets = [45, 0], sizes = [7, 64], strides = [1, 1]} : vector<63x64xf32> to vector<7x64xf32>
    %92 = vector.extract_strided_slice %85 {offsets = [54, 0], sizes = [7, 64], strides = [1, 1]} : vector<63x64xf32> to vector<7x64xf32>
    %93 = tpu.concatenate %86, %87, %88, %89, %90, %91, %92 in 0 : vector<7x64xf32>, vector<7x64xf32>, vector<7x64xf32>, vector<7x64xf32>, vector<7x64xf32>, vector<7x64xf32>, vector<7x64xf32> -> vector<49x64xf32>
    %94 = arith.truncf %93 : vector<49x64xf32> to vector<49x64xbf16>
    %c0_41 = arith.constant 0 : index
    %c0_42 = arith.constant 0 : index
    %c0_43 = arith.constant 0 : index
    %95 = vector.load %arg7[%c0_41, %c0_42, %c0_43] : memref<2x49x64xbf16, #tpu.memory_space<vmem>>, vector<1x49x64xbf16>
    %96 = vector.shape_cast %95 : vector<1x49x64xbf16> to vector<49x64xbf16>
    %97 = vector.shape_cast %94 : vector<49x64xbf16> to vector<1x49x64xbf16>
    tpu.vector_store %arg7[%c0_41, %c0_42, %c0_43], %97 {strides = array<i32>} : memref<2x49x64xbf16, #tpu.memory_space<vmem>>, vector<1x49x64xbf16>,
    %c1 = arith.constant 1 : index
    %c0_44 = arith.constant 0 : index
    %c0_45 = arith.constant 0 : index
    %98 = vector.load %arg1[%c1, %c0_44, %c0_45] : memref<2x81x16xbf16, #tpu.memory_space<vmem>>, vector<1x81x16xbf16>
    %99 = vector.shape_cast %98 : vector<1x81x16xbf16> to vector<81x16xbf16>
    %cst_46 = arith.constant 0.000000e+00 : f32
    %100 = vector.broadcast %cst_46 : f32 to vector<63x512xf32>
    %101 = vector.extract_strided_slice %99 {offsets = [0, 0], sizes = [63, 16], strides = [1, 1]} : vector<81x16xbf16> to vector<63x16xbf16>
    %c0_47 = arith.constant 0 : index
    %c0_48 = arith.constant 0 : index
    %102 = vector.load %arg2[%c0_47, %c0_48] : memref<64x512xbf16, #tpu.memory_space<vmem>>, vector<16x512xbf16>
    %cst_49 = arith.constant dense<0.000000e+00> : vector<63x512xf32>
    %103 = tpu.matmul %101, %102, %cst_49 {dimension_numbers = #tpu.dot_dimension_numbers<[1], [0], [0], [1], [0, 0, 1, 1], [], []>} : vector<63x16xbf16>, vector<16x512xbf16>, vector<63x512xf32> -> vector<63x512xf32>
    %104 = arith.addf %100, %103 : vector<63x512xf32>
    %105 = vector.extract_strided_slice %99 {offsets = [1, 0], sizes = [63, 16], strides = [1, 1]} : vector<81x16xbf16> to vector<63x16xbf16>
    %c16_50 = arith.constant 16 : index
    %c0_51 = arith.constant 0 : index
    %106 = vector.load %arg2[%c16_50, %c0_51] : memref<64x512xbf16, #tpu.memory_space<vmem>>, vector<16x512xbf16>
    %cst_52 = arith.constant dense<0.000000e+00> : vector<63x512xf32>
    %107 = tpu.matmul %105, %106, %cst_52 {dimension_numbers = #tpu.dot_dimension_numbers<[1], [0], [0], [1], [0, 0, 1, 1], [], []>} : vector<63x16xbf16>, vector<16x512xbf16>, vector<63x512xf32> -> vector<63x512xf32>
    %108 = arith.addf %104, %107 : vector<63x512xf32>
    %109 = vector.extract_strided_slice %99 {offsets = [9, 0], sizes = [63, 16], strides = [1, 1]} : vector<81x16xbf16> to vector<63x16xbf16>
    %c32_53 = arith.constant 32 : index
    %c0_54 = arith.constant 0 : index
    %110 = vector.load %arg2[%c32_53, %c0_54] : memref<64x512xbf16, #tpu.memory_space<vmem>>, vector<16x512xbf16>
    %cst_55 = arith.constant dense<0.000000e+00> : vector<63x512xf32>
    %111 = tpu.matmul %109, %110, %cst_55 {dimension_numbers = #tpu.dot_dimension_numbers<[1], [0], [0], [1], [0, 0, 1, 1], [], []>} : vector<63x16xbf16>, vector<16x512xbf16>, vector<63x512xf32> -> vector<63x512xf32>
    %112 = arith.addf %108, %111 : vector<63x512xf32>
    %113 = vector.extract_strided_slice %99 {offsets = [10, 0], sizes = [63, 16], strides = [1, 1]} : vector<81x16xbf16> to vector<63x16xbf16>
    %c48_56 = arith.constant 48 : index
    %c0_57 = arith.constant 0 : index
    %114 = vector.load %arg2[%c48_56, %c0_57] : memref<64x512xbf16, #tpu.memory_space<vmem>>, vector<16x512xbf16>
    %cst_58 = arith.constant dense<0.000000e+00> : vector<63x512xf32>
    %115 = tpu.matmul %113, %114, %cst_58 {dimension_numbers = #tpu.dot_dimension_numbers<[1], [0], [0], [1], [0, 0, 1, 1], [], []>} : vector<63x16xbf16>, vector<16x512xbf16>, vector<63x512xf32> -> vector<63x512xf32>
    %116 = arith.addf %112, %115 : vector<63x512xf32>
    %117 = vector.broadcast %0 : vector<1x512xf32> to vector<63x512xf32>
    %118 = arith.addf %116, %117 : vector<63x512xf32>
    %cst_59 = arith.constant 0.000000e+00 : f32
    %119 = vector.broadcast %cst_59 : f32 to vector<63x512xf32>
    %120 = arith.maximumf %118, %119 : vector<63x512xf32>
    %121 = vector.extract_strided_slice %120 {offsets = [0, 0], sizes = [63, 128], strides = [1, 1]} : vector<63x512xf32> to vector<63x128xf32>
    %122 = vector.extract_strided_slice %120 {offsets = [0, 128], sizes = [63, 128], strides = [1, 1]} : vector<63x512xf32> to vector<63x128xf32>
    %123 = arith.maximumf %121, %122 : vector<63x128xf32>
    %124 = vector.extract_strided_slice %120 {offsets = [0, 256], sizes = [63, 128], strides = [1, 1]} : vector<63x512xf32> to vector<63x128xf32>
    %125 = vector.extract_strided_slice %120 {offsets = [0, 384], sizes = [63, 128], strides = [1, 1]} : vector<63x512xf32> to vector<63x128xf32>
    %126 = arith.maximumf %124, %125 : vector<63x128xf32>
    %127 = arith.maximumf %123, %126 : vector<63x128xf32>
    %128 = arith.mulf %127, %2 : vector<63x128xf32>
    %cst_60 = arith.constant 0.000000e+00 : f32
    %129 = vector.broadcast %cst_60 : f32 to vector<10x128xf32>
    %cst_61 = arith.constant 0.000000e+00 : f32
    %130 = vector.broadcast %cst_61 : f32 to vector<17x128xf32>
    %131 = tpu.concatenate %129, %128, %130 in 0 : vector<10x128xf32>, vector<63x128xf32>, vector<17x128xf32> -> vector<90x128xf32>
    %132 = arith.truncf %131 : vector<90x128xf32> to vector<90x128xbf16>
    %cst_62 = arith.constant 0.000000e+00 : f32
    %133 = vector.broadcast %cst_62 : f32 to vector<63x256xf32>
    %134 = vector.extract_strided_slice %132 {offsets = [0, 0], sizes = [63, 128], strides = [1, 1]} : vector<90x128xbf16> to vector<63x128xbf16>
    %c0_63 = arith.constant 0 : index
    %c0_64 = arith.constant 0 : index
    %135 = vector.load %arg4[%c0_63, %c0_64] : memref<1152x256xbf16, #tpu.memory_space<vmem>>, vector<128x256xbf16>
    %cst_65 = arith.constant dense<0.000000e+00> : vector<63x256xf32>
    %136 = tpu.matmul %134, %135, %cst_65 {dimension_numbers = #tpu.dot_dimension_numbers<[1], [0], [0], [1], [0, 0, 1, 1], [], []>} : vector<63x128xbf16>, vector<128x256xbf16>, vector<63x256xf32> -> vector<63x256xf32>
    %137 = arith.addf %133, %136 : vector<63x256xf32>
    %138 = vector.extract_strided_slice %132 {offsets = [1, 0], sizes = [63, 128], strides = [1, 1]} : vector<90x128xbf16> to vector<63x128xbf16>
    %c128_66 = arith.constant 128 : index
    %c0_67 = arith.constant 0 : index
    %139 = vector.load %arg4[%c128_66, %c0_67] : memref<1152x256xbf16, #tpu.memory_space<vmem>>, vector<128x256xbf16>
    %cst_68 = arith.constant dense<0.000000e+00> : vector<63x256xf32>
    %140 = tpu.matmul %138, %139, %cst_68 {dimension_numbers = #tpu.dot_dimension_numbers<[1], [0], [0], [1], [0, 0, 1, 1], [], []>} : vector<63x128xbf16>, vector<128x256xbf16>, vector<63x256xf32> -> vector<63x256xf32>
    %141 = arith.addf %137, %140 : vector<63x256xf32>
    %142 = vector.extract_strided_slice %132 {offsets = [2, 0], sizes = [63, 128], strides = [1, 1]} : vector<90x128xbf16> to vector<63x128xbf16>
    %c256_69 = arith.constant 256 : index
    %c0_70 = arith.constant 0 : index
    %143 = vector.load %arg4[%c256_69, %c0_70] : memref<1152x256xbf16, #tpu.memory_space<vmem>>, vector<128x256xbf16>
    %cst_71 = arith.constant dense<0.000000e+00> : vector<63x256xf32>
    %144 = tpu.matmul %142, %143, %cst_71 {dimension_numbers = #tpu.dot_dimension_numbers<[1], [0], [0], [1], [0, 0, 1, 1], [], []>} : vector<63x128xbf16>, vector<128x256xbf16>, vector<63x256xf32> -> vector<63x256xf32>
    %145 = arith.addf %141, %144 : vector<63x256xf32>
    %146 = vector.extract_strided_slice %132 {offsets = [9, 0], sizes = [63, 128], strides = [1, 1]} : vector<90x128xbf16> to vector<63x128xbf16>
    %c384_72 = arith.constant 384 : index
    %c0_73 = arith.constant 0 : index
    %147 = vector.load %arg4[%c384_72, %c0_73] : memref<1152x256xbf16, #tpu.memory_space<vmem>>, vector<128x256xbf16>
    %cst_74 = arith.constant dense<0.000000e+00> : vector<63x256xf32>
    %148 = tpu.matmul %146, %147, %cst_74 {dimension_numbers = #tpu.dot_dimension_numbers<[1], [0], [0], [1], [0, 0, 1, 1], [], []>} : vector<63x128xbf16>, vector<128x256xbf16>, vector<63x256xf32> -> vector<63x256xf32>
    %149 = arith.addf %145, %148 : vector<63x256xf32>
    %150 = vector.extract_strided_slice %132 {offsets = [10, 0], sizes = [63, 128], strides = [1, 1]} : vector<90x128xbf16> to vector<63x128xbf16>
    %c512_75 = arith.constant 512 : index
    %c0_76 = arith.constant 0 : index
    %151 = vector.load %arg4[%c512_75, %c0_76] : memref<1152x256xbf16, #tpu.memory_space<vmem>>, vector<128x256xbf16>
    %cst_77 = arith.constant dense<0.000000e+00> : vector<63x256xf32>
    %152 = tpu.matmul %150, %151, %cst_77 {dimension_numbers = #tpu.dot_dimension_numbers<[1], [0], [0], [1], [0, 0, 1, 1], [], []>} : vector<63x128xbf16>, vector<128x256xbf16>, vector<63x256xf32> -> vector<63x256xf32>
    %153 = arith.addf %149, %152 : vector<63x256xf32>
    %154 = vector.extract_strided_slice %132 {offsets = [11, 0], sizes = [63, 128], strides = [1, 1]} : vector<90x128xbf16> to vector<63x128xbf16>
    %c640_78 = arith.constant 640 : index
    %c0_79 = arith.constant 0 : index
    %155 = vector.load %arg4[%c640_78, %c0_79] : memref<1152x256xbf16, #tpu.memory_space<vmem>>, vector<128x256xbf16>
    %cst_80 = arith.constant dense<0.000000e+00> : vector<63x256xf32>
    %156 = tpu.matmul %154, %155, %cst_80 {dimension_numbers = #tpu.dot_dimension_numbers<[1], [0], [0], [1], [0, 0, 1, 1], [], []>} : vector<63x128xbf16>, vector<128x256xbf16>, vector<63x256xf32> -> vector<63x256xf32>
    %157 = arith.addf %153, %156 : vector<63x256xf32>
    %158 = vector.extract_strided_slice %132 {offsets = [18, 0], sizes = [63, 128], strides = [1, 1]} : vector<90x128xbf16> to vector<63x128xbf16>
    %c768_81 = arith.constant 768 : index
    %c0_82 = arith.constant 0 : index
    %159 = vector.load %arg4[%c768_81, %c0_82] : memref<1152x256xbf16, #tpu.memory_space<vmem>>, vector<128x256xbf16>
    %cst_83 = arith.constant dense<0.000000e+00> : vector<63x256xf32>
    %160 = tpu.matmul %158, %159, %cst_83 {dimension_numbers = #tpu.dot_dimension_numbers<[1], [0], [0], [1], [0, 0, 1, 1], [], []>} : vector<63x128xbf16>, vector<128x256xbf16>, vector<63x256xf32> -> vector<63x256xf32>
    %161 = arith.addf %157, %160 : vector<63x256xf32>
    %162 = vector.extract_strided_slice %132 {offsets = [19, 0], sizes = [63, 128], strides = [1, 1]} : vector<90x128xbf16> to vector<63x128xbf16>
    %c896_84 = arith.constant 896 : index
    %c0_85 = arith.constant 0 : index
    %163 = vector.load %arg4[%c896_84, %c0_85] : memref<1152x256xbf16, #tpu.memory_space<vmem>>, vector<128x256xbf16>
    %cst_86 = arith.constant dense<0.000000e+00> : vector<63x256xf32>
    %164 = tpu.matmul %162, %163, %cst_86 {dimension_numbers = #tpu.dot_dimension_numbers<[1], [0], [0], [1], [0, 0, 1, 1], [], []>} : vector<63x128xbf16>, vector<128x256xbf16>, vector<63x256xf32> -> vector<63x256xf32>
    %165 = arith.addf %161, %164 : vector<63x256xf32>
    %166 = vector.extract_strided_slice %132 {offsets = [20, 0], sizes = [63, 128], strides = [1, 1]} : vector<90x128xbf16> to vector<63x128xbf16>
    %c1024_87 = arith.constant 1024 : index
    %c0_88 = arith.constant 0 : index
    %167 = vector.load %arg4[%c1024_87, %c0_88] : memref<1152x256xbf16, #tpu.memory_space<vmem>>, vector<128x256xbf16>
    %cst_89 = arith.constant dense<0.000000e+00> : vector<63x256xf32>
    %168 = tpu.matmul %166, %167, %cst_89 {dimension_numbers = #tpu.dot_dimension_numbers<[1], [0], [0], [1], [0, 0, 1, 1], [], []>} : vector<63x128xbf16>, vector<128x256xbf16>, vector<63x256xf32> -> vector<63x256xf32>
    %169 = arith.addf %165, %168 : vector<63x256xf32>
    %170 = vector.broadcast %1 : vector<1x256xf32> to vector<63x256xf32>
    %171 = arith.addf %169, %170 : vector<63x256xf32>
    %cst_90 = arith.constant 0.000000e+00 : f32
    %172 = vector.broadcast %cst_90 : f32 to vector<63x256xf32>
    %173 = arith.maximumf %171, %172 : vector<63x256xf32>
    %174 = vector.extract_strided_slice %173 {offsets = [0, 0], sizes = [63, 64], strides = [1, 1]} : vector<63x256xf32> to vector<63x64xf32>
    %175 = vector.extract_strided_slice %173 {offsets = [0, 64], sizes = [63, 64], strides = [1, 1]} : vector<63x256xf32> to vector<63x64xf32>
    %176 = arith.maximumf %174, %175 : vector<63x64xf32>
    %177 = vector.extract_strided_slice %173 {offsets = [0, 128], sizes = [63, 64], strides = [1, 1]} : vector<63x256xf32> to vector<63x64xf32>
    %178 = vector.extract_strided_slice %173 {offsets = [0, 192], sizes = [63, 64], strides = [1, 1]} : vector<63x256xf32> to vector<63x64xf32>
    %179 = arith.maximumf %177, %178 : vector<63x64xf32>
    %180 = arith.maximumf %176, %179 : vector<63x64xf32>
    %181 = vector.extract_strided_slice %180 {offsets = [0, 0], sizes = [7, 64], strides = [1, 1]} : vector<63x64xf32> to vector<7x64xf32>
    %182 = vector.extract_strided_slice %180 {offsets = [9, 0], sizes = [7, 64], strides = [1, 1]} : vector<63x64xf32> to vector<7x64xf32>
    %183 = vector.extract_strided_slice %180 {offsets = [18, 0], sizes = [7, 64], strides = [1, 1]} : vector<63x64xf32> to vector<7x64xf32>
    %184 = vector.extract_strided_slice %180 {offsets = [27, 0], sizes = [7, 64], strides = [1, 1]} : vector<63x64xf32> to vector<7x64xf32>
    %185 = vector.extract_strided_slice %180 {offsets = [36, 0], sizes = [7, 64], strides = [1, 1]} : vector<63x64xf32> to vector<7x64xf32>
    %186 = vector.extract_strided_slice %180 {offsets = [45, 0], sizes = [7, 64], strides = [1, 1]} : vector<63x64xf32> to vector<7x64xf32>
    %187 = vector.extract_strided_slice %180 {offsets = [54, 0], sizes = [7, 64], strides = [1, 1]} : vector<63x64xf32> to vector<7x64xf32>
    %188 = tpu.concatenate %181, %182, %183, %184, %185, %186, %187 in 0 : vector<7x64xf32>, vector<7x64xf32>, vector<7x64xf32>, vector<7x64xf32>, vector<7x64xf32>, vector<7x64xf32>, vector<7x64xf32> -> vector<49x64xf32>
    %189 = arith.truncf %188 : vector<49x64xf32> to vector<49x64xbf16>
    %c1_91 = arith.constant 1 : index
    %c0_92 = arith.constant 0 : index
    %c0_93 = arith.constant 0 : index
    %190 = vector.load %arg7[%c1_91, %c0_92, %c0_93] : memref<2x49x64xbf16, #tpu.memory_space<vmem>>, vector<1x49x64xbf16>
    %191 = vector.shape_cast %190 : vector<1x49x64xbf16> to vector<49x64xbf16>
    %192 = vector.shape_cast %189 : vector<49x64xbf16> to vector<1x49x64xbf16>
    tpu.vector_store %arg7[%c1_91, %c0_92, %c0_93], %192 {strides = array<i32>} : memref<2x49x64xbf16, #tpu.memory_space<vmem>>, vector<1x49x64xbf16>,
    return
  }
  func.func @transform_0(%arg0: i32) -> (i32, i32, i32) {
    %c0_i32 = arith.constant 0 : i32
    %c0_i32_0 = arith.constant 0 : i32
    %c0_i32_1 = arith.constant 0 : i32
    return %arg0, %c0_i32, %c0_i32_0 : i32, i32, i32
  }
  func.func @transform_1(%arg0: i32) -> (i32, i32) {
    %c0_i32 = arith.constant 0 : i32
    %c0_i32_0 = arith.constant 0 : i32
    %c0_i32_1 = arith.constant 0 : i32
    return %c0_i32, %c0_i32_0 : i32, i32
  }
  func.func @transform_2(%arg0: i32) -> (i32, i32) {
    %c0_i32 = arith.constant 0 : i32
    %c0_i32_0 = arith.constant 0 : i32
    %c0_i32_1 = arith.constant 0 : i32
    return %c0_i32, %c0_i32_0 : i32, i32
  }
  func.func @transform_3(%arg0: i32) -> (i32, i32) {
    %c0_i32 = arith.constant 0 : i32
    %c0_i32_0 = arith.constant 0 : i32
    %c0_i32_1 = arith.constant 0 : i32
    return %c0_i32, %c0_i32_0 : i32, i32
  }
  func.func @transform_4(%arg0: i32) -> (i32, i32) {
    %c0_i32 = arith.constant 0 : i32
    %c0_i32_0 = arith.constant 0 : i32
    %c0_i32_1 = arith.constant 0 : i32
    return %c0_i32, %c0_i32_0 : i32, i32
  }
  func.func @transform_5(%arg0: i32) -> (i32, i32) {
    %c0_i32 = arith.constant 0 : i32
    %c0_i32_0 = arith.constant 0 : i32
    %c0_i32_1 = arith.constant 0 : i32
    return %c0_i32, %c0_i32_0 : i32, i32
  }
  func.func @transform_6(%arg0: i32) -> (i32, i32, i32) {
    %c0_i32 = arith.constant 0 : i32
    %c0_i32_0 = arith.constant 0 : i32
    %c0_i32_1 = arith.constant 0 : i32
    return %arg0, %c0_i32, %c0_i32_0 : i32, i32, i32
  }
}

</mosaic_0001>

<llo_original>
// kernel: lenet_forward.2
$region0: #{lenet_forward.2}
  #allocation0 [shape = 'u32[]', space=smem, size = 0x4, offset = 0x4, fixed_abs, tag = 'smem constant byte address 0x4 - core index']
  #allocation1 [shape = 'u32[144,128]{1,0:T(1,128)}', space=vmem, size = 0x12000, scoped, tag = 'internal scratch']
  %s0 = inlined_call_operand.vmem [shape: bf16[2,81,16], index: 0, kind: input, shape index: {}]
  %s1 = inlined_call_operand.hbm [shape: bf16[64,512], index: 1, kind: input, shape index: {}]
  %s2 = inlined_call_operand.hbm [shape: f32[1,512], index: 2, kind: input, shape index: {}]
  %s3 = inlined_call_operand.hbm [shape: bf16[1152,256], index: 3, kind: input, shape index: {}]
  %s4 = inlined_call_operand.hbm [shape: f32[1,256], index: 4, kind: input, shape index: {}]
  %s5 = inlined_call_operand.hbm [shape: f32[63,128], index: 5, kind: input, shape index: {}]
  %s6 = inlined_call_operand.vmem [shape: bf16[2,49,64], index: 6, kind: output, shape index: {}]
  %s7 = sld [smem:[#allocation0]]
  $region54: #{lenet_forward.2} parent=0
    _
  %s9 = ssub.s32 1, %s7
  %s10 = scalar_select 0, %s9, %s7
  $region1: #{lenet_forward.2} parent=0
    #allocation2 [shape = 'u8[65536]{0}', space=vmem, size = 0x10000, scoped, tag = 'input window, operand 1, single buffered']
    #allocation3 [shape = 's32[1]{0}', space=sflag, size = 0x4, scoped, tag = 'scoped memory for lenet_forward.2']
    #allocation4 [shape = 'u8[2048]{0}', space=vmem, size = 0x800, scoped, tag = 'input window, operand 2, single buffered']
    #allocation5 [shape = 's32[1]{0}', space=sflag, size = 0x4, scoped, tag = 'scoped memory for lenet_forward.2']
    #allocation6 [shape = 'u8[589824]{0}', space=vmem, size = 0x90000, scoped, tag = 'input window, operand 3, single buffered']
    #allocation7 [shape = 'u8[1024]{0}', space=vmem, size = 0x400, scoped, tag = 'input window, operand 4, single buffered']
    #allocation8 [shape = 's32[1]{0}', space=sflag, size = 0x4, scoped, tag = 'scoped memory for lenet_forward.2']
    #allocation9 [shape = 'u8[32768]{0}', space=vmem, size = 0x8000, scoped, tag = 'input window, operand 5, single buffered']
    %11 = vsyncpa [#allocation3], 0
    %12 = vsyncpa [#allocation5], 0
    %13 = vsyncpa [#allocation8], 0
    // Predicated region
    $region2: #{lenet_forward.2} parent=1 // pred_check
      _
    $region3: #{lenet_forward.2} parent=1 // pred_check_branch
      %15 = sbr.rel (0) target = $region5
    $region4: #{lenet_forward.2} parent=1 // pred_region
      _
    $region5: #{lenet_forward.2} parent=1 // pred_fallthru
      _
    // Predicated region
    $region6: #{lenet_forward.2} parent=1 // pred_check
      _
    $region7: #{lenet_forward.2} parent=1 // pred_check_branch
      %17 = sbr.rel (0) target = $region9
    $region8: #{lenet_forward.2} parent=1 // pred_region
      %s19 = ssub.s32 2048, 2048
      %20 = vsyncadd [#allocation3], %s19
      %s21 = sshll.u32 [#allocation2], 4
      %s22 = int_to_ptr.vmem [resolvable:$true] %s21
      %27 = dma.hbm_to_vmem [thread:$0]  %s1, 2048, %s22, [#allocation3], 256, 256, 16
    $region9: #{lenet_forward.2} parent=1 // pred_fallthru
      _
    // Predicated region
    $region10: #{lenet_forward.2} parent=1 // pred_check
      _
    $region11: #{lenet_forward.2} parent=1 // pred_check_branch
      %29 = sbr.rel (0) target = $region13
    $region12: #{lenet_forward.2} parent=1 // pred_region
      %s31 = ssub.s32 64, 64
      %32 = vsyncadd [#allocation5], %s31
      %s34 = sshll.u32 [#allocation4], 4
      %s35 = int_to_ptr.vmem [resolvable:$true] %s34
      %37 = dma.hbm_to_vmem [thread:$0]  %s2, 64, %s35, [#allocation5]
    $region13: #{lenet_forward.2} parent=1 // pred_fallthru
      _
    // Predicated region
    $region14: #{lenet_forward.2} parent=1 // pred_check
      _
    $region15: #{lenet_forward.2} parent=1 // pred_check_branch
      %39 = sbr.rel (0) target = $region17
    $region16: #{lenet_forward.2} parent=1 // pred_region
      %s41 = ssub.s32 18432, 18432
      %42 = vsyncadd [#allocation5], %s41
      %s43 = sshll.u32 [#allocation6], 4
      %s44 = int_to_ptr.vmem [resolvable:$true] %s43
      %49 = dma.hbm_to_vmem [thread:$0]  %s3, 18432, %s44, [#allocation5], 128, 128, 8
    $region17: #{lenet_forward.2} parent=1 // pred_fallthru
      _
    // Predicated region
    $region18: #{lenet_forward.2} parent=1 // pred_check
      _
    $region19: #{lenet_forward.2} parent=1 // pred_check_branch
      %51 = sbr.rel (0) target = $region21
    $region20: #{lenet_forward.2} parent=1 // pred_region
      %s53 = ssub.s32 32, 32
      %54 = vsyncadd [#allocation8], %s53
      %s56 = sshll.u32 [#allocation7], 4
      %s57 = int_to_ptr.vmem [resolvable:$true] %s56
      %59 = dma.hbm_to_vmem [thread:$0]  %s4, 32, %s57, [#allocation8]
    $region21: #{lenet_forward.2} parent=1 // pred_fallthru
      _
    // Predicated region
    $region22: #{lenet_forward.2} parent=1 // pred_check
      _
    $region23: #{lenet_forward.2} parent=1 // pred_check_branch
      %61 = sbr.rel (0) target = $region25
    $region24: #{lenet_forward.2} parent=1 // pred_region
      %s63 = ssub.s32 1024, 1024
      %64 = vsyncadd [#allocation8], %s63
      %s65 = sshll.u32 [#allocation9], 4
      %s66 = int_to_ptr.vmem [resolvable:$true] %s65
      %71 = dma.hbm_to_vmem [thread:$0]  %s5, 1024, %s66, [#allocation8], 128, 128, 8
    $region25: #{lenet_forward.2} parent=1 // pred_fallthru
      _
    // Predicated region
    $region26: #{lenet_forward.2} parent=1 // pred_check
      _
    $region27: #{lenet_forward.2} parent=1 // pred_check_branch
      %73 = sbr.rel (0) target = $region29
    $region28: #{lenet_forward.2} parent=1 // pred_region
      %74 = dma.done [#allocation3], 2048
    $region29: #{lenet_forward.2} parent=1 // pred_fallthru
      _
    // Predicated region
    $region30: #{lenet_forward.2} parent=1 // pred_check
      _
    $region31: #{lenet_forward.2} parent=1 // pred_check_branch
      %76 = sbr.rel (0) target = $region33
    $region32: #{lenet_forward.2} parent=1 // pred_region
      %77 = dma.done [#allocation5], 64
    $region33: #{lenet_forward.2} parent=1 // pred_fallthru
      _
    // Predicated region
    $region34: #{lenet_forward.2} parent=1 // pred_check
      _
    $region35: #{lenet_forward.2} parent=1 // pred_check_branch
      %79 = sbr.rel (0) target = $region37
    $region36: #{lenet_forward.2} parent=1 // pred_region
      %80 = dma.done [#allocation5], 18432
    $region37: #{lenet_forward.2} parent=1 // pred_fallthru
      _
    // Predicated region
    $region38: #{lenet_forward.2} parent=1 // pred_check
      _
    $region39: #{lenet_forward.2} parent=1 // pred_check_branch
      %82 = sbr.rel (0) target = $region41
    $region40: #{lenet_forward.2} parent=1 // pred_region
      %83 = dma.done [#allocation8], 32
    $region41: #{lenet_forward.2} parent=1 // pred_fallthru
      _
    // Predicated region
    $region42: #{lenet_forward.2} parent=1 // pred_check
      _
    $region43: #{lenet_forward.2} parent=1 // pred_check_branch
      %85 = sbr.rel (0) target = $region45
    $region44: #{lenet_forward.2} parent=1 // pred_region
      %86 = dma.done [#allocation8], 1024
    $region45: #{lenet_forward.2} parent=1 // pred_fallthru
      _
    %v88 = vld [vmem:[#allocation4] sm:$0xf]
    %v89 = vld [vmem:[#allocation7] sm:$0x3]
    %v90 = vld [vmem:[#allocation9] sm:$0xff]
    %v91 = vld [vmem:[#allocation9 + $0x8] sm:$0xff]
    %v92 = vld [vmem:[#allocation9 + $0x10] sm:$0xff]
    %v93 = vld [vmem:[#allocation9 + $0x18] sm:$0xff]
    %v94 = vld [vmem:[#allocation9 + $0x20] sm:$0xff]
    %v95 = vld [vmem:[#allocation9 + $0x28] sm:$0xff]
    %v96 = vld [vmem:[#allocation9 + $0x30] sm:$0xff]
    %v97 = vld [vmem:[#allocation9 + $0x38] sm:$0x7f]
    %v98 = vld [vmem:[%s0] sm:$0xf]
    %v99 = vld [vmem:[%s0 + $0x4] sm:$0xf]
    %v100 = vld [vmem:[%s0 + $0x8] sm:$0xf]
    %v101 = vld [vmem:[%s0 + $0xc] sm:$0xf]
    %v102 = vld [vmem:[%s0 + $0x10] sm:$0xf]
    %v103 = vld [vmem:[%s0 + $0x14] sm:$0xf]
    %v104 = vld [vmem:[%s0 + $0x18] sm:$0xf]
    %v105 = vld [vmem:[%s0 + $0x1c] sm:$0xf]
    %v106 = vld [vmem:[%s0 + $0x20] sm:$0xf]
    %v107 = vld [vmem:[%s0 + $0x24] sm:$0xf]
    %v108 = vld [vmem:[#allocation2] sm:$0xff]
    %v109 = vld [vmem:[#allocation2 + $0x8] sm:$0xff]
    %v110 = vld [vmem:[#allocation2 + $0x10] sm:$0xff]
    %v111 = vld [vmem:[#allocation2 + $0x18] sm:$0xff]
    %v112 = vld [vmem:[#allocation2 + $0x20] sm:$0xff]
    %v113 = vld [vmem:[#allocation2 + $0x28] sm:$0xff]
    %v114 = vld [vmem:[#allocation2 + $0x30] sm:$0xff]
    %v115 = vld [vmem:[#allocation2 + $0x38] sm:$0xff]
    %v124 = vunpack.c.l.b16 %v98
    %v125 = vunpack.c.l.b16 %v99
    %v126 = vunpack.c.l.b16 %v100
    %v127 = vunpack.c.l.b16 %v101
    %v128 = vunpack.c.l.b16 %v102
    %v129 = vunpack.c.l.b16 %v103
    %v130 = vunpack.c.l.b16 %v104
    %v131 = vunpack.c.l.b16 %v105
    %v132 = vpack.c.b16 %v125, %v124
    %v133 = vpack.c.b16 %v127, %v126
    %v134 = vpack.c.b16 %v129, %v128
    %v135 = vpack.c.b16 %v131, %v130
    %vm136 = vsmask.f32 7424
    %v138 = vshrl.u32 %v132, 16
    %v140 = vshll.u32 %v132, 16
    %v142 = vrot.slane %v140, 1
    %v143 = vor.u32 %v138, %v142
    %v145 = vshll.u32 %v133, 16
    %v147 = vrot.slane %v145, 1
    %v148 = vsel %vm136, %v143, %v147
    %v149 = vshrl.u32 %v133, 16
    %v151 = vor.u32 %v149, %v147
    %v153 = vshll.u32 %v134, 16
    %v155 = vrot.slane %v153, 1
    %v156 = vsel %vm136, %v151, %v155
    %v157 = vshrl.u32 %v134, 16
    %v159 = vor.u32 %v157, %v155
    %v161 = vshll.u32 %v135, 16
    %v163 = vrot.slane %v161, 1
    %v164 = vsel %vm136, %v159, %v163
    %v165 = vshrl.u32 %v135, 16
    %v167 = vor.u32 %v165, %v163
    %v172 = vunpack.c.l.b16 %v112
    %v173 = vunpack.c.h.b16 %v112
    %v174 = vunpack.c.l.b16 %v113
    %v175 = vunpack.c.h.b16 %v113
    %v176 = vunpack.c.l.b16 %v114
    %v177 = vunpack.c.h.b16 %v114
    %v178 = vunpack.c.l.b16 %v115
    %v179 = vunpack.c.h.b16 %v115
    %v180 = vpack.c.b16 %v176, %v172
    %v181 = vpack.c.b16 %v177, %v173
    %v182 = vpack.c.b16 %v178, %v174
    %v183 = vpack.c.b16 %v179, %v175
    %vm188 = vcmask 130048
    %v190 = vsel %vm188, %v148, 0
    %v193 = vsel %vm188, %v156, 0
    %v196 = vsel %vm188, %v164, 0
    %v199 = vsel %vm188, %v167, 0
    %201 = vmatprep.subr.bf16.mxu0 0
    %202 = vmatpush1.bf16.msra.mxu0 0
    %203 = vmatprep.subr.bf16.mxu0 0
    %204 = vmatpush1.bf16.msra.mxu0 0
    %205 = vmatprep.subr.bf16.mxu0 0
    %206 = vmatpush1.bf16.msra.mxu0 0
    %207 = vmatprep.subr.bf16.mxu0 0
    %208 = vmatpush1.bf16.msra.mxu0 0
    %209 = vmatprep.subr.bf16.mxu0 0
    %210 = vmatpush1.bf16.msra.mxu0 0
    %211 = vmatprep.subr.bf16.mxu0 0
    %212 = vmatpush1.bf16.msra.mxu0 0
    %213 = vmatprep.subr.bf16.mxu0 0
    %214 = vmatpush1.bf16.msra.mxu0 0
    %215 = vmatprep.subr.bf16.mxu0 %v181
    %216 = vmatpush1.bf16.msra.mxu0 %v180
    %217 = vmatprep.subr.bf16.mxu0 0
    %218 = vmatpush2.bf16.msra.mxu0 0
    %219 = vmatprep.subr.bf16.mxu0 0
    %220 = vmatpush2.bf16.msra.mxu0 0
    %221 = vmatprep.subr.bf16.mxu0 0
    %222 = vmatpush2.bf16.msra.mxu0 0
    %223 = vmatprep.subr.bf16.mxu0 0
    %224 = vmatpush2.bf16.msra.mxu0 0
    %225 = vmatprep.subr.bf16.mxu0 0
    %226 = vmatpush2.bf16.msra.mxu0 0
    %227 = vmatprep.subr.bf16.mxu0 0
    %228 = vmatpush2.bf16.msra.mxu0 0
    %229 = vmatprep.subr.bf16.mxu0 0
    %230 = vmatpush2.bf16.msra.mxu0 0
    %231 = vmatprep.subr.bf16.mxu0 0
    %232 = vmatpush2.bf16.msra.mxu0 0
    %233 = vmatprep.mubr.bf16.mxu0 0
    %234 = vmatmul.mubr.bf16.gmra.mxu0 %v190
    %v235 = vpop.f32.mrf.mxu0
    %v236 = vadd.f32 0.0, %v235
    %v237 = vpop.f32.mrf.mxu0
    %v238 = vadd.f32 0.0, %v237
    %v239 = vpop.f32.mrf.mxu0
    %v240 = vadd.f32 0.0, %v239
    %v241 = vpop.f32.mrf.mxu0
    %v242 = vadd.f32 0.0, %v241
    %243 = vmatprep.mubr.bf16.mxu0 0
    %244 = vmatmul.mubr.bf16.gmra.mxu0 %v193
    %v245 = vpop.f32.mrf.mxu0
    %v246 = vadd.f32 0.0, %v245
    %v247 = vpop.f32.mrf.mxu0
    %v248 = vadd.f32 0.0, %v247
    %v249 = vpop.f32.mrf.mxu0
    %v250 = vadd.f32 0.0, %v249
    %v251 = vpop.f32.mrf.mxu0
    %v252 = vadd.f32 0.0, %v251
    %253 = vmatprep.mubr.bf16.mxu0 0
    %254 = vmatmul.mubr.bf16.gmra.mxu0 %v196
    %v255 = vpop.f32.mrf.mxu0
    %v256 = vadd.f32 0.0, %v255
    %v257 = vpop.f32.mrf.mxu0
    %v258 = vadd.f32 0.0, %v257
    %v259 = vpop.f32.mrf.mxu0
    %v260 = vadd.f32 0.0, %v259
    %v261 = vpop.f32.mrf.mxu0
    %v262 = vadd.f32 0.0, %v261
    %263 = vmatprep.mubr.bf16.mxu0 0
    %264 = vmatmul.mubr.bf16.gmra.mxu0 %v199
    %v265 = vpop.f32.mrf.mxu0
    %v266 = vadd.f32 0.0, %v265
    %v267 = vpop.f32.mrf.mxu0
    %v268 = vadd.f32 0.0, %v267
    %v269 = vpop.f32.mrf.mxu0
    %v270 = vadd.f32 0.0, %v269
    %v271 = vpop.f32.mrf.mxu0
    %v272 = vadd.f32 0.0, %v271
    %273 = vdwg.mxu0
    %274 = vmatprep.subr.bf16.mxu0 0
    %275 = vmatpush1.bf16.msra.mxu0 0
    %276 = vmatprep.subr.bf16.mxu0 0
    %277 = vmatpush1.bf16.msra.mxu0 0
    %278 = vmatprep.subr.bf16.mxu0 0
    %279 = vmatpush1.bf16.msra.mxu0 0
    %280 = vmatprep.subr.bf16.mxu0 0
    %281 = vmatpush1.bf16.msra.mxu0 0
    %282 = vmatprep.subr.bf16.mxu0 0
    %283 = vmatpush1.bf16.msra.mxu0 0
    %284 = vmatprep.subr.bf16.mxu0 0
    %285 = vmatpush1.bf16.msra.mxu0 0
    %286 = vmatprep.subr.bf16.mxu0 0
    %287 = vmatpush1.bf16.msra.mxu0 0
    %288 = vmatprep.subr.bf16.mxu0 %v183
    %289 = vmatpush1.bf16.msra.mxu0 %v182
    %290 = vmatprep.subr.bf16.mxu0 0
    %291 = vmatpush2.bf16.msra.mxu0 0
    %292 = vmatprep.subr.bf16.mxu0 0
    %293 = vmatpush2.bf16.msra.mxu0 0
    %294 = vmatprep.subr.bf16.mxu0 0
    %295 = vmatpush2.bf16.msra.mxu0 0
    %296 = vmatprep.subr.bf16.mxu0 0
    %297 = vmatpush2.bf16.msra.mxu0 0
    %298 = vmatprep.subr.bf16.mxu0 0
    %299 = vmatpush2.bf16.msra.mxu0 0
    %300 = vmatprep.subr.bf16.mxu0 0
    %301 = vmatpush2.bf16.msra.mxu0 0
    %302 = vmatprep.subr.bf16.mxu0 0
    %303 = vmatpush2.bf16.msra.mxu0 0
    %304 = vmatprep.subr.bf16.mxu0 0
    %305 = vmatpush2.bf16.msra.mxu0 0
    %306 = vmatprep.mubr.bf16.mxu0 0
    %307 = vmatmul.mubr.bf16.gmra.mxu0 %v190
    %v308 = vpop.f32.mrf.mxu0
    %v309 = vadd.f32 0.0, %v308
    %v310 = vpop.f32.mrf.mxu0
    %v311 = vadd.f32 0.0, %v310
    %v312 = vpop.f32.mrf.mxu0
    %v313 = vadd.f32 0.0, %v312
    %v314 = vpop.f32.mrf.mxu0
    %v315 = vadd.f32 0.0, %v314
    %316 = vmatprep.mubr.bf16.mxu0 0
    %317 = vmatmul.mubr.bf16.gmra.mxu0 %v193
    %v318 = vpop.f32.mrf.mxu0
    %v319 = vadd.f32 0.0, %v318
    %v320 = vpop.f32.mrf.mxu0
    %v321 = vadd.f32 0.0, %v320
    %v322 = vpop.f32.mrf.mxu0
    %v323 = vadd.f32 0.0, %v322
    %v324 = vpop.f32.mrf.mxu0
    %v325 = vadd.f32 0.0, %v324
    %326 = vmatprep.mubr.bf16.mxu0 0
    %327 = vmatmul.mubr.bf16.gmra.mxu0 %v196
    %v328 = vpop.f32.mrf.mxu0
    %v329 = vadd.f32 0.0, %v328
    %v330 = vpop.f32.mrf.mxu0
    %v331 = vadd.f32 0.0, %v330
    %v332 = vpop.f32.mrf.mxu0
    %v333 = vadd.f32 0.0, %v332
    %v334 = vpop.f32.mrf.mxu0
    %v335 = vadd.f32 0.0, %v334
    %336 = vmatprep.mubr.bf16.mxu0 0
    %337 = vmatmul.mubr.bf16.gmra.mxu0 %v199
    %v338 = vpop.f32.mrf.mxu0
    %v339 = vadd.f32 0.0, %v338
    %v340 = vpop.f32.mrf.mxu0
    %v341 = vadd.f32 0.0, %v340
    %v342 = vpop.f32.mrf.mxu0
    %v343 = vadd.f32 0.0, %v342
    %v344 = vpop.f32.mrf.mxu0
    %v345 = vadd.f32 0.0, %v344
    %346 = vdwg.mxu0
    %v351 = vunpack.c.l.b16 %v108
    %v352 = vunpack.c.h.b16 %v108
    %v353 = vunpack.c.l.b16 %v109
    %v354 = vunpack.c.h.b16 %v109
    %v355 = vunpack.c.l.b16 %v110
    %v356 = vunpack.c.h.b16 %v110
    %v357 = vunpack.c.l.b16 %v111
    %v358 = vunpack.c.h.b16 %v111
    %v359 = vpack.c.b16 %v355, %v351
    %v360 = vpack.c.b16 %v356, %v352
    %v361 = vpack.c.b16 %v357, %v353
    %v362 = vpack.c.b16 %v358, %v354
    %v367 = vsel %vm188, %v132, 0
    %v369 = vsel %vm188, %v133, 0
    %v371 = vsel %vm188, %v134, 0
    %v373 = vsel %vm188, %v135, 0
    %375 = vmatprep.subr.bf16.mxu0 0
    %376 = vmatpush1.bf16.msra.mxu0 0
    %377 = vmatprep.subr.bf16.mxu0 0
    %378 = vmatpush1.bf16.msra.mxu0 0
    %379 = vmatprep.subr.bf16.mxu0 0
    %380 = vmatpush1.bf16.msra.mxu0 0
    %381 = vmatprep.subr.bf16.mxu0 0
    %382 = vmatpush1.bf16.msra.mxu0 0
    %383 = vmatprep.subr.bf16.mxu0 0
    %384 = vmatpush1.bf16.msra.mxu0 0
    %385 = vmatprep.subr.bf16.mxu0 0
    %386 = vmatpush1.bf16.msra.mxu0 0
    %387 = vmatprep.subr.bf16.mxu0 0
    %388 = vmatpush1.bf16.msra.mxu0 0
    %389 = vmatprep.subr.bf16.mxu0 %v360
    %390 = vmatpush1.bf16.msra.mxu0 %v359
    %391 = vmatprep.subr.bf16.mxu0 0
    %392 = vmatpush2.bf16.msra.mxu0 0
    %393 = vmatprep.subr.bf16.mxu0 0
    %394 = vmatpush2.bf16.msra.mxu0 0
    %395 = vmatprep.subr.bf16.mxu0 0
    %396 = vmatpush2.bf16.msra.mxu0 0
    %397 = vmatprep.subr.bf16.mxu0 0
    %398 = vmatpush2.bf16.msra.mxu0 0
    %399 = vmatprep.subr.bf16.mxu0 0
    %400 = vmatpush2.bf16.msra.mxu0 0
    %401 = vmatprep.subr.bf16.mxu0 0
    %402 = vmatpush2.bf16.msra.mxu0 0
    %403 = vmatprep.subr.bf16.mxu0 0
    %404 = vmatpush2.bf16.msra.mxu0 0
    %405 = vmatprep.subr.bf16.mxu0 0
    %406 = vmatpush2.bf16.msra.mxu0 0
    %407 = vmatprep.mubr.bf16.mxu0 0
    %408 = vmatmul.mubr.bf16.gmra.mxu0 %v367
    %v409 = vpop.f32.mrf.mxu0
    %v410 = vadd.f32 %v236, %v409
    %v411 = vpop.f32.mrf.mxu0
    %v412 = vadd.f32 %v238, %v411
    %v413 = vpop.f32.mrf.mxu0
    %v414 = vadd.f32 %v240, %v413
    %v415 = vpop.f32.mrf.mxu0
    %v416 = vadd.f32 %v242, %v415
    %417 = vmatprep.mubr.bf16.mxu0 0
    %418 = vmatmul.mubr.bf16.gmra.mxu0 %v369
    %v419 = vpop.f32.mrf.mxu0
    %v420 = vadd.f32 %v246, %v419
    %v421 = vpop.f32.mrf.mxu0
    %v422 = vadd.f32 %v248, %v421
    %v423 = vpop.f32.mrf.mxu0
    %v424 = vadd.f32 %v250, %v423
    %v425 = vpop.f32.mrf.mxu0
    %v426 = vadd.f32 %v252, %v425
    %427 = vmatprep.mubr.bf16.mxu0 0
    %428 = vmatmul.mubr.bf16.gmra.mxu0 %v371
    %v429 = vpop.f32.mrf.mxu0
    %v430 = vadd.f32 %v256, %v429
    %v431 = vpop.f32.mrf.mxu0
    %v432 = vadd.f32 %v258, %v431
    %v433 = vpop.f32.mrf.mxu0
    %v434 = vadd.f32 %v260, %v433
    %v435 = vpop.f32.mrf.mxu0
    %v436 = vadd.f32 %v262, %v435
    %437 = vmatprep.mubr.bf16.mxu0 0
    %438 = vmatmul.mubr.bf16.gmra.mxu0 %v373
    %v439 = vpop.f32.mrf.mxu0
    %v440 = vadd.f32 %v266, %v439
    %v441 = vpop.f32.mrf.mxu0
    %v442 = vadd.f32 %v268, %v441
    %v443 = vpop.f32.mrf.mxu0
    %v444 = vadd.f32 %v270, %v443
    %v445 = vpop.f32.mrf.mxu0
    %v446 = vadd.f32 %v272, %v445
    %447 = vdwg.mxu0
    %448 = vmatprep.subr.bf16.mxu0 0
    %449 = vmatpush1.bf16.msra.mxu0 0
    %450 = vmatprep.subr.bf16.mxu0 0
    %451 = vmatpush1.bf16.msra.mxu0 0
    %452 = vmatprep.subr.bf16.mxu0 0
    %453 = vmatpush1.bf16.msra.mxu0 0
    %454 = vmatprep.subr.bf16.mxu0 0
    %455 = vmatpush1.bf16.msra.mxu0 0
    %456 = vmatprep.subr.bf16.mxu0 0
    %457 = vmatpush1.bf16.msra.mxu0 0
    %458 = vmatprep.subr.bf16.mxu0 0
    %459 = vmatpush1.bf16.msra.mxu0 0
    %460 = vmatprep.subr.bf16.mxu0 0
    %461 = vmatpush1.bf16.msra.mxu0 0
    %462 = vmatprep.subr.bf16.mxu0 %v362
    %463 = vmatpush1.bf16.msra.mxu0 %v361
    %464 = vmatprep.subr.bf16.mxu0 0
    %465 = vmatpush2.bf16.msra.mxu0 0
    %466 = vmatprep.subr.bf16.mxu0 0
    %467 = vmatpush2.bf16.msra.mxu0 0
    %468 = vmatprep.subr.bf16.mxu0 0
    %469 = vmatpush2.bf16.msra.mxu0 0
    %470 = vmatprep.subr.bf16.mxu0 0
    %471 = vmatpush2.bf16.msra.mxu0 0
    %472 = vmatprep.subr.bf16.mxu0 0
    %473 = vmatpush2.bf16.msra.mxu0 0
    %474 = vmatprep.subr.bf16.mxu0 0
    %475 = vmatpush2.bf16.msra.mxu0 0
    %476 = vmatprep.subr.bf16.mxu0 0
    %477 = vmatpush2.bf16.msra.mxu0 0
    %478 = vmatprep.subr.bf16.mxu0 0
    %479 = vmatpush2.bf16.msra.mxu0 0
    %480 = vmatprep.mubr.bf16.mxu0 0
    %481 = vmatmul.mubr.bf16.gmra.mxu0 %v367
    %v482 = vpop.f32.mrf.mxu0
    %v483 = vadd.f32 %v309, %v482
    %v484 = vpop.f32.mrf.mxu0
    %v485 = vadd.f32 %v311, %v484
    %v486 = vpop.f32.mrf.mxu0
    %v487 = vadd.f32 %v313, %v486
    %v488 = vpop.f32.mrf.mxu0
    %v489 = vadd.f32 %v315, %v488
    %490 = vmatprep.mubr.bf16.mxu0 0
    %491 = vmatmul.mubr.bf16.gmra.mxu0 %v369
    %v492 = vpop.f32.mrf.mxu0
    %v493 = vadd.f32 %v319, %v492
    %v494 = vpop.f32.mrf.mxu0
    %v495 = vadd.f32 %v321, %v494
    %v496 = vpop.f32.mrf.mxu0
    %v497 = vadd.f32 %v323, %v496
    %v498 = vpop.f32.mrf.mxu0
    %v499 = vadd.f32 %v325, %v498
    %500 = vmatprep.mubr.bf16.mxu0 0
    %501 = vmatmul.mubr.bf16.gmra.mxu0 %v371
    %v502 = vpop.f32.mrf.mxu0
    %v503 = vadd.f32 %v329, %v502
    %v504 = vpop.f32.mrf.mxu0
    %v505 = vadd.f32 %v331, %v504
    %v506 = vpop.f32.mrf.mxu0
    %v507 = vadd.f32 %v333, %v506
    %v508 = vpop.f32.mrf.mxu0
    %v509 = vadd.f32 %v335, %v508
    %510 = vmatprep.mubr.bf16.mxu0 0
    %511 = vmatmul.mubr.bf16.gmra.mxu0 %v373
    %v512 = vpop.f32.mrf.mxu0
    %v513 = vadd.f32 %v339, %v512
    %v514 = vpop.f32.mrf.mxu0
    %v515 = vadd.f32 %v341, %v514
    %v516 = vpop.f32.mrf.mxu0
    %v517 = vadd.f32 %v343, %v516
    %v518 = vpop.f32.mrf.mxu0
    %v519 = vadd.f32 %v345, %v518
    %520 = vdwg.mxu0
    %v521 = vld [vmem:[#allocation2 + $0x40] sm:$0xff]
    %v522 = vld [vmem:[#allocation2 + $0x48] sm:$0xff]
    %v523 = vld [vmem:[#allocation2 + $0x50] sm:$0xff]
    %v524 = vld [vmem:[#allocation2 + $0x58] sm:$0xff]
    %v526 = vunpack.c.l.b16 %v106
    %v527 = vpack.c.b16 %v126, %v125
    %v528 = vpack.c.b16 %v128, %v127
    %v529 = vpack.c.b16 %v130, %v129
    %v530 = vpack.c.b16 %v526, %v131
    %v532 = vshrl.u32 %v527, 16
    %v534 = vshll.u32 %v527, 16
    %v536 = vrot.slane %v534, 1
    %v537 = vor.u32 %v532, %v536
    %v539 = vshll.u32 %v528, 16
    %v541 = vrot.slane %v539, 1
    %v542 = vsel %vm136, %v537, %v541
    %v543 = vshrl.u32 %v528, 16
    %v545 = vor.u32 %v543, %v541
    %v547 = vshll.u32 %v529, 16
    %v549 = vrot.slane %v547, 1
    %v550 = vsel %vm136, %v545, %v549
    %v551 = vshrl.u32 %v529, 16
    %v553 = vor.u32 %v551, %v549
    %v555 = vshll.u32 %v530, 16
    %v557 = vrot.slane %v555, 1
    %v558 = vsel %vm136, %v553, %v557
    %v559 = vshrl.u32 %v530, 16
    %v561 = vor.u32 %v559, %v557
    %v566 = vunpack.c.l.b16 %v521
    %v567 = vunpack.c.h.b16 %v521
    %v568 = vunpack.c.l.b16 %v522
    %v569 = vunpack.c.h.b16 %v522
    %v570 = vunpack.c.l.b16 %v523
    %v571 = vunpack.c.h.b16 %v523
    %v572 = vunpack.c.l.b16 %v524
    %v573 = vunpack.c.h.b16 %v524
    %v574 = vpack.c.b16 %v570, %v566
    %v575 = vpack.c.b16 %v571, %v567
    %v576 = vpack.c.b16 %v572, %v568
    %v577 = vpack.c.b16 %v573, %v569
    %v583 = vsel %vm188, %v542, 0
    %v586 = vsel %vm188, %v550, 0
    %v589 = vsel %vm188, %v558, 0
    %v592 = vsel %vm188, %v561, 0
    %594 = vmatprep.subr.bf16.mxu0 0
    %595 = vmatpush1.bf16.msra.mxu0 0
    %596 = vmatprep.subr.bf16.mxu0 0
    %597 = vmatpush1.bf16.msra.mxu0 0
    %598 = vmatprep.subr.bf16.mxu0 0
    %599 = vmatpush1.bf16.msra.mxu0 0
    %600 = vmatprep.subr.bf16.mxu0 0
    %601 = vmatpush1.bf16.msra.mxu0 0
    %602 = vmatprep.subr.bf16.mxu0 0
    %603 = vmatpush1.bf16.msra.mxu0 0
    %604 = vmatprep.subr.bf16.mxu0 0
    %605 = vmatpush1.bf16.msra.mxu0 0
    %606 = vmatprep.subr.bf16.mxu0 0
    %607 = vmatpush1.bf16.msra.mxu0 0
    %608 = vmatprep.subr.bf16.mxu0 %v575
    %609 = vmatpush1.bf16.msra.mxu0 %v574
    %610 = vmatprep.subr.bf16.mxu0 0
    %611 = vmatpush2.bf16.msra.mxu0 0
    %612 = vmatprep.subr.bf16.mxu0 0
    %613 = vmatpush2.bf16.msra.mxu0 0
    %614 = vmatprep.subr.bf16.mxu0 0
    %615 = vmatpush2.bf16.msra.mxu0 0
    %616 = vmatprep.subr.bf16.mxu0 0
    %617 = vmatpush2.bf16.msra.mxu0 0
    %618 = vmatprep.subr.bf16.mxu0 0
    %619 = vmatpush2.bf16.msra.mxu0 0
    %620 = vmatprep.subr.bf16.mxu0 0
    %621 = vmatpush2.bf16.msra.mxu0 0
    %622 = vmatprep.subr.bf16.mxu0 0
    %623 = vmatpush2.bf16.msra.mxu0 0
    %624 = vmatprep.subr.bf16.mxu0 0
    %625 = vmatpush2.bf16.msra.mxu0 0
    %626 = vmatprep.mubr.bf16.mxu0 0
    %627 = vmatmul.mubr.bf16.gmra.mxu0 %v583
    %v628 = vpop.f32.mrf.mxu0
    %v629 = vadd.f32 0.0, %v628
    %v630 = vpop.f32.mrf.mxu0
    %v631 = vadd.f32 0.0, %v630
    %v632 = vpop.f32.mrf.mxu0
    %v633 = vadd.f32 0.0, %v632
    %v634 = vpop.f32.mrf.mxu0
    %v635 = vadd.f32 0.0, %v634
    %636 = vmatprep.mubr.bf16.mxu0 0
    %637 = vmatmul.mubr.bf16.gmra.mxu0 %v586
    %v638 = vpop.f32.mrf.mxu0
    %v639 = vadd.f32 0.0, %v638
    %v640 = vpop.f32.mrf.mxu0
    %v641 = vadd.f32 0.0, %v640
    %v642 = vpop.f32.mrf.mxu0
    %v643 = vadd.f32 0.0, %v642
    %v644 = vpop.f32.mrf.mxu0
    %v645 = vadd.f32 0.0, %v644
    %646 = vmatprep.mubr.bf16.mxu0 0
    %647 = vmatmul.mubr.bf16.gmra.mxu0 %v589
    %v648 = vpop.f32.mrf.mxu0
    %v649 = vadd.f32 0.0, %v648
    %v650 = vpop.f32.mrf.mxu0
    %v651 = vadd.f32 0.0, %v650
    %v652 = vpop.f32.mrf.mxu0
    %v653 = vadd.f32 0.0, %v652
    %v654 = vpop.f32.mrf.mxu0
    %v655 = vadd.f32 0.0, %v654
    %656 = vmatprep.mubr.bf16.mxu0 0
    %657 = vmatmul.mubr.bf16.gmra.mxu0 %v592
    %v658 = vpop.f32.mrf.mxu0
    %v659 = vadd.f32 0.0, %v658
    %v660 = vpop.f32.mrf.mxu0
    %v661 = vadd.f32 0.0, %v660
    %v662 = vpop.f32.mrf.mxu0
    %v663 = vadd.f32 0.0, %v662
    %v664 = vpop.f32.mrf.mxu0
    %v665 = vadd.f32 0.0, %v664
    %666 = vdwg.mxu0
    %667 = vmatprep.subr.bf16.mxu0 0
    %668 = vmatpush1.bf16.msra.mxu0 0
    %669 = vmatprep.subr.bf16.mxu0 0
    %670 = vmatpush1.bf16.msra.mxu0 0
    %671 = vmatprep.subr.bf16.mxu0 0
    %672 = vmatpush1.bf16.msra.mxu0 0
    %673 = vmatprep.subr.bf16.mxu0 0
    %674 = vmatpush1.bf16.msra.mxu0 0
    %675 = vmatprep.subr.bf16.mxu0 0
    %676 = vmatpush1.bf16.msra.mxu0 0
    %677 = vmatprep.subr.bf16.mxu0 0
    %678 = vmatpush1.bf16.msra.mxu0 0
    %679 = vmatprep.subr.bf16.mxu0 0
    %680 = vmatpush1.bf16.msra.mxu0 0
    %681 = vmatprep.subr.bf16.mxu0 %v577
    %682 = vmatpush1.bf16.msra.mxu0 %v576
    %683 = vmatprep.subr.bf16.mxu0 0
    %684 = vmatpush2.bf16.msra.mxu0 0
    %685 = vmatprep.subr.bf16.mxu0 0
    %686 = vmatpush2.bf16.msra.mxu0 0
    %687 = vmatprep.subr.bf16.mxu0 0
    %688 = vmatpush2.bf16.msra.mxu0 0
    %689 = vmatprep.subr.bf16.mxu0 0
    %690 = vmatpush2.bf16.msra.mxu0 0
    %691 = vmatprep.subr.bf16.mxu0 0
    %692 = vmatpush2.bf16.msra.mxu0 0
    %693 = vmatprep.subr.bf16.mxu0 0
    %694 = vmatpush2.bf16.msra.mxu0 0
    %695 = vmatprep.subr.bf16.mxu0 0
    %696 = vmatpush2.bf16.msra.mxu0 0
    %697 = vmatprep.subr.bf16.mxu0 0
    %698 = vmatpush2.bf16.msra.mxu0 0
    %699 = vmatprep.mubr.bf16.mxu0 0
    %700 = vmatmul.mubr.bf16.gmra.mxu0 %v583
    %v701 = vpop.f32.mrf.mxu0
    %v702 = vadd.f32 0.0, %v701
    %v703 = vpop.f32.mrf.mxu0
    %v704 = vadd.f32 0.0, %v703
    %v705 = vpop.f32.mrf.mxu0
    %v706 = vadd.f32 0.0, %v705
    %v707 = vpop.f32.mrf.mxu0
    %v708 = vadd.f32 0.0, %v707
    %709 = vmatprep.mubr.bf16.mxu0 0
    %710 = vmatmul.mubr.bf16.gmra.mxu0 %v586
    %v711 = vpop.f32.mrf.mxu0
    %v712 = vadd.f32 0.0, %v711
    %v713 = vpop.f32.mrf.mxu0
    %v714 = vadd.f32 0.0, %v713
    %v715 = vpop.f32.mrf.mxu0
    %v716 = vadd.f32 0.0, %v715
    %v717 = vpop.f32.mrf.mxu0
    %v718 = vadd.f32 0.0, %v717
    %719 = vmatprep.mubr.bf16.mxu0 0
    %720 = vmatmul.mubr.bf16.gmra.mxu0 %v589
    %v721 = vpop.f32.mrf.mxu0
    %v722 = vadd.f32 0.0, %v721
    %v723 = vpop.f32.mrf.mxu0
    %v724 = vadd.f32 0.0, %v723
    %v725 = vpop.f32.mrf.mxu0
    %v726 = vadd.f32 0.0, %v725
    %v727 = vpop.f32.mrf.mxu0
    %v728 = vadd.f32 0.0, %v727
    %729 = vmatprep.mubr.bf16.mxu0 0
    %730 = vmatmul.mubr.bf16.gmra.mxu0 %v592
    %v731 = vpop.f32.mrf.mxu0
    %v732 = vadd.f32 0.0, %v731
    %v733 = vpop.f32.mrf.mxu0
    %v734 = vadd.f32 0.0, %v733
    %v735 = vpop.f32.mrf.mxu0
    %v736 = vadd.f32 0.0, %v735
    %v737 = vpop.f32.mrf.mxu0
    %v738 = vadd.f32 0.0, %v737
    %739 = vdwg.mxu0
    %v740 = vadd.f32 %v410, %v629
    %v741 = vadd.f32 %v412, %v631
    %v742 = vadd.f32 %v483, %v702
    %v743 = vadd.f32 %v485, %v704
    %v744 = vadd.f32 %v414, %v633
    %v745 = vadd.f32 %v416, %v635
    %v746 = vadd.f32 %v487, %v706
    %v747 = vadd.f32 %v489, %v708
    %v748 = vadd.f32 %v420, %v639
    %v749 = vadd.f32 %v422, %v641
    %v750 = vadd.f32 %v493, %v712
    %v751 = vadd.f32 %v495, %v714
    %v752 = vadd.f32 %v424, %v643
    %v753 = vadd.f32 %v426, %v645
    %v754 = vadd.f32 %v497, %v716
    %v755 = vadd.f32 %v499, %v718
    %v756 = vadd.f32 %v430, %v649
    %v757 = vadd.f32 %v432, %v651
    %v758 = vadd.f32 %v503, %v722
    %v759 = vadd.f32 %v505, %v724
    %v760 = vadd.f32 %v434, %v653
    %v761 = vadd.f32 %v436, %v655
    %v762 = vadd.f32 %v507, %v726
    %v763 = vadd.f32 %v509, %v728
    %v764 = vadd.f32 %v440, %v659
    %v765 = vadd.f32 %v442, %v661
    %v766 = vadd.f32 %v513, %v732
    %v767 = vadd.f32 %v515, %v734
    %v768 = vadd.f32 %v444, %v663
    %v769 = vadd.f32 %v446, %v665
    %v770 = vadd.f32 %v517, %v736
    %v771 = vadd.f32 %v519, %v738
    %v772 = vld [vmem:[#allocation2 + $0x60] sm:$0xff]
    %v773 = vld [vmem:[#allocation2 + $0x68] sm:$0xff]
    %v774 = vld [vmem:[#allocation2 + $0x70] sm:$0xff]
    %v775 = vld [vmem:[#allocation2 + $0x78] sm:$0xff]
    %v777 = vunpack.c.l.b16 %v107
    %v778 = vpack.c.b16 %v777, %v777
    %vm779 = vcmask 1046528
    %v780 = vrot.slane %v527, 1
    %v781 = vrot.slane %v528, 1
    %v782 = vsel %vm779, %v780, %v781
    %v783 = vrot.slane %v529, 1
    %v784 = vsel %vm779, %v781, %v783
    %v785 = vrot.slane %v530, 1
    %v786 = vsel %vm779, %v783, %v785
    %v787 = vrot.slane %v778, 1
    %v788 = vsel %vm779, %v785, %v787
    %v793 = vunpack.c.l.b16 %v772
    %v794 = vunpack.c.h.b16 %v772
    %v795 = vunpack.c.l.b16 %v773
    %v796 = vunpack.c.h.b16 %v773
    %v797 = vunpack.c.l.b16 %v774
    %v798 = vunpack.c.h.b16 %v774
    %v799 = vunpack.c.l.b16 %v775
    %v800 = vunpack.c.h.b16 %v775
    %v801 = vpack.c.b16 %v797, %v793
    %v802 = vpack.c.b16 %v798, %v794
    %v803 = vpack.c.b16 %v799, %v795
    %v804 = vpack.c.b16 %v800, %v796
    %v810 = vsel %vm188, %v782, 0
    %v813 = vsel %vm188, %v784, 0
    %v816 = vsel %vm188, %v786, 0
    %v819 = vsel %vm188, %v788, 0
    %821 = vmatprep.subr.bf16.mxu0 0
    %822 = vmatpush1.bf16.msra.mxu0 0
    %823 = vmatprep.subr.bf16.mxu0 0
    %824 = vmatpush1.bf16.msra.mxu0 0
    %825 = vmatprep.subr.bf16.mxu0 0
    %826 = vmatpush1.bf16.msra.mxu0 0
    %827 = vmatprep.subr.bf16.mxu0 0
    %828 = vmatpush1.bf16.msra.mxu0 0
    %829 = vmatprep.subr.bf16.mxu0 0
    %830 = vmatpush1.bf16.msra.mxu0 0
    %831 = vmatprep.subr.bf16.mxu0 0
    %832 = vmatpush1.bf16.msra.mxu0 0
    %833 = vmatprep.subr.bf16.mxu0 0
    %834 = vmatpush1.bf16.msra.mxu0 0
    %835 = vmatprep.subr.bf16.mxu0 %v802
    %836 = vmatpush1.bf16.msra.mxu0 %v801
    %837 = vmatprep.subr.bf16.mxu0 0
    %838 = vmatpush2.bf16.msra.mxu0 0
    %839 = vmatprep.subr.bf16.mxu0 0
    %840 = vmatpush2.bf16.msra.mxu0 0
    %841 = vmatprep.subr.bf16.mxu0 0
    %842 = vmatpush2.bf16.msra.mxu0 0
    %843 = vmatprep.subr.bf16.mxu0 0
    %844 = vmatpush2.bf16.msra.mxu0 0
    %845 = vmatprep.subr.bf16.mxu0 0
    %846 = vmatpush2.bf16.msra.mxu0 0
    %847 = vmatprep.subr.bf16.mxu0 0
    %848 = vmatpush2.bf16.msra.mxu0 0
    %849 = vmatprep.subr.bf16.mxu0 0
    %850 = vmatpush2.bf16.msra.mxu0 0
    %851 = vmatprep.subr.bf16.mxu0 0
    %852 = vmatpush2.bf16.msra.mxu0 0
    %853 = vmatprep.mubr.bf16.mxu0 0
    %854 = vmatmul.mubr.bf16.gmra.mxu0 %v810
    %v855 = vpop.f32.mrf.mxu0
    %v856 = vadd.f32 0.0, %v855
    %v857 = vpop.f32.mrf.mxu0
    %v858 = vadd.f32 0.0, %v857
    %v859 = vpop.f32.mrf.mxu0
    %v860 = vadd.f32 0.0, %v859
    %v861 = vpop.f32.mrf.mxu0
    %v862 = vadd.f32 0.0, %v861
    %863 = vmatprep.mubr.bf16.mxu0 0
    %864 = vmatmul.mubr.bf16.gmra.mxu0 %v813
    %v865 = vpop.f32.mrf.mxu0
    %v866 = vadd.f32 0.0, %v865
    %v867 = vpop.f32.mrf.mxu0
    %v868 = vadd.f32 0.0, %v867
    %v869 = vpop.f32.mrf.mxu0
    %v870 = vadd.f32 0.0, %v869
    %v871 = vpop.f32.mrf.mxu0
    %v872 = vadd.f32 0.0, %v871
    %873 = vmatprep.mubr.bf16.mxu0 0
    %874 = vmatmul.mubr.bf16.gmra.mxu0 %v816
    %v875 = vpop.f32.mrf.mxu0
    %v876 = vadd.f32 0.0, %v875
    %v877 = vpop.f32.mrf.mxu0
    %v878 = vadd.f32 0.0, %v877
    %v879 = vpop.f32.mrf.mxu0
    %v880 = vadd.f32 0.0, %v879
    %v881 = vpop.f32.mrf.mxu0
    %v882 = vadd.f32 0.0, %v881
    %883 = vmatprep.mubr.bf16.mxu0 0
    %884 = vmatmul.mubr.bf16.gmra.mxu0 %v819
    %v885 = vpop.f32.mrf.mxu0
    %v886 = vadd.f32 0.0, %v885
    %v887 = vpop.f32.mrf.mxu0
    %v888 = vadd.f32 0.0, %v887
    %v889 = vpop.f32.mrf.mxu0
    %v890 = vadd.f32 0.0, %v889
    %v891 = vpop.f32.mrf.mxu0
    %v892 = vadd.f32 0.0, %v891
    %893 = vdwg.mxu0
    %894 = vmatprep.subr.bf16.mxu0 0
    %895 = vmatpush1.bf16.msra.mxu0 0
    %896 = vmatprep.subr.bf16.mxu0 0
    %897 = vmatpush1.bf16.msra.mxu0 0
    %898 = vmatprep.subr.bf16.mxu0 0
    %899 = vmatpush1.bf16.msra.mxu0 0
    %900 = vmatprep.subr.bf16.mxu0 0
    %901 = vmatpush1.bf16.msra.mxu0 0
    %902 = vmatprep.subr.bf16.mxu0 0
    %903 = vmatpush1.bf16.msra.mxu0 0
    %904 = vmatprep.subr.bf16.mxu0 0
    %905 = vmatpush1.bf16.msra.mxu0 0
    %906 = vmatprep.subr.bf16.mxu0 0
    %907 = vmatpush1.bf16.msra.mxu0 0
    %908 = vmatprep.subr.bf16.mxu0 %v804
    %909 = vmatpush1.bf16.msra.mxu0 %v803
    %910 = vmatprep.subr.bf16.mxu0 0
    %911 = vmatpush2.bf16.msra.mxu0 0
    %912 = vmatprep.subr.bf16.mxu0 0
    %913 = vmatpush2.bf16.msra.mxu0 0
    %914 = vmatprep.subr.bf16.mxu0 0
    %915 = vmatpush2.bf16.msra.mxu0 0
    %916 = vmatprep.subr.bf16.mxu0 0
    %917 = vmatpush2.bf16.msra.mxu0 0
    %918 = vmatprep.subr.bf16.mxu0 0
    %919 = vmatpush2.bf16.msra.mxu0 0
    %920 = vmatprep.subr.bf16.mxu0 0
    %921 = vmatpush2.bf16.msra.mxu0 0
    %922 = vmatprep.subr.bf16.mxu0 0
    %923 = vmatpush2.bf16.msra.mxu0 0
    %924 = vmatprep.subr.bf16.mxu0 0
    %925 = vmatpush2.bf16.msra.mxu0 0
    %926 = vmatprep.mubr.bf16.mxu0 0
    %927 = vmatmul.mubr.bf16.gmra.mxu0 %v810
    %v928 = vpop.f32.mrf.mxu0
    %v929 = vadd.f32 0.0, %v928
    %v930 = vpop.f32.mrf.mxu0
    %v931 = vadd.f32 0.0, %v930
    %v932 = vpop.f32.mrf.mxu0
    %v933 = vadd.f32 0.0, %v932
    %v934 = vpop.f32.mrf.mxu0
    %v935 = vadd.f32 0.0, %v934
    %936 = vmatprep.mubr.bf16.mxu0 0
    %937 = vmatmul.mubr.bf16.gmra.mxu0 %v813
    %v938 = vpop.f32.mrf.mxu0
    %v939 = vadd.f32 0.0, %v938
    %v940 = vpop.f32.mrf.mxu0
    %v941 = vadd.f32 0.0, %v940
    %v942 = vpop.f32.mrf.mxu0
    %v943 = vadd.f32 0.0, %v942
    %v944 = vpop.f32.mrf.mxu0
    %v945 = vadd.f32 0.0, %v944
    %946 = vmatprep.mubr.bf16.mxu0 0
    %947 = vmatmul.mubr.bf16.gmra.mxu0 %v816
    %v948 = vpop.f32.mrf.mxu0
    %v949 = vadd.f32 0.0, %v948
    %v950 = vpop.f32.mrf.mxu0
    %v951 = vadd.f32 0.0, %v950
    %v952 = vpop.f32.mrf.mxu0
    %v953 = vadd.f32 0.0, %v952
    %v954 = vpop.f32.mrf.mxu0
    %v955 = vadd.f32 0.0, %v954
    %956 = vmatprep.mubr.bf16.mxu0 0
    %957 = vmatmul.mubr.bf16.gmra.mxu0 %v819
    %v958 = vpop.f32.mrf.mxu0
    %v959 = vadd.f32 0.0, %v958
    %v960 = vpop.f32.mrf.mxu0
    %v961 = vadd.f32 0.0, %v960
    %v962 = vpop.f32.mrf.mxu0
    %v963 = vadd.f32 0.0, %v962
    %v964 = vpop.f32.mrf.mxu0
    %v965 = vadd.f32 0.0, %v964
    %966 = vdwg.mxu0
    %v967 = vadd.f32 %v740, %v856
    %v968 = vadd.f32 %v741, %v858
    %v969 = vadd.f32 %v742, %v929
    %v970 = vadd.f32 %v743, %v931
    %v971 = vadd.f32 %v744, %v860
    %v972 = vadd.f32 %v745, %v862
    %v973 = vadd.f32 %v746, %v933
    %v974 = vadd.f32 %v747, %v935
    %v975 = vadd.f32 %v748, %v866
    %v976 = vadd.f32 %v749, %v868
    %v977 = vadd.f32 %v750, %v939
    %v978 = vadd.f32 %v751, %v941
    %v979 = vadd.f32 %v752, %v870
    %v980 = vadd.f32 %v753, %v872
    %v981 = vadd.f32 %v754, %v943
    %v982 = vadd.f32 %v755, %v945
    %v983 = vadd.f32 %v756, %v876
    %v984 = vadd.f32 %v757, %v878
    %v985 = vadd.f32 %v758, %v949
    %v986 = vadd.f32 %v759, %v951
    %v987 = vadd.f32 %v760, %v880
    %v988 = vadd.f32 %v761, %v882
    %v989 = vadd.f32 %v762, %v953
    %v990 = vadd.f32 %v763, %v955
    %v991 = vadd.f32 %v764, %v886
    %v992 = vadd.f32 %v765, %v888
    %v993 = vadd.f32 %v766, %v959
    %v994 = vadd.f32 %v767, %v961
    %v995 = vadd.f32 %v768, %v890
    %v996 = vadd.f32 %v769, %v892
    %v997 = vadd.f32 %v770, %v963
    %v998 = vadd.f32 %v771, %v965
    %v1000 = vlaneseq
    %v1001 = vshrl.u32 %v1000, 7
    %v1002 = vsub.s32 0, %v1001
    %v1003 = vrot.slane %v88, %v1002
    %v1004 = vlaneseq
    %v1005 = vshrl.u32 %v1004, 7
    %v1006 = vsub.s32 1, %v1005
    %v1007 = vrot.slane %v88, %v1006
    %v1008 = vlaneseq
    %v1009 = vshrl.u32 %v1008, 7
    %v1010 = vsub.s32 2, %v1009
    %v1011 = vrot.slane %v88, %v1010
    %v1012 = vlaneseq
    %v1013 = vshrl.u32 %v1012, 7
    %v1014 = vsub.s32 3, %v1013
    %v1015 = vrot.slane %v88, %v1014
    %v1020 = vadd.f32 %v967, %v1003
    %v1021 = vadd.f32 %v968, %v1007
    %v1022 = vadd.f32 %v969, %v1011
    %v1023 = vadd.f32 %v970, %v1015
    %v1024 = vadd.f32 %v971, %v1003
    %v1025 = vadd.f32 %v972, %v1007
    %v1026 = vadd.f32 %v973, %v1011
    %v1027 = vadd.f32 %v974, %v1015
    %v1028 = vadd.f32 %v975, %v1003
    %v1029 = vadd.f32 %v976, %v1007
    %v1030 = vadd.f32 %v977, %v1011
    %v1031 = vadd.f32 %v978, %v1015
    %v1032 = vadd.f32 %v979, %v1003
    %v1033 = vadd.f32 %v980, %v1007
    %v1034 = vadd.f32 %v981, %v1011
    %v1035 = vadd.f32 %v982, %v1015
    %v1036 = vadd.f32 %v983, %v1003
    %v1037 = vadd.f32 %v984, %v1007
    %v1038 = vadd.f32 %v985, %v1011
    %v1039 = vadd.f32 %v986, %v1015
    %v1040 = vadd.f32 %v987, %v1003
    %v1041 = vadd.f32 %v988, %v1007
    %v1042 = vadd.f32 %v989, %v1011
    %v1043 = vadd.f32 %v990, %v1015
    %v1044 = vadd.f32 %v991, %v1003
    %v1045 = vadd.f32 %v992, %v1007
    %v1046 = vadd.f32 %v993, %v1011
    %v1047 = vadd.f32 %v994, %v1015
    %v1048 = vadd.f32 %v995, %v1003
    %v1049 = vadd.f32 %v996, %v1007
    %v1050 = vadd.f32 %v997, %v1011
    %v1051 = vadd.f32 %v998, %v1015
    %v1052 = vmax.f32 %v1020, 0.0
    %v1053 = vmax.f32 %v1021, 0.0
    %v1054 = vmax.f32 %v1022, 0.0
    %v1055 = vmax.f32 %v1023, 0.0
    %v1056 = vmax.f32 %v1024, 0.0
    %v1057 = vmax.f32 %v1025, 0.0
    %v1058 = vmax.f32 %v1026, 0.0
    %v1059 = vmax.f32 %v1027, 0.0
    %v1060 = vmax.f32 %v1028, 0.0
    %v1061 = vmax.f32 %v1029, 0.0
    %v1062 = vmax.f32 %v1030, 0.0
    %v1063 = vmax.f32 %v1031, 0.0
    %v1064 = vmax.f32 %v1032, 0.0
    %v1065 = vmax.f32 %v1033, 0.0
    %v1066 = vmax.f32 %v1034, 0.0
    %v1067 = vmax.f32 %v1035, 0.0
    %v1068 = vmax.f32 %v1036, 0.0
    %v1069 = vmax.f32 %v1037, 0.0
    %v1070 = vmax.f32 %v1038, 0.0
    %v1071 = vmax.f32 %v1039, 0.0
    %v1072 = vmax.f32 %v1040, 0.0
    %v1073 = vmax.f32 %v1041, 0.0
    %v1074 = vmax.f32 %v1042, 0.0
    %v1075 = vmax.f32 %v1043, 0.0
    %v1076 = vmax.f32 %v1044, 0.0
    %v1077 = vmax.f32 %v1045, 0.0
    %v1078 = vmax.f32 %v1046, 0.0
    %v1079 = vmax.f32 %v1047, 0.0
    %v1080 = vmax.f32 %v1048, 0.0
    %v1081 = vmax.f32 %v1049, 0.0
    %v1082 = vmax.f32 %v1050, 0.0
    %v1083 = vmax.f32 %v1051, 0.0
    %v1084 = vmax.f32 %v1052, %v1053
    %v1085 = vmax.f32 %v1056, %v1057
    %v1086 = vmax.f32 %v1060, %v1061
    %v1087 = vmax.f32 %v1064, %v1065
    %v1088 = vmax.f32 %v1068, %v1069
    %v1089 = vmax.f32 %v1072, %v1073
    %v1090 = vmax.f32 %v1076, %v1077
    %v1091 = vmax.f32 %v1080, %v1081
    %v1092 = vmax.f32 %v1054, %v1055
    %v1093 = vmax.f32 %v1058, %v1059
    %v1094 = vmax.f32 %v1062, %v1063
    %v1095 = vmax.f32 %v1066, %v1067
    %v1096 = vmax.f32 %v1070, %v1071
    %v1097 = vmax.f32 %v1074, %v1075
    %v1098 = vmax.f32 %v1078, %v1079
    %v1099 = vmax.f32 %v1082, %v1083
    %v1100 = vmax.f32 %v1084, %v1092
    %v1101 = vmax.f32 %v1085, %v1093
    %v1102 = vmax.f32 %v1086, %v1094
    %v1103 = vmax.f32 %v1087, %v1095
    %v1104 = vmax.f32 %v1088, %v1096
    %v1105 = vmax.f32 %v1089, %v1097
    %v1106 = vmax.f32 %v1090, %v1098
    %v1107 = vmax.f32 %v1091, %v1099
    %v1108 = vmul.f32 %v1100, %v90
    %v1109 = vmul.f32 %v1101, %v91
    %v1110 = vmul.f32 %v1102, %v92
    %v1111 = vmul.f32 %v1103, %v93
    %v1112 = vmul.f32 %v1104, %v94
    %v1113 = vmul.f32 %v1105, %v95
    %v1114 = vmul.f32 %v1106, %v96
    %v1115 = vmul.f32 %v1107, %v97
    %vm1124 = vcmask 1041408
    %v1125 = vrot.slane %v1108, 6
    %v1126 = vrot.slane %v1109, 6
    %v1127 = vsel %vm1124, %v1125, %v1126
    %v1128 = vrot.slane %v1110, 6
    %v1129 = vsel %vm1124, %v1126, %v1128
    %v1130 = vrot.slane %v1111, 6
    %v1131 = vsel %vm1124, %v1128, %v1130
    %v1132 = vrot.slane %v1112, 6
    %v1133 = vsel %vm1124, %v1130, %v1132
    %v1134 = vrot.slane %v1113, 6
    %v1135 = vsel %vm1124, %v1132, %v1134
    %v1136 = vrot.slane %v1114, 6
    %v1137 = vsel %vm1124, %v1134, %v1136
    %v1138 = vrot.slane %v1115, 6
    %v1139 = vsel %vm1124, %v1136, %v1138
    %v1149 = vsel %vm1124, 0.0, %v1125
    %vm1150 = vcmask 1040384
    %v1151 = vsel %vm1150, %v1138, 0.0
    %v1152 = vpack.c.bf16 %v1149, 0.0
    %v1153 = vpack.c.bf16 %v1129, %v1127
    %v1154 = vpack.c.bf16 %v1133, %v1131
    %v1155 = vpack.c.bf16 %v1137, %v1135
    %v1156 = vpack.c.bf16 %v1151, %v1139
    %v1157 = vpack.c.bf16 0.0, 0.0
    %v1158 = vld [vmem:[#allocation6] sm:$0xff]
    %v1159 = vld [vmem:[#allocation6 + $0x8] sm:$0xff]
    %v1160 = vld [vmem:[#allocation6 + $0x10] sm:$0xff]
    %v1161 = vld [vmem:[#allocation6 + $0x18] sm:$0xff]
    %v1162 = vld [vmem:[#allocation6 + $0x20] sm:$0xff]
    %v1163 = vld [vmem:[#allocation6 + $0x28] sm:$0xff]
    %v1164 = vld [vmem:[#allocation6 + $0x30] sm:$0xff]
    %v1165 = vld [vmem:[#allocation6 + $0x38] sm:$0xff]
    %v1166 = vld [vmem:[#allocation6 + $0x40] sm:$0xff]
    %v1167 = vld [vmem:[#allocation6 + $0x48] sm:$0xff]
    %v1168 = vld [vmem:[#allocation6 + $0x50] sm:$0xff]
    %v1169 = vld [vmem:[#allocation6 + $0x58] sm:$0xff]
    %v1170 = vld [vmem:[#allocation6 + $0x60] sm:$0xff]
    %v1171 = vld [vmem:[#allocation6 + $0x68] sm:$0xff]
    %v1172 = vld [vmem:[#allocation6 + $0x70] sm:$0xff]
    %v1173 = vld [vmem:[#allocation6 + $0x78] sm:$0xff]
    %v1174 = vld [vmem:[#allocation6 + $0x80] sm:$0xff]
    %v1175 = vld [vmem:[#allocation6 + $0x88] sm:$0xff]
    %v1176 = vld [vmem:[#allocation6 + $0x90] sm:$0xff]
    %v1177 = vld [vmem:[#allocation6 + $0x98] sm:$0xff]
    %v1178 = vld [vmem:[#allocation6 + $0xa0] sm:$0xff]
    %v1179 = vld [vmem:[#allocation6 + $0xa8] sm:$0xff]
    %v1180 = vld [vmem:[#allocation6 + $0xb0] sm:$0xff]
    %v1181 = vld [vmem:[#allocation6 + $0xb8] sm:$0xff]
    %v1182 = vld [vmem:[#allocation6 + $0xc0] sm:$0xff]
    %v1183 = vld [vmem:[#allocation6 + $0xc8] sm:$0xff]
    %v1184 = vld [vmem:[#allocation6 + $0xd0] sm:$0xff]
    %v1185 = vld [vmem:[#allocation6 + $0xd8] sm:$0xff]
    %v1186 = vld [vmem:[#allocation6 + $0xe0] sm:$0xff]
    %v1187 = vld [vmem:[#allocation6 + $0xe8] sm:$0xff]
    %v1188 = vld [vmem:[#allocation6 + $0xf0] sm:$0xff]
    %v1189 = vld [vmem:[#allocation6 + $0xf8] sm:$0xff]
    %v1191 = vshrl.u32 %v1152, 16
    %v1193 = vshll.u32 %v1152, 16
    %v1195 = vrot.slane %v1193, 1
    %v1196 = vor.u32 %v1191, %v1195
    %v1198 = vshll.u32 %v1153, 16
    %v1200 = vrot.slane %v1198, 1
    %v1201 = vsel %vm136, %v1196, %v1200
    %v1202 = vshrl.u32 %v1153, 16
    %v1204 = vor.u32 %v1202, %v1200
    %v1206 = vshll.u32 %v1154, 16
    %v1208 = vrot.slane %v1206, 1
    %v1209 = vsel %vm136, %v1204, %v1208
    %v1210 = vshrl.u32 %v1154, 16
    %v1212 = vor.u32 %v1210, %v1208
    %v1214 = vshll.u32 %v1155, 16
    %v1216 = vrot.slane %v1214, 1
    %v1217 = vsel %vm136, %v1212, %v1216
    %v1218 = vshrl.u32 %v1155, 16
    %v1220 = vor.u32 %v1218, %v1216
    %v1241 = vunpack.c.l.b16 %v1174
    %v1242 = vunpack.c.h.b16 %v1174
    %v1243 = vunpack.c.l.b16 %v1175
    %v1244 = vunpack.c.h.b16 %v1175
    %v1245 = vunpack.c.l.b16 %v1176
    %v1246 = vunpack.c.h.b16 %v1176
    %v1247 = vunpack.c.l.b16 %v1177
    %v1248 = vunpack.c.h.b16 %v1177
    %v1249 = vunpack.c.l.b16 %v1178
    %v1250 = vunpack.c.h.b16 %v1178
    %v1251 = vunpack.c.l.b16 %v1179
    %v1252 = vunpack.c.h.b16 %v1179
    %v1253 = vunpack.c.l.b16 %v1180
    %v1254 = vunpack.c.h.b16 %v1180
    %v1255 = vunpack.c.l.b16 %v1181
    %v1256 = vunpack.c.h.b16 %v1181
    %v1257 = vunpack.c.l.b16 %v1182
    %v1258 = vunpack.c.h.b16 %v1182
    %v1259 = vunpack.c.l.b16 %v1183
    %v1260 = vunpack.c.h.b16 %v1183
    %v1261 = vunpack.c.l.b16 %v1184
    %v1262 = vunpack.c.h.b16 %v1184
    %v1263 = vunpack.c.l.b16 %v1185
    %v1264 = vunpack.c.h.b16 %v1185
    %v1265 = vunpack.c.l.b16 %v1186
    %v1266 = vunpack.c.h.b16 %v1186
    %v1267 = vunpack.c.l.b16 %v1187
    %v1268 = vunpack.c.h.b16 %v1187
    %v1269 = vunpack.c.l.b16 %v1188
    %v1270 = vunpack.c.h.b16 %v1188
    %v1271 = vunpack.c.l.b16 %v1189
    %v1272 = vunpack.c.h.b16 %v1189
    %v1273 = vpack.c.b16 %v1243, %v1241
    %v1274 = vpack.c.b16 %v1244, %v1242
    %v1275 = vpack.c.b16 %v1247, %v1245
    %v1276 = vpack.c.b16 %v1248, %v1246
    %v1277 = vpack.c.b16 %v1251, %v1249
    %v1278 = vpack.c.b16 %v1252, %v1250
    %v1279 = vpack.c.b16 %v1255, %v1253
    %v1280 = vpack.c.b16 %v1256, %v1254
    %v1281 = vpack.c.b16 %v1259, %v1257
    %v1282 = vpack.c.b16 %v1260, %v1258
    %v1283 = vpack.c.b16 %v1263, %v1261
    %v1284 = vpack.c.b16 %v1264, %v1262
    %v1285 = vpack.c.b16 %v1267, %v1265
    %v1286 = vpack.c.b16 %v1268, %v1266
    %v1287 = vpack.c.b16 %v1271, %v1269
    %v1288 = vpack.c.b16 %v1272, %v1270
    %1305 = vmatprep.subr.bf16.mxu0 %v1288
    %1306 = vmatpush1.bf16.msra.mxu0 %v1287
    %1307 = vmatprep.subr.bf16.mxu0 %v1286
    %1308 = vmatpush1.bf16.msra.mxu0 %v1285
    %1309 = vmatprep.subr.bf16.mxu0 %v1284
    %1310 = vmatpush1.bf16.msra.mxu0 %v1283
    %1311 = vmatprep.subr.bf16.mxu0 %v1282
    %1312 = vmatpush1.bf16.msra.mxu0 %v1281
    %1313 = vmatprep.subr.bf16.mxu0 %v1280
    %1314 = vmatpush1.bf16.msra.mxu0 %v1279
    %1315 = vmatprep.subr.bf16.mxu0 %v1278
    %1316 = vmatpush1.bf16.msra.mxu0 %v1277
    %1317 = vmatprep.subr.bf16.mxu0 %v1276
    %1318 = vmatpush1.bf16.msra.mxu0 %v1275
    %1319 = vmatprep.subr.bf16.mxu0 %v1274
    %1320 = vmatpush1.bf16.msra.mxu0 %v1273
    %1321 = vmatprep.subr.bf16.mxu0 0
    %1322 = vmatpush2.bf16.msra.mxu0 0
    %1323 = vmatprep.subr.bf16.mxu0 0
    %1324 = vmatpush2.bf16.msra.mxu0 0
    %1325 = vmatprep.subr.bf16.mxu0 0
    %1326 = vmatpush2.bf16.msra.mxu0 0
    %1327 = vmatprep.subr.bf16.mxu0 0
    %1328 = vmatpush2.bf16.msra.mxu0 0
    %1329 = vmatprep.subr.bf16.mxu0 0
    %1330 = vmatpush2.bf16.msra.mxu0 0
    %1331 = vmatprep.subr.bf16.mxu0 0
    %1332 = vmatpush2.bf16.msra.mxu0 0
    %1333 = vmatprep.subr.bf16.mxu0 0
    %1334 = vmatpush2.bf16.msra.mxu0 0
    %1335 = vmatprep.subr.bf16.mxu0 0
    %1336 = vmatpush2.bf16.msra.mxu0 0
    %1337 = vmatprep.mubr.bf16.mxu0 0
    %1338 = vmatmul.mubr.bf16.gmra.mxu0 %v1201
    %v1339 = vpop.f32.mrf.mxu0
    %v1340 = vadd.f32 0.0, %v1339
    %v1341 = vpop.f32.mrf.mxu0
    %v1342 = vadd.f32 0.0, %v1341
    %v1343 = vpop.f32.mrf.mxu0
    %v1344 = vadd.f32 0.0, %v1343
    %v1345 = vpop.f32.mrf.mxu0
    %v1346 = vadd.f32 0.0, %v1345
    %1347 = vmatprep.mubr.bf16.mxu0 0
    %1348 = vmatmul.mubr.bf16.gmra.mxu0 %v1209
    %v1349 = vpop.f32.mrf.mxu0
    %v1350 = vadd.f32 0.0, %v1349
    %v1351 = vpop.f32.mrf.mxu0
    %v1352 = vadd.f32 0.0, %v1351
    %v1353 = vpop.f32.mrf.mxu0
    %v1354 = vadd.f32 0.0, %v1353
    %v1355 = vpop.f32.mrf.mxu0
    %v1356 = vadd.f32 0.0, %v1355
    %1357 = vmatprep.mubr.bf16.mxu0 0
    %1358 = vmatmul.mubr.bf16.gmra.mxu0 %v1217
    %v1359 = vpop.f32.mrf.mxu0
    %v1360 = vadd.f32 0.0, %v1359
    %v1361 = vpop.f32.mrf.mxu0
    %v1362 = vadd.f32 0.0, %v1361
    %v1363 = vpop.f32.mrf.mxu0
    %v1364 = vadd.f32 0.0, %v1363
    %v1365 = vpop.f32.mrf.mxu0
    %v1366 = vadd.f32 0.0, %v1365
    %1367 = vmatprep.mubr.bf16.mxu0 0
    %1368 = vmatmul.mubr.bf16.gmra.mxu0 %v1220
    %v1369 = vpop.f32.mrf.mxu0
    %v1370 = vadd.f32 0.0, %v1369
    %v1371 = vpop.f32.mrf.mxu0
    %v1372 = vadd.f32 0.0, %v1371
    %v1373 = vpop.f32.mrf.mxu0
    %v1374 = vadd.f32 0.0, %v1373
    %v1375 = vpop.f32.mrf.mxu0
    %v1376 = vadd.f32 0.0, %v1375
    %1377 = vdwg.mxu0
    %v1394 = vunpack.c.l.b16 %v1158
    %v1395 = vunpack.c.h.b16 %v1158
    %v1396 = vunpack.c.l.b16 %v1159
    %v1397 = vunpack.c.h.b16 %v1159
    %v1398 = vunpack.c.l.b16 %v1160
    %v1399 = vunpack.c.h.b16 %v1160
    %v1400 = vunpack.c.l.b16 %v1161
    %v1401 = vunpack.c.h.b16 %v1161
    %v1402 = vunpack.c.l.b16 %v1162
    %v1403 = vunpack.c.h.b16 %v1162
    %v1404 = vunpack.c.l.b16 %v1163
    %v1405 = vunpack.c.h.b16 %v1163
    %v1406 = vunpack.c.l.b16 %v1164
    %v1407 = vunpack.c.h.b16 %v1164
    %v1408 = vunpack.c.l.b16 %v1165
    %v1409 = vunpack.c.h.b16 %v1165
    %v1410 = vunpack.c.l.b16 %v1166
    %v1411 = vunpack.c.h.b16 %v1166
    %v1412 = vunpack.c.l.b16 %v1167
    %v1413 = vunpack.c.h.b16 %v1167
    %v1414 = vunpack.c.l.b16 %v1168
    %v1415 = vunpack.c.h.b16 %v1168
    %v1416 = vunpack.c.l.b16 %v1169
    %v1417 = vunpack.c.h.b16 %v1169
    %v1418 = vunpack.c.l.b16 %v1170
    %v1419 = vunpack.c.h.b16 %v1170
    %v1420 = vunpack.c.l.b16 %v1171
    %v1421 = vunpack.c.h.b16 %v1171
    %v1422 = vunpack.c.l.b16 %v1172
    %v1423 = vunpack.c.h.b16 %v1172
    %v1424 = vunpack.c.l.b16 %v1173
    %v1425 = vunpack.c.h.b16 %v1173
    %v1426 = vpack.c.b16 %v1396, %v1394
    %v1427 = vpack.c.b16 %v1397, %v1395
    %v1428 = vpack.c.b16 %v1400, %v1398
    %v1429 = vpack.c.b16 %v1401, %v1399
    %v1430 = vpack.c.b16 %v1404, %v1402
    %v1431 = vpack.c.b16 %v1405, %v1403
    %v1432 = vpack.c.b16 %v1408, %v1406
    %v1433 = vpack.c.b16 %v1409, %v1407
    %v1434 = vpack.c.b16 %v1412, %v1410
    %v1435 = vpack.c.b16 %v1413, %v1411
    %v1436 = vpack.c.b16 %v1416, %v1414
    %v1437 = vpack.c.b16 %v1417, %v1415
    %v1438 = vpack.c.b16 %v1420, %v1418
    %v1439 = vpack.c.b16 %v1421, %v1419
    %v1440 = vpack.c.b16 %v1424, %v1422
    %v1441 = vpack.c.b16 %v1425, %v1423
    %1458 = vmatprep.subr.bf16.mxu0 %v1441
    %1459 = vmatpush1.bf16.msra.mxu0 %v1440
    %1460 = vmatprep.subr.bf16.mxu0 %v1439
    %1461 = vmatpush1.bf16.msra.mxu0 %v1438
    %1462 = vmatprep.subr.bf16.mxu0 %v1437
    %1463 = vmatpush1.bf16.msra.mxu0 %v1436
    %1464 = vmatprep.subr.bf16.mxu0 %v1435
    %1465 = vmatpush1.bf16.msra.mxu0 %v1434
    %1466 = vmatprep.subr.bf16.mxu0 %v1433
    %1467 = vmatpush1.bf16.msra.mxu0 %v1432
    %1468 = vmatprep.subr.bf16.mxu0 %v1431
    %1469 = vmatpush1.bf16.msra.mxu0 %v1430
    %1470 = vmatprep.subr.bf16.mxu0 %v1429
    %1471 = vmatpush1.bf16.msra.mxu0 %v1428
    %1472 = vmatprep.subr.bf16.mxu0 %v1427
    %1473 = vmatpush1.bf16.msra.mxu0 %v1426
    %1474 = vmatprep.subr.bf16.mxu0 0
    %1475 = vmatpush2.bf16.msra.mxu0 0
    %1476 = vmatprep.subr.bf16.mxu0 0
    %1477 = vmatpush2.bf16.msra.mxu0 0
    %1478 = vmatprep.subr.bf16.mxu0 0
    %1479 = vmatpush2.bf16.msra.mxu0 0
    %1480 = vmatprep.subr.bf16.mxu0 0
    %1481 = vmatpush2.bf16.msra.mxu0 0
    %1482 = vmatprep.subr.bf16.mxu0 0
    %1483 = vmatpush2.bf16.msra.mxu0 0
    %1484 = vmatprep.subr.bf16.mxu0 0
    %1485 = vmatpush2.bf16.msra.mxu0 0
    %1486 = vmatprep.subr.bf16.mxu0 0
    %1487 = vmatpush2.bf16.msra.mxu0 0
    %1488 = vmatprep.subr.bf16.mxu0 0
    %1489 = vmatpush2.bf16.msra.mxu0 0
    %1490 = vmatprep.mubr.bf16.mxu0 0
    %1491 = vmatmul.mubr.bf16.gmra.mxu0 %v1152
    %v1492 = vpop.f32.mrf.mxu0
    %v1493 = vadd.f32 %v1340, %v1492
    %v1494 = vpop.f32.mrf.mxu0
    %v1495 = vadd.f32 %v1342, %v1494
    %v1496 = vpop.f32.mrf.mxu0
    %v1497 = vadd.f32 %v1344, %v1496
    %v1498 = vpop.f32.mrf.mxu0
    %v1499 = vadd.f32 %v1346, %v1498
    %1500 = vmatprep.mubr.bf16.mxu0 0
    %1501 = vmatmul.mubr.bf16.gmra.mxu0 %v1153
    %v1502 = vpop.f32.mrf.mxu0
    %v1503 = vadd.f32 %v1350, %v1502
    %v1504 = vpop.f32.mrf.mxu0
    %v1505 = vadd.f32 %v1352, %v1504
    %v1506 = vpop.f32.mrf.mxu0
    %v1507 = vadd.f32 %v1354, %v1506
    %v1508 = vpop.f32.mrf.mxu0
    %v1509 = vadd.f32 %v1356, %v1508
    %1510 = vmatprep.mubr.bf16.mxu0 0
    %1511 = vmatmul.mubr.bf16.gmra.mxu0 %v1154
    %v1512 = vpop.f32.mrf.mxu0
    %v1513 = vadd.f32 %v1360, %v1512
    %v1514 = vpop.f32.mrf.mxu0
    %v1515 = vadd.f32 %v1362, %v1514
    %v1516 = vpop.f32.mrf.mxu0
    %v1517 = vadd.f32 %v1364, %v1516
    %v1518 = vpop.f32.mrf.mxu0
    %v1519 = vadd.f32 %v1366, %v1518
    %1520 = vmatprep.mubr.bf16.mxu0 0
    %1521 = vmatmul.mubr.bf16.gmra.mxu0 %v1155
    %v1522 = vpop.f32.mrf.mxu0
    %v1523 = vadd.f32 %v1370, %v1522
    %v1524 = vpop.f32.mrf.mxu0
    %v1525 = vadd.f32 %v1372, %v1524
    %v1526 = vpop.f32.mrf.mxu0
    %v1527 = vadd.f32 %v1374, %v1526
    %v1528 = vpop.f32.mrf.mxu0
    %v1529 = vadd.f32 %v1376, %v1528
    %1530 = vdwg.mxu0
    %v1531 = vld [vmem:[#allocation6 + $0x100] sm:$0xff]
    %v1532 = vld [vmem:[#allocation6 + $0x108] sm:$0xff]
    %v1533 = vld [vmem:[#allocation6 + $0x110] sm:$0xff]
    %v1534 = vld [vmem:[#allocation6 + $0x118] sm:$0xff]
    %v1535 = vld [vmem:[#allocation6 + $0x120] sm:$0xff]
    %v1536 = vld [vmem:[#allocation6 + $0x128] sm:$0xff]
    %v1537 = vld [vmem:[#allocation6 + $0x130] sm:$0xff]
    %v1538 = vld [vmem:[#allocation6 + $0x138] sm:$0xff]
    %v1539 = vld [vmem:[#allocation6 + $0x140] sm:$0xff]
    %v1540 = vld [vmem:[#allocation6 + $0x148] sm:$0xff]
    %v1541 = vld [vmem:[#allocation6 + $0x150] sm:$0xff]
    %v1542 = vld [vmem:[#allocation6 + $0x158] sm:$0xff]
    %v1543 = vld [vmem:[#allocation6 + $0x160] sm:$0xff]
    %v1544 = vld [vmem:[#allocation6 + $0x168] sm:$0xff]
    %v1545 = vld [vmem:[#allocation6 + $0x170] sm:$0xff]
    %v1546 = vld [vmem:[#allocation6 + $0x178] sm:$0xff]
    %v1552 = vrot.slane %v1152, 1
    %v1553 = vrot.slane %v1153, 1
    %v1554 = vsel %vm779, %v1552, %v1553
    %v1555 = vrot.slane %v1154, 1
    %v1556 = vsel %vm779, %v1553, %v1555
    %v1557 = vrot.slane %v1155, 1
    %v1558 = vsel %vm779, %v1555, %v1557
    %v1559 = vrot.slane %v1156, 1
    %v1560 = vsel %vm779, %v1557, %v1559
    %v1581 = vunpack.c.l.b16 %v1531
    %v1582 = vunpack.c.h.b16 %v1531
    %v1583 = vunpack.c.l.b16 %v1532
    %v1584 = vunpack.c.h.b16 %v1532
    %v1585 = vunpack.c.l.b16 %v1533
    %v1586 = vunpack.c.h.b16 %v1533
    %v1587 = vunpack.c.l.b16 %v1534
    %v1588 = vunpack.c.h.b16 %v1534
    %v1589 = vunpack.c.l.b16 %v1535
    %v1590 = vunpack.c.h.b16 %v1535
    %v1591 = vunpack.c.l.b16 %v1536
    %v1592 = vunpack.c.h.b16 %v1536
    %v1593 = vunpack.c.l.b16 %v1537
    %v1594 = vunpack.c.h.b16 %v1537
    %v1595 = vunpack.c.l.b16 %v1538
    %v1596 = vunpack.c.h.b16 %v1538
    %v1597 = vunpack.c.l.b16 %v1539
    %v1598 = vunpack.c.h.b16 %v1539
    %v1599 = vunpack.c.l.b16 %v1540
    %v1600 = vunpack.c.h.b16 %v1540
    %v1601 = vunpack.c.l.b16 %v1541
    %v1602 = vunpack.c.h.b16 %v1541
    %v1603 = vunpack.c.l.b16 %v1542
    %v1604 = vunpack.c.h.b16 %v1542
    %v1605 = vunpack.c.l.b16 %v1543
    %v1606 = vunpack.c.h.b16 %v1543
    %v1607 = vunpack.c.l.b16 %v1544
    %v1608 = vunpack.c.h.b16 %v1544
    %v1609 = vunpack.c.l.b16 %v1545
    %v1610 = vunpack.c.h.b16 %v1545
    %v1611 = vunpack.c.l.b16 %v1546
    %v1612 = vunpack.c.h.b16 %v1546
    %v1613 = vpack.c.b16 %v1583, %v1581
    %v1614 = vpack.c.b16 %v1584, %v1582
    %v1615 = vpack.c.b16 %v1587, %v1585
    %v1616 = vpack.c.b16 %v1588, %v1586
    %v1617 = vpack.c.b16 %v1591, %v1589
    %v1618 = vpack.c.b16 %v1592, %v1590
    %v1619 = vpack.c.b16 %v1595, %v1593
    %v1620 = vpack.c.b16 %v1596, %v1594
    %v1621 = vpack.c.b16 %v1599, %v1597
    %v1622 = vpack.c.b16 %v1600, %v1598
    %v1623 = vpack.c.b16 %v1603, %v1601
    %v1624 = vpack.c.b16 %v1604, %v1602
    %v1625 = vpack.c.b16 %v1607, %v1605
    %v1626 = vpack.c.b16 %v1608, %v1606
    %v1627 = vpack.c.b16 %v1611, %v1609
    %v1628 = vpack.c.b16 %v1612, %v1610
    %1645 = vmatprep.subr.bf16.mxu0 %v1628
    %1646 = vmatpush1.bf16.msra.mxu0 %v1627
    %1647 = vmatprep.subr.bf16.mxu0 %v1626
    %1648 = vmatpush1.bf16.msra.mxu0 %v1625
    %1649 = vmatprep.subr.bf16.mxu0 %v1624
    %1650 = vmatpush1.bf16.msra.mxu0 %v1623
    %1651 = vmatprep.subr.bf16.mxu0 %v1622
    %1652 = vmatpush1.bf16.msra.mxu0 %v1621
    %1653 = vmatprep.subr.bf16.mxu0 %v1620
    %1654 = vmatpush1.bf16.msra.mxu0 %v1619
    %1655 = vmatprep.subr.bf16.mxu0 %v1618
    %1656 = vmatpush1.bf16.msra.mxu0 %v1617
    %1657 = vmatprep.subr.bf16.mxu0 %v1616
    %1658 = vmatpush1.bf16.msra.mxu0 %v1615
    %1659 = vmatprep.subr.bf16.mxu0 %v1614
    %1660 = vmatpush1.bf16.msra.mxu0 %v1613
    %1661 = vmatprep.subr.bf16.mxu0 0
    %1662 = vmatpush2.bf16.msra.mxu0 0
    %1663 = vmatprep.subr.bf16.mxu0 0
    %1664 = vmatpush2.bf16.msra.mxu0 0
    %1665 = vmatprep.subr.bf16.mxu0 0
    %1666 = vmatpush2.bf16.msra.mxu0 0
    %1667 = vmatprep.subr.bf16.mxu0 0
    %1668 = vmatpush2.bf16.msra.mxu0 0
    %1669 = vmatprep.subr.bf16.mxu0 0
    %1670 = vmatpush2.bf16.msra.mxu0 0
    %1671 = vmatprep.subr.bf16.mxu0 0
    %1672 = vmatpush2.bf16.msra.mxu0 0
    %1673 = vmatprep.subr.bf16.mxu0 0
    %1674 = vmatpush2.bf16.msra.mxu0 0
    %1675 = vmatprep.subr.bf16.mxu0 0
    %1676 = vmatpush2.bf16.msra.mxu0 0
    %1677 = vmatprep.mubr.bf16.mxu0 0
    %1678 = vmatmul.mubr.bf16.gmra.mxu0 %v1554
    %v1679 = vpop.f32.mrf.mxu0
    %v1680 = vadd.f32 0.0, %v1679
    %v1681 = vpop.f32.mrf.mxu0
    %v1682 = vadd.f32 0.0, %v1681
    %v1683 = vpop.f32.mrf.mxu0
    %v1684 = vadd.f32 0.0, %v1683
    %v1685 = vpop.f32.mrf.mxu0
    %v1686 = vadd.f32 0.0, %v1685
    %1687 = vmatprep.mubr.bf16.mxu0 0
    %1688 = vmatmul.mubr.bf16.gmra.mxu0 %v1556
    %v1689 = vpop.f32.mrf.mxu0
    %v1690 = vadd.f32 0.0, %v1689
    %v1691 = vpop.f32.mrf.mxu0
    %v1692 = vadd.f32 0.0, %v1691
    %v1693 = vpop.f32.mrf.mxu0
    %v1694 = vadd.f32 0.0, %v1693
    %v1695 = vpop.f32.mrf.mxu0
    %v1696 = vadd.f32 0.0, %v1695
    %1697 = vmatprep.mubr.bf16.mxu0 0
    %1698 = vmatmul.mubr.bf16.gmra.mxu0 %v1558
    %v1699 = vpop.f32.mrf.mxu0
    %v1700 = vadd.f32 0.0, %v1699
    %v1701 = vpop.f32.mrf.mxu0
    %v1702 = vadd.f32 0.0, %v1701
    %v1703 = vpop.f32.mrf.mxu0
    %v1704 = vadd.f32 0.0, %v1703
    %v1705 = vpop.f32.mrf.mxu0
    %v1706 = vadd.f32 0.0, %v1705
    %1707 = vmatprep.mubr.bf16.mxu0 0
    %1708 = vmatmul.mubr.bf16.gmra.mxu0 %v1560
    %v1709 = vpop.f32.mrf.mxu0
    %v1710 = vadd.f32 0.0, %v1709
    %v1711 = vpop.f32.mrf.mxu0
    %v1712 = vadd.f32 0.0, %v1711
    %v1713 = vpop.f32.mrf.mxu0
    %v1714 = vadd.f32 0.0, %v1713
    %v1715 = vpop.f32.mrf.mxu0
    %v1716 = vadd.f32 0.0, %v1715
    %1717 = vdwg.mxu0
    %v1718 = vadd.f32 %v1493, %v1680
    %v1719 = vadd.f32 %v1495, %v1682
    %v1720 = vadd.f32 %v1497, %v1684
    %v1721 = vadd.f32 %v1499, %v1686
    %v1722 = vadd.f32 %v1503, %v1690
    %v1723 = vadd.f32 %v1505, %v1692
    %v1724 = vadd.f32 %v1507, %v1694
    %v1725 = vadd.f32 %v1509, %v1696
    %v1726 = vadd.f32 %v1513, %v1700
    %v1727 = vadd.f32 %v1515, %v1702
    %v1728 = vadd.f32 %v1517, %v1704
    %v1729 = vadd.f32 %v1519, %v1706
    %v1730 = vadd.f32 %v1523, %v1710
    %v1731 = vadd.f32 %v1525, %v1712
    %v1732 = vadd.f32 %v1527, %v1714
    %v1733 = vadd.f32 %v1529, %v1716
    %v1734 = vld [vmem:[#allocation6 + $0x180] sm:$0xff]
    %v1735 = vld [vmem:[#allocation6 + $0x188] sm:$0xff]
    %v1736 = vld [vmem:[#allocation6 + $0x190] sm:$0xff]
    %v1737 = vld [vmem:[#allocation6 + $0x198] sm:$0xff]
    %v1738 = vld [vmem:[#allocation6 + $0x1a0] sm:$0xff]
    %v1739 = vld [vmem:[#allocation6 + $0x1a8] sm:$0xff]
    %v1740 = vld [vmem:[#allocation6 + $0x1b0] sm:$0xff]
    %v1741 = vld [vmem:[#allocation6 + $0x1b8] sm:$0xff]
    %v1742 = vld [vmem:[#allocation6 + $0x1c0] sm:$0xff]
    %v1743 = vld [vmem:[#allocation6 + $0x1c8] sm:$0xff]
    %v1744 = vld [vmem:[#allocation6 + $0x1d0] sm:$0xff]
    %v1745 = vld [vmem:[#allocation6 + $0x1d8] sm:$0xff]
    %v1746 = vld [vmem:[#allocation6 + $0x1e0] sm:$0xff]
    %v1747 = vld [vmem:[#allocation6 + $0x1e8] sm:$0xff]
    %v1748 = vld [vmem:[#allocation6 + $0x1f0] sm:$0xff]
    %v1749 = vld [vmem:[#allocation6 + $0x1f8] sm:$0xff]
    %vm1750 = vsmask.f32 3328
    %v1751 = vrot.slane %v1191, 4
    %v1752 = vrot.slane %v1193, 5
    %v1753 = vor.u32 %v1751, %v1752
    %v1754 = vrot.slane %v1202, 4
    %v1755 = vrot.slane %v1198, 5
    %v1756 = vor.u32 %v1754, %v1755
    %v1757 = vsel %vm1750, %v1753, %v1756
    %v1758 = vrot.slane %v1210, 4
    %v1759 = vrot.slane %v1206, 5
    %v1760 = vor.u32 %v1758, %v1759
    %v1761 = vsel %vm1750, %v1756, %v1760
    %v1762 = vrot.slane %v1218, 4
    %v1763 = vrot.slane %v1214, 5
    %v1764 = vor.u32 %v1762, %v1763
    %v1765 = vsel %vm1750, %v1760, %v1764
    %v1767 = vshrl.u32 %v1156, 16
    %v1769 = vrot.slane %v1767, 4
    %v1770 = vshll.u32 %v1156, 16
    %v1772 = vrot.slane %v1770, 5
    %v1773 = vor.u32 %v1769, %v1772
    %v1774 = vsel %vm1750, %v1764, %v1773
    %v1795 = vunpack.c.l.b16 %v1734
    %v1796 = vunpack.c.h.b16 %v1734
    %v1797 = vunpack.c.l.b16 %v1735
    %v1798 = vunpack.c.h.b16 %v1735
    %v1799 = vunpack.c.l.b16 %v1736
    %v1800 = vunpack.c.h.b16 %v1736
    %v1801 = vunpack.c.l.b16 %v1737
    %v1802 = vunpack.c.h.b16 %v1737
    %v1803 = vunpack.c.l.b16 %v1738
    %v1804 = vunpack.c.h.b16 %v1738
    %v1805 = vunpack.c.l.b16 %v1739
    %v1806 = vunpack.c.h.b16 %v1739
    %v1807 = vunpack.c.l.b16 %v1740
    %v1808 = vunpack.c.h.b16 %v1740
    %v1809 = vunpack.c.l.b16 %v1741
    %v1810 = vunpack.c.h.b16 %v1741
    %v1811 = vunpack.c.l.b16 %v1742
    %v1812 = vunpack.c.h.b16 %v1742
    %v1813 = vunpack.c.l.b16 %v1743
    %v1814 = vunpack.c.h.b16 %v1743
    %v1815 = vunpack.c.l.b16 %v1744
    %v1816 = vunpack.c.h.b16 %v1744
    %v1817 = vunpack.c.l.b16 %v1745
    %v1818 = vunpack.c.h.b16 %v1745
    %v1819 = vunpack.c.l.b16 %v1746
    %v1820 = vunpack.c.h.b16 %v1746
    %v1821 = vunpack.c.l.b16 %v1747
    %v1822 = vunpack.c.h.b16 %v1747
    %v1823 = vunpack.c.l.b16 %v1748
    %v1824 = vunpack.c.h.b16 %v1748
    %v1825 = vunpack.c.l.b16 %v1749
    %v1826 = vunpack.c.h.b16 %v1749
    %v1827 = vpack.c.b16 %v1797, %v1795
    %v1828 = vpack.c.b16 %v1798, %v1796
    %v1829 = vpack.c.b16 %v1801, %v1799
    %v1830 = vpack.c.b16 %v1802, %v1800
    %v1831 = vpack.c.b16 %v1805, %v1803
    %v1832 = vpack.c.b16 %v1806, %v1804
    %v1833 = vpack.c.b16 %v1809, %v1807
    %v1834 = vpack.c.b16 %v1810, %v1808
    %v1835 = vpack.c.b16 %v1813, %v1811
    %v1836 = vpack.c.b16 %v1814, %v1812
    %v1837 = vpack.c.b16 %v1817, %v1815
    %v1838 = vpack.c.b16 %v1818, %v1816
    %v1839 = vpack.c.b16 %v1821, %v1819
    %v1840 = vpack.c.b16 %v1822, %v1820
    %v1841 = vpack.c.b16 %v1825, %v1823
    %v1842 = vpack.c.b16 %v1826, %v1824
    %1859 = vmatprep.subr.bf16.mxu0 %v1842
    %1860 = vmatpush1.bf16.msra.mxu0 %v1841
    %1861 = vmatprep.subr.bf16.mxu0 %v1840
    %1862 = vmatpush1.bf16.msra.mxu0 %v1839
    %1863 = vmatprep.subr.bf16.mxu0 %v1838
    %1864 = vmatpush1.bf16.msra.mxu0 %v1837
    %1865 = vmatprep.subr.bf16.mxu0 %v1836
    %1866 = vmatpush1.bf16.msra.mxu0 %v1835
    %1867 = vmatprep.subr.bf16.mxu0 %v1834
    %1868 = vmatpush1.bf16.msra.mxu0 %v1833
    %1869 = vmatprep.subr.bf16.mxu0 %v1832
    %1870 = vmatpush1.bf16.msra.mxu0 %v1831
    %1871 = vmatprep.subr.bf16.mxu0 %v1830
    %1872 = vmatpush1.bf16.msra.mxu0 %v1829
    %1873 = vmatprep.subr.bf16.mxu0 %v1828
    %1874 = vmatpush1.bf16.msra.mxu0 %v1827
    %1875 = vmatprep.subr.bf16.mxu0 0
    %1876 = vmatpush2.bf16.msra.mxu0 0
    %1877 = vmatprep.subr.bf16.mxu0 0
    %1878 = vmatpush2.bf16.msra.mxu0 0
    %1879 = vmatprep.subr.bf16.mxu0 0
    %1880 = vmatpush2.bf16.msra.mxu0 0
    %1881 = vmatprep.subr.bf16.mxu0 0
    %1882 = vmatpush2.bf16.msra.mxu0 0
    %1883 = vmatprep.subr.bf16.mxu0 0
    %1884 = vmatpush2.bf16.msra.mxu0 0
    %1885 = vmatprep.subr.bf16.mxu0 0
    %1886 = vmatpush2.bf16.msra.mxu0 0
    %1887 = vmatprep.subr.bf16.mxu0 0
    %1888 = vmatpush2.bf16.msra.mxu0 0
    %1889 = vmatprep.subr.bf16.mxu0 0
    %1890 = vmatpush2.bf16.msra.mxu0 0
    %1891 = vmatprep.mubr.bf16.mxu0 0
    %1892 = vmatmul.mubr.bf16.gmra.mxu0 %v1757
    %v1893 = vpop.f32.mrf.mxu0
    %v1894 = vadd.f32 0.0, %v1893
    %v1895 = vpop.f32.mrf.mxu0
    %v1896 = vadd.f32 0.0, %v1895
    %v1897 = vpop.f32.mrf.mxu0
    %v1898 = vadd.f32 0.0, %v1897
    %v1899 = vpop.f32.mrf.mxu0
    %v1900 = vadd.f32 0.0, %v1899
    %1901 = vmatprep.mubr.bf16.mxu0 0
    %1902 = vmatmul.mubr.bf16.gmra.mxu0 %v1761
    %v1903 = vpop.f32.mrf.mxu0
    %v1904 = vadd.f32 0.0, %v1903
    %v1905 = vpop.f32.mrf.mxu0
    %v1906 = vadd.f32 0.0, %v1905
    %v1907 = vpop.f32.mrf.mxu0
    %v1908 = vadd.f32 0.0, %v1907
    %v1909 = vpop.f32.mrf.mxu0
    %v1910 = vadd.f32 0.0, %v1909
    %1911 = vmatprep.mubr.bf16.mxu0 0
    %1912 = vmatmul.mubr.bf16.gmra.mxu0 %v1765
    %v1913 = vpop.f32.mrf.mxu0
    %v1914 = vadd.f32 0.0, %v1913
    %v1915 = vpop.f32.mrf.mxu0
    %v1916 = vadd.f32 0.0, %v1915
    %v1917 = vpop.f32.mrf.mxu0
    %v1918 = vadd.f32 0.0, %v1917
    %v1919 = vpop.f32.mrf.mxu0
    %v1920 = vadd.f32 0.0, %v1919
    %1921 = vmatprep.mubr.bf16.mxu0 0
    %1922 = vmatmul.mubr.bf16.gmra.mxu0 %v1774
    %v1923 = vpop.f32.mrf.mxu0
    %v1924 = vadd.f32 0.0, %v1923
    %v1925 = vpop.f32.mrf.mxu0
    %v1926 = vadd.f32 0.0, %v1925
    %v1927 = vpop.f32.mrf.mxu0
    %v1928 = vadd.f32 0.0, %v1927
    %v1929 = vpop.f32.mrf.mxu0
    %v1930 = vadd.f32 0.0, %v1929
    %1931 = vdwg.mxu0
    %v1932 = vadd.f32 %v1718, %v1894
    %v1933 = vadd.f32 %v1719, %v1896
    %v1934 = vadd.f32 %v1720, %v1898
    %v1935 = vadd.f32 %v1721, %v1900
    %v1936 = vadd.f32 %v1722, %v1904
    %v1937 = vadd.f32 %v1723, %v1906
    %v1938 = vadd.f32 %v1724, %v1908
    %v1939 = vadd.f32 %v1725, %v1910
    %v1940 = vadd.f32 %v1726, %v1914
    %v1941 = vadd.f32 %v1727, %v1916
    %v1942 = vadd.f32 %v1728, %v1918
    %v1943 = vadd.f32 %v1729, %v1920
    %v1944 = vadd.f32 %v1730, %v1924
    %v1945 = vadd.f32 %v1731, %v1926
    %v1946 = vadd.f32 %v1732, %v1928
    %v1947 = vadd.f32 %v1733, %v1930
    %v1948 = vld [vmem:[#allocation6 + $0x200] sm:$0xff]
    %v1949 = vld [vmem:[#allocation6 + $0x208] sm:$0xff]
    %v1950 = vld [vmem:[#allocation6 + $0x210] sm:$0xff]
    %v1951 = vld [vmem:[#allocation6 + $0x218] sm:$0xff]
    %v1952 = vld [vmem:[#allocation6 + $0x220] sm:$0xff]
    %v1953 = vld [vmem:[#allocation6 + $0x228] sm:$0xff]
    %v1954 = vld [vmem:[#allocation6 + $0x230] sm:$0xff]
    %v1955 = vld [vmem:[#allocation6 + $0x238] sm:$0xff]
    %v1956 = vld [vmem:[#allocation6 + $0x240] sm:$0xff]
    %v1957 = vld [vmem:[#allocation6 + $0x248] sm:$0xff]
    %v1958 = vld [vmem:[#allocation6 + $0x250] sm:$0xff]
    %v1959 = vld [vmem:[#allocation6 + $0x258] sm:$0xff]
    %v1960 = vld [vmem:[#allocation6 + $0x260] sm:$0xff]
    %v1961 = vld [vmem:[#allocation6 + $0x268] sm:$0xff]
    %v1962 = vld [vmem:[#allocation6 + $0x270] sm:$0xff]
    %v1963 = vld [vmem:[#allocation6 + $0x278] sm:$0xff]
    %vm1964 = vcmask 1042432
    %v1965 = vrot.slane %v1152, 5
    %v1966 = vrot.slane %v1153, 5
    %v1967 = vsel %vm1964, %v1965, %v1966
    %v1968 = vrot.slane %v1154, 5
    %v1969 = vsel %vm1964, %v1966, %v1968
    %v1970 = vrot.slane %v1155, 5
    %v1971 = vsel %vm1964, %v1968, %v1970
    %v1972 = vrot.slane %v1156, 5
    %v1973 = vsel %vm1964, %v1970, %v1972
    %v1994 = vunpack.c.l.b16 %v1948
    %v1995 = vunpack.c.h.b16 %v1948
    %v1996 = vunpack.c.l.b16 %v1949
    %v1997 = vunpack.c.h.b16 %v1949
    %v1998 = vunpack.c.l.b16 %v1950
    %v1999 = vunpack.c.h.b16 %v1950
    %v2000 = vunpack.c.l.b16 %v1951
    %v2001 = vunpack.c.h.b16 %v1951
    %v2002 = vunpack.c.l.b16 %v1952
    %v2003 = vunpack.c.h.b16 %v1952
    %v2004 = vunpack.c.l.b16 %v1953
    %v2005 = vunpack.c.h.b16 %v1953
    %v2006 = vunpack.c.l.b16 %v1954
    %v2007 = vunpack.c.h.b16 %v1954
    %v2008 = vunpack.c.l.b16 %v1955
    %v2009 = vunpack.c.h.b16 %v1955
    %v2010 = vunpack.c.l.b16 %v1956
    %v2011 = vunpack.c.h.b16 %v1956
    %v2012 = vunpack.c.l.b16 %v1957
    %v2013 = vunpack.c.h.b16 %v1957
    %v2014 = vunpack.c.l.b16 %v1958
    %v2015 = vunpack.c.h.b16 %v1958
    %v2016 = vunpack.c.l.b16 %v1959
    %v2017 = vunpack.c.h.b16 %v1959
    %v2018 = vunpack.c.l.b16 %v1960
    %v2019 = vunpack.c.h.b16 %v1960
    %v2020 = vunpack.c.l.b16 %v1961
    %v2021 = vunpack.c.h.b16 %v1961
    %v2022 = vunpack.c.l.b16 %v1962
    %v2023 = vunpack.c.h.b16 %v1962
    %v2024 = vunpack.c.l.b16 %v1963
    %v2025 = vunpack.c.h.b16 %v1963
    %v2026 = vpack.c.b16 %v1996, %v1994
    %v2027 = vpack.c.b16 %v1997, %v1995
    %v2028 = vpack.c.b16 %v2000, %v1998
    %v2029 = vpack.c.b16 %v2001, %v1999
    %v2030 = vpack.c.b16 %v2004, %v2002
    %v2031 = vpack.c.b16 %v2005, %v2003
    %v2032 = vpack.c.b16 %v2008, %v2006
    %v2033 = vpack.c.b16 %v2009, %v2007
    %v2034 = vpack.c.b16 %v2012, %v2010
    %v2035 = vpack.c.b16 %v2013, %v2011
    %v2036 = vpack.c.b16 %v2016, %v2014
    %v2037 = vpack.c.b16 %v2017, %v2015
    %v2038 = vpack.c.b16 %v2020, %v2018
    %v2039 = vpack.c.b16 %v2021, %v2019
    %v2040 = vpack.c.b16 %v2024, %v2022
    %v2041 = vpack.c.b16 %v2025, %v2023
    %2058 = vmatprep.subr.bf16.mxu0 %v2041
    %2059 = vmatpush1.bf16.msra.mxu0 %v2040
    %2060 = vmatprep.subr.bf16.mxu0 %v2039
    %2061 = vmatpush1.bf16.msra.mxu0 %v2038
    %2062 = vmatprep.subr.bf16.mxu0 %v2037
    %2063 = vmatpush1.bf16.msra.mxu0 %v2036
    %2064 = vmatprep.subr.bf16.mxu0 %v2035
    %2065 = vmatpush1.bf16.msra.mxu0 %v2034
    %2066 = vmatprep.subr.bf16.mxu0 %v2033
    %2067 = vmatpush1.bf16.msra.mxu0 %v2032
    %2068 = vmatprep.subr.bf16.mxu0 %v2031
    %2069 = vmatpush1.bf16.msra.mxu0 %v2030
    %2070 = vmatprep.subr.bf16.mxu0 %v2029
    %2071 = vmatpush1.bf16.msra.mxu0 %v2028
    %2072 = vmatprep.subr.bf16.mxu0 %v2027
    %2073 = vmatpush1.bf16.msra.mxu0 %v2026
    %2074 = vmatprep.subr.bf16.mxu0 0
    %2075 = vmatpush2.bf16.msra.mxu0 0
    %2076 = vmatprep.subr.bf16.mxu0 0
    %2077 = vmatpush2.bf16.msra.mxu0 0
    %2078 = vmatprep.subr.bf16.mxu0 0
    %2079 = vmatpush2.bf16.msra.mxu0 0
    %2080 = vmatprep.subr.bf16.mxu0 0
    %2081 = vmatpush2.bf16.msra.mxu0 0
    %2082 = vmatprep.subr.bf16.mxu0 0
    %2083 = vmatpush2.bf16.msra.mxu0 0
    %2084 = vmatprep.subr.bf16.mxu0 0
    %2085 = vmatpush2.bf16.msra.mxu0 0
    %2086 = vmatprep.subr.bf16.mxu0 0
    %2087 = vmatpush2.bf16.msra.mxu0 0
    %2088 = vmatprep.subr.bf16.mxu0 0
    %2089 = vmatpush2.bf16.msra.mxu0 0
    %2090 = vmatprep.mubr.bf16.mxu0 0
    %2091 = vmatmul.mubr.bf16.gmra.mxu0 %v1967
    %v2092 = vpop.f32.mrf.mxu0
    %v2093 = vadd.f32 0.0, %v2092
    %v2094 = vpop.f32.mrf.mxu0
    %v2095 = vadd.f32 0.0, %v2094
    %v2096 = vpop.f32.mrf.mxu0
    %v2097 = vadd.f32 0.0, %v2096
    %v2098 = vpop.f32.mrf.mxu0
    %v2099 = vadd.f32 0.0, %v2098
    %2100 = vmatprep.mubr.bf16.mxu0 0
    %2101 = vmatmul.mubr.bf16.gmra.mxu0 %v1969
    %v2102 = vpop.f32.mrf.mxu0
    %v2103 = vadd.f32 0.0, %v2102
    %v2104 = vpop.f32.mrf.mxu0
    %v2105 = vadd.f32 0.0, %v2104
    %v2106 = vpop.f32.mrf.mxu0
    %v2107 = vadd.f32 0.0, %v2106
    %v2108 = vpop.f32.mrf.mxu0
    %v2109 = vadd.f32 0.0, %v2108
    %2110 = vmatprep.mubr.bf16.mxu0 0
    %2111 = vmatmul.mubr.bf16.gmra.mxu0 %v1971
    %v2112 = vpop.f32.mrf.mxu0
    %v2113 = vadd.f32 0.0, %v2112
    %v2114 = vpop.f32.mrf.mxu0
    %v2115 = vadd.f32 0.0, %v2114
    %v2116 = vpop.f32.mrf.mxu0
    %v2117 = vadd.f32 0.0, %v2116
    %v2118 = vpop.f32.mrf.mxu0
    %v2119 = vadd.f32 0.0, %v2118
    %2120 = vmatprep.mubr.bf16.mxu0 0
    %2121 = vmatmul.mubr.bf16.gmra.mxu0 %v1973
    %v2122 = vpop.f32.mrf.mxu0
    %v2123 = vadd.f32 0.0, %v2122
    %v2124 = vpop.f32.mrf.mxu0
    %v2125 = vadd.f32 0.0, %v2124
    %v2126 = vpop.f32.mrf.mxu0
    %v2127 = vadd.f32 0.0, %v2126
    %v2128 = vpop.f32.mrf.mxu0
    %v2129 = vadd.f32 0.0, %v2128
    %2130 = vdwg.mxu0
    %v2131 = vadd.f32 %v1932, %v2093
    %v2132 = vadd.f32 %v1933, %v2095
    %v2133 = vadd.f32 %v1934, %v2097
    %v2134 = vadd.f32 %v1935, %v2099
    %v2135 = vadd.f32 %v1936, %v2103
    %v2136 = vadd.f32 %v1937, %v2105
    %v2137 = vadd.f32 %v1938, %v2107
    %v2138 = vadd.f32 %v1939, %v2109
    %v2139 = vadd.f32 %v1940, %v2113
    %v2140 = vadd.f32 %v1941, %v2115
    %v2141 = vadd.f32 %v1942, %v2117
    %v2142 = vadd.f32 %v1943, %v2119
    %v2143 = vadd.f32 %v1944, %v2123
    %v2144 = vadd.f32 %v1945, %v2125
    %v2145 = vadd.f32 %v1946, %v2127
    %v2146 = vadd.f32 %v1947, %v2129
    %v2147 = vld [vmem:[#allocation6 + $0x280] sm:$0xff]
    %v2148 = vld [vmem:[#allocation6 + $0x288] sm:$0xff]
    %v2149 = vld [vmem:[#allocation6 + $0x290] sm:$0xff]
    %v2150 = vld [vmem:[#allocation6 + $0x298] sm:$0xff]
    %v2151 = vld [vmem:[#allocation6 + $0x2a0] sm:$0xff]
    %v2152 = vld [vmem:[#allocation6 + $0x2a8] sm:$0xff]
    %v2153 = vld [vmem:[#allocation6 + $0x2b0] sm:$0xff]
    %v2154 = vld [vmem:[#allocation6 + $0x2b8] sm:$0xff]
    %v2155 = vld [vmem:[#allocation6 + $0x2c0] sm:$0xff]
    %v2156 = vld [vmem:[#allocation6 + $0x2c8] sm:$0xff]
    %v2157 = vld [vmem:[#allocation6 + $0x2d0] sm:$0xff]
    %v2158 = vld [vmem:[#allocation6 + $0x2d8] sm:$0xff]
    %v2159 = vld [vmem:[#allocation6 + $0x2e0] sm:$0xff]
    %v2160 = vld [vmem:[#allocation6 + $0x2e8] sm:$0xff]
    %v2161 = vld [vmem:[#allocation6 + $0x2f0] sm:$0xff]
    %v2162 = vld [vmem:[#allocation6 + $0x2f8] sm:$0xff]
    %vm2163 = vsmask.f32 2304
    %v2164 = vrot.slane %v1191, 5
    %v2165 = vrot.slane %v1193, 6
    %v2166 = vor.u32 %v2164, %v2165
    %v2167 = vrot.slane %v1202, 5
    %v2168 = vrot.slane %v1198, 6
    %v2169 = vor.u32 %v2167, %v2168
    %v2170 = vsel %vm2163, %v2166, %v2169
    %v2171 = vrot.slane %v1210, 5
    %v2172 = vrot.slane %v1206, 6
    %v2173 = vor.u32 %v2171, %v2172
    %v2174 = vsel %vm2163, %v2169, %v2173
    %v2175 = vrot.slane %v1218, 5
    %v2176 = vrot.slane %v1214, 6
    %v2177 = vor.u32 %v2175, %v2176
    %v2178 = vsel %vm2163, %v2173, %v2177
    %v2179 = vrot.slane %v1767, 5
    %v2180 = vrot.slane %v1770, 6
    %v2181 = vor.u32 %v2179, %v2180
    %v2182 = vsel %vm2163, %v2177, %v2181
    %v2203 = vunpack.c.l.b16 %v2147
    %v2204 = vunpack.c.h.b16 %v2147
    %v2205 = vunpack.c.l.b16 %v2148
    %v2206 = vunpack.c.h.b16 %v2148
    %v2207 = vunpack.c.l.b16 %v2149
    %v2208 = vunpack.c.h.b16 %v2149
    %v2209 = vunpack.c.l.b16 %v2150
    %v2210 = vunpack.c.h.b16 %v2150
    %v2211 = vunpack.c.l.b16 %v2151
    %v2212 = vunpack.c.h.b16 %v2151
    %v2213 = vunpack.c.l.b16 %v2152
    %v2214 = vunpack.c.h.b16 %v2152
    %v2215 = vunpack.c.l.b16 %v2153
    %v2216 = vunpack.c.h.b16 %v2153
    %v2217 = vunpack.c.l.b16 %v2154
    %v2218 = vunpack.c.h.b16 %v2154
    %v2219 = vunpack.c.l.b16 %v2155
    %v2220 = vunpack.c.h.b16 %v2155
    %v2221 = vunpack.c.l.b16 %v2156
    %v2222 = vunpack.c.h.b16 %v2156
    %v2223 = vunpack.c.l.b16 %v2157
    %v2224 = vunpack.c.h.b16 %v2157
    %v2225 = vunpack.c.l.b16 %v2158
    %v2226 = vunpack.c.h.b16 %v2158
    %v2227 = vunpack.c.l.b16 %v2159
    %v2228 = vunpack.c.h.b16 %v2159
    %v2229 = vunpack.c.l.b16 %v2160
    %v2230 = vunpack.c.h.b16 %v2160
    %v2231 = vunpack.c.l.b16 %v2161
    %v2232 = vunpack.c.h.b16 %v2161
    %v2233 = vunpack.c.l.b16 %v2162
    %v2234 = vunpack.c.h.b16 %v2162
    %v2235 = vpack.c.b16 %v2205, %v2203
    %v2236 = vpack.c.b16 %v2206, %v2204
    %v2237 = vpack.c.b16 %v2209, %v2207
    %v2238 = vpack.c.b16 %v2210, %v2208
    %v2239 = vpack.c.b16 %v2213, %v2211
    %v2240 = vpack.c.b16 %v2214, %v2212
    %v2241 = vpack.c.b16 %v2217, %v2215
    %v2242 = vpack.c.b16 %v2218, %v2216
    %v2243 = vpack.c.b16 %v2221, %v2219
    %v2244 = vpack.c.b16 %v2222, %v2220
    %v2245 = vpack.c.b16 %v2225, %v2223
    %v2246 = vpack.c.b16 %v2226, %v2224
    %v2247 = vpack.c.b16 %v2229, %v2227
    %v2248 = vpack.c.b16 %v2230, %v2228
    %v2249 = vpack.c.b16 %v2233, %v2231
    %v2250 = vpack.c.b16 %v2234, %v2232
    %2267 = vmatprep.subr.bf16.mxu0 %v2250
    %2268 = vmatpush1.bf16.msra.mxu0 %v2249
    %2269 = vmatprep.subr.bf16.mxu0 %v2248
    %2270 = vmatpush1.bf16.msra.mxu0 %v2247
    %2271 = vmatprep.subr.bf16.mxu0 %v2246
    %2272 = vmatpush1.bf16.msra.mxu0 %v2245
    %2273 = vmatprep.subr.bf16.mxu0 %v2244
    %2274 = vmatpush1.bf16.msra.mxu0 %v2243
    %2275 = vmatprep.subr.bf16.mxu0 %v2242
    %2276 = vmatpush1.bf16.msra.mxu0 %v2241
    %2277 = vmatprep.subr.bf16.mxu0 %v2240
    %2278 = vmatpush1.bf16.msra.mxu0 %v2239
    %2279 = vmatprep.subr.bf16.mxu0 %v2238
    %2280 = vmatpush1.bf16.msra.mxu0 %v2237
    %2281 = vmatprep.subr.bf16.mxu0 %v2236
    %2282 = vmatpush1.bf16.msra.mxu0 %v2235
    %2283 = vmatprep.subr.bf16.mxu0 0
    %2284 = vmatpush2.bf16.msra.mxu0 0
    %2285 = vmatprep.subr.bf16.mxu0 0
    %2286 = vmatpush2.bf16.msra.mxu0 0
    %2287 = vmatprep.subr.bf16.mxu0 0
    %2288 = vmatpush2.bf16.msra.mxu0 0
    %2289 = vmatprep.subr.bf16.mxu0 0
    %2290 = vmatpush2.bf16.msra.mxu0 0
    %2291 = vmatprep.subr.bf16.mxu0 0
    %2292 = vmatpush2.bf16.msra.mxu0 0
    %2293 = vmatprep.subr.bf16.mxu0 0
    %2294 = vmatpush2.bf16.msra.mxu0 0
    %2295 = vmatprep.subr.bf16.mxu0 0
    %2296 = vmatpush2.bf16.msra.mxu0 0
    %2297 = vmatprep.subr.bf16.mxu0 0
    %2298 = vmatpush2.bf16.msra.mxu0 0
    %2299 = vmatprep.mubr.bf16.mxu0 0
    %2300 = vmatmul.mubr.bf16.gmra.mxu0 %v2170
    %v2301 = vpop.f32.mrf.mxu0
    %v2302 = vadd.f32 0.0, %v2301
    %v2303 = vpop.f32.mrf.mxu0
    %v2304 = vadd.f32 0.0, %v2303
    %v2305 = vpop.f32.mrf.mxu0
    %v2306 = vadd.f32 0.0, %v2305
    %v2307 = vpop.f32.mrf.mxu0
    %v2308 = vadd.f32 0.0, %v2307
    %2309 = vmatprep.mubr.bf16.mxu0 0
    %2310 = vmatmul.mubr.bf16.gmra.mxu0 %v2174
    %v2311 = vpop.f32.mrf.mxu0
    %v2312 = vadd.f32 0.0, %v2311
    %v2313 = vpop.f32.mrf.mxu0
    %v2314 = vadd.f32 0.0, %v2313
    %v2315 = vpop.f32.mrf.mxu0
    %v2316 = vadd.f32 0.0, %v2315
    %v2317 = vpop.f32.mrf.mxu0
    %v2318 = vadd.f32 0.0, %v2317
    %2319 = vmatprep.mubr.bf16.mxu0 0
    %2320 = vmatmul.mubr.bf16.gmra.mxu0 %v2178
    %v2321 = vpop.f32.mrf.mxu0
    %v2322 = vadd.f32 0.0, %v2321
    %v2323 = vpop.f32.mrf.mxu0
    %v2324 = vadd.f32 0.0, %v2323
    %v2325 = vpop.f32.mrf.mxu0
    %v2326 = vadd.f32 0.0, %v2325
    %v2327 = vpop.f32.mrf.mxu0
    %v2328 = vadd.f32 0.0, %v2327
    %2329 = vmatprep.mubr.bf16.mxu0 0
    %2330 = vmatmul.mubr.bf16.gmra.mxu0 %v2182
    %v2331 = vpop.f32.mrf.mxu0
    %v2332 = vadd.f32 0.0, %v2331
    %v2333 = vpop.f32.mrf.mxu0
    %v2334 = vadd.f32 0.0, %v2333
    %v2335 = vpop.f32.mrf.mxu0
    %v2336 = vadd.f32 0.0, %v2335
    %v2337 = vpop.f32.mrf.mxu0
    %v2338 = vadd.f32 0.0, %v2337
    %2339 = vdwg.mxu0
    %v2340 = vadd.f32 %v2131, %v2302
    %v2341 = vadd.f32 %v2132, %v2304
    %v2342 = vadd.f32 %v2133, %v2306
    %v2343 = vadd.f32 %v2134, %v2308
    %v2344 = vadd.f32 %v2135, %v2312
    %v2345 = vadd.f32 %v2136, %v2314
    %v2346 = vadd.f32 %v2137, %v2316
    %v2347 = vadd.f32 %v2138, %v2318
    %v2348 = vadd.f32 %v2139, %v2322
    %v2349 = vadd.f32 %v2140, %v2324
    %v2350 = vadd.f32 %v2141, %v2326
    %v2351 = vadd.f32 %v2142, %v2328
    %v2352 = vadd.f32 %v2143, %v2332
    %v2353 = vadd.f32 %v2144, %v2334
    %v2354 = vadd.f32 %v2145, %v2336
    %v2355 = vadd.f32 %v2146, %v2338
    %v2356 = vld [vmem:[#allocation6 + $0x300] sm:$0xff]
    %v2357 = vld [vmem:[#allocation6 + $0x308] sm:$0xff]
    %v2358 = vld [vmem:[#allocation6 + $0x310] sm:$0xff]
    %v2359 = vld [vmem:[#allocation6 + $0x318] sm:$0xff]
    %v2360 = vld [vmem:[#allocation6 + $0x320] sm:$0xff]
    %v2361 = vld [vmem:[#allocation6 + $0x328] sm:$0xff]
    %v2362 = vld [vmem:[#allocation6 + $0x330] sm:$0xff]
    %v2363 = vld [vmem:[#allocation6 + $0x338] sm:$0xff]
    %v2364 = vld [vmem:[#allocation6 + $0x340] sm:$0xff]
    %v2365 = vld [vmem:[#allocation6 + $0x348] sm:$0xff]
    %v2366 = vld [vmem:[#allocation6 + $0x350] sm:$0xff]
    %v2367 = vld [vmem:[#allocation6 + $0x358] sm:$0xff]
    %v2368 = vld [vmem:[#allocation6 + $0x360] sm:$0xff]
    %v2369 = vld [vmem:[#allocation6 + $0x368] sm:$0xff]
    %v2370 = vld [vmem:[#allocation6 + $0x370] sm:$0xff]
    %v2371 = vld [vmem:[#allocation6 + $0x378] sm:$0xff]
    %v2373 = vrot.slane %v1157, 1
    %v2374 = vsel %vm779, %v1559, %v2373
    %v2392 = vunpack.c.l.b16 %v2356
    %v2393 = vunpack.c.h.b16 %v2356
    %v2394 = vunpack.c.l.b16 %v2357
    %v2395 = vunpack.c.h.b16 %v2357
    %v2396 = vunpack.c.l.b16 %v2358
    %v2397 = vunpack.c.h.b16 %v2358
    %v2398 = vunpack.c.l.b16 %v2359
    %v2399 = vunpack.c.h.b16 %v2359
    %v2400 = vunpack.c.l.b16 %v2360
    %v2401 = vunpack.c.h.b16 %v2360
    %v2402 = vunpack.c.l.b16 %v2361
    %v2403 = vunpack.c.h.b16 %v2361
    %v2404 = vunpack.c.l.b16 %v2362
    %v2405 = vunpack.c.h.b16 %v2362
    %v2406 = vunpack.c.l.b16 %v2363
    %v2407 = vunpack.c.h.b16 %v2363
    %v2408 = vunpack.c.l.b16 %v2364
    %v2409 = vunpack.c.h.b16 %v2364
    %v2410 = vunpack.c.l.b16 %v2365
    %v2411 = vunpack.c.h.b16 %v2365
    %v2412 = vunpack.c.l.b16 %v2366
    %v2413 = vunpack.c.h.b16 %v2366
    %v2414 = vunpack.c.l.b16 %v2367
    %v2415 = vunpack.c.h.b16 %v2367
    %v2416 = vunpack.c.l.b16 %v2368
    %v2417 = vunpack.c.h.b16 %v2368
    %v2418 = vunpack.c.l.b16 %v2369
    %v2419 = vunpack.c.h.b16 %v2369
    %v2420 = vunpack.c.l.b16 %v2370
    %v2421 = vunpack.c.h.b16 %v2370
    %v2422 = vunpack.c.l.b16 %v2371
    %v2423 = vunpack.c.h.b16 %v2371
    %v2424 = vpack.c.b16 %v2394, %v2392
    %v2425 = vpack.c.b16 %v2395, %v2393
    %v2426 = vpack.c.b16 %v2398, %v2396
    %v2427 = vpack.c.b16 %v2399, %v2397
    %v2428 = vpack.c.b16 %v2402, %v2400
    %v2429 = vpack.c.b16 %v2403, %v2401
    %v2430 = vpack.c.b16 %v2406, %v2404
    %v2431 = vpack.c.b16 %v2407, %v2405
    %v2432 = vpack.c.b16 %v2410, %v2408
    %v2433 = vpack.c.b16 %v2411, %v2409
    %v2434 = vpack.c.b16 %v2414, %v2412
    %v2435 = vpack.c.b16 %v2415, %v2413
    %v2436 = vpack.c.b16 %v2418, %v2416
    %v2437 = vpack.c.b16 %v2419, %v2417
    %v2438 = vpack.c.b16 %v2422, %v2420
    %v2439 = vpack.c.b16 %v2423, %v2421
    %2456 = vmatprep.subr.bf16.mxu0 %v2439
    %2457 = vmatpush1.bf16.msra.mxu0 %v2438
    %2458 = vmatprep.subr.bf16.mxu0 %v2437
    %2459 = vmatpush1.bf16.msra.mxu0 %v2436
    %2460 = vmatprep.subr.bf16.mxu0 %v2435
    %2461 = vmatpush1.bf16.msra.mxu0 %v2434
    %2462 = vmatprep.subr.bf16.mxu0 %v2433
    %2463 = vmatpush1.bf16.msra.mxu0 %v2432
    %2464 = vmatprep.subr.bf16.mxu0 %v2431
    %2465 = vmatpush1.bf16.msra.mxu0 %v2430
    %2466 = vmatprep.subr.bf16.mxu0 %v2429
    %2467 = vmatpush1.bf16.msra.mxu0 %v2428
    %2468 = vmatprep.subr.bf16.mxu0 %v2427
    %2469 = vmatpush1.bf16.msra.mxu0 %v2426
    %2470 = vmatprep.subr.bf16.mxu0 %v2425
    %2471 = vmatpush1.bf16.msra.mxu0 %v2424
    %2472 = vmatprep.subr.bf16.mxu0 0
    %2473 = vmatpush2.bf16.msra.mxu0 0
    %2474 = vmatprep.subr.bf16.mxu0 0
    %2475 = vmatpush2.bf16.msra.mxu0 0
    %2476 = vmatprep.subr.bf16.mxu0 0
    %2477 = vmatpush2.bf16.msra.mxu0 0
    %2478 = vmatprep.subr.bf16.mxu0 0
    %2479 = vmatpush2.bf16.msra.mxu0 0
    %2480 = vmatprep.subr.bf16.mxu0 0
    %2481 = vmatpush2.bf16.msra.mxu0 0
    %2482 = vmatprep.subr.bf16.mxu0 0
    %2483 = vmatpush2.bf16.msra.mxu0 0
    %2484 = vmatprep.subr.bf16.mxu0 0
    %2485 = vmatpush2.bf16.msra.mxu0 0
    %2486 = vmatprep.subr.bf16.mxu0 0
    %2487 = vmatpush2.bf16.msra.mxu0 0
    %2488 = vmatprep.mubr.bf16.mxu0 0
    %2489 = vmatmul.mubr.bf16.gmra.mxu0 %v1556
    %v2490 = vpop.f32.mrf.mxu0
    %v2491 = vadd.f32 0.0, %v2490
    %v2492 = vpop.f32.mrf.mxu0
    %v2493 = vadd.f32 0.0, %v2492
    %v2494 = vpop.f32.mrf.mxu0
    %v2495 = vadd.f32 0.0, %v2494
    %v2496 = vpop.f32.mrf.mxu0
    %v2497 = vadd.f32 0.0, %v2496
    %2498 = vmatprep.mubr.bf16.mxu0 0
    %2499 = vmatmul.mubr.bf16.gmra.mxu0 %v1558
    %v2500 = vpop.f32.mrf.mxu0
    %v2501 = vadd.f32 0.0, %v2500
    %v2502 = vpop.f32.mrf.mxu0
    %v2503 = vadd.f32 0.0, %v2502
    %v2504 = vpop.f32.mrf.mxu0
    %v2505 = vadd.f32 0.0, %v2504
    %v2506 = vpop.f32.mrf.mxu0
    %v2507 = vadd.f32 0.0, %v2506
    %2508 = vmatprep.mubr.bf16.mxu0 0
    %2509 = vmatmul.mubr.bf16.gmra.mxu0 %v1560
    %v2510 = vpop.f32.mrf.mxu0
    %v2511 = vadd.f32 0.0, %v2510
    %v2512 = vpop.f32.mrf.mxu0
    %v2513 = vadd.f32 0.0, %v2512
    %v2514 = vpop.f32.mrf.mxu0
    %v2515 = vadd.f32 0.0, %v2514
    %v2516 = vpop.f32.mrf.mxu0
    %v2517 = vadd.f32 0.0, %v2516
    %2518 = vmatprep.mubr.bf16.mxu0 0
    %2519 = vmatmul.mubr.bf16.gmra.mxu0 %v2374
    %v2520 = vpop.f32.mrf.mxu0
    %v2521 = vadd.f32 0.0, %v2520
    %v2522 = vpop.f32.mrf.mxu0
    %v2523 = vadd.f32 0.0, %v2522
    %v2524 = vpop.f32.mrf.mxu0
    %v2525 = vadd.f32 0.0, %v2524
    %v2526 = vpop.f32.mrf.mxu0
    %v2527 = vadd.f32 0.0, %v2526
    %2528 = vdwg.mxu0
    %v2529 = vadd.f32 %v2340, %v2491
    %v2530 = vadd.f32 %v2341, %v2493
    %v2531 = vadd.f32 %v2342, %v2495
    %v2532 = vadd.f32 %v2343, %v2497
    %v2533 = vadd.f32 %v2344, %v2501
    %v2534 = vadd.f32 %v2345, %v2503
    %v2535 = vadd.f32 %v2346, %v2505
    %v2536 = vadd.f32 %v2347, %v2507
    %v2537 = vadd.f32 %v2348, %v2511
    %v2538 = vadd.f32 %v2349, %v2513
    %v2539 = vadd.f32 %v2350, %v2515
    %v2540 = vadd.f32 %v2351, %v2517
    %v2541 = vadd.f32 %v2352, %v2521
    %v2542 = vadd.f32 %v2353, %v2523
    %v2543 = vadd.f32 %v2354, %v2525
    %v2544 = vadd.f32 %v2355, %v2527
    %v2545 = vld [vmem:[#allocation6 + $0x380] sm:$0xff]
    %v2546 = vld [vmem:[#allocation6 + $0x388] sm:$0xff]
    %v2547 = vld [vmem:[#allocation6 + $0x390] sm:$0xff]
    %v2548 = vld [vmem:[#allocation6 + $0x398] sm:$0xff]
    %v2549 = vld [vmem:[#allocation6 + $0x3a0] sm:$0xff]
    %v2550 = vld [vmem:[#allocation6 + $0x3a8] sm:$0xff]
    %v2551 = vld [vmem:[#allocation6 + $0x3b0] sm:$0xff]
    %v2552 = vld [vmem:[#allocation6 + $0x3b8] sm:$0xff]
    %v2553 = vld [vmem:[#allocation6 + $0x3c0] sm:$0xff]
    %v2554 = vld [vmem:[#allocation6 + $0x3c8] sm:$0xff]
    %v2555 = vld [vmem:[#allocation6 + $0x3d0] sm:$0xff]
    %v2556 = vld [vmem:[#allocation6 + $0x3d8] sm:$0xff]
    %v2557 = vld [vmem:[#allocation6 + $0x3e0] sm:$0xff]
    %v2558 = vld [vmem:[#allocation6 + $0x3e8] sm:$0xff]
    %v2559 = vld [vmem:[#allocation6 + $0x3f0] sm:$0xff]
    %v2560 = vld [vmem:[#allocation6 + $0x3f8] sm:$0xff]
    %vm2561 = vsmask.f32 6400
    %v2562 = vrot.slane %v1202, 1
    %v2563 = vrot.slane %v1198, 2
    %v2564 = vor.u32 %v2562, %v2563
    %v2565 = vrot.slane %v1210, 1
    %v2566 = vrot.slane %v1206, 2
    %v2567 = vor.u32 %v2565, %v2566
    %v2568 = vsel %vm2561, %v2564, %v2567
    %v2569 = vrot.slane %v1218, 1
    %v2570 = vrot.slane %v1214, 2
    %v2571 = vor.u32 %v2569, %v2570
    %v2572 = vsel %vm2561, %v2567, %v2571
    %v2573 = vrot.slane %v1767, 1
    %v2574 = vrot.slane %v1770, 2
    %v2575 = vor.u32 %v2573, %v2574
    %v2576 = vsel %vm2561, %v2571, %v2575
    %v2578 = vshrl.u32 %v1157, 16
    %v2580 = vrot.slane %v2578, 1
    %v2581 = vshll.u32 %v1157, 16
    %v2583 = vrot.slane %v2581, 2
    %v2584 = vor.u32 %v2580, %v2583
    %v2585 = vsel %vm2561, %v2575, %v2584
    %v2606 = vunpack.c.l.b16 %v2545
    %v2607 = vunpack.c.h.b16 %v2545
    %v2608 = vunpack.c.l.b16 %v2546
    %v2609 = vunpack.c.h.b16 %v2546
    %v2610 = vunpack.c.l.b16 %v2547
    %v2611 = vunpack.c.h.b16 %v2547
    %v2612 = vunpack.c.l.b16 %v2548
    %v2613 = vunpack.c.h.b16 %v2548
    %v2614 = vunpack.c.l.b16 %v2549
    %v2615 = vunpack.c.h.b16 %v2549
    %v2616 = vunpack.c.l.b16 %v2550
    %v2617 = vunpack.c.h.b16 %v2550
    %v2618 = vunpack.c.l.b16 %v2551
    %v2619 = vunpack.c.h.b16 %v2551
    %v2620 = vunpack.c.l.b16 %v2552
    %v2621 = vunpack.c.h.b16 %v2552
    %v2622 = vunpack.c.l.b16 %v2553
    %v2623 = vunpack.c.h.b16 %v2553
    %v2624 = vunpack.c.l.b16 %v2554
    %v2625 = vunpack.c.h.b16 %v2554
    %v2626 = vunpack.c.l.b16 %v2555
    %v2627 = vunpack.c.h.b16 %v2555
    %v2628 = vunpack.c.l.b16 %v2556
    %v2629 = vunpack.c.h.b16 %v2556
    %v2630 = vunpack.c.l.b16 %v2557
    %v2631 = vunpack.c.h.b16 %v2557
    %v2632 = vunpack.c.l.b16 %v2558
    %v2633 = vunpack.c.h.b16 %v2558
    %v2634 = vunpack.c.l.b16 %v2559
    %v2635 = vunpack.c.h.b16 %v2559
    %v2636 = vunpack.c.l.b16 %v2560
    %v2637 = vunpack.c.h.b16 %v2560
    %v2638 = vpack.c.b16 %v2608, %v2606
    %v2639 = vpack.c.b16 %v2609, %v2607
    %v2640 = vpack.c.b16 %v2612, %v2610
    %v2641 = vpack.c.b16 %v2613, %v2611
    %v2642 = vpack.c.b16 %v2616, %v2614
    %v2643 = vpack.c.b16 %v2617, %v2615
    %v2644 = vpack.c.b16 %v2620, %v2618
    %v2645 = vpack.c.b16 %v2621, %v2619
    %v2646 = vpack.c.b16 %v2624, %v2622
    %v2647 = vpack.c.b16 %v2625, %v2623
    %v2648 = vpack.c.b16 %v2628, %v2626
    %v2649 = vpack.c.b16 %v2629, %v2627
    %v2650 = vpack.c.b16 %v2632, %v2630
    %v2651 = vpack.c.b16 %v2633, %v2631
    %v2652 = vpack.c.b16 %v2636, %v2634
    %v2653 = vpack.c.b16 %v2637, %v2635
    %2670 = vmatprep.subr.bf16.mxu0 %v2653
    %2671 = vmatpush1.bf16.msra.mxu0 %v2652
    %2672 = vmatprep.subr.bf16.mxu0 %v2651
    %2673 = vmatpush1.bf16.msra.mxu0 %v2650
    %2674 = vmatprep.subr.bf16.mxu0 %v2649
    %2675 = vmatpush1.bf16.msra.mxu0 %v2648
    %2676 = vmatprep.subr.bf16.mxu0 %v2647
    %2677 = vmatpush1.bf16.msra.mxu0 %v2646
    %2678 = vmatprep.subr.bf16.mxu0 %v2645
    %2679 = vmatpush1.bf16.msra.mxu0 %v2644
    %2680 = vmatprep.subr.bf16.mxu0 %v2643
    %2681 = vmatpush1.bf16.msra.mxu0 %v2642
    %2682 = vmatprep.subr.bf16.mxu0 %v2641
    %2683 = vmatpush1.bf16.msra.mxu0 %v2640
    %2684 = vmatprep.subr.bf16.mxu0 %v2639
    %2685 = vmatpush1.bf16.msra.mxu0 %v2638
    %2686 = vmatprep.subr.bf16.mxu0 0
    %2687 = vmatpush2.bf16.msra.mxu0 0
    %2688 = vmatprep.subr.bf16.mxu0 0
    %2689 = vmatpush2.bf16.msra.mxu0 0
    %2690 = vmatprep.subr.bf16.mxu0 0
    %2691 = vmatpush2.bf16.msra.mxu0 0
    %2692 = vmatprep.subr.bf16.mxu0 0
    %2693 = vmatpush2.bf16.msra.mxu0 0
    %2694 = vmatprep.subr.bf16.mxu0 0
    %2695 = vmatpush2.bf16.msra.mxu0 0
    %2696 = vmatprep.subr.bf16.mxu0 0
    %2697 = vmatpush2.bf16.msra.mxu0 0
    %2698 = vmatprep.subr.bf16.mxu0 0
    %2699 = vmatpush2.bf16.msra.mxu0 0
    %2700 = vmatprep.subr.bf16.mxu0 0
    %2701 = vmatpush2.bf16.msra.mxu0 0
    %2702 = vmatprep.mubr.bf16.mxu0 0
    %2703 = vmatmul.mubr.bf16.gmra.mxu0 %v2568
    %v2704 = vpop.f32.mrf.mxu0
    %v2705 = vadd.f32 0.0, %v2704
    %v2706 = vpop.f32.mrf.mxu0
    %v2707 = vadd.f32 0.0, %v2706
    %v2708 = vpop.f32.mrf.mxu0
    %v2709 = vadd.f32 0.0, %v2708
    %v2710 = vpop.f32.mrf.mxu0
    %v2711 = vadd.f32 0.0, %v2710
    %2712 = vmatprep.mubr.bf16.mxu0 0
    %2713 = vmatmul.mubr.bf16.gmra.mxu0 %v2572
    %v2714 = vpop.f32.mrf.mxu0
    %v2715 = vadd.f32 0.0, %v2714
    %v2716 = vpop.f32.mrf.mxu0
    %v2717 = vadd.f32 0.0, %v2716
    %v2718 = vpop.f32.mrf.mxu0
    %v2719 = vadd.f32 0.0, %v2718
    %v2720 = vpop.f32.mrf.mxu0
    %v2721 = vadd.f32 0.0, %v2720
    %2722 = vmatprep.mubr.bf16.mxu0 0
    %2723 = vmatmul.mubr.bf16.gmra.mxu0 %v2576
    %v2724 = vpop.f32.mrf.mxu0
    %v2725 = vadd.f32 0.0, %v2724
    %v2726 = vpop.f32.mrf.mxu0
    %v2727 = vadd.f32 0.0, %v2726
    %v2728 = vpop.f32.mrf.mxu0
    %v2729 = vadd.f32 0.0, %v2728
    %v2730 = vpop.f32.mrf.mxu0
    %v2731 = vadd.f32 0.0, %v2730
    %2732 = vmatprep.mubr.bf16.mxu0 0
    %2733 = vmatmul.mubr.bf16.gmra.mxu0 %v2585
    %v2734 = vpop.f32.mrf.mxu0
    %v2735 = vadd.f32 0.0, %v2734
    %v2736 = vpop.f32.mrf.mxu0
    %v2737 = vadd.f32 0.0, %v2736
    %v2738 = vpop.f32.mrf.mxu0
    %v2739 = vadd.f32 0.0, %v2738
    %v2740 = vpop.f32.mrf.mxu0
    %v2741 = vadd.f32 0.0, %v2740
    %2742 = vdwg.mxu0
    %v2743 = vadd.f32 %v2529, %v2705
    %v2744 = vadd.f32 %v2530, %v2707
    %v2745 = vadd.f32 %v2531, %v2709
    %v2746 = vadd.f32 %v2532, %v2711
    %v2747 = vadd.f32 %v2533, %v2715
    %v2748 = vadd.f32 %v2534, %v2717
    %v2749 = vadd.f32 %v2535, %v2719
    %v2750 = vadd.f32 %v2536, %v2721
    %v2751 = vadd.f32 %v2537, %v2725
    %v2752 = vadd.f32 %v2538, %v2727
    %v2753 = vadd.f32 %v2539, %v2729
    %v2754 = vadd.f32 %v2540, %v2731
    %v2755 = vadd.f32 %v2541, %v2735
    %v2756 = vadd.f32 %v2542, %v2737
    %v2757 = vadd.f32 %v2543, %v2739
    %v2758 = vadd.f32 %v2544, %v2741
    %v2759 = vld [vmem:[#allocation6 + $0x400] sm:$0xff]
    %v2760 = vld [vmem:[#allocation6 + $0x408] sm:$0xff]
    %v2761 = vld [vmem:[#allocation6 + $0x410] sm:$0xff]
    %v2762 = vld [vmem:[#allocation6 + $0x418] sm:$0xff]
    %v2763 = vld [vmem:[#allocation6 + $0x420] sm:$0xff]
    %v2764 = vld [vmem:[#allocation6 + $0x428] sm:$0xff]
    %v2765 = vld [vmem:[#allocation6 + $0x430] sm:$0xff]
    %v2766 = vld [vmem:[#allocation6 + $0x438] sm:$0xff]
    %v2767 = vld [vmem:[#allocation6 + $0x440] sm:$0xff]
    %v2768 = vld [vmem:[#allocation6 + $0x448] sm:$0xff]
    %v2769 = vld [vmem:[#allocation6 + $0x450] sm:$0xff]
    %v2770 = vld [vmem:[#allocation6 + $0x458] sm:$0xff]
    %v2771 = vld [vmem:[#allocation6 + $0x460] sm:$0xff]
    %v2772 = vld [vmem:[#allocation6 + $0x468] sm:$0xff]
    %v2773 = vld [vmem:[#allocation6 + $0x470] sm:$0xff]
    %v2774 = vld [vmem:[#allocation6 + $0x478] sm:$0xff]
    %vm2775 = vcmask 1045504
    %v2776 = vrot.slane %v1153, 2
    %v2777 = vrot.slane %v1154, 2
    %v2778 = vsel %vm2775, %v2776, %v2777
    %v2779 = vrot.slane %v1155, 2
    %v2780 = vsel %vm2775, %v2777, %v2779
    %v2781 = vrot.slane %v1156, 2
    %v2782 = vsel %vm2775, %v2779, %v2781
    %v2783 = vrot.slane %v1157, 2
    %v2784 = vsel %vm2775, %v2781, %v2783
    %v2805 = vunpack.c.l.b16 %v2759
    %v2806 = vunpack.c.h.b16 %v2759
    %v2807 = vunpack.c.l.b16 %v2760
    %v2808 = vunpack.c.h.b16 %v2760
    %v2809 = vunpack.c.l.b16 %v2761
    %v2810 = vunpack.c.h.b16 %v2761
    %v2811 = vunpack.c.l.b16 %v2762
    %v2812 = vunpack.c.h.b16 %v2762
    %v2813 = vunpack.c.l.b16 %v2763
    %v2814 = vunpack.c.h.b16 %v2763
    %v2815 = vunpack.c.l.b16 %v2764
    %v2816 = vunpack.c.h.b16 %v2764
    %v2817 = vunpack.c.l.b16 %v2765
    %v2818 = vunpack.c.h.b16 %v2765
    %v2819 = vunpack.c.l.b16 %v2766
    %v2820 = vunpack.c.h.b16 %v2766
    %v2821 = vunpack.c.l.b16 %v2767
    %v2822 = vunpack.c.h.b16 %v2767
    %v2823 = vunpack.c.l.b16 %v2768
    %v2824 = vunpack.c.h.b16 %v2768
    %v2825 = vunpack.c.l.b16 %v2769
    %v2826 = vunpack.c.h.b16 %v2769
    %v2827 = vunpack.c.l.b16 %v2770
    %v2828 = vunpack.c.h.b16 %v2770
    %v2829 = vunpack.c.l.b16 %v2771
    %v2830 = vunpack.c.h.b16 %v2771
    %v2831 = vunpack.c.l.b16 %v2772
    %v2832 = vunpack.c.h.b16 %v2772
    %v2833 = vunpack.c.l.b16 %v2773
    %v2834 = vunpack.c.h.b16 %v2773
    %v2835 = vunpack.c.l.b16 %v2774
    %v2836 = vunpack.c.h.b16 %v2774
    %v2837 = vpack.c.b16 %v2807, %v2805
    %v2838 = vpack.c.b16 %v2808, %v2806
    %v2839 = vpack.c.b16 %v2811, %v2809
    %v2840 = vpack.c.b16 %v2812, %v2810
    %v2841 = vpack.c.b16 %v2815, %v2813
    %v2842 = vpack.c.b16 %v2816, %v2814
    %v2843 = vpack.c.b16 %v2819, %v2817
    %v2844 = vpack.c.b16 %v2820, %v2818
    %v2845 = vpack.c.b16 %v2823, %v2821
    %v2846 = vpack.c.b16 %v2824, %v2822
    %v2847 = vpack.c.b16 %v2827, %v2825
    %v2848 = vpack.c.b16 %v2828, %v2826
    %v2849 = vpack.c.b16 %v2831, %v2829
    %v2850 = vpack.c.b16 %v2832, %v2830
    %v2851 = vpack.c.b16 %v2835, %v2833
    %v2852 = vpack.c.b16 %v2836, %v2834
    %2869 = vmatprep.subr.bf16.mxu0 %v2852
    %2870 = vmatpush1.bf16.msra.mxu0 %v2851
    %2871 = vmatprep.subr.bf16.mxu0 %v2850
    %2872 = vmatpush1.bf16.msra.mxu0 %v2849
    %2873 = vmatprep.subr.bf16.mxu0 %v2848
    %2874 = vmatpush1.bf16.msra.mxu0 %v2847
    %2875 = vmatprep.subr.bf16.mxu0 %v2846
    %2876 = vmatpush1.bf16.msra.mxu0 %v2845
    %2877 = vmatprep.subr.bf16.mxu0 %v2844
    %2878 = vmatpush1.bf16.msra.mxu0 %v2843
    %2879 = vmatprep.subr.bf16.mxu0 %v2842
    %2880 = vmatpush1.bf16.msra.mxu0 %v2841
    %2881 = vmatprep.subr.bf16.mxu0 %v2840
    %2882 = vmatpush1.bf16.msra.mxu0 %v2839
    %2883 = vmatprep.subr.bf16.mxu0 %v2838
    %2884 = vmatpush1.bf16.msra.mxu0 %v2837
    %2885 = vmatprep.subr.bf16.mxu0 0
    %2886 = vmatpush2.bf16.msra.mxu0 0
    %2887 = vmatprep.subr.bf16.mxu0 0
    %2888 = vmatpush2.bf16.msra.mxu0 0
    %2889 = vmatprep.subr.bf16.mxu0 0
    %2890 = vmatpush2.bf16.msra.mxu0 0
    %2891 = vmatprep.subr.bf16.mxu0 0
    %2892 = vmatpush2.bf16.msra.mxu0 0
    %2893 = vmatprep.subr.bf16.mxu0 0
    %2894 = vmatpush2.bf16.msra.mxu0 0
    %2895 = vmatprep.subr.bf16.mxu0 0
    %2896 = vmatpush2.bf16.msra.mxu0 0
    %2897 = vmatprep.subr.bf16.mxu0 0
    %2898 = vmatpush2.bf16.msra.mxu0 0
    %2899 = vmatprep.subr.bf16.mxu0 0
    %2900 = vmatpush2.bf16.msra.mxu0 0
    %2901 = vmatprep.mubr.bf16.mxu0 0
    %2902 = vmatmul.mubr.bf16.gmra.mxu0 %v2778
    %v2903 = vpop.f32.mrf.mxu0
    %v2904 = vadd.f32 0.0, %v2903
    %v2905 = vpop.f32.mrf.mxu0
    %v2906 = vadd.f32 0.0, %v2905
    %v2907 = vpop.f32.mrf.mxu0
    %v2908 = vadd.f32 0.0, %v2907
    %v2909 = vpop.f32.mrf.mxu0
    %v2910 = vadd.f32 0.0, %v2909
    %2911 = vmatprep.mubr.bf16.mxu0 0
    %2912 = vmatmul.mubr.bf16.gmra.mxu0 %v2780
    %v2913 = vpop.f32.mrf.mxu0
    %v2914 = vadd.f32 0.0, %v2913
    %v2915 = vpop.f32.mrf.mxu0
    %v2916 = vadd.f32 0.0, %v2915
    %v2917 = vpop.f32.mrf.mxu0
    %v2918 = vadd.f32 0.0, %v2917
    %v2919 = vpop.f32.mrf.mxu0
    %v2920 = vadd.f32 0.0, %v2919
    %2921 = vmatprep.mubr.bf16.mxu0 0
    %2922 = vmatmul.mubr.bf16.gmra.mxu0 %v2782
    %v2923 = vpop.f32.mrf.mxu0
    %v2924 = vadd.f32 0.0, %v2923
    %v2925 = vpop.f32.mrf.mxu0
    %v2926 = vadd.f32 0.0, %v2925
    %v2927 = vpop.f32.mrf.mxu0
    %v2928 = vadd.f32 0.0, %v2927
    %v2929 = vpop.f32.mrf.mxu0
    %v2930 = vadd.f32 0.0, %v2929
    %2931 = vmatprep.mubr.bf16.mxu0 0
    %2932 = vmatmul.mubr.bf16.gmra.mxu0 %v2784
    %v2933 = vpop.f32.mrf.mxu0
    %v2934 = vadd.f32 0.0, %v2933
    %v2935 = vpop.f32.mrf.mxu0
    %v2936 = vadd.f32 0.0, %v2935
    %v2937 = vpop.f32.mrf.mxu0
    %v2938 = vadd.f32 0.0, %v2937
    %v2939 = vpop.f32.mrf.mxu0
    %v2940 = vadd.f32 0.0, %v2939
    %2941 = vdwg.mxu0
    %v2942 = vadd.f32 %v2743, %v2904
    %v2943 = vadd.f32 %v2744, %v2906
    %v2944 = vadd.f32 %v2745, %v2908
    %v2945 = vadd.f32 %v2746, %v2910
    %v2946 = vadd.f32 %v2747, %v2914
    %v2947 = vadd.f32 %v2748, %v2916
    %v2948 = vadd.f32 %v2749, %v2918
    %v2949 = vadd.f32 %v2750, %v2920
    %v2950 = vadd.f32 %v2751, %v2924
    %v2951 = vadd.f32 %v2752, %v2926
    %v2952 = vadd.f32 %v2753, %v2928
    %v2953 = vadd.f32 %v2754, %v2930
    %v2954 = vadd.f32 %v2755, %v2934
    %v2955 = vadd.f32 %v2756, %v2936
    %v2956 = vadd.f32 %v2757, %v2938
    %v2957 = vadd.f32 %v2758, %v2940
    %v2959 = vlaneseq
    %v2960 = vshrl.u32 %v2959, 7
    %v2961 = vsub.s32 0, %v2960
    %v2962 = vrot.slane %v89, %v2961
    %v2963 = vlaneseq
    %v2964 = vshrl.u32 %v2963, 7
    %v2965 = vsub.s32 1, %v2964
    %v2966 = vrot.slane %v89, %v2965
    %v2969 = vadd.f32 %v2942, %v2962
    %v2970 = vadd.f32 %v2943, %v2966
    %v2971 = vadd.f32 %v2944, %v2962
    %v2972 = vadd.f32 %v2945, %v2966
    %v2973 = vadd.f32 %v2946, %v2962
    %v2974 = vadd.f32 %v2947, %v2966
    %v2975 = vadd.f32 %v2948, %v2962
    %v2976 = vadd.f32 %v2949, %v2966
    %v2977 = vadd.f32 %v2950, %v2962
    %v2978 = vadd.f32 %v2951, %v2966
    %v2979 = vadd.f32 %v2952, %v2962
    %v2980 = vadd.f32 %v2953, %v2966
    %v2981 = vadd.f32 %v2954, %v2962
    %v2982 = vadd.f32 %v2955, %v2966
    %v2983 = vadd.f32 %v2956, %v2962
    %v2984 = vadd.f32 %v2957, %v2966
    %v2985 = vmax.f32 %v2969, 0.0
    %v2986 = vmax.f32 %v2970, 0.0
    %v2987 = vmax.f32 %v2971, 0.0
    %v2988 = vmax.f32 %v2972, 0.0
    %v2989 = vmax.f32 %v2973, 0.0
    %v2990 = vmax.f32 %v2974, 0.0
    %v2991 = vmax.f32 %v2975, 0.0
    %v2992 = vmax.f32 %v2976, 0.0
    %v2993 = vmax.f32 %v2977, 0.0
    %v2994 = vmax.f32 %v2978, 0.0
    %v2995 = vmax.f32 %v2979, 0.0
    %v2996 = vmax.f32 %v2980, 0.0
    %v2997 = vmax.f32 %v2981, 0.0
    %v2998 = vmax.f32 %v2982, 0.0
    %v2999 = vmax.f32 %v2983, 0.0
    %v3000 = vmax.f32 %v2984, 0.0
    %3009 = vrot.lane.b32.xlu0 %v2985, 64
    %v3010 = vpop.permute.xlu0 %3009
    %3011 = vrot.lane.b32.xlu0 %v2987, 64
    %v3012 = vpop.permute.xlu0 %3011
    %3013 = vrot.lane.b32.xlu0 %v2989, 64
    %v3014 = vpop.permute.xlu0 %3013
    %3015 = vrot.lane.b32.xlu0 %v2991, 64
    %v3016 = vpop.permute.xlu0 %3015
    %3017 = vrot.lane.b32.xlu0 %v2993, 64
    %v3018 = vpop.permute.xlu0 %3017
    %3019 = vrot.lane.b32.xlu0 %v2995, 64
    %v3020 = vpop.permute.xlu0 %3019
    %3021 = vrot.lane.b32.xlu0 %v2997, 64
    %v3022 = vpop.permute.xlu0 %3021
    %3023 = vrot.lane.b32.xlu0 %v2999, 64
    %v3024 = vpop.permute.xlu0 %3023
    %v3033 = vmax.f32 %v2985, %v3010
    %v3034 = vmax.f32 %v2987, %v3012
    %v3035 = vmax.f32 %v2989, %v3014
    %v3036 = vmax.f32 %v2991, %v3016
    %v3037 = vmax.f32 %v2993, %v3018
    %v3038 = vmax.f32 %v2995, %v3020
    %v3039 = vmax.f32 %v2997, %v3022
    %v3040 = vmax.f32 %v2999, %v3024
    %3049 = vrot.lane.b32.xlu0 %v2986, 64
    %v3050 = vpop.permute.xlu0 %3049
    %3051 = vrot.lane.b32.xlu0 %v2988, 64
    %v3052 = vpop.permute.xlu0 %3051
    %3053 = vrot.lane.b32.xlu0 %v2990, 64
    %v3054 = vpop.permute.xlu0 %3053
    %3055 = vrot.lane.b32.xlu0 %v2992, 64
    %v3056 = vpop.permute.xlu0 %3055
    %3057 = vrot.lane.b32.xlu0 %v2994, 64
    %v3058 = vpop.permute.xlu0 %3057
    %3059 = vrot.lane.b32.xlu0 %v2996, 64
    %v3060 = vpop.permute.xlu0 %3059
    %3061 = vrot.lane.b32.xlu0 %v2998, 64
    %v3062 = vpop.permute.xlu0 %3061
    %3063 = vrot.lane.b32.xlu0 %v3000, 64
    %v3064 = vpop.permute.xlu0 %3063
    %v3073 = vmax.f32 %v2986, %v3050
    %v3074 = vmax.f32 %v2988, %v3052
    %v3075 = vmax.f32 %v2990, %v3054
    %v3076 = vmax.f32 %v2992, %v3056
    %v3077 = vmax.f32 %v2994, %v3058
    %v3078 = vmax.f32 %v2996, %v3060
    %v3079 = vmax.f32 %v2998, %v3062
    %v3080 = vmax.f32 %v3000, %v3064
    %v3081 = vmax.f32 %v3033, %v3073
    %v3082 = vmax.f32 %v3034, %v3074
    %v3083 = vmax.f32 %v3035, %v3075
    %v3084 = vmax.f32 %v3036, %v3076
    %v3085 = vmax.f32 %v3037, %v3077
    %v3086 = vmax.f32 %v3038, %v3078
    %v3087 = vmax.f32 %v3039, %v3079
    %v3088 = vmax.f32 %v3040, %v3080
    %v3090 = vrot.slane %v3082, 2
    %vm3094 = vcmask 1043456
    %v3095 = vrot.slane %v3083, 4
    %v3096 = vrot.slane %v3084, 4
    %v3097 = vsel %vm3094, %v3095, %v3096
    %v3101 = vrot.slane %v3084, 6
    %v3102 = vrot.slane %v3085, 6
    %v3103 = vsel %vm1124, %v3101, %v3102
    %vm3108 = vcmask 1045504
    %v3109 = vrot.slane %v3086, 2
    %v3110 = vrot.slane %v3087, 2
    %v3111 = vsel %vm3108, %v3109, %v3110
    %v3115 = vrot.slane %v3087, 4
    %v3116 = vrot.slane %v3088, 4
    %v3117 = vsel %vm3094, %v3115, %v3116
    %vm3120 = vcmask 1046528
    %v3121 = vsel %vm3120, %v3081, %v3090
    %v3122 = vsel %vm3108, %v3090, %v3095
    %vm3123 = vcmask 1044480
    %v3124 = vsel %vm3123, %v3097, %v3101
    %v3125 = vsel %vm3094, %v3103, %v3085
    %vm3126 = vcmask 1042432
    %v3127 = vsel %vm3126, %v3086, %v3111
    %v3128 = vsel %vm1124, %v3110, %v3117
    %v3129 = vpack.c.bf16 %v3122, %v3121
    %v3130 = vpack.c.bf16 %v3125, %v3124
    %v3131 = vpack.c.bf16 %v3128, %v3127
    %v3132 = vpack.c.bf16 %v3116, %v3116
    %v3137 = vunpack.c.l.b16 %v3129
    %v3138 = vunpack.c.h.b16 %v3129
    %v3139 = vunpack.c.l.b16 %v3130
    %v3140 = vunpack.c.h.b16 %v3130
    %v3141 = vunpack.c.l.b16 %v3131
    %v3142 = vunpack.c.h.b16 %v3131
    %v3143 = vunpack.c.l.b16 %v3132
    %v3144 = vpack.c.b16 %v3137, %v3137
    %v3145 = vpack.c.b16 %v3138, %v3138
    %v3146 = vpack.c.b16 %v3139, %v3139
    %v3147 = vpack.c.b16 %v3140, %v3140
    %v3148 = vpack.c.b16 %v3141, %v3141
    %v3149 = vpack.c.b16 %v3142, %v3142
    %v3150 = vpack.c.b16 %v3143, %v3143
    %vm3158 = vcmask 519168
    %3159 = vst.msk [vmem:[%s6] sm:$0xf] %vm3158, %v3144
    %3160 = vst.msk [vmem:[%s6 + $0x4] sm:$0xf] %vm3158, %v3145
    %3161 = vst.msk [vmem:[%s6 + $0x8] sm:$0xf] %vm3158, %v3146
    %3162 = vst.msk [vmem:[%s6 + $0xc] sm:$0xf] %vm3158, %v3147
    %3163 = vst.msk [vmem:[%s6 + $0x10] sm:$0xf] %vm3158, %v3148
    %3164 = vst.msk [vmem:[%s6 + $0x14] sm:$0xf] %vm3158, %v3149
    %vm3165 = vcmask 516096
    %vm3166 = vsmask.f32 256
    %vm3167 = vmand %vm3165, %vm3166
    %v3168 = vld [vmem:[%s6 + $0x18] sm:$0x1]
    %v3169 = vsel %vm3167, %v3150, %v3168
    %3170 = vst [vmem:[%s6 + $0x18] sm:$0x1] %v3169
    %s3171 = scalar_lea.vmem %s0, 44
    %v3172 = vld [vmem:[%s3171] sm:$0xf]
    %v3173 = vld [vmem:[%s3171 + $0x4] sm:$0xf]
    %v3174 = vld [vmem:[%s3171 + $0x8] sm:$0xf]
    %v3175 = vld [vmem:[%s3171 + $0xc] sm:$0xf]
    %v3176 = vld [vmem:[%s3171 + $0x10] sm:$0xf]
    %v3177 = vld [vmem:[%s3171 + $0x14] sm:$0xf]
    %v3178 = vld [vmem:[%s3171 + $0x18] sm:$0xf]
    %v3179 = vld [vmem:[%s3171 + $0x1c] sm:$0xf]
    %v3180 = vld [vmem:[%s3171 + $0x20] sm:$0xf]
    %v3181 = vld [vmem:[%s3171 + $0x24] sm:$0xf]
    %v3182 = vld [vmem:[#allocation2] sm:$0xff]
    %v3183 = vld [vmem:[#allocation2 + $0x8] sm:$0xff]
    %v3184 = vld [vmem:[#allocation2 + $0x10] sm:$0xff]
    %v3185 = vld [vmem:[#allocation2 + $0x18] sm:$0xff]
    %v3186 = vld [vmem:[#allocation2 + $0x20] sm:$0xff]
    %v3187 = vld [vmem:[#allocation2 + $0x28] sm:$0xff]
    %v3188 = vld [vmem:[#allocation2 + $0x30] sm:$0xff]
    %v3189 = vld [vmem:[#allocation2 + $0x38] sm:$0xff]
    %v3198 = vunpack.c.l.b16 %v3172
    %v3199 = vunpack.c.l.b16 %v3173
    %v3200 = vunpack.c.l.b16 %v3174
    %v3201 = vunpack.c.l.b16 %v3175
    %v3202 = vunpack.c.l.b16 %v3176
    %v3203 = vunpack.c.l.b16 %v3177
    %v3204 = vunpack.c.l.b16 %v3178
    %v3205 = vunpack.c.l.b16 %v3179
    %v3206 = vpack.c.b16 %v3199, %v3198
    %v3207 = vpack.c.b16 %v3201, %v3200
    %v3208 = vpack.c.b16 %v3203, %v3202
    %v3209 = vpack.c.b16 %v3205, %v3204
    %v3211 = vshrl.u32 %v3206, 16
    %v3213 = vshll.u32 %v3206, 16
    %v3215 = vrot.slane %v3213, 1
    %v3216 = vor.u32 %v3211, %v3215
    %v3218 = vshll.u32 %v3207, 16
    %v3220 = vrot.slane %v3218, 1
    %v3221 = vsel %vm136, %v3216, %v3220
    %v3222 = vshrl.u32 %v3207, 16
    %v3224 = vor.u32 %v3222, %v3220
    %v3226 = vshll.u32 %v3208, 16
    %v3228 = vrot.slane %v3226, 1
    %v3229 = vsel %vm136, %v3224, %v3228
    %v3230 = vshrl.u32 %v3208, 16
    %v3232 = vor.u32 %v3230, %v3228
    %v3234 = vshll.u32 %v3209, 16
    %v3236 = vrot.slane %v3234, 1
    %v3237 = vsel %vm136, %v3232, %v3236
    %v3238 = vshrl.u32 %v3209, 16
    %v3240 = vor.u32 %v3238, %v3236
    %v3245 = vunpack.c.l.b16 %v3186
    %v3246 = vunpack.c.h.b16 %v3186
    %v3247 = vunpack.c.l.b16 %v3187
    %v3248 = vunpack.c.h.b16 %v3187
    %v3249 = vunpack.c.l.b16 %v3188
    %v3250 = vunpack.c.h.b16 %v3188
    %v3251 = vunpack.c.l.b16 %v3189
    %v3252 = vunpack.c.h.b16 %v3189
    %v3253 = vpack.c.b16 %v3249, %v3245
    %v3254 = vpack.c.b16 %v3250, %v3246
    %v3255 = vpack.c.b16 %v3251, %v3247
    %v3256 = vpack.c.b16 %v3252, %v3248
    %v3262 = vsel %vm188, %v3221, 0
    %v3265 = vsel %vm188, %v3229, 0
    %v3268 = vsel %vm188, %v3237, 0
    %v3271 = vsel %vm188, %v3240, 0
    %3273 = vmatprep.subr.bf16.mxu0 0
    %3274 = vmatpush1.bf16.msra.mxu0 0
    %3275 = vmatprep.subr.bf16.mxu0 0
    %3276 = vmatpush1.bf16.msra.mxu0 0
    %3277 = vmatprep.subr.bf16.mxu0 0
    %3278 = vmatpush1.bf16.msra.mxu0 0
    %3279 = vmatprep.subr.bf16.mxu0 0
    %3280 = vmatpush1.bf16.msra.mxu0 0
    %3281 = vmatprep.subr.bf16.mxu0 0
    %3282 = vmatpush1.bf16.msra.mxu0 0
    %3283 = vmatprep.subr.bf16.mxu0 0
    %3284 = vmatpush1.bf16.msra.mxu0 0
    %3285 = vmatprep.subr.bf16.mxu0 0
    %3286 = vmatpush1.bf16.msra.mxu0 0
    %3287 = vmatprep.subr.bf16.mxu0 %v3254
    %3288 = vmatpush1.bf16.msra.mxu0 %v3253
    %3289 = vmatprep.subr.bf16.mxu0 0
    %3290 = vmatpush2.bf16.msra.mxu0 0
    %3291 = vmatprep.subr.bf16.mxu0 0
    %3292 = vmatpush2.bf16.msra.mxu0 0
    %3293 = vmatprep.subr.bf16.mxu0 0
    %3294 = vmatpush2.bf16.msra.mxu0 0
    %3295 = vmatprep.subr.bf16.mxu0 0
    %3296 = vmatpush2.bf16.msra.mxu0 0
    %3297 = vmatprep.subr.bf16.mxu0 0
    %3298 = vmatpush2.bf16.msra.mxu0 0
    %3299 = vmatprep.subr.bf16.mxu0 0
    %3300 = vmatpush2.bf16.msra.mxu0 0
    %3301 = vmatprep.subr.bf16.mxu0 0
    %3302 = vmatpush2.bf16.msra.mxu0 0
    %3303 = vmatprep.subr.bf16.mxu0 0
    %3304 = vmatpush2.bf16.msra.mxu0 0
    %3305 = vmatprep.mubr.bf16.mxu0 0
    %3306 = vmatmul.mubr.bf16.gmra.mxu0 %v3262
    %v3307 = vpop.f32.mrf.mxu0
    %v3308 = vadd.f32 0.0, %v3307
    %v3309 = vpop.f32.mrf.mxu0
    %v3310 = vadd.f32 0.0, %v3309
    %v3311 = vpop.f32.mrf.mxu0
    %v3312 = vadd.f32 0.0, %v3311
    %v3313 = vpop.f32.mrf.mxu0
    %v3314 = vadd.f32 0.0, %v3313
    %3315 = vmatprep.mubr.bf16.mxu0 0
    %3316 = vmatmul.mubr.bf16.gmra.mxu0 %v3265
    %v3317 = vpop.f32.mrf.mxu0
    %v3318 = vadd.f32 0.0, %v3317
    %v3319 = vpop.f32.mrf.mxu0
    %v3320 = vadd.f32 0.0, %v3319
    %v3321 = vpop.f32.mrf.mxu0
    %v3322 = vadd.f32 0.0, %v3321
    %v3323 = vpop.f32.mrf.mxu0
    %v3324 = vadd.f32 0.0, %v3323
    %3325 = vmatprep.mubr.bf16.mxu0 0
    %3326 = vmatmul.mubr.bf16.gmra.mxu0 %v3268
    %v3327 = vpop.f32.mrf.mxu0
    %v3328 = vadd.f32 0.0, %v3327
    %v3329 = vpop.f32.mrf.mxu0
    %v3330 = vadd.f32 0.0, %v3329
    %v3331 = vpop.f32.mrf.mxu0
    %v3332 = vadd.f32 0.0, %v3331
    %v3333 = vpop.f32.mrf.mxu0
    %v3334 = vadd.f32 0.0, %v3333
    %3335 = vmatprep.mubr.bf16.mxu0 0
    %3336 = vmatmul.mubr.bf16.gmra.mxu0 %v3271
    %v3337 = vpop.f32.mrf.mxu0
    %v3338 = vadd.f32 0.0, %v3337
    %v3339 = vpop.f32.mrf.mxu0
    %v3340 = vadd.f32 0.0, %v3339
    %v3341 = vpop.f32.mrf.mxu0
    %v3342 = vadd.f32 0.0, %v3341
    %v3343 = vpop.f32.mrf.mxu0
    %v3344 = vadd.f32 0.0, %v3343
    %3345 = vdwg.mxu0
    %3346 = vmatprep.subr.bf16.mxu0 0
    %3347 = vmatpush1.bf16.msra.mxu0 0
    %3348 = vmatprep.subr.bf16.mxu0 0
    %3349 = vmatpush1.bf16.msra.mxu0 0
    %3350 = vmatprep.subr.bf16.mxu0 0
    %3351 = vmatpush1.bf16.msra.mxu0 0
    %3352 = vmatprep.subr.bf16.mxu0 0
    %3353 = vmatpush1.bf16.msra.mxu0 0
    %3354 = vmatprep.subr.bf16.mxu0 0
    %3355 = vmatpush1.bf16.msra.mxu0 0
    %3356 = vmatprep.subr.bf16.mxu0 0
    %3357 = vmatpush1.bf16.msra.mxu0 0
    %3358 = vmatprep.subr.bf16.mxu0 0
    %3359 = vmatpush1.bf16.msra.mxu0 0
    %3360 = vmatprep.subr.bf16.mxu0 %v3256
    %3361 = vmatpush1.bf16.msra.mxu0 %v3255
    %3362 = vmatprep.subr.bf16.mxu0 0
    %3363 = vmatpush2.bf16.msra.mxu0 0
    %3364 = vmatprep.subr.bf16.mxu0 0
    %3365 = vmatpush2.bf16.msra.mxu0 0
    %3366 = vmatprep.subr.bf16.mxu0 0
    %3367 = vmatpush2.bf16.msra.mxu0 0
    %3368 = vmatprep.subr.bf16.mxu0 0
    %3369 = vmatpush2.bf16.msra.mxu0 0
    %3370 = vmatprep.subr.bf16.mxu0 0
    %3371 = vmatpush2.bf16.msra.mxu0 0
    %3372 = vmatprep.subr.bf16.mxu0 0
    %3373 = vmatpush2.bf16.msra.mxu0 0
    %3374 = vmatprep.subr.bf16.mxu0 0
    %3375 = vmatpush2.bf16.msra.mxu0 0
    %3376 = vmatprep.subr.bf16.mxu0 0
    %3377 = vmatpush2.bf16.msra.mxu0 0
    %3378 = vmatprep.mubr.bf16.mxu0 0
    %3379 = vmatmul.mubr.bf16.gmra.mxu0 %v3262
    %v3380 = vpop.f32.mrf.mxu0
    %v3381 = vadd.f32 0.0, %v3380
    %v3382 = vpop.f32.mrf.mxu0
    %v3383 = vadd.f32 0.0, %v3382
    %v3384 = vpop.f32.mrf.mxu0
    %v3385 = vadd.f32 0.0, %v3384
    %v3386 = vpop.f32.mrf.mxu0
    %v3387 = vadd.f32 0.0, %v3386
    %3388 = vmatprep.mubr.bf16.mxu0 0
    %3389 = vmatmul.mubr.bf16.gmra.mxu0 %v3265
    %v3390 = vpop.f32.mrf.mxu0
    %v3391 = vadd.f32 0.0, %v3390
    %v3392 = vpop.f32.mrf.mxu0
    %v3393 = vadd.f32 0.0, %v3392
    %v3394 = vpop.f32.mrf.mxu0
    %v3395 = vadd.f32 0.0, %v3394
    %v3396 = vpop.f32.mrf.mxu0
    %v3397 = vadd.f32 0.0, %v3396
    %3398 = vmatprep.mubr.bf16.mxu0 0
    %3399 = vmatmul.mubr.bf16.gmra.mxu0 %v3268
    %v3400 = vpop.f32.mrf.mxu0
    %v3401 = vadd.f32 0.0, %v3400
    %v3402 = vpop.f32.mrf.mxu0
    %v3403 = vadd.f32 0.0, %v3402
    %v3404 = vpop.f32.mrf.mxu0
    %v3405 = vadd.f32 0.0, %v3404
    %v3406 = vpop.f32.mrf.mxu0
    %v3407 = vadd.f32 0.0, %v3406
    %3408 = vmatprep.mubr.bf16.mxu0 0
    %3409 = vmatmul.mubr.bf16.gmra.mxu0 %v3271
    %v3410 = vpop.f32.mrf.mxu0
    %v3411 = vadd.f32 0.0, %v3410
    %v3412 = vpop.f32.mrf.mxu0
    %v3413 = vadd.f32 0.0, %v3412
    %v3414 = vpop.f32.mrf.mxu0
    %v3415 = vadd.f32 0.0, %v3414
    %v3416 = vpop.f32.mrf.mxu0
    %v3417 = vadd.f32 0.0, %v3416
    %3418 = vdwg.mxu0
    %v3423 = vunpack.c.l.b16 %v3182
    %v3424 = vunpack.c.h.b16 %v3182
    %v3425 = vunpack.c.l.b16 %v3183
    %v3426 = vunpack.c.h.b16 %v3183
    %v3427 = vunpack.c.l.b16 %v3184
    %v3428 = vunpack.c.h.b16 %v3184
    %v3429 = vunpack.c.l.b16 %v3185
    %v3430 = vunpack.c.h.b16 %v3185
    %v3431 = vpack.c.b16 %v3427, %v3423
    %v3432 = vpack.c.b16 %v3428, %v3424
    %v3433 = vpack.c.b16 %v3429, %v3425
    %v3434 = vpack.c.b16 %v3430, %v3426
    %v3439 = vsel %vm188, %v3206, 0
    %v3441 = vsel %vm188, %v3207, 0
    %v3443 = vsel %vm188, %v3208, 0
    %v3445 = vsel %vm188, %v3209, 0
    %3447 = vmatprep.subr.bf16.mxu0 0
    %3448 = vmatpush1.bf16.msra.mxu0 0
    %3449 = vmatprep.subr.bf16.mxu0 0
    %3450 = vmatpush1.bf16.msra.mxu0 0
    %3451 = vmatprep.subr.bf16.mxu0 0
    %3452 = vmatpush1.bf16.msra.mxu0 0
    %3453 = vmatprep.subr.bf16.mxu0 0
    %3454 = vmatpush1.bf16.msra.mxu0 0
    %3455 = vmatprep.subr.bf16.mxu0 0
    %3456 = vmatpush1.bf16.msra.mxu0 0
    %3457 = vmatprep.subr.bf16.mxu0 0
    %3458 = vmatpush1.bf16.msra.mxu0 0
    %3459 = vmatprep.subr.bf16.mxu0 0
    %3460 = vmatpush1.bf16.msra.mxu0 0
    %3461 = vmatprep.subr.bf16.mxu0 %v3432
    %3462 = vmatpush1.bf16.msra.mxu0 %v3431
    %3463 = vmatprep.subr.bf16.mxu0 0
    %3464 = vmatpush2.bf16.msra.mxu0 0
    %3465 = vmatprep.subr.bf16.mxu0 0
    %3466 = vmatpush2.bf16.msra.mxu0 0
    %3467 = vmatprep.subr.bf16.mxu0 0
    %3468 = vmatpush2.bf16.msra.mxu0 0
    %3469 = vmatprep.subr.bf16.mxu0 0
    %3470 = vmatpush2.bf16.msra.mxu0 0
    %3471 = vmatprep.subr.bf16.mxu0 0
    %3472 = vmatpush2.bf16.msra.mxu0 0
    %3473 = vmatprep.subr.bf16.mxu0 0
    %3474 = vmatpush2.bf16.msra.mxu0 0
    %3475 = vmatprep.subr.bf16.mxu0 0
    %3476 = vmatpush2.bf16.msra.mxu0 0
    %3477 = vmatprep.subr.bf16.mxu0 0
    %3478 = vmatpush2.bf16.msra.mxu0 0
    %3479 = vmatprep.mubr.bf16.mxu0 0
    %3480 = vmatmul.mubr.bf16.gmra.mxu0 %v3439
    %v3481 = vpop.f32.mrf.mxu0
    %v3482 = vadd.f32 %v3308, %v3481
    %v3483 = vpop.f32.mrf.mxu0
    %v3484 = vadd.f32 %v3310, %v3483
    %v3485 = vpop.f32.mrf.mxu0
    %v3486 = vadd.f32 %v3312, %v3485
    %v3487 = vpop.f32.mrf.mxu0
    %v3488 = vadd.f32 %v3314, %v3487
    %3489 = vmatprep.mubr.bf16.mxu0 0
    %3490 = vmatmul.mubr.bf16.gmra.mxu0 %v3441
    %v3491 = vpop.f32.mrf.mxu0
    %v3492 = vadd.f32 %v3318, %v3491
    %v3493 = vpop.f32.mrf.mxu0
    %v3494 = vadd.f32 %v3320, %v3493
    %v3495 = vpop.f32.mrf.mxu0
    %v3496 = vadd.f32 %v3322, %v3495
    %v3497 = vpop.f32.mrf.mxu0
    %v3498 = vadd.f32 %v3324, %v3497
    %3499 = vmatprep.mubr.bf16.mxu0 0
    %3500 = vmatmul.mubr.bf16.gmra.mxu0 %v3443
    %v3501 = vpop.f32.mrf.mxu0
    %v3502 = vadd.f32 %v3328, %v3501
    %v3503 = vpop.f32.mrf.mxu0
    %v3504 = vadd.f32 %v3330, %v3503
    %v3505 = vpop.f32.mrf.mxu0
    %v3506 = vadd.f32 %v3332, %v3505
    %v3507 = vpop.f32.mrf.mxu0
    %v3508 = vadd.f32 %v3334, %v3507
    %3509 = vmatprep.mubr.bf16.mxu0 0
    %3510 = vmatmul.mubr.bf16.gmra.mxu0 %v3445
    %v3511 = vpop.f32.mrf.mxu0
    %v3512 = vadd.f32 %v3338, %v3511
    %v3513 = vpop.f32.mrf.mxu0
    %v3514 = vadd.f32 %v3340, %v3513
    %v3515 = vpop.f32.mrf.mxu0
    %v3516 = vadd.f32 %v3342, %v3515
    %v3517 = vpop.f32.mrf.mxu0
    %v3518 = vadd.f32 %v3344, %v3517
    %3519 = vdwg.mxu0
    %3520 = vmatprep.subr.bf16.mxu0 0
    %3521 = vmatpush1.bf16.msra.mxu0 0
    %3522 = vmatprep.subr.bf16.mxu0 0
    %3523 = vmatpush1.bf16.msra.mxu0 0
    %3524 = vmatprep.subr.bf16.mxu0 0
    %3525 = vmatpush1.bf16.msra.mxu0 0
    %3526 = vmatprep.subr.bf16.mxu0 0
    %3527 = vmatpush1.bf16.msra.mxu0 0
    %3528 = vmatprep.subr.bf16.mxu0 0
    %3529 = vmatpush1.bf16.msra.mxu0 0
    %3530 = vmatprep.subr.bf16.mxu0 0
    %3531 = vmatpush1.bf16.msra.mxu0 0
    %3532 = vmatprep.subr.bf16.mxu0 0
    %3533 = vmatpush1.bf16.msra.mxu0 0
    %3534 = vmatprep.subr.bf16.mxu0 %v3434
    %3535 = vmatpush1.bf16.msra.mxu0 %v3433
    %3536 = vmatprep.subr.bf16.mxu0 0
    %3537 = vmatpush2.bf16.msra.mxu0 0
    %3538 = vmatprep.subr.bf16.mxu0 0
    %3539 = vmatpush2.bf16.msra.mxu0 0
    %3540 = vmatprep.subr.bf16.mxu0 0
    %3541 = vmatpush2.bf16.msra.mxu0 0
    %3542 = vmatprep.subr.bf16.mxu0 0
    %3543 = vmatpush2.bf16.msra.mxu0 0
    %3544 = vmatprep.subr.bf16.mxu0 0
    %3545 = vmatpush2.bf16.msra.mxu0 0
    %3546 = vmatprep.subr.bf16.mxu0 0
    %3547 = vmatpush2.bf16.msra.mxu0 0
    %3548 = vmatprep.subr.bf16.mxu0 0
    %3549 = vmatpush2.bf16.msra.mxu0 0
    %3550 = vmatprep.subr.bf16.mxu0 0
    %3551 = vmatpush2.bf16.msra.mxu0 0
    %3552 = vmatprep.mubr.bf16.mxu0 0
    %3553 = vmatmul.mubr.bf16.gmra.mxu0 %v3439
    %v3554 = vpop.f32.mrf.mxu0
    %v3555 = vadd.f32 %v3381, %v3554
    %v3556 = vpop.f32.mrf.mxu0
    %v3557 = vadd.f32 %v3383, %v3556
    %v3558 = vpop.f32.mrf.mxu0
    %v3559 = vadd.f32 %v3385, %v3558
    %v3560 = vpop.f32.mrf.mxu0
    %v3561 = vadd.f32 %v3387, %v3560
    %3562 = vmatprep.mubr.bf16.mxu0 0
    %3563 = vmatmul.mubr.bf16.gmra.mxu0 %v3441
    %v3564 = vpop.f32.mrf.mxu0
    %v3565 = vadd.f32 %v3391, %v3564
    %v3566 = vpop.f32.mrf.mxu0
    %v3567 = vadd.f32 %v3393, %v3566
    %v3568 = vpop.f32.mrf.mxu0
    %v3569 = vadd.f32 %v3395, %v3568
    %v3570 = vpop.f32.mrf.mxu0
    %v3571 = vadd.f32 %v3397, %v3570
    %3572 = vmatprep.mubr.bf16.mxu0 0
    %3573 = vmatmul.mubr.bf16.gmra.mxu0 %v3443
    %v3574 = vpop.f32.mrf.mxu0
    %v3575 = vadd.f32 %v3401, %v3574
    %v3576 = vpop.f32.mrf.mxu0
    %v3577 = vadd.f32 %v3403, %v3576
    %v3578 = vpop.f32.mrf.mxu0
    %v3579 = vadd.f32 %v3405, %v3578
    %v3580 = vpop.f32.mrf.mxu0
    %v3581 = vadd.f32 %v3407, %v3580
    %3582 = vmatprep.mubr.bf16.mxu0 0
    %3583 = vmatmul.mubr.bf16.gmra.mxu0 %v3445
    %v3584 = vpop.f32.mrf.mxu0
    %v3585 = vadd.f32 %v3411, %v3584
    %v3586 = vpop.f32.mrf.mxu0
    %v3587 = vadd.f32 %v3413, %v3586
    %v3588 = vpop.f32.mrf.mxu0
    %v3589 = vadd.f32 %v3415, %v3588
    %v3590 = vpop.f32.mrf.mxu0
    %v3591 = vadd.f32 %v3417, %v3590
    %3592 = vdwg.mxu0
    %v3593 = vld [vmem:[#allocation2 + $0x40] sm:$0xff]
    %v3594 = vld [vmem:[#allocation2 + $0x48] sm:$0xff]
    %v3595 = vld [vmem:[#allocation2 + $0x50] sm:$0xff]
    %v3596 = vld [vmem:[#allocation2 + $0x58] sm:$0xff]
    %v3598 = vunpack.c.l.b16 %v3180
    %v3599 = vpack.c.b16 %v3200, %v3199
    %v3600 = vpack.c.b16 %v3202, %v3201
    %v3601 = vpack.c.b16 %v3204, %v3203
    %v3602 = vpack.c.b16 %v3598, %v3205
    %v3604 = vshrl.u32 %v3599, 16
    %v3606 = vshll.u32 %v3599, 16
    %v3608 = vrot.slane %v3606, 1
    %v3609 = vor.u32 %v3604, %v3608
    %v3611 = vshll.u32 %v3600, 16
    %v3613 = vrot.slane %v3611, 1
    %v3614 = vsel %vm136, %v3609, %v3613
    %v3615 = vshrl.u32 %v3600, 16
    %v3617 = vor.u32 %v3615, %v3613
    %v3619 = vshll.u32 %v3601, 16
    %v3621 = vrot.slane %v3619, 1
    %v3622 = vsel %vm136, %v3617, %v3621
    %v3623 = vshrl.u32 %v3601, 16
    %v3625 = vor.u32 %v3623, %v3621
    %v3627 = vshll.u32 %v3602, 16
    %v3629 = vrot.slane %v3627, 1
    %v3630 = vsel %vm136, %v3625, %v3629
    %v3631 = vshrl.u32 %v3602, 16
    %v3633 = vor.u32 %v3631, %v3629
    %v3638 = vunpack.c.l.b16 %v3593
    %v3639 = vunpack.c.h.b16 %v3593
    %v3640 = vunpack.c.l.b16 %v3594
    %v3641 = vunpack.c.h.b16 %v3594
    %v3642 = vunpack.c.l.b16 %v3595
    %v3643 = vunpack.c.h.b16 %v3595
    %v3644 = vunpack.c.l.b16 %v3596
    %v3645 = vunpack.c.h.b16 %v3596
    %v3646 = vpack.c.b16 %v3642, %v3638
    %v3647 = vpack.c.b16 %v3643, %v3639
    %v3648 = vpack.c.b16 %v3644, %v3640
    %v3649 = vpack.c.b16 %v3645, %v3641
    %v3655 = vsel %vm188, %v3614, 0
    %v3658 = vsel %vm188, %v3622, 0
    %v3661 = vsel %vm188, %v3630, 0
    %v3664 = vsel %vm188, %v3633, 0
    %3666 = vmatprep.subr.bf16.mxu0 0
    %3667 = vmatpush1.bf16.msra.mxu0 0
    %3668 = vmatprep.subr.bf16.mxu0 0
    %3669 = vmatpush1.bf16.msra.mxu0 0
    %3670 = vmatprep.subr.bf16.mxu0 0
    %3671 = vmatpush1.bf16.msra.mxu0 0
    %3672 = vmatprep.subr.bf16.mxu0 0
    %3673 = vmatpush1.bf16.msra.mxu0 0
    %3674 = vmatprep.subr.bf16.mxu0 0
    %3675 = vmatpush1.bf16.msra.mxu0 0
    %3676 = vmatprep.subr.bf16.mxu0 0
    %3677 = vmatpush1.bf16.msra.mxu0 0
    %3678 = vmatprep.subr.bf16.mxu0 0
    %3679 = vmatpush1.bf16.msra.mxu0 0
    %3680 = vmatprep.subr.bf16.mxu0 %v3647
    %3681 = vmatpush1.bf16.msra.mxu0 %v3646
    %3682 = vmatprep.subr.bf16.mxu0 0
    %3683 = vmatpush2.bf16.msra.mxu0 0
    %3684 = vmatprep.subr.bf16.mxu0 0
    %3685 = vmatpush2.bf16.msra.mxu0 0
    %3686 = vmatprep.subr.bf16.mxu0 0
    %3687 = vmatpush2.bf16.msra.mxu0 0
    %3688 = vmatprep.subr.bf16.mxu0 0
    %3689 = vmatpush2.bf16.msra.mxu0 0
    %3690 = vmatprep.subr.bf16.mxu0 0
    %3691 = vmatpush2.bf16.msra.mxu0 0
    %3692 = vmatprep.subr.bf16.mxu0 0
    %3693 = vmatpush2.bf16.msra.mxu0 0
    %3694 = vmatprep.subr.bf16.mxu0 0
    %3695 = vmatpush2.bf16.msra.mxu0 0
    %3696 = vmatprep.subr.bf16.mxu0 0
    %3697 = vmatpush2.bf16.msra.mxu0 0
    %3698 = vmatprep.mubr.bf16.mxu0 0
    %3699 = vmatmul.mubr.bf16.gmra.mxu0 %v3655
    %v3700 = vpop.f32.mrf.mxu0
    %v3701 = vadd.f32 0.0, %v3700
    %v3702 = vpop.f32.mrf.mxu0
    %v3703 = vadd.f32 0.0, %v3702
    %v3704 = vpop.f32.mrf.mxu0
    %v3705 = vadd.f32 0.0, %v3704
    %v3706 = vpop.f32.mrf.mxu0
    %v3707 = vadd.f32 0.0, %v3706
    %3708 = vmatprep.mubr.bf16.mxu0 0
    %3709 = vmatmul.mubr.bf16.gmra.mxu0 %v3658
    %v3710 = vpop.f32.mrf.mxu0
    %v3711 = vadd.f32 0.0, %v3710
    %v3712 = vpop.f32.mrf.mxu0
    %v3713 = vadd.f32 0.0, %v3712
    %v3714 = vpop.f32.mrf.mxu0
    %v3715 = vadd.f32 0.0, %v3714
    %v3716 = vpop.f32.mrf.mxu0
    %v3717 = vadd.f32 0.0, %v3716
    %3718 = vmatprep.mubr.bf16.mxu0 0
    %3719 = vmatmul.mubr.bf16.gmra.mxu0 %v3661
    %v3720 = vpop.f32.mrf.mxu0
    %v3721 = vadd.f32 0.0, %v3720
    %v3722 = vpop.f32.mrf.mxu0
    %v3723 = vadd.f32 0.0, %v3722
    %v3724 = vpop.f32.mrf.mxu0
    %v3725 = vadd.f32 0.0, %v3724
    %v3726 = vpop.f32.mrf.mxu0
    %v3727 = vadd.f32 0.0, %v3726
    %3728 = vmatprep.mubr.bf16.mxu0 0
    %3729 = vmatmul.mubr.bf16.gmra.mxu0 %v3664
    %v3730 = vpop.f32.mrf.mxu0
    %v3731 = vadd.f32 0.0, %v3730
    %v3732 = vpop.f32.mrf.mxu0
    %v3733 = vadd.f32 0.0, %v3732
    %v3734 = vpop.f32.mrf.mxu0
    %v3735 = vadd.f32 0.0, %v3734
    %v3736 = vpop.f32.mrf.mxu0
    %v3737 = vadd.f32 0.0, %v3736
    %3738 = vdwg.mxu0
    %3739 = vmatprep.subr.bf16.mxu0 0
    %3740 = vmatpush1.bf16.msra.mxu0 0
    %3741 = vmatprep.subr.bf16.mxu0 0
    %3742 = vmatpush1.bf16.msra.mxu0 0
    %3743 = vmatprep.subr.bf16.mxu0 0
    %3744 = vmatpush1.bf16.msra.mxu0 0
    %3745 = vmatprep.subr.bf16.mxu0 0
    %3746 = vmatpush1.bf16.msra.mxu0 0
    %3747 = vmatprep.subr.bf16.mxu0 0
    %3748 = vmatpush1.bf16.msra.mxu0 0
    %3749 = vmatprep.subr.bf16.mxu0 0
    %3750 = vmatpush1.bf16.msra.mxu0 0
    %3751 = vmatprep.subr.bf16.mxu0 0
    %3752 = vmatpush1.bf16.msra.mxu0 0
    %3753 = vmatprep.subr.bf16.mxu0 %v3649
    %3754 = vmatpush1.bf16.msra.mxu0 %v3648
    %3755 = vmatprep.subr.bf16.mxu0 0
    %3756 = vmatpush2.bf16.msra.mxu0 0
    %3757 = vmatprep.subr.bf16.mxu0 0
    %3758 = vmatpush2.bf16.msra.mxu0 0
    %3759 = vmatprep.subr.bf16.mxu0 0
    %3760 = vmatpush2.bf16.msra.mxu0 0
    %3761 = vmatprep.subr.bf16.mxu0 0
    %3762 = vmatpush2.bf16.msra.mxu0 0
    %3763 = vmatprep.subr.bf16.mxu0 0
    %3764 = vmatpush2.bf16.msra.mxu0 0
    %3765 = vmatprep.subr.bf16.mxu0 0
    %3766 = vmatpush2.bf16.msra.mxu0 0
    %3767 = vmatprep.subr.bf16.mxu0 0
    %3768 = vmatpush2.bf16.msra.mxu0 0
    %3769 = vmatprep.subr.bf16.mxu0 0
    %3770 = vmatpush2.bf16.msra.mxu0 0
    %3771 = vmatprep.mubr.bf16.mxu0 0
    %3772 = vmatmul.mubr.bf16.gmra.mxu0 %v3655
    %v3773 = vpop.f32.mrf.mxu0
    %v3774 = vadd.f32 0.0, %v3773
    %v3775 = vpop.f32.mrf.mxu0
    %v3776 = vadd.f32 0.0, %v3775
    %v3777 = vpop.f32.mrf.mxu0
    %v3778 = vadd.f32 0.0, %v3777
    %v3779 = vpop.f32.mrf.mxu0
    %v3780 = vadd.f32 0.0, %v3779
    %3781 = vmatprep.mubr.bf16.mxu0 0
    %3782 = vmatmul.mubr.bf16.gmra.mxu0 %v3658
    %v3783 = vpop.f32.mrf.mxu0
    %v3784 = vadd.f32 0.0, %v3783
    %v3785 = vpop.f32.mrf.mxu0
    %v3786 = vadd.f32 0.0, %v3785
    %v3787 = vpop.f32.mrf.mxu0
    %v3788 = vadd.f32 0.0, %v3787
    %v3789 = vpop.f32.mrf.mxu0
    %v3790 = vadd.f32 0.0, %v3789
    %3791 = vmatprep.mubr.bf16.mxu0 0
    %3792 = vmatmul.mubr.bf16.gmra.mxu0 %v3661
    %v3793 = vpop.f32.mrf.mxu0
    %v3794 = vadd.f32 0.0, %v3793
    %v3795 = vpop.f32.mrf.mxu0
    %v3796 = vadd.f32 0.0, %v3795
    %v3797 = vpop.f32.mrf.mxu0
    %v3798 = vadd.f32 0.0, %v3797
    %v3799 = vpop.f32.mrf.mxu0
    %v3800 = vadd.f32 0.0, %v3799
    %3801 = vmatprep.mubr.bf16.mxu0 0
    %3802 = vmatmul.mubr.bf16.gmra.mxu0 %v3664
    %v3803 = vpop.f32.mrf.mxu0
    %v3804 = vadd.f32 0.0, %v3803
    %v3805 = vpop.f32.mrf.mxu0
    %v3806 = vadd.f32 0.0, %v3805
    %v3807 = vpop.f32.mrf.mxu0
    %v3808 = vadd.f32 0.0, %v3807
    %v3809 = vpop.f32.mrf.mxu0
    %v3810 = vadd.f32 0.0, %v3809
    %3811 = vdwg.mxu0
    %v3812 = vadd.f32 %v3482, %v3701
    %v3813 = vadd.f32 %v3484, %v3703
    %v3814 = vadd.f32 %v3555, %v3774
    %v3815 = vadd.f32 %v3557, %v3776
    %v3816 = vadd.f32 %v3486, %v3705
    %v3817 = vadd.f32 %v3488, %v3707
    %v3818 = vadd.f32 %v3559, %v3778
    %v3819 = vadd.f32 %v3561, %v3780
    %v3820 = vadd.f32 %v3492, %v3711
    %v3821 = vadd.f32 %v3494, %v3713
    %v3822 = vadd.f32 %v3565, %v3784
    %v3823 = vadd.f32 %v3567, %v3786
    %v3824 = vadd.f32 %v3496, %v3715
    %v3825 = vadd.f32 %v3498, %v3717
    %v3826 = vadd.f32 %v3569, %v3788
    %v3827 = vadd.f32 %v3571, %v3790
    %v3828 = vadd.f32 %v3502, %v3721
    %v3829 = vadd.f32 %v3504, %v3723
    %v3830 = vadd.f32 %v3575, %v3794
    %v3831 = vadd.f32 %v3577, %v3796
    %v3832 = vadd.f32 %v3506, %v3725
    %v3833 = vadd.f32 %v3508, %v3727
    %v3834 = vadd.f32 %v3579, %v3798
    %v3835 = vadd.f32 %v3581, %v3800
    %v3836 = vadd.f32 %v3512, %v3731
    %v3837 = vadd.f32 %v3514, %v3733
    %v3838 = vadd.f32 %v3585, %v3804
    %v3839 = vadd.f32 %v3587, %v3806
    %v3840 = vadd.f32 %v3516, %v3735
    %v3841 = vadd.f32 %v3518, %v3737
    %v3842 = vadd.f32 %v3589, %v3808
    %v3843 = vadd.f32 %v3591, %v3810
    %v3844 = vld [vmem:[#allocation2 + $0x60] sm:$0xff]
    %v3845 = vld [vmem:[#allocation2 + $0x68] sm:$0xff]
    %v3846 = vld [vmem:[#allocation2 + $0x70] sm:$0xff]
    %v3847 = vld [vmem:[#allocation2 + $0x78] sm:$0xff]
    %v3849 = vunpack.c.l.b16 %v3181
    %v3850 = vpack.c.b16 %v3849, %v3849
    %v3851 = vrot.slane %v3599, 1
    %v3852 = vrot.slane %v3600, 1
    %v3853 = vsel %vm779, %v3851, %v3852
    %v3854 = vrot.slane %v3601, 1
    %v3855 = vsel %vm779, %v3852, %v3854
    %v3856 = vrot.slane %v3602, 1
    %v3857 = vsel %vm779, %v3854, %v3856
    %v3858 = vrot.slane %v3850, 1
    %v3859 = vsel %vm779, %v3856, %v3858
    %v3864 = vunpack.c.l.b16 %v3844
    %v3865 = vunpack.c.h.b16 %v3844
    %v3866 = vunpack.c.l.b16 %v3845
    %v3867 = vunpack.c.h.b16 %v3845
    %v3868 = vunpack.c.l.b16 %v3846
    %v3869 = vunpack.c.h.b16 %v3846
    %v3870 = vunpack.c.l.b16 %v3847
    %v3871 = vunpack.c.h.b16 %v3847
    %v3872 = vpack.c.b16 %v3868, %v3864
    %v3873 = vpack.c.b16 %v3869, %v3865
    %v3874 = vpack.c.b16 %v3870, %v3866
    %v3875 = vpack.c.b16 %v3871, %v3867
    %v3881 = vsel %vm188, %v3853, 0
    %v3884 = vsel %vm188, %v3855, 0
    %v3887 = vsel %vm188, %v3857, 0
    %v3890 = vsel %vm188, %v3859, 0
    %3892 = vmatprep.subr.bf16.mxu0 0
    %3893 = vmatpush1.bf16.msra.mxu0 0
    %3894 = vmatprep.subr.bf16.mxu0 0
    %3895 = vmatpush1.bf16.msra.mxu0 0
    %3896 = vmatprep.subr.bf16.mxu0 0
    %3897 = vmatpush1.bf16.msra.mxu0 0
    %3898 = vmatprep.subr.bf16.mxu0 0
    %3899 = vmatpush1.bf16.msra.mxu0 0
    %3900 = vmatprep.subr.bf16.mxu0 0
    %3901 = vmatpush1.bf16.msra.mxu0 0
    %3902 = vmatprep.subr.bf16.mxu0 0
    %3903 = vmatpush1.bf16.msra.mxu0 0
    %3904 = vmatprep.subr.bf16.mxu0 0
    %3905 = vmatpush1.bf16.msra.mxu0 0
    %3906 = vmatprep.subr.bf16.mxu0 %v3873
    %3907 = vmatpush1.bf16.msra.mxu0 %v3872
    %3908 = vmatprep.subr.bf16.mxu0 0
    %3909 = vmatpush2.bf16.msra.mxu0 0
    %3910 = vmatprep.subr.bf16.mxu0 0
    %3911 = vmatpush2.bf16.msra.mxu0 0
    %3912 = vmatprep.subr.bf16.mxu0 0
    %3913 = vmatpush2.bf16.msra.mxu0 0
    %3914 = vmatprep.subr.bf16.mxu0 0
    %3915 = vmatpush2.bf16.msra.mxu0 0
    %3916 = vmatprep.subr.bf16.mxu0 0
    %3917 = vmatpush2.bf16.msra.mxu0 0
    %3918 = vmatprep.subr.bf16.mxu0 0
    %3919 = vmatpush2.bf16.msra.mxu0 0
    %3920 = vmatprep.subr.bf16.mxu0 0
    %3921 = vmatpush2.bf16.msra.mxu0 0
    %3922 = vmatprep.subr.bf16.mxu0 0
    %3923 = vmatpush2.bf16.msra.mxu0 0
    %3924 = vmatprep.mubr.bf16.mxu0 0
    %3925 = vmatmul.mubr.bf16.gmra.mxu0 %v3881
    %v3926 = vpop.f32.mrf.mxu0
    %v3927 = vadd.f32 0.0, %v3926
    %v3928 = vpop.f32.mrf.mxu0
    %v3929 = vadd.f32 0.0, %v3928
    %v3930 = vpop.f32.mrf.mxu0
    %v3931 = vadd.f32 0.0, %v3930
    %v3932 = vpop.f32.mrf.mxu0
    %v3933 = vadd.f32 0.0, %v3932
    %3934 = vmatprep.mubr.bf16.mxu0 0
    %3935 = vmatmul.mubr.bf16.gmra.mxu0 %v3884
    %v3936 = vpop.f32.mrf.mxu0
    %v3937 = vadd.f32 0.0, %v3936
    %v3938 = vpop.f32.mrf.mxu0
    %v3939 = vadd.f32 0.0, %v3938
    %v3940 = vpop.f32.mrf.mxu0
    %v3941 = vadd.f32 0.0, %v3940
    %v3942 = vpop.f32.mrf.mxu0
    %v3943 = vadd.f32 0.0, %v3942
    %3944 = vmatprep.mubr.bf16.mxu0 0
    %3945 = vmatmul.mubr.bf16.gmra.mxu0 %v3887
    %v3946 = vpop.f32.mrf.mxu0
    %v3947 = vadd.f32 0.0, %v3946
    %v3948 = vpop.f32.mrf.mxu0
    %v3949 = vadd.f32 0.0, %v3948
    %v3950 = vpop.f32.mrf.mxu0
    %v3951 = vadd.f32 0.0, %v3950
    %v3952 = vpop.f32.mrf.mxu0
    %v3953 = vadd.f32 0.0, %v3952
    %3954 = vmatprep.mubr.bf16.mxu0 0
    %3955 = vmatmul.mubr.bf16.gmra.mxu0 %v3890
    %v3956 = vpop.f32.mrf.mxu0
    %v3957 = vadd.f32 0.0, %v3956
    %v3958 = vpop.f32.mrf.mxu0
    %v3959 = vadd.f32 0.0, %v3958
    %v3960 = vpop.f32.mrf.mxu0
    %v3961 = vadd.f32 0.0, %v3960
    %v3962 = vpop.f32.mrf.mxu0
    %v3963 = vadd.f32 0.0, %v3962
    %3964 = vdwg.mxu0
    %3965 = vmatprep.subr.bf16.mxu0 0
    %3966 = vmatpush1.bf16.msra.mxu0 0
    %3967 = vmatprep.subr.bf16.mxu0 0
    %3968 = vmatpush1.bf16.msra.mxu0 0
    %3969 = vmatprep.subr.bf16.mxu0 0
    %3970 = vmatpush1.bf16.msra.mxu0 0
    %3971 = vmatprep.subr.bf16.mxu0 0
    %3972 = vmatpush1.bf16.msra.mxu0 0
    %3973 = vmatprep.subr.bf16.mxu0 0
    %3974 = vmatpush1.bf16.msra.mxu0 0
    %3975 = vmatprep.subr.bf16.mxu0 0
    %3976 = vmatpush1.bf16.msra.mxu0 0
    %3977 = vmatprep.subr.bf16.mxu0 0
    %3978 = vmatpush1.bf16.msra.mxu0 0
    %3979 = vmatprep.subr.bf16.mxu0 %v3875
    %3980 = vmatpush1.bf16.msra.mxu0 %v3874
    %3981 = vmatprep.subr.bf16.mxu0 0
    %3982 = vmatpush2.bf16.msra.mxu0 0
    %3983 = vmatprep.subr.bf16.mxu0 0
    %3984 = vmatpush2.bf16.msra.mxu0 0
    %3985 = vmatprep.subr.bf16.mxu0 0
    %3986 = vmatpush2.bf16.msra.mxu0 0
    %3987 = vmatprep.subr.bf16.mxu0 0
    %3988 = vmatpush2.bf16.msra.mxu0 0
    %3989 = vmatprep.subr.bf16.mxu0 0
    %3990 = vmatpush2.bf16.msra.mxu0 0
    %3991 = vmatprep.subr.bf16.mxu0 0
    %3992 = vmatpush2.bf16.msra.mxu0 0
    %3993 = vmatprep.subr.bf16.mxu0 0
    %3994 = vmatpush2.bf16.msra.mxu0 0
    %3995 = vmatprep.subr.bf16.mxu0 0
    %3996 = vmatpush2.bf16.msra.mxu0 0
    %3997 = vmatprep.mubr.bf16.mxu0 0
    %3998 = vmatmul.mubr.bf16.gmra.mxu0 %v3881
    %v3999 = vpop.f32.mrf.mxu0
    %v4000 = vadd.f32 0.0, %v3999
    %v4001 = vpop.f32.mrf.mxu0
    %v4002 = vadd.f32 0.0, %v4001
    %v4003 = vpop.f32.mrf.mxu0
    %v4004 = vadd.f32 0.0, %v4003
    %v4005 = vpop.f32.mrf.mxu0
    %v4006 = vadd.f32 0.0, %v4005
    %4007 = vmatprep.mubr.bf16.mxu0 0
    %4008 = vmatmul.mubr.bf16.gmra.mxu0 %v3884
    %v4009 = vpop.f32.mrf.mxu0
    %v4010 = vadd.f32 0.0, %v4009
    %v4011 = vpop.f32.mrf.mxu0
    %v4012 = vadd.f32 0.0, %v4011
    %v4013 = vpop.f32.mrf.mxu0
    %v4014 = vadd.f32 0.0, %v4013
    %v4015 = vpop.f32.mrf.mxu0
    %v4016 = vadd.f32 0.0, %v4015
    %4017 = vmatprep.mubr.bf16.mxu0 0
    %4018 = vmatmul.mubr.bf16.gmra.mxu0 %v3887
    %v4019 = vpop.f32.mrf.mxu0
    %v4020 = vadd.f32 0.0, %v4019
    %v4021 = vpop.f32.mrf.mxu0
    %v4022 = vadd.f32 0.0, %v4021
    %v4023 = vpop.f32.mrf.mxu0
    %v4024 = vadd.f32 0.0, %v4023
    %v4025 = vpop.f32.mrf.mxu0
    %v4026 = vadd.f32 0.0, %v4025
    %4027 = vmatprep.mubr.bf16.mxu0 0
    %4028 = vmatmul.mubr.bf16.gmra.mxu0 %v3890
    %v4029 = vpop.f32.mrf.mxu0
    %v4030 = vadd.f32 0.0, %v4029
    %v4031 = vpop.f32.mrf.mxu0
    %v4032 = vadd.f32 0.0, %v4031
    %v4033 = vpop.f32.mrf.mxu0
    %v4034 = vadd.f32 0.0, %v4033
    %v4035 = vpop.f32.mrf.mxu0
    %v4036 = vadd.f32 0.0, %v4035
    %4037 = vdwg.mxu0
    %v4038 = vadd.f32 %v3812, %v3927
    %v4039 = vadd.f32 %v3813, %v3929
    %v4040 = vadd.f32 %v3814, %v4000
    %v4041 = vadd.f32 %v3815, %v4002
    %v4042 = vadd.f32 %v3816, %v3931
    %v4043 = vadd.f32 %v3817, %v3933
    %v4044 = vadd.f32 %v3818, %v4004
    %v4045 = vadd.f32 %v3819, %v4006
    %v4046 = vadd.f32 %v3820, %v3937
    %v4047 = vadd.f32 %v3821, %v3939
    %v4048 = vadd.f32 %v3822, %v4010
    %v4049 = vadd.f32 %v3823, %v4012
    %v4050 = vadd.f32 %v3824, %v3941
    %v4051 = vadd.f32 %v3825, %v3943
    %v4052 = vadd.f32 %v3826, %v4014
    %v4053 = vadd.f32 %v3827, %v4016
    %v4054 = vadd.f32 %v3828, %v3947
    %v4055 = vadd.f32 %v3829, %v3949
    %v4056 = vadd.f32 %v3830, %v4020
    %v4057 = vadd.f32 %v3831, %v4022
    %v4058 = vadd.f32 %v3832, %v3951
    %v4059 = vadd.f32 %v3833, %v3953
    %v4060 = vadd.f32 %v3834, %v4024
    %v4061 = vadd.f32 %v3835, %v4026
    %v4062 = vadd.f32 %v3836, %v3957
    %v4063 = vadd.f32 %v3837, %v3959
    %v4064 = vadd.f32 %v3838, %v4030
    %v4065 = vadd.f32 %v3839, %v4032
    %v4066 = vadd.f32 %v3840, %v3961
    %v4067 = vadd.f32 %v3841, %v3963
    %v4068 = vadd.f32 %v3842, %v4034
    %v4069 = vadd.f32 %v3843, %v4036
    %v4070 = vadd.f32 %v4038, %v1003
    %v4071 = vadd.f32 %v4039, %v1007
    %v4072 = vadd.f32 %v4040, %v1011
    %v4073 = vadd.f32 %v4041, %v1015
    %v4074 = vadd.f32 %v4042, %v1003
    %v4075 = vadd.f32 %v4043, %v1007
    %v4076 = vadd.f32 %v4044, %v1011
    %v4077 = vadd.f32 %v4045, %v1015
    %v4078 = vadd.f32 %v4046, %v1003
    %v4079 = vadd.f32 %v4047, %v1007
    %v4080 = vadd.f32 %v4048, %v1011
    %v4081 = vadd.f32 %v4049, %v1015
    %v4082 = vadd.f32 %v4050, %v1003
    %v4083 = vadd.f32 %v4051, %v1007
    %v4084 = vadd.f32 %v4052, %v1011
    %v4085 = vadd.f32 %v4053, %v1015
    %v4086 = vadd.f32 %v4054, %v1003
    %v4087 = vadd.f32 %v4055, %v1007
    %v4088 = vadd.f32 %v4056, %v1011
    %v4089 = vadd.f32 %v4057, %v1015
    %v4090 = vadd.f32 %v4058, %v1003
    %v4091 = vadd.f32 %v4059, %v1007
    %v4092 = vadd.f32 %v4060, %v1011
    %v4093 = vadd.f32 %v4061, %v1015
    %v4094 = vadd.f32 %v4062, %v1003
    %v4095 = vadd.f32 %v4063, %v1007
    %v4096 = vadd.f32 %v4064, %v1011
    %v4097 = vadd.f32 %v4065, %v1015
    %v4098 = vadd.f32 %v4066, %v1003
    %v4099 = vadd.f32 %v4067, %v1007
    %v4100 = vadd.f32 %v4068, %v1011
    %v4101 = vadd.f32 %v4069, %v1015
    %v4102 = vmax.f32 %v4070, 0.0
    %v4103 = vmax.f32 %v4071, 0.0
    %v4104 = vmax.f32 %v4072, 0.0
    %v4105 = vmax.f32 %v4073, 0.0
    %v4106 = vmax.f32 %v4074, 0.0
    %v4107 = vmax.f32 %v4075, 0.0
    %v4108 = vmax.f32 %v4076, 0.0
    %v4109 = vmax.f32 %v4077, 0.0
    %v4110 = vmax.f32 %v4078, 0.0
    %v4111 = vmax.f32 %v4079, 0.0
    %v4112 = vmax.f32 %v4080, 0.0
    %v4113 = vmax.f32 %v4081, 0.0
    %v4114 = vmax.f32 %v4082, 0.0
    %v4115 = vmax.f32 %v4083, 0.0
    %v4116 = vmax.f32 %v4084, 0.0
    %v4117 = vmax.f32 %v4085, 0.0
    %v4118 = vmax.f32 %v4086, 0.0
    %v4119 = vmax.f32 %v4087, 0.0
    %v4120 = vmax.f32 %v4088, 0.0
    %v4121 = vmax.f32 %v4089, 0.0
    %v4122 = vmax.f32 %v4090, 0.0
    %v4123 = vmax.f32 %v4091, 0.0
    %v4124 = vmax.f32 %v4092, 0.0
    %v4125 = vmax.f32 %v4093, 0.0
    %v4126 = vmax.f32 %v4094, 0.0
    %v4127 = vmax.f32 %v4095, 0.0
    %v4128 = vmax.f32 %v4096, 0.0
    %v4129 = vmax.f32 %v4097, 0.0
    %v4130 = vmax.f32 %v4098, 0.0
    %v4131 = vmax.f32 %v4099, 0.0
    %v4132 = vmax.f32 %v4100, 0.0
    %v4133 = vmax.f32 %v4101, 0.0
    %v4134 = vmax.f32 %v4102, %v4103
    %v4135 = vmax.f32 %v4106, %v4107
    %v4136 = vmax.f32 %v4110, %v4111
    %v4137 = vmax.f32 %v4114, %v4115
    %v4138 = vmax.f32 %v4118, %v4119
    %v4139 = vmax.f32 %v4122, %v4123
    %v4140 = vmax.f32 %v4126, %v4127
    %v4141 = vmax.f32 %v4130, %v4131
    %v4142 = vmax.f32 %v4104, %v4105
    %v4143 = vmax.f32 %v4108, %v4109
    %v4144 = vmax.f32 %v4112, %v4113
    %v4145 = vmax.f32 %v4116, %v4117
    %v4146 = vmax.f32 %v4120, %v4121
    %v4147 = vmax.f32 %v4124, %v4125
    %v4148 = vmax.f32 %v4128, %v4129
    %v4149 = vmax.f32 %v4132, %v4133
    %v4150 = vmax.f32 %v4134, %v4142
    %v4151 = vmax.f32 %v4135, %v4143
    %v4152 = vmax.f32 %v4136, %v4144
    %v4153 = vmax.f32 %v4137, %v4145
    %v4154 = vmax.f32 %v4138, %v4146
    %v4155 = vmax.f32 %v4139, %v4147
    %v4156 = vmax.f32 %v4140, %v4148
    %v4157 = vmax.f32 %v4141, %v4149
    %v4158 = vmul.f32 %v4150, %v90
    %v4159 = vmul.f32 %v4151, %v91
    %v4160 = vmul.f32 %v4152, %v92
    %v4161 = vmul.f32 %v4153, %v93
    %v4162 = vmul.f32 %v4154, %v94
    %v4163 = vmul.f32 %v4155, %v95
    %v4164 = vmul.f32 %v4156, %v96
    %v4165 = vmul.f32 %v4157, %v97
    %v4174 = vrot.slane %v4158, 6
    %v4175 = vrot.slane %v4159, 6
    %v4176 = vsel %vm1124, %v4174, %v4175
    %v4177 = vrot.slane %v4160, 6
    %v4178 = vsel %vm1124, %v4175, %v4177
    %v4179 = vrot.slane %v4161, 6
    %v4180 = vsel %vm1124, %v4177, %v4179
    %v4181 = vrot.slane %v4162, 6
    %v4182 = vsel %vm1124, %v4179, %v4181
    %v4183 = vrot.slane %v4163, 6
    %v4184 = vsel %vm1124, %v4181, %v4183
    %v4185 = vrot.slane %v4164, 6
    %v4186 = vsel %vm1124, %v4183, %v4185
    %v4187 = vrot.slane %v4165, 6
    %v4188 = vsel %vm1124, %v4185, %v4187
    %v4198 = vsel %vm1124, 0.0, %v4174
    %v4199 = vsel %vm1150, %v4187, 0.0
    %v4200 = vpack.c.bf16 %v4198, 0.0
    %v4201 = vpack.c.bf16 %v4178, %v4176
    %v4202 = vpack.c.bf16 %v4182, %v4180
    %v4203 = vpack.c.bf16 %v4186, %v4184
    %v4204 = vpack.c.bf16 %v4199, %v4188
    %v4205 = vld [vmem:[#allocation6] sm:$0xff]
    %v4206 = vld [vmem:[#allocation6 + $0x8] sm:$0xff]
    %v4207 = vld [vmem:[#allocation6 + $0x10] sm:$0xff]
    %v4208 = vld [vmem:[#allocation6 + $0x18] sm:$0xff]
    %v4209 = vld [vmem:[#allocation6 + $0x20] sm:$0xff]
    %v4210 = vld [vmem:[#allocation6 + $0x28] sm:$0xff]
    %v4211 = vld [vmem:[#allocation6 + $0x30] sm:$0xff]
    %v4212 = vld [vmem:[#allocation6 + $0x38] sm:$0xff]
    %v4213 = vld [vmem:[#allocation6 + $0x40] sm:$0xff]
    %v4214 = vld [vmem:[#allocation6 + $0x48] sm:$0xff]
    %v4215 = vld [vmem:[#allocation6 + $0x50] sm:$0xff]
    %v4216 = vld [vmem:[#allocation6 + $0x58] sm:$0xff]
    %v4217 = vld [vmem:[#allocation6 + $0x60] sm:$0xff]
    %v4218 = vld [vmem:[#allocation6 + $0x68] sm:$0xff]
    %v4219 = vld [vmem:[#allocation6 + $0x70] sm:$0xff]
    %v4220 = vld [vmem:[#allocation6 + $0x78] sm:$0xff]
    %v4221 = vld [vmem:[#allocation6 + $0x80] sm:$0xff]
    %v4222 = vld [vmem:[#allocation6 + $0x88] sm:$0xff]
    %v4223 = vld [vmem:[#allocation6 + $0x90] sm:$0xff]
    %v4224 = vld [vmem:[#allocation6 + $0x98] sm:$0xff]
    %v4225 = vld [vmem:[#allocation6 + $0xa0] sm:$0xff]
    %v4226 = vld [vmem:[#allocation6 + $0xa8] sm:$0xff]
    %v4227 = vld [vmem:[#allocation6 + $0xb0] sm:$0xff]
    %v4228 = vld [vmem:[#allocation6 + $0xb8] sm:$0xff]
    %v4229 = vld [vmem:[#allocation6 + $0xc0] sm:$0xff]
    %v4230 = vld [vmem:[#allocation6 + $0xc8] sm:$0xff]
    %v4231 = vld [vmem:[#allocation6 + $0xd0] sm:$0xff]
    %v4232 = vld [vmem:[#allocation6 + $0xd8] sm:$0xff]
    %v4233 = vld [vmem:[#allocation6 + $0xe0] sm:$0xff]
    %v4234 = vld [vmem:[#allocation6 + $0xe8] sm:$0xff]
    %v4235 = vld [vmem:[#allocation6 + $0xf0] sm:$0xff]
    %v4236 = vld [vmem:[#allocation6 + $0xf8] sm:$0xff]
    %v4238 = vshrl.u32 %v4200, 16
    %v4240 = vshll.u32 %v4200, 16
    %v4242 = vrot.slane %v4240, 1
    %v4243 = vor.u32 %v4238, %v4242
    %v4245 = vshll.u32 %v4201, 16
    %v4247 = vrot.slane %v4245, 1
    %v4248 = vsel %vm136, %v4243, %v4247
    %v4249 = vshrl.u32 %v4201, 16
    %v4251 = vor.u32 %v4249, %v4247
    %v4253 = vshll.u32 %v4202, 16
    %v4255 = vrot.slane %v4253, 1
    %v4256 = vsel %vm136, %v4251, %v4255
    %v4257 = vshrl.u32 %v4202, 16
    %v4259 = vor.u32 %v4257, %v4255
    %v4261 = vshll.u32 %v4203, 16
    %v4263 = vrot.slane %v4261, 1
    %v4264 = vsel %vm136, %v4259, %v4263
    %v4265 = vshrl.u32 %v4203, 16
    %v4267 = vor.u32 %v4265, %v4263
    %v4288 = vunpack.c.l.b16 %v4221
    %v4289 = vunpack.c.h.b16 %v4221
    %v4290 = vunpack.c.l.b16 %v4222
    %v4291 = vunpack.c.h.b16 %v4222
    %v4292 = vunpack.c.l.b16 %v4223
    %v4293 = vunpack.c.h.b16 %v4223
    %v4294 = vunpack.c.l.b16 %v4224
    %v4295 = vunpack.c.h.b16 %v4224
    %v4296 = vunpack.c.l.b16 %v4225
    %v4297 = vunpack.c.h.b16 %v4225
    %v4298 = vunpack.c.l.b16 %v4226
    %v4299 = vunpack.c.h.b16 %v4226
    %v4300 = vunpack.c.l.b16 %v4227
    %v4301 = vunpack.c.h.b16 %v4227
    %v4302 = vunpack.c.l.b16 %v4228
    %v4303 = vunpack.c.h.b16 %v4228
    %v4304 = vunpack.c.l.b16 %v4229
    %v4305 = vunpack.c.h.b16 %v4229
    %v4306 = vunpack.c.l.b16 %v4230
    %v4307 = vunpack.c.h.b16 %v4230
    %v4308 = vunpack.c.l.b16 %v4231
    %v4309 = vunpack.c.h.b16 %v4231
    %v4310 = vunpack.c.l.b16 %v4232
    %v4311 = vunpack.c.h.b16 %v4232
    %v4312 = vunpack.c.l.b16 %v4233
    %v4313 = vunpack.c.h.b16 %v4233
    %v4314 = vunpack.c.l.b16 %v4234
    %v4315 = vunpack.c.h.b16 %v4234
    %v4316 = vunpack.c.l.b16 %v4235
    %v4317 = vunpack.c.h.b16 %v4235
    %v4318 = vunpack.c.l.b16 %v4236
    %v4319 = vunpack.c.h.b16 %v4236
    %v4320 = vpack.c.b16 %v4290, %v4288
    %v4321 = vpack.c.b16 %v4291, %v4289
    %v4322 = vpack.c.b16 %v4294, %v4292
    %v4323 = vpack.c.b16 %v4295, %v4293
    %v4324 = vpack.c.b16 %v4298, %v4296
    %v4325 = vpack.c.b16 %v4299, %v4297
    %v4326 = vpack.c.b16 %v4302, %v4300
    %v4327 = vpack.c.b16 %v4303, %v4301
    %v4328 = vpack.c.b16 %v4306, %v4304
    %v4329 = vpack.c.b16 %v4307, %v4305
    %v4330 = vpack.c.b16 %v4310, %v4308
    %v4331 = vpack.c.b16 %v4311, %v4309
    %v4332 = vpack.c.b16 %v4314, %v4312
    %v4333 = vpack.c.b16 %v4315, %v4313
    %v4334 = vpack.c.b16 %v4318, %v4316
    %v4335 = vpack.c.b16 %v4319, %v4317
    %4352 = vmatprep.subr.bf16.mxu0 %v4335
    %4353 = vmatpush1.bf16.msra.mxu0 %v4334
    %4354 = vmatprep.subr.bf16.mxu0 %v4333
    %4355 = vmatpush1.bf16.msra.mxu0 %v4332
    %4356 = vmatprep.subr.bf16.mxu0 %v4331
    %4357 = vmatpush1.bf16.msra.mxu0 %v4330
    %4358 = vmatprep.subr.bf16.mxu0 %v4329
    %4359 = vmatpush1.bf16.msra.mxu0 %v4328
    %4360 = vmatprep.subr.bf16.mxu0 %v4327
    %4361 = vmatpush1.bf16.msra.mxu0 %v4326
    %4362 = vmatprep.subr.bf16.mxu0 %v4325
    %4363 = vmatpush1.bf16.msra.mxu0 %v4324
    %4364 = vmatprep.subr.bf16.mxu0 %v4323
    %4365 = vmatpush1.bf16.msra.mxu0 %v4322
    %4366 = vmatprep.subr.bf16.mxu0 %v4321
    %4367 = vmatpush1.bf16.msra.mxu0 %v4320
    %4368 = vmatprep.subr.bf16.mxu0 0
    %4369 = vmatpush2.bf16.msra.mxu0 0
    %4370 = vmatprep.subr.bf16.mxu0 0
    %4371 = vmatpush2.bf16.msra.mxu0 0
    %4372 = vmatprep.subr.bf16.mxu0 0
    %4373 = vmatpush2.bf16.msra.mxu0 0
    %4374 = vmatprep.subr.bf16.mxu0 0
    %4375 = vmatpush2.bf16.msra.mxu0 0
    %4376 = vmatprep.subr.bf16.mxu0 0
    %4377 = vmatpush2.bf16.msra.mxu0 0
    %4378 = vmatprep.subr.bf16.mxu0 0
    %4379 = vmatpush2.bf16.msra.mxu0 0
    %4380 = vmatprep.subr.bf16.mxu0 0
    %4381 = vmatpush2.bf16.msra.mxu0 0
    %4382 = vmatprep.subr.bf16.mxu0 0
    %4383 = vmatpush2.bf16.msra.mxu0 0
    %4384 = vmatprep.mubr.bf16.mxu0 0
    %4385 = vmatmul.mubr.bf16.gmra.mxu0 %v4248
    %v4386 = vpop.f32.mrf.mxu0
    %v4387 = vadd.f32 0.0, %v4386
    %v4388 = vpop.f32.mrf.mxu0
    %v4389 = vadd.f32 0.0, %v4388
    %v4390 = vpop.f32.mrf.mxu0
    %v4391 = vadd.f32 0.0, %v4390
    %v4392 = vpop.f32.mrf.mxu0
    %v4393 = vadd.f32 0.0, %v4392
    %4394 = vmatprep.mubr.bf16.mxu0 0
    %4395 = vmatmul.mubr.bf16.gmra.mxu0 %v4256
    %v4396 = vpop.f32.mrf.mxu0
    %v4397 = vadd.f32 0.0, %v4396
    %v4398 = vpop.f32.mrf.mxu0
    %v4399 = vadd.f32 0.0, %v4398
    %v4400 = vpop.f32.mrf.mxu0
    %v4401 = vadd.f32 0.0, %v4400
    %v4402 = vpop.f32.mrf.mxu0
    %v4403 = vadd.f32 0.0, %v4402
    %4404 = vmatprep.mubr.bf16.mxu0 0
    %4405 = vmatmul.mubr.bf16.gmra.mxu0 %v4264
    %v4406 = vpop.f32.mrf.mxu0
    %v4407 = vadd.f32 0.0, %v4406
    %v4408 = vpop.f32.mrf.mxu0
    %v4409 = vadd.f32 0.0, %v4408
    %v4410 = vpop.f32.mrf.mxu0
    %v4411 = vadd.f32 0.0, %v4410
    %v4412 = vpop.f32.mrf.mxu0
    %v4413 = vadd.f32 0.0, %v4412
    %4414 = vmatprep.mubr.bf16.mxu0 0
    %4415 = vmatmul.mubr.bf16.gmra.mxu0 %v4267
    %v4416 = vpop.f32.mrf.mxu0
    %v4417 = vadd.f32 0.0, %v4416
    %v4418 = vpop.f32.mrf.mxu0
    %v4419 = vadd.f32 0.0, %v4418
    %v4420 = vpop.f32.mrf.mxu0
    %v4421 = vadd.f32 0.0, %v4420
    %v4422 = vpop.f32.mrf.mxu0
    %v4423 = vadd.f32 0.0, %v4422
    %4424 = vdwg.mxu0
    %v4441 = vunpack.c.l.b16 %v4205
    %v4442 = vunpack.c.h.b16 %v4205
    %v4443 = vunpack.c.l.b16 %v4206
    %v4444 = vunpack.c.h.b16 %v4206
    %v4445 = vunpack.c.l.b16 %v4207
    %v4446 = vunpack.c.h.b16 %v4207
    %v4447 = vunpack.c.l.b16 %v4208
    %v4448 = vunpack.c.h.b16 %v4208
    %v4449 = vunpack.c.l.b16 %v4209
    %v4450 = vunpack.c.h.b16 %v4209
    %v4451 = vunpack.c.l.b16 %v4210
    %v4452 = vunpack.c.h.b16 %v4210
    %v4453 = vunpack.c.l.b16 %v4211
    %v4454 = vunpack.c.h.b16 %v4211
    %v4455 = vunpack.c.l.b16 %v4212
    %v4456 = vunpack.c.h.b16 %v4212
    %v4457 = vunpack.c.l.b16 %v4213
    %v4458 = vunpack.c.h.b16 %v4213
    %v4459 = vunpack.c.l.b16 %v4214
    %v4460 = vunpack.c.h.b16 %v4214
    %v4461 = vunpack.c.l.b16 %v4215
    %v4462 = vunpack.c.h.b16 %v4215
    %v4463 = vunpack.c.l.b16 %v4216
    %v4464 = vunpack.c.h.b16 %v4216
    %v4465 = vunpack.c.l.b16 %v4217
    %v4466 = vunpack.c.h.b16 %v4217
    %v4467 = vunpack.c.l.b16 %v4218
    %v4468 = vunpack.c.h.b16 %v4218
    %v4469 = vunpack.c.l.b16 %v4219
    %v4470 = vunpack.c.h.b16 %v4219
    %v4471 = vunpack.c.l.b16 %v4220
    %v4472 = vunpack.c.h.b16 %v4220
    %v4473 = vpack.c.b16 %v4443, %v4441
    %v4474 = vpack.c.b16 %v4444, %v4442
    %v4475 = vpack.c.b16 %v4447, %v4445
    %v4476 = vpack.c.b16 %v4448, %v4446
    %v4477 = vpack.c.b16 %v4451, %v4449
    %v4478 = vpack.c.b16 %v4452, %v4450
    %v4479 = vpack.c.b16 %v4455, %v4453
    %v4480 = vpack.c.b16 %v4456, %v4454
    %v4481 = vpack.c.b16 %v4459, %v4457
    %v4482 = vpack.c.b16 %v4460, %v4458
    %v4483 = vpack.c.b16 %v4463, %v4461
    %v4484 = vpack.c.b16 %v4464, %v4462
    %v4485 = vpack.c.b16 %v4467, %v4465
    %v4486 = vpack.c.b16 %v4468, %v4466
    %v4487 = vpack.c.b16 %v4471, %v4469
    %v4488 = vpack.c.b16 %v4472, %v4470
    %4505 = vmatprep.subr.bf16.mxu0 %v4488
    %4506 = vmatpush1.bf16.msra.mxu0 %v4487
    %4507 = vmatprep.subr.bf16.mxu0 %v4486
    %4508 = vmatpush1.bf16.msra.mxu0 %v4485
    %4509 = vmatprep.subr.bf16.mxu0 %v4484
    %4510 = vmatpush1.bf16.msra.mxu0 %v4483
    %4511 = vmatprep.subr.bf16.mxu0 %v4482
    %4512 = vmatpush1.bf16.msra.mxu0 %v4481
    %4513 = vmatprep.subr.bf16.mxu0 %v4480
    %4514 = vmatpush1.bf16.msra.mxu0 %v4479
    %4515 = vmatprep.subr.bf16.mxu0 %v4478
    %4516 = vmatpush1.bf16.msra.mxu0 %v4477
    %4517 = vmatprep.subr.bf16.mxu0 %v4476
    %4518 = vmatpush1.bf16.msra.mxu0 %v4475
    %4519 = vmatprep.subr.bf16.mxu0 %v4474
    %4520 = vmatpush1.bf16.msra.mxu0 %v4473
    %4521 = vmatprep.subr.bf16.mxu0 0
    %4522 = vmatpush2.bf16.msra.mxu0 0
    %4523 = vmatprep.subr.bf16.mxu0 0
    %4524 = vmatpush2.bf16.msra.mxu0 0
    %4525 = vmatprep.subr.bf16.mxu0 0
    %4526 = vmatpush2.bf16.msra.mxu0 0
    %4527 = vmatprep.subr.bf16.mxu0 0
    %4528 = vmatpush2.bf16.msra.mxu0 0
    %4529 = vmatprep.subr.bf16.mxu0 0
    %4530 = vmatpush2.bf16.msra.mxu0 0
    %4531 = vmatprep.subr.bf16.mxu0 0
    %4532 = vmatpush2.bf16.msra.mxu0 0
    %4533 = vmatprep.subr.bf16.mxu0 0
    %4534 = vmatpush2.bf16.msra.mxu0 0
    %4535 = vmatprep.subr.bf16.mxu0 0
    %4536 = vmatpush2.bf16.msra.mxu0 0
    %4537 = vmatprep.mubr.bf16.mxu0 0
    %4538 = vmatmul.mubr.bf16.gmra.mxu0 %v4200
    %v4539 = vpop.f32.mrf.mxu0
    %v4540 = vadd.f32 %v4387, %v4539
    %v4541 = vpop.f32.mrf.mxu0
    %v4542 = vadd.f32 %v4389, %v4541
    %v4543 = vpop.f32.mrf.mxu0
    %v4544 = vadd.f32 %v4391, %v4543
    %v4545 = vpop.f32.mrf.mxu0
    %v4546 = vadd.f32 %v4393, %v4545
    %4547 = vmatprep.mubr.bf16.mxu0 0
    %4548 = vmatmul.mubr.bf16.gmra.mxu0 %v4201
    %v4549 = vpop.f32.mrf.mxu0
    %v4550 = vadd.f32 %v4397, %v4549
    %v4551 = vpop.f32.mrf.mxu0
    %v4552 = vadd.f32 %v4399, %v4551
    %v4553 = vpop.f32.mrf.mxu0
    %v4554 = vadd.f32 %v4401, %v4553
    %v4555 = vpop.f32.mrf.mxu0
    %v4556 = vadd.f32 %v4403, %v4555
    %4557 = vmatprep.mubr.bf16.mxu0 0
    %4558 = vmatmul.mubr.bf16.gmra.mxu0 %v4202
    %v4559 = vpop.f32.mrf.mxu0
    %v4560 = vadd.f32 %v4407, %v4559
    %v4561 = vpop.f32.mrf.mxu0
    %v4562 = vadd.f32 %v4409, %v4561
    %v4563 = vpop.f32.mrf.mxu0
    %v4564 = vadd.f32 %v4411, %v4563
    %v4565 = vpop.f32.mrf.mxu0
    %v4566 = vadd.f32 %v4413, %v4565
    %4567 = vmatprep.mubr.bf16.mxu0 0
    %4568 = vmatmul.mubr.bf16.gmra.mxu0 %v4203
    %v4569 = vpop.f32.mrf.mxu0
    %v4570 = vadd.f32 %v4417, %v4569
    %v4571 = vpop.f32.mrf.mxu0
    %v4572 = vadd.f32 %v4419, %v4571
    %v4573 = vpop.f32.mrf.mxu0
    %v4574 = vadd.f32 %v4421, %v4573
    %v4575 = vpop.f32.mrf.mxu0
    %v4576 = vadd.f32 %v4423, %v4575
    %4577 = vdwg.mxu0
    %v4578 = vld [vmem:[#allocation6 + $0x100] sm:$0xff]
    %v4579 = vld [vmem:[#allocation6 + $0x108] sm:$0xff]
    %v4580 = vld [vmem:[#allocation6 + $0x110] sm:$0xff]
    %v4581 = vld [vmem:[#allocation6 + $0x118] sm:$0xff]
    %v4582 = vld [vmem:[#allocation6 + $0x120] sm:$0xff]
    %v4583 = vld [vmem:[#allocation6 + $0x128] sm:$0xff]
    %v4584 = vld [vmem:[#allocation6 + $0x130] sm:$0xff]
    %v4585 = vld [vmem:[#allocation6 + $0x138] sm:$0xff]
    %v4586 = vld [vmem:[#allocation6 + $0x140] sm:$0xff]
    %v4587 = vld [vmem:[#allocation6 + $0x148] sm:$0xff]
    %v4588 = vld [vmem:[#allocation6 + $0x150] sm:$0xff]
    %v4589 = vld [vmem:[#allocation6 + $0x158] sm:$0xff]
    %v4590 = vld [vmem:[#allocation6 + $0x160] sm:$0xff]
    %v4591 = vld [vmem:[#allocation6 + $0x168] sm:$0xff]
    %v4592 = vld [vmem:[#allocation6 + $0x170] sm:$0xff]
    %v4593 = vld [vmem:[#allocation6 + $0x178] sm:$0xff]
    %v4599 = vrot.slane %v4200, 1
    %v4600 = vrot.slane %v4201, 1
    %v4601 = vsel %vm779, %v4599, %v4600
    %v4602 = vrot.slane %v4202, 1
    %v4603 = vsel %vm779, %v4600, %v4602
    %v4604 = vrot.slane %v4203, 1
    %v4605 = vsel %vm779, %v4602, %v4604
    %v4606 = vrot.slane %v4204, 1
    %v4607 = vsel %vm779, %v4604, %v4606
    %v4628 = vunpack.c.l.b16 %v4578
    %v4629 = vunpack.c.h.b16 %v4578
    %v4630 = vunpack.c.l.b16 %v4579
    %v4631 = vunpack.c.h.b16 %v4579
    %v4632 = vunpack.c.l.b16 %v4580
    %v4633 = vunpack.c.h.b16 %v4580
    %v4634 = vunpack.c.l.b16 %v4581
    %v4635 = vunpack.c.h.b16 %v4581
    %v4636 = vunpack.c.l.b16 %v4582
    %v4637 = vunpack.c.h.b16 %v4582
    %v4638 = vunpack.c.l.b16 %v4583
    %v4639 = vunpack.c.h.b16 %v4583
    %v4640 = vunpack.c.l.b16 %v4584
    %v4641 = vunpack.c.h.b16 %v4584
    %v4642 = vunpack.c.l.b16 %v4585
    %v4643 = vunpack.c.h.b16 %v4585
    %v4644 = vunpack.c.l.b16 %v4586
    %v4645 = vunpack.c.h.b16 %v4586
    %v4646 = vunpack.c.l.b16 %v4587
    %v4647 = vunpack.c.h.b16 %v4587
    %v4648 = vunpack.c.l.b16 %v4588
    %v4649 = vunpack.c.h.b16 %v4588
    %v4650 = vunpack.c.l.b16 %v4589
    %v4651 = vunpack.c.h.b16 %v4589
    %v4652 = vunpack.c.l.b16 %v4590
    %v4653 = vunpack.c.h.b16 %v4590
    %v4654 = vunpack.c.l.b16 %v4591
    %v4655 = vunpack.c.h.b16 %v4591
    %v4656 = vunpack.c.l.b16 %v4592
    %v4657 = vunpack.c.h.b16 %v4592
    %v4658 = vunpack.c.l.b16 %v4593
    %v4659 = vunpack.c.h.b16 %v4593
    %v4660 = vpack.c.b16 %v4630, %v4628
    %v4661 = vpack.c.b16 %v4631, %v4629
    %v4662 = vpack.c.b16 %v4634, %v4632
    %v4663 = vpack.c.b16 %v4635, %v4633
    %v4664 = vpack.c.b16 %v4638, %v4636
    %v4665 = vpack.c.b16 %v4639, %v4637
    %v4666 = vpack.c.b16 %v4642, %v4640
    %v4667 = vpack.c.b16 %v4643, %v4641
    %v4668 = vpack.c.b16 %v4646, %v4644
    %v4669 = vpack.c.b16 %v4647, %v4645
    %v4670 = vpack.c.b16 %v4650, %v4648
    %v4671 = vpack.c.b16 %v4651, %v4649
    %v4672 = vpack.c.b16 %v4654, %v4652
    %v4673 = vpack.c.b16 %v4655, %v4653
    %v4674 = vpack.c.b16 %v4658, %v4656
    %v4675 = vpack.c.b16 %v4659, %v4657
    %4692 = vmatprep.subr.bf16.mxu0 %v4675
    %4693 = vmatpush1.bf16.msra.mxu0 %v4674
    %4694 = vmatprep.subr.bf16.mxu0 %v4673
    %4695 = vmatpush1.bf16.msra.mxu0 %v4672
    %4696 = vmatprep.subr.bf16.mxu0 %v4671
    %4697 = vmatpush1.bf16.msra.mxu0 %v4670
    %4698 = vmatprep.subr.bf16.mxu0 %v4669
    %4699 = vmatpush1.bf16.msra.mxu0 %v4668
    %4700 = vmatprep.subr.bf16.mxu0 %v4667
    %4701 = vmatpush1.bf16.msra.mxu0 %v4666
    %4702 = vmatprep.subr.bf16.mxu0 %v4665
    %4703 = vmatpush1.bf16.msra.mxu0 %v4664
    %4704 = vmatprep.subr.bf16.mxu0 %v4663
    %4705 = vmatpush1.bf16.msra.mxu0 %v4662
    %4706 = vmatprep.subr.bf16.mxu0 %v4661
    %4707 = vmatpush1.bf16.msra.mxu0 %v4660
    %4708 = vmatprep.subr.bf16.mxu0 0
    %4709 = vmatpush2.bf16.msra.mxu0 0
    %4710 = vmatprep.subr.bf16.mxu0 0
    %4711 = vmatpush2.bf16.msra.mxu0 0
    %4712 = vmatprep.subr.bf16.mxu0 0
    %4713 = vmatpush2.bf16.msra.mxu0 0
    %4714 = vmatprep.subr.bf16.mxu0 0
    %4715 = vmatpush2.bf16.msra.mxu0 0
    %4716 = vmatprep.subr.bf16.mxu0 0
    %4717 = vmatpush2.bf16.msra.mxu0 0
    %4718 = vmatprep.subr.bf16.mxu0 0
    %4719 = vmatpush2.bf16.msra.mxu0 0
    %4720 = vmatprep.subr.bf16.mxu0 0
    %4721 = vmatpush2.bf16.msra.mxu0 0
    %4722 = vmatprep.subr.bf16.mxu0 0
    %4723 = vmatpush2.bf16.msra.mxu0 0
    %4724 = vmatprep.mubr.bf16.mxu0 0
    %4725 = vmatmul.mubr.bf16.gmra.mxu0 %v4601
    %v4726 = vpop.f32.mrf.mxu0
    %v4727 = vadd.f32 0.0, %v4726
    %v4728 = vpop.f32.mrf.mxu0
    %v4729 = vadd.f32 0.0, %v4728
    %v4730 = vpop.f32.mrf.mxu0
    %v4731 = vadd.f32 0.0, %v4730
    %v4732 = vpop.f32.mrf.mxu0
    %v4733 = vadd.f32 0.0, %v4732
    %4734 = vmatprep.mubr.bf16.mxu0 0
    %4735 = vmatmul.mubr.bf16.gmra.mxu0 %v4603
    %v4736 = vpop.f32.mrf.mxu0
    %v4737 = vadd.f32 0.0, %v4736
    %v4738 = vpop.f32.mrf.mxu0
    %v4739 = vadd.f32 0.0, %v4738
    %v4740 = vpop.f32.mrf.mxu0
    %v4741 = vadd.f32 0.0, %v4740
    %v4742 = vpop.f32.mrf.mxu0
    %v4743 = vadd.f32 0.0, %v4742
    %4744 = vmatprep.mubr.bf16.mxu0 0
    %4745 = vmatmul.mubr.bf16.gmra.mxu0 %v4605
    %v4746 = vpop.f32.mrf.mxu0
    %v4747 = vadd.f32 0.0, %v4746
    %v4748 = vpop.f32.mrf.mxu0
    %v4749 = vadd.f32 0.0, %v4748
    %v4750 = vpop.f32.mrf.mxu0
    %v4751 = vadd.f32 0.0, %v4750
    %v4752 = vpop.f32.mrf.mxu0
    %v4753 = vadd.f32 0.0, %v4752
    %4754 = vmatprep.mubr.bf16.mxu0 0
    %4755 = vmatmul.mubr.bf16.gmra.mxu0 %v4607
    %v4756 = vpop.f32.mrf.mxu0
    %v4757 = vadd.f32 0.0, %v4756
    %v4758 = vpop.f32.mrf.mxu0
    %v4759 = vadd.f32 0.0, %v4758
    %v4760 = vpop.f32.mrf.mxu0
    %v4761 = vadd.f32 0.0, %v4760
    %v4762 = vpop.f32.mrf.mxu0
    %v4763 = vadd.f32 0.0, %v4762
    %4764 = vdwg.mxu0
    %v4765 = vadd.f32 %v4540, %v4727
    %v4766 = vadd.f32 %v4542, %v4729
    %v4767 = vadd.f32 %v4544, %v4731
    %v4768 = vadd.f32 %v4546, %v4733
    %v4769 = vadd.f32 %v4550, %v4737
    %v4770 = vadd.f32 %v4552, %v4739
    %v4771 = vadd.f32 %v4554, %v4741
    %v4772 = vadd.f32 %v4556, %v4743
    %v4773 = vadd.f32 %v4560, %v4747
    %v4774 = vadd.f32 %v4562, %v4749
    %v4775 = vadd.f32 %v4564, %v4751
    %v4776 = vadd.f32 %v4566, %v4753
    %v4777 = vadd.f32 %v4570, %v4757
    %v4778 = vadd.f32 %v4572, %v4759
    %v4779 = vadd.f32 %v4574, %v4761
    %v4780 = vadd.f32 %v4576, %v4763
    %v4781 = vld [vmem:[#allocation6 + $0x180] sm:$0xff]
    %v4782 = vld [vmem:[#allocation6 + $0x188] sm:$0xff]
    %v4783 = vld [vmem:[#allocation6 + $0x190] sm:$0xff]
    %v4784 = vld [vmem:[#allocation6 + $0x198] sm:$0xff]
    %v4785 = vld [vmem:[#allocation6 + $0x1a0] sm:$0xff]
    %v4786 = vld [vmem:[#allocation6 + $0x1a8] sm:$0xff]
    %v4787 = vld [vmem:[#allocation6 + $0x1b0] sm:$0xff]
    %v4788 = vld [vmem:[#allocation6 + $0x1b8] sm:$0xff]
    %v4789 = vld [vmem:[#allocation6 + $0x1c0] sm:$0xff]
    %v4790 = vld [vmem:[#allocation6 + $0x1c8] sm:$0xff]
    %v4791 = vld [vmem:[#allocation6 + $0x1d0] sm:$0xff]
    %v4792 = vld [vmem:[#allocation6 + $0x1d8] sm:$0xff]
    %v4793 = vld [vmem:[#allocation6 + $0x1e0] sm:$0xff]
    %v4794 = vld [vmem:[#allocation6 + $0x1e8] sm:$0xff]
    %v4795 = vld [vmem:[#allocation6 + $0x1f0] sm:$0xff]
    %v4796 = vld [vmem:[#allocation6 + $0x1f8] sm:$0xff]
    %v4797 = vrot.slane %v4238, 4
    %v4798 = vrot.slane %v4240, 5
    %v4799 = vor.u32 %v4797, %v4798
    %v4800 = vrot.slane %v4249, 4
    %v4801 = vrot.slane %v4245, 5
    %v4802 = vor.u32 %v4800, %v4801
    %v4803 = vsel %vm1750, %v4799, %v4802
    %v4804 = vrot.slane %v4257, 4
    %v4805 = vrot.slane %v4253, 5
    %v4806 = vor.u32 %v4804, %v4805
    %v4807 = vsel %vm1750, %v4802, %v4806
    %v4808 = vrot.slane %v4265, 4
    %v4809 = vrot.slane %v4261, 5
    %v4810 = vor.u32 %v4808, %v4809
    %v4811 = vsel %vm1750, %v4806, %v4810
    %v4813 = vshrl.u32 %v4204, 16
    %v4815 = vrot.slane %v4813, 4
    %v4816 = vshll.u32 %v4204, 16
    %v4818 = vrot.slane %v4816, 5
    %v4819 = vor.u32 %v4815, %v4818
    %v4820 = vsel %vm1750, %v4810, %v4819
    %v4841 = vunpack.c.l.b16 %v4781
    %v4842 = vunpack.c.h.b16 %v4781
    %v4843 = vunpack.c.l.b16 %v4782
    %v4844 = vunpack.c.h.b16 %v4782
    %v4845 = vunpack.c.l.b16 %v4783
    %v4846 = vunpack.c.h.b16 %v4783
    %v4847 = vunpack.c.l.b16 %v4784
    %v4848 = vunpack.c.h.b16 %v4784
    %v4849 = vunpack.c.l.b16 %v4785
    %v4850 = vunpack.c.h.b16 %v4785
    %v4851 = vunpack.c.l.b16 %v4786
    %v4852 = vunpack.c.h.b16 %v4786
    %v4853 = vunpack.c.l.b16 %v4787
    %v4854 = vunpack.c.h.b16 %v4787
    %v4855 = vunpack.c.l.b16 %v4788
    %v4856 = vunpack.c.h.b16 %v4788
    %v4857 = vunpack.c.l.b16 %v4789
    %v4858 = vunpack.c.h.b16 %v4789
    %v4859 = vunpack.c.l.b16 %v4790
    %v4860 = vunpack.c.h.b16 %v4790
    %v4861 = vunpack.c.l.b16 %v4791
    %v4862 = vunpack.c.h.b16 %v4791
    %v4863 = vunpack.c.l.b16 %v4792
    %v4864 = vunpack.c.h.b16 %v4792
    %v4865 = vunpack.c.l.b16 %v4793
    %v4866 = vunpack.c.h.b16 %v4793
    %v4867 = vunpack.c.l.b16 %v4794
    %v4868 = vunpack.c.h.b16 %v4794
    %v4869 = vunpack.c.l.b16 %v4795
    %v4870 = vunpack.c.h.b16 %v4795
    %v4871 = vunpack.c.l.b16 %v4796
    %v4872 = vunpack.c.h.b16 %v4796
    %v4873 = vpack.c.b16 %v4843, %v4841
    %v4874 = vpack.c.b16 %v4844, %v4842
    %v4875 = vpack.c.b16 %v4847, %v4845
    %v4876 = vpack.c.b16 %v4848, %v4846
    %v4877 = vpack.c.b16 %v4851, %v4849
    %v4878 = vpack.c.b16 %v4852, %v4850
    %v4879 = vpack.c.b16 %v4855, %v4853
    %v4880 = vpack.c.b16 %v4856, %v4854
    %v4881 = vpack.c.b16 %v4859, %v4857
    %v4882 = vpack.c.b16 %v4860, %v4858
    %v4883 = vpack.c.b16 %v4863, %v4861
    %v4884 = vpack.c.b16 %v4864, %v4862
    %v4885 = vpack.c.b16 %v4867, %v4865
    %v4886 = vpack.c.b16 %v4868, %v4866
    %v4887 = vpack.c.b16 %v4871, %v4869
    %v4888 = vpack.c.b16 %v4872, %v4870
    %4905 = vmatprep.subr.bf16.mxu0 %v4888
    %4906 = vmatpush1.bf16.msra.mxu0 %v4887
    %4907 = vmatprep.subr.bf16.mxu0 %v4886
    %4908 = vmatpush1.bf16.msra.mxu0 %v4885
    %4909 = vmatprep.subr.bf16.mxu0 %v4884
    %4910 = vmatpush1.bf16.msra.mxu0 %v4883
    %4911 = vmatprep.subr.bf16.mxu0 %v4882
    %4912 = vmatpush1.bf16.msra.mxu0 %v4881
    %4913 = vmatprep.subr.bf16.mxu0 %v4880
    %4914 = vmatpush1.bf16.msra.mxu0 %v4879
    %4915 = vmatprep.subr.bf16.mxu0 %v4878
    %4916 = vmatpush1.bf16.msra.mxu0 %v4877
    %4917 = vmatprep.subr.bf16.mxu0 %v4876
    %4918 = vmatpush1.bf16.msra.mxu0 %v4875
    %4919 = vmatprep.subr.bf16.mxu0 %v4874
    %4920 = vmatpush1.bf16.msra.mxu0 %v4873
    %4921 = vmatprep.subr.bf16.mxu0 0
    %4922 = vmatpush2.bf16.msra.mxu0 0
    %4923 = vmatprep.subr.bf16.mxu0 0
    %4924 = vmatpush2.bf16.msra.mxu0 0
    %4925 = vmatprep.subr.bf16.mxu0 0
    %4926 = vmatpush2.bf16.msra.mxu0 0
    %4927 = vmatprep.subr.bf16.mxu0 0
    %4928 = vmatpush2.bf16.msra.mxu0 0
    %4929 = vmatprep.subr.bf16.mxu0 0
    %4930 = vmatpush2.bf16.msra.mxu0 0
    %4931 = vmatprep.subr.bf16.mxu0 0
    %4932 = vmatpush2.bf16.msra.mxu0 0
    %4933 = vmatprep.subr.bf16.mxu0 0
    %4934 = vmatpush2.bf16.msra.mxu0 0
    %4935 = vmatprep.subr.bf16.mxu0 0
    %4936 = vmatpush2.bf16.msra.mxu0 0
    %4937 = vmatprep.mubr.bf16.mxu0 0
    %4938 = vmatmul.mubr.bf16.gmra.mxu0 %v4803
    %v4939 = vpop.f32.mrf.mxu0
    %v4940 = vadd.f32 0.0, %v4939
    %v4941 = vpop.f32.mrf.mxu0
    %v4942 = vadd.f32 0.0, %v4941
    %v4943 = vpop.f32.mrf.mxu0
    %v4944 = vadd.f32 0.0, %v4943
    %v4945 = vpop.f32.mrf.mxu0
    %v4946 = vadd.f32 0.0, %v4945
    %4947 = vmatprep.mubr.bf16.mxu0 0
    %4948 = vmatmul.mubr.bf16.gmra.mxu0 %v4807
    %v4949 = vpop.f32.mrf.mxu0
    %v4950 = vadd.f32 0.0, %v4949
    %v4951 = vpop.f32.mrf.mxu0
    %v4952 = vadd.f32 0.0, %v4951
    %v4953 = vpop.f32.mrf.mxu0
    %v4954 = vadd.f32 0.0, %v4953
    %v4955 = vpop.f32.mrf.mxu0
    %v4956 = vadd.f32 0.0, %v4955
    %4957 = vmatprep.mubr.bf16.mxu0 0
    %4958 = vmatmul.mubr.bf16.gmra.mxu0 %v4811
    %v4959 = vpop.f32.mrf.mxu0
    %v4960 = vadd.f32 0.0, %v4959
    %v4961 = vpop.f32.mrf.mxu0
    %v4962 = vadd.f32 0.0, %v4961
    %v4963 = vpop.f32.mrf.mxu0
    %v4964 = vadd.f32 0.0, %v4963
    %v4965 = vpop.f32.mrf.mxu0
    %v4966 = vadd.f32 0.0, %v4965
    %4967 = vmatprep.mubr.bf16.mxu0 0
    %4968 = vmatmul.mubr.bf16.gmra.mxu0 %v4820
    %v4969 = vpop.f32.mrf.mxu0
    %v4970 = vadd.f32 0.0, %v4969
    %v4971 = vpop.f32.mrf.mxu0
    %v4972 = vadd.f32 0.0, %v4971
    %v4973 = vpop.f32.mrf.mxu0
    %v4974 = vadd.f32 0.0, %v4973
    %v4975 = vpop.f32.mrf.mxu0
    %v4976 = vadd.f32 0.0, %v4975
    %4977 = vdwg.mxu0
    %v4978 = vadd.f32 %v4765, %v4940
    %v4979 = vadd.f32 %v4766, %v4942
    %v4980 = vadd.f32 %v4767, %v4944
    %v4981 = vadd.f32 %v4768, %v4946
    %v4982 = vadd.f32 %v4769, %v4950
    %v4983 = vadd.f32 %v4770, %v4952
    %v4984 = vadd.f32 %v4771, %v4954
    %v4985 = vadd.f32 %v4772, %v4956
    %v4986 = vadd.f32 %v4773, %v4960
    %v4987 = vadd.f32 %v4774, %v4962
    %v4988 = vadd.f32 %v4775, %v4964
    %v4989 = vadd.f32 %v4776, %v4966
    %v4990 = vadd.f32 %v4777, %v4970
    %v4991 = vadd.f32 %v4778, %v4972
    %v4992 = vadd.f32 %v4779, %v4974
    %v4993 = vadd.f32 %v4780, %v4976
    %v4994 = vld [vmem:[#allocation6 + $0x200] sm:$0xff]
    %v4995 = vld [vmem:[#allocation6 + $0x208] sm:$0xff]
    %v4996 = vld [vmem:[#allocation6 + $0x210] sm:$0xff]
    %v4997 = vld [vmem:[#allocation6 + $0x218] sm:$0xff]
    %v4998 = vld [vmem:[#allocation6 + $0x220] sm:$0xff]
    %v4999 = vld [vmem:[#allocation6 + $0x228] sm:$0xff]
    %v5000 = vld [vmem:[#allocation6 + $0x230] sm:$0xff]
    %v5001 = vld [vmem:[#allocation6 + $0x238] sm:$0xff]
    %v5002 = vld [vmem:[#allocation6 + $0x240] sm:$0xff]
    %v5003 = vld [vmem:[#allocation6 + $0x248] sm:$0xff]
    %v5004 = vld [vmem:[#allocation6 + $0x250] sm:$0xff]
    %v5005 = vld [vmem:[#allocation6 + $0x258] sm:$0xff]
    %v5006 = vld [vmem:[#allocation6 + $0x260] sm:$0xff]
    %v5007 = vld [vmem:[#allocation6 + $0x268] sm:$0xff]
    %v5008 = vld [vmem:[#allocation6 + $0x270] sm:$0xff]
    %v5009 = vld [vmem:[#allocation6 + $0x278] sm:$0xff]
    %v5010 = vrot.slane %v4200, 5
    %v5011 = vrot.slane %v4201, 5
    %v5012 = vsel %vm1964, %v5010, %v5011
    %v5013 = vrot.slane %v4202, 5
    %v5014 = vsel %vm1964, %v5011, %v5013
    %v5015 = vrot.slane %v4203, 5
    %v5016 = vsel %vm1964, %v5013, %v5015
    %v5017 = vrot.slane %v4204, 5
    %v5018 = vsel %vm1964, %v5015, %v5017
    %v5039 = vunpack.c.l.b16 %v4994
    %v5040 = vunpack.c.h.b16 %v4994
    %v5041 = vunpack.c.l.b16 %v4995
    %v5042 = vunpack.c.h.b16 %v4995
    %v5043 = vunpack.c.l.b16 %v4996
    %v5044 = vunpack.c.h.b16 %v4996
    %v5045 = vunpack.c.l.b16 %v4997
    %v5046 = vunpack.c.h.b16 %v4997
    %v5047 = vunpack.c.l.b16 %v4998
    %v5048 = vunpack.c.h.b16 %v4998
    %v5049 = vunpack.c.l.b16 %v4999
    %v5050 = vunpack.c.h.b16 %v4999
    %v5051 = vunpack.c.l.b16 %v5000
    %v5052 = vunpack.c.h.b16 %v5000
    %v5053 = vunpack.c.l.b16 %v5001
    %v5054 = vunpack.c.h.b16 %v5001
    %v5055 = vunpack.c.l.b16 %v5002
    %v5056 = vunpack.c.h.b16 %v5002
    %v5057 = vunpack.c.l.b16 %v5003
    %v5058 = vunpack.c.h.b16 %v5003
    %v5059 = vunpack.c.l.b16 %v5004
    %v5060 = vunpack.c.h.b16 %v5004
    %v5061 = vunpack.c.l.b16 %v5005
    %v5062 = vunpack.c.h.b16 %v5005
    %v5063 = vunpack.c.l.b16 %v5006
    %v5064 = vunpack.c.h.b16 %v5006
    %v5065 = vunpack.c.l.b16 %v5007
    %v5066 = vunpack.c.h.b16 %v5007
    %v5067 = vunpack.c.l.b16 %v5008
    %v5068 = vunpack.c.h.b16 %v5008
    %v5069 = vunpack.c.l.b16 %v5009
    %v5070 = vunpack.c.h.b16 %v5009
    %v5071 = vpack.c.b16 %v5041, %v5039
    %v5072 = vpack.c.b16 %v5042, %v5040
    %v5073 = vpack.c.b16 %v5045, %v5043
    %v5074 = vpack.c.b16 %v5046, %v5044
    %v5075 = vpack.c.b16 %v5049, %v5047
    %v5076 = vpack.c.b16 %v5050, %v5048
    %v5077 = vpack.c.b16 %v5053, %v5051
    %v5078 = vpack.c.b16 %v5054, %v5052
    %v5079 = vpack.c.b16 %v5057, %v5055
    %v5080 = vpack.c.b16 %v5058, %v5056
    %v5081 = vpack.c.b16 %v5061, %v5059
    %v5082 = vpack.c.b16 %v5062, %v5060
    %v5083 = vpack.c.b16 %v5065, %v5063
    %v5084 = vpack.c.b16 %v5066, %v5064
    %v5085 = vpack.c.b16 %v5069, %v5067
    %v5086 = vpack.c.b16 %v5070, %v5068
    %5103 = vmatprep.subr.bf16.mxu0 %v5086
    %5104 = vmatpush1.bf16.msra.mxu0 %v5085
    %5105 = vmatprep.subr.bf16.mxu0 %v5084
    %5106 = vmatpush1.bf16.msra.mxu0 %v5083
    %5107 = vmatprep.subr.bf16.mxu0 %v5082
    %5108 = vmatpush1.bf16.msra.mxu0 %v5081
    %5109 = vmatprep.subr.bf16.mxu0 %v5080
    %5110 = vmatpush1.bf16.msra.mxu0 %v5079
    %5111 = vmatprep.subr.bf16.mxu0 %v5078
    %5112 = vmatpush1.bf16.msra.mxu0 %v5077
    %5113 = vmatprep.subr.bf16.mxu0 %v5076
    %5114 = vmatpush1.bf16.msra.mxu0 %v5075
    %5115 = vmatprep.subr.bf16.mxu0 %v5074
    %5116 = vmatpush1.bf16.msra.mxu0 %v5073
    %5117 = vmatprep.subr.bf16.mxu0 %v5072
    %5118 = vmatpush1.bf16.msra.mxu0 %v5071
    %5119 = vmatprep.subr.bf16.mxu0 0
    %5120 = vmatpush2.bf16.msra.mxu0 0
    %5121 = vmatprep.subr.bf16.mxu0 0
    %5122 = vmatpush2.bf16.msra.mxu0 0
    %5123 = vmatprep.subr.bf16.mxu0 0
    %5124 = vmatpush2.bf16.msra.mxu0 0
    %5125 = vmatprep.subr.bf16.mxu0 0
    %5126 = vmatpush2.bf16.msra.mxu0 0
    %5127 = vmatprep.subr.bf16.mxu0 0
    %5128 = vmatpush2.bf16.msra.mxu0 0
    %5129 = vmatprep.subr.bf16.mxu0 0
    %5130 = vmatpush2.bf16.msra.mxu0 0
    %5131 = vmatprep.subr.bf16.mxu0 0
    %5132 = vmatpush2.bf16.msra.mxu0 0
    %5133 = vmatprep.subr.bf16.mxu0 0
    %5134 = vmatpush2.bf16.msra.mxu0 0
    %5135 = vmatprep.mubr.bf16.mxu0 0
    %5136 = vmatmul.mubr.bf16.gmra.mxu0 %v5012
    %v5137 = vpop.f32.mrf.mxu0
    %v5138 = vadd.f32 0.0, %v5137
    %v5139 = vpop.f32.mrf.mxu0
    %v5140 = vadd.f32 0.0, %v5139
    %v5141 = vpop.f32.mrf.mxu0
    %v5142 = vadd.f32 0.0, %v5141
    %v5143 = vpop.f32.mrf.mxu0
    %v5144 = vadd.f32 0.0, %v5143
    %5145 = vmatprep.mubr.bf16.mxu0 0
    %5146 = vmatmul.mubr.bf16.gmra.mxu0 %v5014
    %v5147 = vpop.f32.mrf.mxu0
    %v5148 = vadd.f32 0.0, %v5147
    %v5149 = vpop.f32.mrf.mxu0
    %v5150 = vadd.f32 0.0, %v5149
    %v5151 = vpop.f32.mrf.mxu0
    %v5152 = vadd.f32 0.0, %v5151
    %v5153 = vpop.f32.mrf.mxu0
    %v5154 = vadd.f32 0.0, %v5153
    %5155 = vmatprep.mubr.bf16.mxu0 0
    %5156 = vmatmul.mubr.bf16.gmra.mxu0 %v5016
    %v5157 = vpop.f32.mrf.mxu0
    %v5158 = vadd.f32 0.0, %v5157
    %v5159 = vpop.f32.mrf.mxu0
    %v5160 = vadd.f32 0.0, %v5159
    %v5161 = vpop.f32.mrf.mxu0
    %v5162 = vadd.f32 0.0, %v5161
    %v5163 = vpop.f32.mrf.mxu0
    %v5164 = vadd.f32 0.0, %v5163
    %5165 = vmatprep.mubr.bf16.mxu0 0
    %5166 = vmatmul.mubr.bf16.gmra.mxu0 %v5018
    %v5167 = vpop.f32.mrf.mxu0
    %v5168 = vadd.f32 0.0, %v5167
    %v5169 = vpop.f32.mrf.mxu0
    %v5170 = vadd.f32 0.0, %v5169
    %v5171 = vpop.f32.mrf.mxu0
    %v5172 = vadd.f32 0.0, %v5171
    %v5173 = vpop.f32.mrf.mxu0
    %v5174 = vadd.f32 0.0, %v5173
    %5175 = vdwg.mxu0
    %v5176 = vadd.f32 %v4978, %v5138
    %v5177 = vadd.f32 %v4979, %v5140
    %v5178 = vadd.f32 %v4980, %v5142
    %v5179 = vadd.f32 %v4981, %v5144
    %v5180 = vadd.f32 %v4982, %v5148
    %v5181 = vadd.f32 %v4983, %v5150
    %v5182 = vadd.f32 %v4984, %v5152
    %v5183 = vadd.f32 %v4985, %v5154
    %v5184 = vadd.f32 %v4986, %v5158
    %v5185 = vadd.f32 %v4987, %v5160
    %v5186 = vadd.f32 %v4988, %v5162
    %v5187 = vadd.f32 %v4989, %v5164
    %v5188 = vadd.f32 %v4990, %v5168
    %v5189 = vadd.f32 %v4991, %v5170
    %v5190 = vadd.f32 %v4992, %v5172
    %v5191 = vadd.f32 %v4993, %v5174
    %v5192 = vld [vmem:[#allocation6 + $0x280] sm:$0xff]
    %v5193 = vld [vmem:[#allocation6 + $0x288] sm:$0xff]
    %v5194 = vld [vmem:[#allocation6 + $0x290] sm:$0xff]
    %v5195 = vld [vmem:[#allocation6 + $0x298] sm:$0xff]
    %v5196 = vld [vmem:[#allocation6 + $0x2a0] sm:$0xff]
    %v5197 = vld [vmem:[#allocation6 + $0x2a8] sm:$0xff]
    %v5198 = vld [vmem:[#allocation6 + $0x2b0] sm:$0xff]
    %v5199 = vld [vmem:[#allocation6 + $0x2b8] sm:$0xff]
    %v5200 = vld [vmem:[#allocation6 + $0x2c0] sm:$0xff]
    %v5201 = vld [vmem:[#allocation6 + $0x2c8] sm:$0xff]
    %v5202 = vld [vmem:[#allocation6 + $0x2d0] sm:$0xff]
    %v5203 = vld [vmem:[#allocation6 + $0x2d8] sm:$0xff]
    %v5204 = vld [vmem:[#allocation6 + $0x2e0] sm:$0xff]
    %v5205 = vld [vmem:[#allocation6 + $0x2e8] sm:$0xff]
    %v5206 = vld [vmem:[#allocation6 + $0x2f0] sm:$0xff]
    %v5207 = vld [vmem:[#allocation6 + $0x2f8] sm:$0xff]
    %v5208 = vrot.slane %v4238, 5
    %v5209 = vrot.slane %v4240, 6
    %v5210 = vor.u32 %v5208, %v5209
    %v5211 = vrot.slane %v4249, 5
    %v5212 = vrot.slane %v4245, 6
    %v5213 = vor.u32 %v5211, %v5212
    %v5214 = vsel %vm2163, %v5210, %v5213
    %v5215 = vrot.slane %v4257, 5
    %v5216 = vrot.slane %v4253, 6
    %v5217 = vor.u32 %v5215, %v5216
    %v5218 = vsel %vm2163, %v5213, %v5217
    %v5219 = vrot.slane %v4265, 5
    %v5220 = vrot.slane %v4261, 6
    %v5221 = vor.u32 %v5219, %v5220
    %v5222 = vsel %vm2163, %v5217, %v5221
    %v5223 = vrot.slane %v4813, 5
    %v5224 = vrot.slane %v4816, 6
    %v5225 = vor.u32 %v5223, %v5224
    %v5226 = vsel %vm2163, %v5221, %v5225
    %v5247 = vunpack.c.l.b16 %v5192
    %v5248 = vunpack.c.h.b16 %v5192
    %v5249 = vunpack.c.l.b16 %v5193
    %v5250 = vunpack.c.h.b16 %v5193
    %v5251 = vunpack.c.l.b16 %v5194
    %v5252 = vunpack.c.h.b16 %v5194
    %v5253 = vunpack.c.l.b16 %v5195
    %v5254 = vunpack.c.h.b16 %v5195
    %v5255 = vunpack.c.l.b16 %v5196
    %v5256 = vunpack.c.h.b16 %v5196
    %v5257 = vunpack.c.l.b16 %v5197
    %v5258 = vunpack.c.h.b16 %v5197
    %v5259 = vunpack.c.l.b16 %v5198
    %v5260 = vunpack.c.h.b16 %v5198
    %v5261 = vunpack.c.l.b16 %v5199
    %v5262 = vunpack.c.h.b16 %v5199
    %v5263 = vunpack.c.l.b16 %v5200
    %v5264 = vunpack.c.h.b16 %v5200
    %v5265 = vunpack.c.l.b16 %v5201
    %v5266 = vunpack.c.h.b16 %v5201
    %v5267 = vunpack.c.l.b16 %v5202
    %v5268 = vunpack.c.h.b16 %v5202
    %v5269 = vunpack.c.l.b16 %v5203
    %v5270 = vunpack.c.h.b16 %v5203
    %v5271 = vunpack.c.l.b16 %v5204
    %v5272 = vunpack.c.h.b16 %v5204
    %v5273 = vunpack.c.l.b16 %v5205
    %v5274 = vunpack.c.h.b16 %v5205
    %v5275 = vunpack.c.l.b16 %v5206
    %v5276 = vunpack.c.h.b16 %v5206
    %v5277 = vunpack.c.l.b16 %v5207
    %v5278 = vunpack.c.h.b16 %v5207
    %v5279 = vpack.c.b16 %v5249, %v5247
    %v5280 = vpack.c.b16 %v5250, %v5248
    %v5281 = vpack.c.b16 %v5253, %v5251
    %v5282 = vpack.c.b16 %v5254, %v5252
    %v5283 = vpack.c.b16 %v5257, %v5255
    %v5284 = vpack.c.b16 %v5258, %v5256
    %v5285 = vpack.c.b16 %v5261, %v5259
    %v5286 = vpack.c.b16 %v5262, %v5260
    %v5287 = vpack.c.b16 %v5265, %v5263
    %v5288 = vpack.c.b16 %v5266, %v5264
    %v5289 = vpack.c.b16 %v5269, %v5267
    %v5290 = vpack.c.b16 %v5270, %v5268
    %v5291 = vpack.c.b16 %v5273, %v5271
    %v5292 = vpack.c.b16 %v5274, %v5272
    %v5293 = vpack.c.b16 %v5277, %v5275
    %v5294 = vpack.c.b16 %v5278, %v5276
    %5311 = vmatprep.subr.bf16.mxu0 %v5294
    %5312 = vmatpush1.bf16.msra.mxu0 %v5293
    %5313 = vmatprep.subr.bf16.mxu0 %v5292
    %5314 = vmatpush1.bf16.msra.mxu0 %v5291
    %5315 = vmatprep.subr.bf16.mxu0 %v5290
    %5316 = vmatpush1.bf16.msra.mxu0 %v5289
    %5317 = vmatprep.subr.bf16.mxu0 %v5288
    %5318 = vmatpush1.bf16.msra.mxu0 %v5287
    %5319 = vmatprep.subr.bf16.mxu0 %v5286
    %5320 = vmatpush1.bf16.msra.mxu0 %v5285
    %5321 = vmatprep.subr.bf16.mxu0 %v5284
    %5322 = vmatpush1.bf16.msra.mxu0 %v5283
    %5323 = vmatprep.subr.bf16.mxu0 %v5282
    %5324 = vmatpush1.bf16.msra.mxu0 %v5281
    %5325 = vmatprep.subr.bf16.mxu0 %v5280
    %5326 = vmatpush1.bf16.msra.mxu0 %v5279
    %5327 = vmatprep.subr.bf16.mxu0 0
    %5328 = vmatpush2.bf16.msra.mxu0 0
    %5329 = vmatprep.subr.bf16.mxu0 0
    %5330 = vmatpush2.bf16.msra.mxu0 0
    %5331 = vmatprep.subr.bf16.mxu0 0
    %5332 = vmatpush2.bf16.msra.mxu0 0
    %5333 = vmatprep.subr.bf16.mxu0 0
    %5334 = vmatpush2.bf16.msra.mxu0 0
    %5335 = vmatprep.subr.bf16.mxu0 0
    %5336 = vmatpush2.bf16.msra.mxu0 0
    %5337 = vmatprep.subr.bf16.mxu0 0
    %5338 = vmatpush2.bf16.msra.mxu0 0
    %5339 = vmatprep.subr.bf16.mxu0 0
    %5340 = vmatpush2.bf16.msra.mxu0 0
    %5341 = vmatprep.subr.bf16.mxu0 0
    %5342 = vmatpush2.bf16.msra.mxu0 0
    %5343 = vmatprep.mubr.bf16.mxu0 0
    %5344 = vmatmul.mubr.bf16.gmra.mxu0 %v5214
    %v5345 = vpop.f32.mrf.mxu0
    %v5346 = vadd.f32 0.0, %v5345
    %v5347 = vpop.f32.mrf.mxu0
    %v5348 = vadd.f32 0.0, %v5347
    %v5349 = vpop.f32.mrf.mxu0
    %v5350 = vadd.f32 0.0, %v5349
    %v5351 = vpop.f32.mrf.mxu0
    %v5352 = vadd.f32 0.0, %v5351
    %5353 = vmatprep.mubr.bf16.mxu0 0
    %5354 = vmatmul.mubr.bf16.gmra.mxu0 %v5218
    %v5355 = vpop.f32.mrf.mxu0
    %v5356 = vadd.f32 0.0, %v5355
    %v5357 = vpop.f32.mrf.mxu0
    %v5358 = vadd.f32 0.0, %v5357
    %v5359 = vpop.f32.mrf.mxu0
    %v5360 = vadd.f32 0.0, %v5359
    %v5361 = vpop.f32.mrf.mxu0
    %v5362 = vadd.f32 0.0, %v5361
    %5363 = vmatprep.mubr.bf16.mxu0 0
    %5364 = vmatmul.mubr.bf16.gmra.mxu0 %v5222
    %v5365 = vpop.f32.mrf.mxu0
    %v5366 = vadd.f32 0.0, %v5365
    %v5367 = vpop.f32.mrf.mxu0
    %v5368 = vadd.f32 0.0, %v5367
    %v5369 = vpop.f32.mrf.mxu0
    %v5370 = vadd.f32 0.0, %v5369
    %v5371 = vpop.f32.mrf.mxu0
    %v5372 = vadd.f32 0.0, %v5371
    %5373 = vmatprep.mubr.bf16.mxu0 0
    %5374 = vmatmul.mubr.bf16.gmra.mxu0 %v5226
    %v5375 = vpop.f32.mrf.mxu0
    %v5376 = vadd.f32 0.0, %v5375
    %v5377 = vpop.f32.mrf.mxu0
    %v5378 = vadd.f32 0.0, %v5377
    %v5379 = vpop.f32.mrf.mxu0
    %v5380 = vadd.f32 0.0, %v5379
    %v5381 = vpop.f32.mrf.mxu0
    %v5382 = vadd.f32 0.0, %v5381
    %5383 = vdwg.mxu0
    %v5384 = vadd.f32 %v5176, %v5346
    %v5385 = vadd.f32 %v5177, %v5348
    %v5386 = vadd.f32 %v5178, %v5350
    %v5387 = vadd.f32 %v5179, %v5352
    %v5388 = vadd.f32 %v5180, %v5356
    %v5389 = vadd.f32 %v5181, %v5358
    %v5390 = vadd.f32 %v5182, %v5360
    %v5391 = vadd.f32 %v5183, %v5362
    %v5392 = vadd.f32 %v5184, %v5366
    %v5393 = vadd.f32 %v5185, %v5368
    %v5394 = vadd.f32 %v5186, %v5370
    %v5395 = vadd.f32 %v5187, %v5372
    %v5396 = vadd.f32 %v5188, %v5376
    %v5397 = vadd.f32 %v5189, %v5378
    %v5398 = vadd.f32 %v5190, %v5380
    %v5399 = vadd.f32 %v5191, %v5382
    %v5400 = vld [vmem:[#allocation6 + $0x300] sm:$0xff]
    %v5401 = vld [vmem:[#allocation6 + $0x308] sm:$0xff]
    %v5402 = vld [vmem:[#allocation6 + $0x310] sm:$0xff]
    %v5403 = vld [vmem:[#allocation6 + $0x318] sm:$0xff]
    %v5404 = vld [vmem:[#allocation6 + $0x320] sm:$0xff]
    %v5405 = vld [vmem:[#allocation6 + $0x328] sm:$0xff]
    %v5406 = vld [vmem:[#allocation6 + $0x330] sm:$0xff]
    %v5407 = vld [vmem:[#allocation6 + $0x338] sm:$0xff]
    %v5408 = vld [vmem:[#allocation6 + $0x340] sm:$0xff]
    %v5409 = vld [vmem:[#allocation6 + $0x348] sm:$0xff]
    %v5410 = vld [vmem:[#allocation6 + $0x350] sm:$0xff]
    %v5411 = vld [vmem:[#allocation6 + $0x358] sm:$0xff]
    %v5412 = vld [vmem:[#allocation6 + $0x360] sm:$0xff]
    %v5413 = vld [vmem:[#allocation6 + $0x368] sm:$0xff]
    %v5414 = vld [vmem:[#allocation6 + $0x370] sm:$0xff]
    %v5415 = vld [vmem:[#allocation6 + $0x378] sm:$0xff]
    %v5416 = vsel %vm779, %v4606, %v2373
    %v5434 = vunpack.c.l.b16 %v5400
    %v5435 = vunpack.c.h.b16 %v5400
    %v5436 = vunpack.c.l.b16 %v5401
    %v5437 = vunpack.c.h.b16 %v5401
    %v5438 = vunpack.c.l.b16 %v5402
    %v5439 = vunpack.c.h.b16 %v5402
    %v5440 = vunpack.c.l.b16 %v5403
    %v5441 = vunpack.c.h.b16 %v5403
    %v5442 = vunpack.c.l.b16 %v5404
    %v5443 = vunpack.c.h.b16 %v5404
    %v5444 = vunpack.c.l.b16 %v5405
    %v5445 = vunpack.c.h.b16 %v5405
    %v5446 = vunpack.c.l.b16 %v5406
    %v5447 = vunpack.c.h.b16 %v5406
    %v5448 = vunpack.c.l.b16 %v5407
    %v5449 = vunpack.c.h.b16 %v5407
    %v5450 = vunpack.c.l.b16 %v5408
    %v5451 = vunpack.c.h.b16 %v5408
    %v5452 = vunpack.c.l.b16 %v5409
    %v5453 = vunpack.c.h.b16 %v5409
    %v5454 = vunpack.c.l.b16 %v5410
    %v5455 = vunpack.c.h.b16 %v5410
    %v5456 = vunpack.c.l.b16 %v5411
    %v5457 = vunpack.c.h.b16 %v5411
    %v5458 = vunpack.c.l.b16 %v5412
    %v5459 = vunpack.c.h.b16 %v5412
    %v5460 = vunpack.c.l.b16 %v5413
    %v5461 = vunpack.c.h.b16 %v5413
    %v5462 = vunpack.c.l.b16 %v5414
    %v5463 = vunpack.c.h.b16 %v5414
    %v5464 = vunpack.c.l.b16 %v5415
    %v5465 = vunpack.c.h.b16 %v5415
    %v5466 = vpack.c.b16 %v5436, %v5434
    %v5467 = vpack.c.b16 %v5437, %v5435
    %v5468 = vpack.c.b16 %v5440, %v5438
    %v5469 = vpack.c.b16 %v5441, %v5439
    %v5470 = vpack.c.b16 %v5444, %v5442
    %v5471 = vpack.c.b16 %v5445, %v5443
    %v5472 = vpack.c.b16 %v5448, %v5446
    %v5473 = vpack.c.b16 %v5449, %v5447
    %v5474 = vpack.c.b16 %v5452, %v5450
    %v5475 = vpack.c.b16 %v5453, %v5451
    %v5476 = vpack.c.b16 %v5456, %v5454
    %v5477 = vpack.c.b16 %v5457, %v5455
    %v5478 = vpack.c.b16 %v5460, %v5458
    %v5479 = vpack.c.b16 %v5461, %v5459
    %v5480 = vpack.c.b16 %v5464, %v5462
    %v5481 = vpack.c.b16 %v5465, %v5463
    %5498 = vmatprep.subr.bf16.mxu0 %v5481
    %5499 = vmatpush1.bf16.msra.mxu0 %v5480
    %5500 = vmatprep.subr.bf16.mxu0 %v5479
    %5501 = vmatpush1.bf16.msra.mxu0 %v5478
    %5502 = vmatprep.subr.bf16.mxu0 %v5477
    %5503 = vmatpush1.bf16.msra.mxu0 %v5476
    %5504 = vmatprep.subr.bf16.mxu0 %v5475
    %5505 = vmatpush1.bf16.msra.mxu0 %v5474
    %5506 = vmatprep.subr.bf16.mxu0 %v5473
    %5507 = vmatpush1.bf16.msra.mxu0 %v5472
    %5508 = vmatprep.subr.bf16.mxu0 %v5471
    %5509 = vmatpush1.bf16.msra.mxu0 %v5470
    %5510 = vmatprep.subr.bf16.mxu0 %v5469
    %5511 = vmatpush1.bf16.msra.mxu0 %v5468
    %5512 = vmatprep.subr.bf16.mxu0 %v5467
    %5513 = vmatpush1.bf16.msra.mxu0 %v5466
    %5514 = vmatprep.subr.bf16.mxu0 0
    %5515 = vmatpush2.bf16.msra.mxu0 0
    %5516 = vmatprep.subr.bf16.mxu0 0
    %5517 = vmatpush2.bf16.msra.mxu0 0
    %5518 = vmatprep.subr.bf16.mxu0 0
    %5519 = vmatpush2.bf16.msra.mxu0 0
    %5520 = vmatprep.subr.bf16.mxu0 0
    %5521 = vmatpush2.bf16.msra.mxu0 0
    %5522 = vmatprep.subr.bf16.mxu0 0
    %5523 = vmatpush2.bf16.msra.mxu0 0
    %5524 = vmatprep.subr.bf16.mxu0 0
    %5525 = vmatpush2.bf16.msra.mxu0 0
    %5526 = vmatprep.subr.bf16.mxu0 0
    %5527 = vmatpush2.bf16.msra.mxu0 0
    %5528 = vmatprep.subr.bf16.mxu0 0
    %5529 = vmatpush2.bf16.msra.mxu0 0
    %5530 = vmatprep.mubr.bf16.mxu0 0
    %5531 = vmatmul.mubr.bf16.gmra.mxu0 %v4603
    %v5532 = vpop.f32.mrf.mxu0
    %v5533 = vadd.f32 0.0, %v5532
    %v5534 = vpop.f32.mrf.mxu0
    %v5535 = vadd.f32 0.0, %v5534
    %v5536 = vpop.f32.mrf.mxu0
    %v5537 = vadd.f32 0.0, %v5536
    %v5538 = vpop.f32.mrf.mxu0
    %v5539 = vadd.f32 0.0, %v5538
    %5540 = vmatprep.mubr.bf16.mxu0 0
    %5541 = vmatmul.mubr.bf16.gmra.mxu0 %v4605
    %v5542 = vpop.f32.mrf.mxu0
    %v5543 = vadd.f32 0.0, %v5542
    %v5544 = vpop.f32.mrf.mxu0
    %v5545 = vadd.f32 0.0, %v5544
    %v5546 = vpop.f32.mrf.mxu0
    %v5547 = vadd.f32 0.0, %v5546
    %v5548 = vpop.f32.mrf.mxu0
    %v5549 = vadd.f32 0.0, %v5548
    %5550 = vmatprep.mubr.bf16.mxu0 0
    %5551 = vmatmul.mubr.bf16.gmra.mxu0 %v4607
    %v5552 = vpop.f32.mrf.mxu0
    %v5553 = vadd.f32 0.0, %v5552
    %v5554 = vpop.f32.mrf.mxu0
    %v5555 = vadd.f32 0.0, %v5554
    %v5556 = vpop.f32.mrf.mxu0
    %v5557 = vadd.f32 0.0, %v5556
    %v5558 = vpop.f32.mrf.mxu0
    %v5559 = vadd.f32 0.0, %v5558
    %5560 = vmatprep.mubr.bf16.mxu0 0
    %5561 = vmatmul.mubr.bf16.gmra.mxu0 %v5416
    %v5562 = vpop.f32.mrf.mxu0
    %v5563 = vadd.f32 0.0, %v5562
    %v5564 = vpop.f32.mrf.mxu0
    %v5565 = vadd.f32 0.0, %v5564
    %v5566 = vpop.f32.mrf.mxu0
    %v5567 = vadd.f32 0.0, %v5566
    %v5568 = vpop.f32.mrf.mxu0
    %v5569 = vadd.f32 0.0, %v5568
    %5570 = vdwg.mxu0
    %v5571 = vadd.f32 %v5384, %v5533
    %v5572 = vadd.f32 %v5385, %v5535
    %v5573 = vadd.f32 %v5386, %v5537
    %v5574 = vadd.f32 %v5387, %v5539
    %v5575 = vadd.f32 %v5388, %v5543
    %v5576 = vadd.f32 %v5389, %v5545
    %v5577 = vadd.f32 %v5390, %v5547
    %v5578 = vadd.f32 %v5391, %v5549
    %v5579 = vadd.f32 %v5392, %v5553
    %v5580 = vadd.f32 %v5393, %v5555
    %v5581 = vadd.f32 %v5394, %v5557
    %v5582 = vadd.f32 %v5395, %v5559
    %v5583 = vadd.f32 %v5396, %v5563
    %v5584 = vadd.f32 %v5397, %v5565
    %v5585 = vadd.f32 %v5398, %v5567
    %v5586 = vadd.f32 %v5399, %v5569
    %v5587 = vld [vmem:[#allocation6 + $0x380] sm:$0xff]
    %v5588 = vld [vmem:[#allocation6 + $0x388] sm:$0xff]
    %v5589 = vld [vmem:[#allocation6 + $0x390] sm:$0xff]
    %v5590 = vld [vmem:[#allocation6 + $0x398] sm:$0xff]
    %v5591 = vld [vmem:[#allocation6 + $0x3a0] sm:$0xff]
    %v5592 = vld [vmem:[#allocation6 + $0x3a8] sm:$0xff]
    %v5593 = vld [vmem:[#allocation6 + $0x3b0] sm:$0xff]
    %v5594 = vld [vmem:[#allocation6 + $0x3b8] sm:$0xff]
    %v5595 = vld [vmem:[#allocation6 + $0x3c0] sm:$0xff]
    %v5596 = vld [vmem:[#allocation6 + $0x3c8] sm:$0xff]
    %v5597 = vld [vmem:[#allocation6 + $0x3d0] sm:$0xff]
    %v5598 = vld [vmem:[#allocation6 + $0x3d8] sm:$0xff]
    %v5599 = vld [vmem:[#allocation6 + $0x3e0] sm:$0xff]
    %v5600 = vld [vmem:[#allocation6 + $0x3e8] sm:$0xff]
    %v5601 = vld [vmem:[#allocation6 + $0x3f0] sm:$0xff]
    %v5602 = vld [vmem:[#allocation6 + $0x3f8] sm:$0xff]
    %v5603 = vrot.slane %v4249, 1
    %v5604 = vrot.slane %v4245, 2
    %v5605 = vor.u32 %v5603, %v5604
    %v5606 = vrot.slane %v4257, 1
    %v5607 = vrot.slane %v4253, 2
    %v5608 = vor.u32 %v5606, %v5607
    %v5609 = vsel %vm2561, %v5605, %v5608
    %v5610 = vrot.slane %v4265, 1
    %v5611 = vrot.slane %v4261, 2
    %v5612 = vor.u32 %v5610, %v5611
    %v5613 = vsel %vm2561, %v5608, %v5612
    %v5614 = vrot.slane %v4813, 1
    %v5615 = vrot.slane %v4816, 2
    %v5616 = vor.u32 %v5614, %v5615
    %v5617 = vsel %vm2561, %v5612, %v5616
    %v5618 = vsel %vm2561, %v5616, %v2584
    %v5639 = vunpack.c.l.b16 %v5587
    %v5640 = vunpack.c.h.b16 %v5587
    %v5641 = vunpack.c.l.b16 %v5588
    %v5642 = vunpack.c.h.b16 %v5588
    %v5643 = vunpack.c.l.b16 %v5589
    %v5644 = vunpack.c.h.b16 %v5589
    %v5645 = vunpack.c.l.b16 %v5590
    %v5646 = vunpack.c.h.b16 %v5590
    %v5647 = vunpack.c.l.b16 %v5591
    %v5648 = vunpack.c.h.b16 %v5591
    %v5649 = vunpack.c.l.b16 %v5592
    %v5650 = vunpack.c.h.b16 %v5592
    %v5651 = vunpack.c.l.b16 %v5593
    %v5652 = vunpack.c.h.b16 %v5593
    %v5653 = vunpack.c.l.b16 %v5594
    %v5654 = vunpack.c.h.b16 %v5594
    %v5655 = vunpack.c.l.b16 %v5595
    %v5656 = vunpack.c.h.b16 %v5595
    %v5657 = vunpack.c.l.b16 %v5596
    %v5658 = vunpack.c.h.b16 %v5596
    %v5659 = vunpack.c.l.b16 %v5597
    %v5660 = vunpack.c.h.b16 %v5597
    %v5661 = vunpack.c.l.b16 %v5598
    %v5662 = vunpack.c.h.b16 %v5598
    %v5663 = vunpack.c.l.b16 %v5599
    %v5664 = vunpack.c.h.b16 %v5599
    %v5665 = vunpack.c.l.b16 %v5600
    %v5666 = vunpack.c.h.b16 %v5600
    %v5667 = vunpack.c.l.b16 %v5601
    %v5668 = vunpack.c.h.b16 %v5601
    %v5669 = vunpack.c.l.b16 %v5602
    %v5670 = vunpack.c.h.b16 %v5602
    %v5671 = vpack.c.b16 %v5641, %v5639
    %v5672 = vpack.c.b16 %v5642, %v5640
    %v5673 = vpack.c.b16 %v5645, %v5643
    %v5674 = vpack.c.b16 %v5646, %v5644
    %v5675 = vpack.c.b16 %v5649, %v5647
    %v5676 = vpack.c.b16 %v5650, %v5648
    %v5677 = vpack.c.b16 %v5653, %v5651
    %v5678 = vpack.c.b16 %v5654, %v5652
    %v5679 = vpack.c.b16 %v5657, %v5655
    %v5680 = vpack.c.b16 %v5658, %v5656
    %v5681 = vpack.c.b16 %v5661, %v5659
    %v5682 = vpack.c.b16 %v5662, %v5660
    %v5683 = vpack.c.b16 %v5665, %v5663
    %v5684 = vpack.c.b16 %v5666, %v5664
    %v5685 = vpack.c.b16 %v5669, %v5667
    %v5686 = vpack.c.b16 %v5670, %v5668
    %5703 = vmatprep.subr.bf16.mxu0 %v5686
    %5704 = vmatpush1.bf16.msra.mxu0 %v5685
    %5705 = vmatprep.subr.bf16.mxu0 %v5684
    %5706 = vmatpush1.bf16.msra.mxu0 %v5683
    %5707 = vmatprep.subr.bf16.mxu0 %v5682
    %5708 = vmatpush1.bf16.msra.mxu0 %v5681
    %5709 = vmatprep.subr.bf16.mxu0 %v5680
    %5710 = vmatpush1.bf16.msra.mxu0 %v5679
    %5711 = vmatprep.subr.bf16.mxu0 %v5678
    %5712 = vmatpush1.bf16.msra.mxu0 %v5677
    %5713 = vmatprep.subr.bf16.mxu0 %v5676
    %5714 = vmatpush1.bf16.msra.mxu0 %v5675
    %5715 = vmatprep.subr.bf16.mxu0 %v5674
    %5716 = vmatpush1.bf16.msra.mxu0 %v5673
    %5717 = vmatprep.subr.bf16.mxu0 %v5672
    %5718 = vmatpush1.bf16.msra.mxu0 %v5671
    %5719 = vmatprep.subr.bf16.mxu0 0
    %5720 = vmatpush2.bf16.msra.mxu0 0
    %5721 = vmatprep.subr.bf16.mxu0 0
    %5722 = vmatpush2.bf16.msra.mxu0 0
    %5723 = vmatprep.subr.bf16.mxu0 0
    %5724 = vmatpush2.bf16.msra.mxu0 0
    %5725 = vmatprep.subr.bf16.mxu0 0
    %5726 = vmatpush2.bf16.msra.mxu0 0
    %5727 = vmatprep.subr.bf16.mxu0 0
    %5728 = vmatpush2.bf16.msra.mxu0 0
    %5729 = vmatprep.subr.bf16.mxu0 0
    %5730 = vmatpush2.bf16.msra.mxu0 0
    %5731 = vmatprep.subr.bf16.mxu0 0
    %5732 = vmatpush2.bf16.msra.mxu0 0
    %5733 = vmatprep.subr.bf16.mxu0 0
    %5734 = vmatpush2.bf16.msra.mxu0 0
    %5735 = vmatprep.mubr.bf16.mxu0 0
    %5736 = vmatmul.mubr.bf16.gmra.mxu0 %v5609
    %v5737 = vpop.f32.mrf.mxu0
    %v5738 = vadd.f32 0.0, %v5737
    %v5739 = vpop.f32.mrf.mxu0
    %v5740 = vadd.f32 0.0, %v5739
    %v5741 = vpop.f32.mrf.mxu0
    %v5742 = vadd.f32 0.0, %v5741
    %v5743 = vpop.f32.mrf.mxu0
    %v5744 = vadd.f32 0.0, %v5743
    %5745 = vmatprep.mubr.bf16.mxu0 0
    %5746 = vmatmul.mubr.bf16.gmra.mxu0 %v5613
    %v5747 = vpop.f32.mrf.mxu0
    %v5748 = vadd.f32 0.0, %v5747
    %v5749 = vpop.f32.mrf.mxu0
    %v5750 = vadd.f32 0.0, %v5749
    %v5751 = vpop.f32.mrf.mxu0
    %v5752 = vadd.f32 0.0, %v5751
    %v5753 = vpop.f32.mrf.mxu0
    %v5754 = vadd.f32 0.0, %v5753
    %5755 = vmatprep.mubr.bf16.mxu0 0
    %5756 = vmatmul.mubr.bf16.gmra.mxu0 %v5617
    %v5757 = vpop.f32.mrf.mxu0
    %v5758 = vadd.f32 0.0, %v5757
    %v5759 = vpop.f32.mrf.mxu0
    %v5760 = vadd.f32 0.0, %v5759
    %v5761 = vpop.f32.mrf.mxu0
    %v5762 = vadd.f32 0.0, %v5761
    %v5763 = vpop.f32.mrf.mxu0
    %v5764 = vadd.f32 0.0, %v5763
    %5765 = vmatprep.mubr.bf16.mxu0 0
    %5766 = vmatmul.mubr.bf16.gmra.mxu0 %v5618
    %v5767 = vpop.f32.mrf.mxu0
    %v5768 = vadd.f32 0.0, %v5767
    %v5769 = vpop.f32.mrf.mxu0
    %v5770 = vadd.f32 0.0, %v5769
    %v5771 = vpop.f32.mrf.mxu0
    %v5772 = vadd.f32 0.0, %v5771
    %v5773 = vpop.f32.mrf.mxu0
    %v5774 = vadd.f32 0.0, %v5773
    %5775 = vdwg.mxu0
    %v5776 = vadd.f32 %v5571, %v5738
    %v5777 = vadd.f32 %v5572, %v5740
    %v5778 = vadd.f32 %v5573, %v5742
    %v5779 = vadd.f32 %v5574, %v5744
    %v5780 = vadd.f32 %v5575, %v5748
    %v5781 = vadd.f32 %v5576, %v5750
    %v5782 = vadd.f32 %v5577, %v5752
    %v5783 = vadd.f32 %v5578, %v5754
    %v5784 = vadd.f32 %v5579, %v5758
    %v5785 = vadd.f32 %v5580, %v5760
    %v5786 = vadd.f32 %v5581, %v5762
    %v5787 = vadd.f32 %v5582, %v5764
    %v5788 = vadd.f32 %v5583, %v5768
    %v5789 = vadd.f32 %v5584, %v5770
    %v5790 = vadd.f32 %v5585, %v5772
    %v5791 = vadd.f32 %v5586, %v5774
    %v5792 = vld [vmem:[#allocation6 + $0x400] sm:$0xff]
    %v5793 = vld [vmem:[#allocation6 + $0x408] sm:$0xff]
    %v5794 = vld [vmem:[#allocation6 + $0x410] sm:$0xff]
    %v5795 = vld [vmem:[#allocation6 + $0x418] sm:$0xff]
    %v5796 = vld [vmem:[#allocation6 + $0x420] sm:$0xff]
    %v5797 = vld [vmem:[#allocation6 + $0x428] sm:$0xff]
    %v5798 = vld [vmem:[#allocation6 + $0x430] sm:$0xff]
    %v5799 = vld [vmem:[#allocation6 + $0x438] sm:$0xff]
    %v5800 = vld [vmem:[#allocation6 + $0x440] sm:$0xff]
    %v5801 = vld [vmem:[#allocation6 + $0x448] sm:$0xff]
    %v5802 = vld [vmem:[#allocation6 + $0x450] sm:$0xff]
    %v5803 = vld [vmem:[#allocation6 + $0x458] sm:$0xff]
    %v5804 = vld [vmem:[#allocation6 + $0x460] sm:$0xff]
    %v5805 = vld [vmem:[#allocation6 + $0x468] sm:$0xff]
    %v5806 = vld [vmem:[#allocation6 + $0x470] sm:$0xff]
    %v5807 = vld [vmem:[#allocation6 + $0x478] sm:$0xff]
    %v5808 = vrot.slane %v4201, 2
    %v5809 = vrot.slane %v4202, 2
    %v5810 = vsel %vm2775, %v5808, %v5809
    %v5811 = vrot.slane %v4203, 2
    %v5812 = vsel %vm2775, %v5809, %v5811
    %v5813 = vrot.slane %v4204, 2
    %v5814 = vsel %vm2775, %v5811, %v5813
    %v5815 = vsel %vm2775, %v5813, %v2783
    %v5836 = vunpack.c.l.b16 %v5792
    %v5837 = vunpack.c.h.b16 %v5792
    %v5838 = vunpack.c.l.b16 %v5793
    %v5839 = vunpack.c.h.b16 %v5793
    %v5840 = vunpack.c.l.b16 %v5794
    %v5841 = vunpack.c.h.b16 %v5794
    %v5842 = vunpack.c.l.b16 %v5795
    %v5843 = vunpack.c.h.b16 %v5795
    %v5844 = vunpack.c.l.b16 %v5796
    %v5845 = vunpack.c.h.b16 %v5796
    %v5846 = vunpack.c.l.b16 %v5797
    %v5847 = vunpack.c.h.b16 %v5797
    %v5848 = vunpack.c.l.b16 %v5798
    %v5849 = vunpack.c.h.b16 %v5798
    %v5850 = vunpack.c.l.b16 %v5799
    %v5851 = vunpack.c.h.b16 %v5799
    %v5852 = vunpack.c.l.b16 %v5800
    %v5853 = vunpack.c.h.b16 %v5800
    %v5854 = vunpack.c.l.b16 %v5801
    %v5855 = vunpack.c.h.b16 %v5801
    %v5856 = vunpack.c.l.b16 %v5802
    %v5857 = vunpack.c.h.b16 %v5802
    %v5858 = vunpack.c.l.b16 %v5803
    %v5859 = vunpack.c.h.b16 %v5803
    %v5860 = vunpack.c.l.b16 %v5804
    %v5861 = vunpack.c.h.b16 %v5804
    %v5862 = vunpack.c.l.b16 %v5805
    %v5863 = vunpack.c.h.b16 %v5805
    %v5864 = vunpack.c.l.b16 %v5806
    %v5865 = vunpack.c.h.b16 %v5806
    %v5866 = vunpack.c.l.b16 %v5807
    %v5867 = vunpack.c.h.b16 %v5807
    %v5868 = vpack.c.b16 %v5838, %v5836
    %v5869 = vpack.c.b16 %v5839, %v5837
    %v5870 = vpack.c.b16 %v5842, %v5840
    %v5871 = vpack.c.b16 %v5843, %v5841
    %v5872 = vpack.c.b16 %v5846, %v5844
    %v5873 = vpack.c.b16 %v5847, %v5845
    %v5874 = vpack.c.b16 %v5850, %v5848
    %v5875 = vpack.c.b16 %v5851, %v5849
    %v5876 = vpack.c.b16 %v5854, %v5852
    %v5877 = vpack.c.b16 %v5855, %v5853
    %v5878 = vpack.c.b16 %v5858, %v5856
    %v5879 = vpack.c.b16 %v5859, %v5857
    %v5880 = vpack.c.b16 %v5862, %v5860
    %v5881 = vpack.c.b16 %v5863, %v5861
    %v5882 = vpack.c.b16 %v5866, %v5864
    %v5883 = vpack.c.b16 %v5867, %v5865
    %5900 = vmatprep.subr.bf16.mxu0 %v5883
    %5901 = vmatpush1.bf16.msra.mxu0 %v5882
    %5902 = vmatprep.subr.bf16.mxu0 %v5881
    %5903 = vmatpush1.bf16.msra.mxu0 %v5880
    %5904 = vmatprep.subr.bf16.mxu0 %v5879
    %5905 = vmatpush1.bf16.msra.mxu0 %v5878
    %5906 = vmatprep.subr.bf16.mxu0 %v5877
    %5907 = vmatpush1.bf16.msra.mxu0 %v5876
    %5908 = vmatprep.subr.bf16.mxu0 %v5875
    %5909 = vmatpush1.bf16.msra.mxu0 %v5874
    %5910 = vmatprep.subr.bf16.mxu0 %v5873
    %5911 = vmatpush1.bf16.msra.mxu0 %v5872
    %5912 = vmatprep.subr.bf16.mxu0 %v5871
    %5913 = vmatpush1.bf16.msra.mxu0 %v5870
    %5914 = vmatprep.subr.bf16.mxu0 %v5869
    %5915 = vmatpush1.bf16.msra.mxu0 %v5868
    %5916 = vmatprep.subr.bf16.mxu0 0
    %5917 = vmatpush2.bf16.msra.mxu0 0
    %5918 = vmatprep.subr.bf16.mxu0 0
    %5919 = vmatpush2.bf16.msra.mxu0 0
    %5920 = vmatprep.subr.bf16.mxu0 0
    %5921 = vmatpush2.bf16.msra.mxu0 0
    %5922 = vmatprep.subr.bf16.mxu0 0
    %5923 = vmatpush2.bf16.msra.mxu0 0
    %5924 = vmatprep.subr.bf16.mxu0 0
    %5925 = vmatpush2.bf16.msra.mxu0 0
    %5926 = vmatprep.subr.bf16.mxu0 0
    %5927 = vmatpush2.bf16.msra.mxu0 0
    %5928 = vmatprep.subr.bf16.mxu0 0
    %5929 = vmatpush2.bf16.msra.mxu0 0
    %5930 = vmatprep.subr.bf16.mxu0 0
    %5931 = vmatpush2.bf16.msra.mxu0 0
    %5932 = vmatprep.mubr.bf16.mxu0 0
    %5933 = vmatmul.mubr.bf16.gmra.mxu0 %v5810
    %v5934 = vpop.f32.mrf.mxu0
    %v5935 = vadd.f32 0.0, %v5934
    %v5936 = vpop.f32.mrf.mxu0
    %v5937 = vadd.f32 0.0, %v5936
    %v5938 = vpop.f32.mrf.mxu0
    %v5939 = vadd.f32 0.0, %v5938
    %v5940 = vpop.f32.mrf.mxu0
    %v5941 = vadd.f32 0.0, %v5940
    %5942 = vmatprep.mubr.bf16.mxu0 0
    %5943 = vmatmul.mubr.bf16.gmra.mxu0 %v5812
    %v5944 = vpop.f32.mrf.mxu0
    %v5945 = vadd.f32 0.0, %v5944
    %v5946 = vpop.f32.mrf.mxu0
    %v5947 = vadd.f32 0.0, %v5946
    %v5948 = vpop.f32.mrf.mxu0
    %v5949 = vadd.f32 0.0, %v5948
    %v5950 = vpop.f32.mrf.mxu0
    %v5951 = vadd.f32 0.0, %v5950
    %5952 = vmatprep.mubr.bf16.mxu0 0
    %5953 = vmatmul.mubr.bf16.gmra.mxu0 %v5814
    %v5954 = vpop.f32.mrf.mxu0
    %v5955 = vadd.f32 0.0, %v5954
    %v5956 = vpop.f32.mrf.mxu0
    %v5957 = vadd.f32 0.0, %v5956
    %v5958 = vpop.f32.mrf.mxu0
    %v5959 = vadd.f32 0.0, %v5958
    %v5960 = vpop.f32.mrf.mxu0
    %v5961 = vadd.f32 0.0, %v5960
    %5962 = vmatprep.mubr.bf16.mxu0 0
    %5963 = vmatmul.mubr.bf16.gmra.mxu0 %v5815
    %v5964 = vpop.f32.mrf.mxu0
    %v5965 = vadd.f32 0.0, %v5964
    %v5966 = vpop.f32.mrf.mxu0
    %v5967 = vadd.f32 0.0, %v5966
    %v5968 = vpop.f32.mrf.mxu0
    %v5969 = vadd.f32 0.0, %v5968
    %v5970 = vpop.f32.mrf.mxu0
    %v5971 = vadd.f32 0.0, %v5970
    %5972 = vdwg.mxu0
    %v5973 = vadd.f32 %v5776, %v5935
    %v5974 = vadd.f32 %v5777, %v5937
    %v5975 = vadd.f32 %v5778, %v5939
    %v5976 = vadd.f32 %v5779, %v5941
    %v5977 = vadd.f32 %v5780, %v5945
    %v5978 = vadd.f32 %v5781, %v5947
    %v5979 = vadd.f32 %v5782, %v5949
    %v5980 = vadd.f32 %v5783, %v5951
    %v5981 = vadd.f32 %v5784, %v5955
    %v5982 = vadd.f32 %v5785, %v5957
    %v5983 = vadd.f32 %v5786, %v5959
    %v5984 = vadd.f32 %v5787, %v5961
    %v5985 = vadd.f32 %v5788, %v5965
    %v5986 = vadd.f32 %v5789, %v5967
    %v5987 = vadd.f32 %v5790, %v5969
    %v5988 = vadd.f32 %v5791, %v5971
    %v5989 = vadd.f32 %v5973, %v2962
    %v5990 = vadd.f32 %v5974, %v2966
    %v5991 = vadd.f32 %v5975, %v2962
    %v5992 = vadd.f32 %v5976, %v2966
    %v5993 = vadd.f32 %v5977, %v2962
    %v5994 = vadd.f32 %v5978, %v2966
    %v5995 = vadd.f32 %v5979, %v2962
    %v5996 = vadd.f32 %v5980, %v2966
    %v5997 = vadd.f32 %v5981, %v2962
    %v5998 = vadd.f32 %v5982, %v2966
    %v5999 = vadd.f32 %v5983, %v2962
    %v6000 = vadd.f32 %v5984, %v2966
    %v6001 = vadd.f32 %v5985, %v2962
    %v6002 = vadd.f32 %v5986, %v2966
    %v6003 = vadd.f32 %v5987, %v2962
    %v6004 = vadd.f32 %v5988, %v2966
    %v6005 = vmax.f32 %v5989, 0.0
    %v6006 = vmax.f32 %v5990, 0.0
    %v6007 = vmax.f32 %v5991, 0.0
    %v6008 = vmax.f32 %v5992, 0.0
    %v6009 = vmax.f32 %v5993, 0.0
    %v6010 = vmax.f32 %v5994, 0.0
    %v6011 = vmax.f32 %v5995, 0.0
    %v6012 = vmax.f32 %v5996, 0.0
    %v6013 = vmax.f32 %v5997, 0.0
    %v6014 = vmax.f32 %v5998, 0.0
    %v6015 = vmax.f32 %v5999, 0.0
    %v6016 = vmax.f32 %v6000, 0.0
    %v6017 = vmax.f32 %v6001, 0.0
    %v6018 = vmax.f32 %v6002, 0.0
    %v6019 = vmax.f32 %v6003, 0.0
    %v6020 = vmax.f32 %v6004, 0.0
    %6029 = vrot.lane.b32.xlu0 %v6005, 64
    %v6030 = vpop.permute.xlu0 %6029
    %6031 = vrot.lane.b32.xlu0 %v6007, 64
    %v6032 = vpop.permute.xlu0 %6031
    %6033 = vrot.lane.b32.xlu0 %v6009, 64
    %v6034 = vpop.permute.xlu0 %6033
    %6035 = vrot.lane.b32.xlu0 %v6011, 64
    %v6036 = vpop.permute.xlu0 %6035
    %6037 = vrot.lane.b32.xlu0 %v6013, 64
    %v6038 = vpop.permute.xlu0 %6037
    %6039 = vrot.lane.b32.xlu0 %v6015, 64
    %v6040 = vpop.permute.xlu0 %6039
    %6041 = vrot.lane.b32.xlu0 %v6017, 64
    %v6042 = vpop.permute.xlu0 %6041
    %6043 = vrot.lane.b32.xlu0 %v6019, 64
    %v6044 = vpop.permute.xlu0 %6043
    %v6053 = vmax.f32 %v6005, %v6030
    %v6054 = vmax.f32 %v6007, %v6032
    %v6055 = vmax.f32 %v6009, %v6034
    %v6056 = vmax.f32 %v6011, %v6036
    %v6057 = vmax.f32 %v6013, %v6038
    %v6058 = vmax.f32 %v6015, %v6040
    %v6059 = vmax.f32 %v6017, %v6042
    %v6060 = vmax.f32 %v6019, %v6044
    %6069 = vrot.lane.b32.xlu0 %v6006, 64
    %v6070 = vpop.permute.xlu0 %6069
    %6071 = vrot.lane.b32.xlu0 %v6008, 64
    %v6072 = vpop.permute.xlu0 %6071
    %6073 = vrot.lane.b32.xlu0 %v6010, 64
    %v6074 = vpop.permute.xlu0 %6073
    %6075 = vrot.lane.b32.xlu0 %v6012, 64
    %v6076 = vpop.permute.xlu0 %6075
    %6077 = vrot.lane.b32.xlu0 %v6014, 64
    %v6078 = vpop.permute.xlu0 %6077
    %6079 = vrot.lane.b32.xlu0 %v6016, 64
    %v6080 = vpop.permute.xlu0 %6079
    %6081 = vrot.lane.b32.xlu0 %v6018, 64
    %v6082 = vpop.permute.xlu0 %6081
    %6083 = vrot.lane.b32.xlu0 %v6020, 64
    %v6084 = vpop.permute.xlu0 %6083
    %v6093 = vmax.f32 %v6006, %v6070
    %v6094 = vmax.f32 %v6008, %v6072
    %v6095 = vmax.f32 %v6010, %v6074
    %v6096 = vmax.f32 %v6012, %v6076
    %v6097 = vmax.f32 %v6014, %v6078
    %v6098 = vmax.f32 %v6016, %v6080
    %v6099 = vmax.f32 %v6018, %v6082
    %v6100 = vmax.f32 %v6020, %v6084
    %v6101 = vmax.f32 %v6053, %v6093
    %v6102 = vmax.f32 %v6054, %v6094
    %v6103 = vmax.f32 %v6055, %v6095
    %v6104 = vmax.f32 %v6056, %v6096
    %v6105 = vmax.f32 %v6057, %v6097
    %v6106 = vmax.f32 %v6058, %v6098
    %v6107 = vmax.f32 %v6059, %v6099
    %v6108 = vmax.f32 %v6060, %v6100
    %v6110 = vrot.slane %v6102, 2
    %v6114 = vrot.slane %v6103, 4
    %v6115 = vrot.slane %v6104, 4
    %v6116 = vsel %vm3094, %v6114, %v6115
    %v6120 = vrot.slane %v6104, 6
    %v6121 = vrot.slane %v6105, 6
    %v6122 = vsel %vm1124, %v6120, %v6121
    %v6127 = vrot.slane %v6106, 2
    %v6128 = vrot.slane %v6107, 2
    %v6129 = vsel %vm3108, %v6127, %v6128
    %v6133 = vrot.slane %v6107, 4
    %v6134 = vrot.slane %v6108, 4
    %v6135 = vsel %vm3094, %v6133, %v6134
    %v6138 = vsel %vm3120, %v6101, %v6110
    %v6139 = vsel %vm3108, %v6110, %v6114
    %v6140 = vsel %vm3123, %v6116, %v6120
    %v6141 = vsel %vm3094, %v6122, %v6105
    %v6142 = vsel %vm3126, %v6106, %v6129
    %v6143 = vsel %vm1124, %v6128, %v6135
    %v6144 = vpack.c.bf16 %v6139, %v6138
    %v6145 = vpack.c.bf16 %v6141, %v6140
    %v6146 = vpack.c.bf16 %v6143, %v6142
    %v6147 = vpack.c.bf16 %v6134, %v6134
    %v6152 = vunpack.c.l.b16 %v6144
    %v6153 = vunpack.c.h.b16 %v6144
    %v6154 = vunpack.c.l.b16 %v6145
    %v6155 = vunpack.c.h.b16 %v6145
    %v6156 = vunpack.c.l.b16 %v6146
    %v6157 = vunpack.c.h.b16 %v6146
    %v6158 = vunpack.c.l.b16 %v6147
    %v6159 = vpack.c.b16 %v6152, %v6152
    %v6160 = vpack.c.b16 %v6153, %v6153
    %v6161 = vpack.c.b16 %v6154, %v6154
    %v6162 = vpack.c.b16 %v6155, %v6155
    %v6163 = vpack.c.b16 %v6156, %v6156
    %v6164 = vpack.c.b16 %v6157, %v6157
    %v6165 = vpack.c.b16 %v6158, %v6158
    %s6173 = scalar_lea.vmem %s6, 28
    %6174 = vst.msk [vmem:[%s6173] sm:$0xf] %vm3158, %v6159
    %6175 = vst.msk [vmem:[%s6173 + $0x4] sm:$0xf] %vm3158, %v6160
    %6176 = vst.msk [vmem:[%s6173 + $0x8] sm:$0xf] %vm3158, %v6161
    %6177 = vst.msk [vmem:[%s6173 + $0xc] sm:$0xf] %vm3158, %v6162
    %6178 = vst.msk [vmem:[%s6173 + $0x10] sm:$0xf] %vm3158, %v6163
    %6179 = vst.msk [vmem:[%s6173 + $0x14] sm:$0xf] %vm3158, %v6164
    %v6180 = vld [vmem:[%s6173 + $0x18] sm:$0x1]
    %v6181 = vsel %vm3167, %v6165, %v6180
    %6182 = vst [vmem:[%s6173 + $0x18] sm:$0x1] %v6181
    // Predicated region
    $region46: #{lenet_forward.2} parent=1 // pred_check
      _
    $region47: #{lenet_forward.2} parent=1 // pred_check_branch
      %6184 = sbr.rel (0) target = $region49
    $region48: #{lenet_forward.2} parent=1 // pred_region
      _
    $region49: #{lenet_forward.2} parent=1 // pred_fallthru
      _
    // Predicated region
    $region50: #{lenet_forward.2} parent=1 // pred_check
      _
    $region51: #{lenet_forward.2} parent=1 // pred_check_branch
      %6186 = sbr.rel (0) target = $region53
    $region52: #{lenet_forward.2} parent=1 // pred_region
      _
    $region53: #{lenet_forward.2} parent=1 // pred_fallthru
      _
    %6187 = vsyncpa [#allocation3], 1
    %6188 = vsyncpa [#allocation5], 1
    %6189 = vsyncpa [#allocation8], 1

// kernel: lenet_forward.3
$region0: #{lenet_forward.3}
  #allocation0 [shape = 'u32[]', space=smem, size = 0x4, offset = 0x4, fixed_abs, tag = 'smem constant byte address 0x4 - core index']
  #allocation1 [shape = 'u32[144,128]{1,0:T(1,128)}', space=vmem, size = 0x12000, scoped, tag = 'internal scratch']
  #allocation2 [shape = 'f32[2,128]{1,0:T(2,128)}', space=vmem, size = 0x400, scoped, tag = 'scratch operand']
  %s0 = inlined_call_operand.vmem [shape: bf16[2,3136], index: 0, kind: input, shape index: {}]
  %s1 = inlined_call_operand.hbm [shape: bf16[3136,1024], index: 1, kind: input, shape index: {}]
  %s2 = inlined_call_operand.hbm [shape: f32[1,1024], index: 2, kind: input, shape index: {}]
  %s3 = inlined_call_operand.hbm [shape: bf16[1024,128], index: 3, kind: input, shape index: {}]
  %s4 = inlined_call_operand.hbm [shape: f32[1,128], index: 4, kind: input, shape index: {}]
  %s5 = inlined_call_operand.hbm [shape: f32[2,10], index: 5, kind: output, shape index: {}]
  %s6 = sld [smem:[#allocation0]]
  $region77: #{lenet_forward.3} parent=0
    _
  %s8 = ssub.s32 1, %s6
  %s9 = scalar_select 0, %s8, %s6
  $region1: #{lenet_forward.3} parent=0
    #allocation3 [shape = 'u8[6422528]{0}', space=vmem, size = 0x620000, scoped, tag = 'input window, operand 1']
    #allocation4 [shape = 's32[2]{0}', space=sflag, size = 0x8, scoped, tag = 'scoped memory for lenet_forward.3']
    #allocation5 [shape = 's32[2]{0}', space=sflag, size = 0x8, scoped, tag = 'scoped memory for lenet_forward.3']
    #allocation6 [shape = 'u8[4096]{0}', space=vmem, size = 0x1000, scoped, tag = 'input window, operand 2']
    #allocation7 [shape = 's32[2]{0}', space=sflag, size = 0x8, scoped, tag = 'scoped memory for lenet_forward.3']
    #allocation8 [shape = 'u8[262144]{0}', space=vmem, size = 0x40000, scoped, tag = 'input window, operand 3']
    #allocation9 [shape = 'u8[512]{0}', space=vmem, size = 0x400, scoped, tag = 'input window, operand 4, single buffered']
    #allocation10 [shape = 's32[1]{0}', space=sflag, size = 0x4, scoped, tag = 'scoped memory for lenet_forward.3']
    #allocation11 [shape = 'u8[1024]{0}', space=vmem, size = 0x400, scoped, tag = 'output window, operand 0, single buffered']
    %10 = vsyncpa [#allocation4], 0
    %s11 = scalar_lea.sflag [#allocation4], 1
    %12 = vsyncpa %s11, 0
    %13 = vsyncpa [#allocation7], 0
    %s14 = scalar_lea.sflag [#allocation7], 1
    %15 = vsyncpa %s14, 0
    %16 = vsyncpa [#allocation10], 0
    %17 = vsyncpa [#allocation5], 0
    loop: start=0, step=1, limit=4
    $region2: #{lenet_forward.3} parent=1 // loop_pre_header
      _
    $region3: #{lenet_forward.3} parent=1 // loop_header
      %s19 = sphi 0, %s23
      %p20 = scmp.ge.s32.totalorder %s19, 4
      %s27 = sphi 0, %s27
      %s29 = sphi 0, %s27
      %s30 = sphi 0, %s29
      %s44 = sphi 0, %s30
      %s50 = sphi 0, %s52
      %s53 = sphi 0, %s50
      %s54 = sphi 0, %s53
      %s70 = sphi 0, %s54
      %s76 = sphi 0, %s78
      %s79 = sphi 0, %s76
      %s80 = sphi 0, %s79
      %s96 = sphi 0, %s80
      %s102 = sphi 0, %s104
      %s105 = sphi 0, %s102
      %s106 = sphi 0, %s105
      %s122 = sphi 0, %s106
      %s126 = sphi 0, %s126
      %s128 = sphi 0, %s126
      %s129 = sphi 0, %s128
      %s143 = sphi 0, %s129
      %s147 = sphi 0, %s147
      %s149 = sphi 0, %s147
      %s150 = sphi 0, %s149
      %s164 = sphi 0, %s150
    $region4: #{lenet_forward.3} parent=1 // loop_header_branch
      %22 = sbr.rel (%p20) target = $region8
    $region5: #{lenet_forward.3} parent=1 // loop_body
      %s24 = ssub.s32 %s19, 1
      %s25 = ssub.s32 %s19, 2
      %s26 = sadd.s32 %s19, 1
      %s28 = sadd.s32 %s27, 1
      %p31 = scmp.eq.s32.totalorder %s19, 1
      %p32 = scmp.ne.s32.totalorder %s27, %s29
      %p33 = scmp.eq.s32.totalorder %s19, 0
      %p34 = por %p32, %p33
      %p35 = scmp.ne.s32.totalorder %s27, %s29
      %p36 = scmp.eq.s32.totalorder %s24, 1
      %p37 = por %p35, %p36
      %p38 = scmp.ne.s32.totalorder %s29, %s30
      %p39 = scmp.eq.s32.totalorder %s24, 0
      %p40 = por %p38, %p39
      %p41 = scmp.ne.s32.totalorder %s29, %s30
      %p42 = scmp.eq.s32.totalorder %s25, 1
      %p43 = por %p41, %p42
      %p45 = scmp.ne.s32.totalorder %s30, %s44
      %p46 = scmp.eq.s32.totalorder %s25, 0
      %p47 = por %p45, %p46
      %s48 = ssub.s32 %s19, %s26
      %p49 = scmp.eq.s32.totalorder %s48, 0
      %s51 = sadd.s32 %s50, 1
      %s52 = scalar_select %p49, %s50, %s51
      %p55 = pneg %p49
      %p56 = scmp.eq.s32.totalorder %s19, 1
      %p57 = por %p55, %p56
      %p58 = scmp.ne.s32.totalorder %s50, %s53
      %p59 = scmp.eq.s32.totalorder %s19, 0
      %p60 = por %p58, %p59
      %p61 = scmp.ne.s32.totalorder %s50, %s53
      %p62 = scmp.eq.s32.totalorder %s24, 1
      %p63 = por %p61, %p62
      %p64 = scmp.ne.s32.totalorder %s53, %s54
      %p65 = scmp.eq.s32.totalorder %s24, 0
      %p66 = por %p64, %p65
      %p67 = scmp.ne.s32.totalorder %s53, %s54
      %p68 = scmp.eq.s32.totalorder %s25, 1
      %p69 = por %p67, %p68
      %p71 = scmp.ne.s32.totalorder %s54, %s70
      %p72 = scmp.eq.s32.totalorder %s25, 0
      %p73 = por %p71, %p72
      %s74 = ssub.s32 %s19, %s26
      %p75 = scmp.eq.s32.totalorder %s74, 0
      %s77 = sadd.s32 %s76, 1
      %s78 = scalar_select %p75, %s76, %s77
      %p81 = pneg %p75
      %p82 = scmp.eq.s32.totalorder %s19, 1
      %p83 = por %p81, %p82
      %p84 = scmp.ne.s32.totalorder %s76, %s79
      %p85 = scmp.eq.s32.totalorder %s19, 0
      %p86 = por %p84, %p85
      %p87 = scmp.ne.s32.totalorder %s76, %s79
      %p88 = scmp.eq.s32.totalorder %s24, 1
      %p89 = por %p87, %p88
      %p90 = scmp.ne.s32.totalorder %s79, %s80
      %p91 = scmp.eq.s32.totalorder %s24, 0
      %p92 = por %p90, %p91
      %p93 = scmp.ne.s32.totalorder %s79, %s80
      %p94 = scmp.eq.s32.totalorder %s25, 1
      %p95 = por %p93, %p94
      %p97 = scmp.ne.s32.totalorder %s80, %s96
      %p98 = scmp.eq.s32.totalorder %s25, 0
      %p99 = por %p97, %p98
      %s100 = ssub.s32 %s19, %s26
      %p101 = scmp.eq.s32.totalorder %s100, 0
      %s103 = sadd.s32 %s102, 1
      %s104 = scalar_select %p101, %s102, %s103
      %p107 = pneg %p101
      %p108 = scmp.eq.s32.totalorder %s19, 1
      %p109 = por %p107, %p108
      %p110 = scmp.ne.s32.totalorder %s102, %s105
      %p111 = scmp.eq.s32.totalorder %s19, 0
      %p112 = por %p110, %p111
      %p113 = scmp.ne.s32.totalorder %s102, %s105
      %p114 = scmp.eq.s32.totalorder %s24, 1
      %p115 = por %p113, %p114
      %p116 = scmp.ne.s32.totalorder %s105, %s106
      %p117 = scmp.eq.s32.totalorder %s24, 0
      %p118 = por %p116, %p117
      %p119 = scmp.ne.s32.totalorder %s105, %s106
      %p120 = scmp.eq.s32.totalorder %s25, 1
      %p121 = por %p119, %p120
      %p123 = scmp.ne.s32.totalorder %s106, %s122
      %p124 = scmp.eq.s32.totalorder %s25, 0
      %p125 = por %p123, %p124
      %s127 = sadd.s32 %s126, 1
      %p130 = scmp.eq.s32.totalorder %s19, 1
      %p131 = scmp.ne.s32.totalorder %s126, %s128
      %p132 = scmp.eq.s32.totalorder %s19, 0
      %p133 = por %p131, %p132
      %p134 = scmp.ne.s32.totalorder %s126, %s128
      %p135 = scmp.eq.s32.totalorder %s24, 1
      %p136 = por %p134, %p135
      %p137 = scmp.ne.s32.totalorder %s128, %s129
      %p138 = scmp.eq.s32.totalorder %s24, 0
      %p139 = por %p137, %p138
      %p140 = scmp.ne.s32.totalorder %s128, %s129
      %p141 = scmp.eq.s32.totalorder %s25, 1
      %p142 = por %p140, %p141
      %p144 = scmp.ne.s32.totalorder %s129, %s143
      %p145 = scmp.eq.s32.totalorder %s25, 0
      %p146 = por %p144, %p145
      %s148 = sadd.s32 %s147, 1
      %p151 = scmp.eq.s32.totalorder %s19, 1
      %p152 = scmp.ne.s32.totalorder %s147, %s149
      %p153 = scmp.eq.s32.totalorder %s19, 0
      %p154 = por %p152, %p153
      %p155 = scmp.ne.s32.totalorder %s147, %s149
      %p156 = scmp.eq.s32.totalorder %s24, 1
      %p157 = por %p155, %p156
      %p158 = scmp.ne.s32.totalorder %s149, %s150
      %p159 = scmp.eq.s32.totalorder %s24, 0
      %p160 = por %p158, %p159
      %p161 = scmp.ne.s32.totalorder %s149, %s150
      %p162 = scmp.eq.s32.totalorder %s25, 1
      %p163 = por %p161, %p162
      %p165 = scmp.ne.s32.totalorder %s150, %s164
      %p166 = scmp.eq.s32.totalorder %s25, 0
      %p167 = por %p165, %p166
      %p168 = scmp.le.s32.totalorder 1, %s19
      %p169 = scmp.lt.s32.totalorder %s19, 3
      %p170 = pnand %p168, %p169
      %p171 = pneg %p170
      // Predicated region
      $region9: #{lenet_forward.3} parent=5 // pred_check
        _
      $region10: #{lenet_forward.3} parent=5 // pred_check_branch
        %173 = sbr.rel (%p170) target = $region12
      $region11: #{lenet_forward.3} parent=5 // pred_region
        %s174 = ssub.s32 %s19, 1
        // Predicated region
        $region13: #{lenet_forward.3} parent=11 // pred_check
          %p175 = pneg %p40
        $region14: #{lenet_forward.3} parent=11 // pred_check_branch
          %177 = sbr.rel (%p175) target = $region16
        $region15: #{lenet_forward.3} parent=11 // pred_region
          _
        $region16: #{lenet_forward.3} parent=11 // pred_fallthru
          _
        // Predicated region
        $region17: #{lenet_forward.3} parent=11 // pred_check
          %p178 = pneg %p139
        $region18: #{lenet_forward.3} parent=11 // pred_check_branch
          %180 = sbr.rel (%p178) target = $region20
        $region19: #{lenet_forward.3} parent=11 // pred_region
          %s182 = ssub.s32 16, 16
          %183 = vsyncadd [#allocation10], %s182
          %s185 = sshll.u32 [#allocation9], 4
          %s186 = int_to_ptr.vmem [resolvable:$true] %s185
          %188 = dma.hbm_to_vmem [thread:$0]  %s4, 16, %s186, [#allocation10]
        $region20: #{lenet_forward.3} parent=11 // pred_fallthru
          _
      $region12: #{lenet_forward.3} parent=5 // pred_fallthru
        _
      %p189 = scmp.lt.s32.totalorder %s19, 2
      // Predicated region
      $region21: #{lenet_forward.3} parent=5 // pred_check
        %p190 = pneg %p189
      $region22: #{lenet_forward.3} parent=5 // pred_check_branch
        %192 = sbr.rel (%p190) target = $region24
      $region23: #{lenet_forward.3} parent=5 // pred_region
        // Predicated region
        $region25: #{lenet_forward.3} parent=23 // pred_check
          %p193 = pneg %p60
        $region26: #{lenet_forward.3} parent=23 // pred_check_branch
          %195 = sbr.rel (%p193) target = $region28
        $region27: #{lenet_forward.3} parent=23 // pred_region
          %s196 = sand.u32 %s50, 1
          %s197 = scalar_lea.sflag [#allocation4], %s196
          %s198 = sand.u32 %s50, 1
          %s199 = smul.addr %s198, 6272
          %s200 = scalar_lea.vmem [#allocation3], %s199
          %s201 = smul.u32 4, %s19
          %s203 = ssub.s32 100352, 100352
          %204 = vsyncadd %s197, %s203
          %s205 = smul.addr %s201, 64
          %s206 = scalar_lea.hbm %s1, %s205
          %s207 = sshll.u32 %s200, 4
          %s208 = int_to_ptr.vmem [resolvable:$true] %s207
          %213 = dma.hbm_to_vmem [thread:$0]  %s206, 100352, %s208, %s197, 512, 256, 16
        $region28: #{lenet_forward.3} parent=23 // pred_fallthru
          _
        // Predicated region
        $region29: #{lenet_forward.3} parent=23 // pred_check
          %p214 = pneg %p86
        $region30: #{lenet_forward.3} parent=23 // pred_check_branch
          %216 = sbr.rel (%p214) target = $region32
        $region31: #{lenet_forward.3} parent=23 // pred_region
          %s217 = sand.u32 %s19, 1
          %s218 = scalar_lea.sflag [#allocation7], %s217
          %s219 = sand.u32 %s76, 1
          %s220 = smul.addr %s219, 4
          %s221 = scalar_lea.vmem [#allocation6], %s220
          %s222 = smul.u32 4, %s19
          %s224 = ssub.s32 64, 64
          %225 = vsyncadd %s218, %s224
          %s226 = smul.addr %s222, 16
          %s227 = scalar_lea.hbm %s2, %s226
          %s229 = sshll.u32 %s221, 4
          %s230 = int_to_ptr.vmem [resolvable:$true] %s229
          %232 = dma.hbm_to_vmem [thread:$0]  %s227, 64, %s230, %s218
        $region32: #{lenet_forward.3} parent=23 // pred_fallthru
          _
        // Predicated region
        $region33: #{lenet_forward.3} parent=23 // pred_check
          %p233 = pneg %p112
        $region34: #{lenet_forward.3} parent=23 // pred_check_branch
          %235 = sbr.rel (%p233) target = $region36
        $region35: #{lenet_forward.3} parent=23 // pred_region
          %s236 = sand.u32 %s19, 1
          %s237 = scalar_lea.sflag [#allocation7], %s236
          %s238 = sand.u32 %s102, 1
          %s239 = smul.addr %s238, 256
          %s240 = scalar_lea.vmem [#allocation8], %s239
          %s241 = smul.u32 64, %s19
          %s243 = ssub.s32 4096, 4096
          %244 = vsyncadd %s237, %s243
          %s245 = smul.addr %s241, 64
          %s246 = scalar_lea.hbm %s3, %s245
          %s247 = sshll.u32 %s240, 4
          %s248 = int_to_ptr.vmem [resolvable:$true] %s247
          %253 = dma.hbm_to_vmem [thread:$0]  %s246, 4096, %s248, %s237, 64, 64, 4
        $region36: #{lenet_forward.3} parent=23 // pred_fallthru
          _
      $region24: #{lenet_forward.3} parent=5 // pred_fallthru
        _
      %p254 = scmp.le.s32.totalorder 1, %s19
      %p255 = scmp.lt.s32.totalorder %s19, 3
      %p256 = pnand %p254, %p255
      %p257 = pneg %p256
      // Predicated region
      $region37: #{lenet_forward.3} parent=5 // pred_check
        _
      $region38: #{lenet_forward.3} parent=5 // pred_check_branch
        %259 = sbr.rel (%p256) target = $region40
      $region39: #{lenet_forward.3} parent=5 // pred_region
        %s260 = ssub.s32 %s19, 1
        %s261 = sand.u32 %s53, 1
        %s262 = scalar_lea.sflag [#allocation4], %s261
        %s263 = sand.u32 %s53, 1
        %s264 = smul.addr %s263, 6272
        %s265 = scalar_lea.vmem [#allocation3], %s264
        // Predicated region
        $region41: #{lenet_forward.3} parent=39 // pred_check
          %p266 = pneg %p66
        $region42: #{lenet_forward.3} parent=39 // pred_check_branch
          %268 = sbr.rel (%p266) target = $region44
        $region43: #{lenet_forward.3} parent=39 // pred_region
          %269 = dma.done %s262, 100352
        $region44: #{lenet_forward.3} parent=39 // pred_fallthru
          _
        %s270 = sand.u32 %s24, 1
        %s271 = scalar_lea.sflag [#allocation7], %s270
        %s272 = sand.u32 %s79, 1
        %s273 = smul.addr %s272, 4
        %s274 = scalar_lea.vmem [#allocation6], %s273
        // Predicated region
        $region45: #{lenet_forward.3} parent=39 // pred_check
          %p275 = pneg %p92
        $region46: #{lenet_forward.3} parent=39 // pred_check_branch
          %277 = sbr.rel (%p275) target = $region48
        $region47: #{lenet_forward.3} parent=39 // pred_region
          %278 = dma.done %s271, 64
        $region48: #{lenet_forward.3} parent=39 // pred_fallthru
          _
        %s279 = sand.u32 %s24, 1
        %s280 = scalar_lea.sflag [#allocation7], %s279
        %s281 = sand.u32 %s105, 1
        %s282 = smul.addr %s281, 256
        %s283 = scalar_lea.vmem [#allocation8], %s282
        // Predicated region
        $region49: #{lenet_forward.3} parent=39 // pred_check
          %p284 = pneg %p118
        $region50: #{lenet_forward.3} parent=39 // pred_check_branch
          %286 = sbr.rel (%p284) target = $region52
        $region51: #{lenet_forward.3} parent=39 // pred_region
          %287 = dma.done %s280, 4096
        $region52: #{lenet_forward.3} parent=39 // pred_fallthru
          _
        // Predicated region
        $region53: #{lenet_forward.3} parent=39 // pred_check
          %p288 = pneg %p139
        $region54: #{lenet_forward.3} parent=39 // pred_check_branch
          %290 = sbr.rel (%p288) target = $region56
        $region55: #{lenet_forward.3} parent=39 // pred_region
          %291 = dma.done [#allocation10], 16
        $region56: #{lenet_forward.3} parent=39 // pred_fallthru
          _
        %p292 = pneg %p40
        %p293 = pneg %p37
        %s294 = sand.u32 %s53, 1
        %s295 = scalar_lea.sflag [#allocation4], %s294
        %s296 = sand.u32 %s53, 1
        %s297 = smul.addr %s296, 6272
        %s298 = scalar_lea.vmem [#allocation3], %s297
        %p299 = pneg %p66
        %p300 = pneg %p63
        %s301 = sand.u32 %s24, 1
        %s302 = scalar_lea.sflag [#allocation7], %s301
        %s303 = sand.u32 %s79, 1
        %s304 = smul.addr %s303, 4
        %s305 = scalar_lea.vmem [#allocation6], %s304
        %p306 = pneg %p92
        %p307 = pneg %p89
        %s308 = sand.u32 %s24, 1
        %s309 = scalar_lea.sflag [#allocation7], %s308
        %s310 = sand.u32 %s105, 1
        %s311 = smul.addr %s310, 256
        %s312 = scalar_lea.vmem [#allocation8], %s311
        %p313 = pneg %p118
        %p314 = pneg %p115
        %p315 = pneg %p139
        %p316 = pneg %p136
        %p317 = pneg %p160
        %p318 = pneg %p157
        %s319 = smul.u32 4, %s24
        %s320 = smul.u32 4, %s24
        %s321 = smul.u32 64, %s24
        %p323 = scmp.eq.s32.totalorder %s24, 0
        // Predicated region
        $region57: #{lenet_forward.3} parent=39 // pred_check
          %p324 = pneg %p323
        $region58: #{lenet_forward.3} parent=39 // pred_check_branch
          %326 = sbr.rel (%p324) target = $region60
        $region59: #{lenet_forward.3} parent=39 // pred_region
          %327 = vst [vmem:[#allocation2] sm:$0x3] 0.0
        $region60: #{lenet_forward.3} parent=39 // pred_fallthru
          _
        %v328 = vld [vmem:[%s0] sm:$0xff]
        %v329 = vld [vmem:[%s0 + $0x8] sm:$0xff]
        %v330 = vld [vmem:[%s0 + $0x10] sm:$0xff]
        %v331 = vld [vmem:[%s0 + $0x18] sm:$0x1]
        %v332 = vld [vmem:[%s265] sm:$0xff]
        %v333 = vld [vmem:[%s265 + $0x8] sm:$0xff]
        %v334 = vld [vmem:[%s265 + $0x10] sm:$0xff]
        %v335 = vld [vmem:[%s265 + $0x18] sm:$0xff]
        %v336 = vld [vmem:[%s265 + $0x20] sm:$0xff]
        %v337 = vld [vmem:[%s265 + $0x28] sm:$0xff]
        %v338 = vld [vmem:[%s265 + $0x30] sm:$0xff]
        %v339 = vld [vmem:[%s265 + $0x38] sm:$0xff]
        %v340 = vld [vmem:[%s265 + $0x40] sm:$0xff]
        %v341 = vld [vmem:[%s265 + $0x48] sm:$0xff]
        %v342 = vld [vmem:[%s265 + $0x50] sm:$0xff]
        %v343 = vld [vmem:[%s265 + $0x58] sm:$0xff]
        %v344 = vld [vmem:[%s265 + $0x60] sm:$0xff]
        %v345 = vld [vmem:[%s265 + $0x68] sm:$0xff]
        %v346 = vld [vmem:[%s265 + $0x70] sm:$0xff]
        %v347 = vld [vmem:[%s265 + $0x78] sm:$0xff]
        %v348 = vld [vmem:[%s265 + $0x80] sm:$0xff]
        %v349 = vld [vmem:[%s265 + $0x88] sm:$0xff]
        %v350 = vld [vmem:[%s265 + $0x90] sm:$0xff]
        %v351 = vld [vmem:[%s265 + $0x98] sm:$0xff]
        %v352 = vld [vmem:[%s265 + $0xa0] sm:$0xff]
        %v353 = vld [vmem:[%s265 + $0xa8] sm:$0xff]
        %v354 = vld [vmem:[%s265 + $0xb0] sm:$0xff]
        %v355 = vld [vmem:[%s265 + $0xb8] sm:$0xff]
        %v356 = vld [vmem:[%s265 + $0xc0] sm:$0xff]
        %v357 = vld [vmem:[%s265 + $0xc8] sm:$0xff]
        %v358 = vld [vmem:[%s265 + $0xd0] sm:$0xff]
        %v359 = vld [vmem:[%s265 + $0xd8] sm:$0xff]
        %v360 = vld [vmem:[%s265 + $0xe0] sm:$0xff]
        %v361 = vld [vmem:[%s265 + $0xe8] sm:$0xff]
        %v362 = vld [vmem:[%s265 + $0xf0] sm:$0xff]
        %v363 = vld [vmem:[%s265 + $0xf8] sm:$0xff]
        %v364 = vld [vmem:[%s265 + $0x100] sm:$0xff]
        %v365 = vld [vmem:[%s265 + $0x108] sm:$0xff]
        %v366 = vld [vmem:[%s265 + $0x110] sm:$0xff]
        %v367 = vld [vmem:[%s265 + $0x118] sm:$0xff]
        %v368 = vld [vmem:[%s265 + $0x120] sm:$0xff]
        %v369 = vld [vmem:[%s265 + $0x128] sm:$0xff]
        %v370 = vld [vmem:[%s265 + $0x130] sm:$0xff]
        %v371 = vld [vmem:[%s265 + $0x138] sm:$0xff]
        %v372 = vld [vmem:[%s265 + $0x140] sm:$0xff]
        %v373 = vld [vmem:[%s265 + $0x148] sm:$0xff]
        %v374 = vld [vmem:[%s265 + $0x150] sm:$0xff]
        %v375 = vld [vmem:[%s265 + $0x158] sm:$0xff]
        %v376 = vld [vmem:[%s265 + $0x160] sm:$0xff]
        %v377 = vld [vmem:[%s265 + $0x168] sm:$0xff]
        %v378 = vld [vmem:[%s265 + $0x170] sm:$0xff]
        %v379 = vld [vmem:[%s265 + $0x178] sm:$0xff]
        %v380 = vld [vmem:[%s265 + $0x180] sm:$0xff]
        %v381 = vld [vmem:[%s265 + $0x188] sm:$0xff]
        %v382 = vld [vmem:[%s265 + $0x190] sm:$0xff]
        %v383 = vld [vmem:[%s265 + $0x198] sm:$0xff]
        %v384 = vld [vmem:[%s265 + $0x1a0] sm:$0xff]
        %v385 = vld [vmem:[%s265 + $0x1a8] sm:$0xff]
        %v386 = vld [vmem:[%s265 + $0x1b0] sm:$0xff]
        %v387 = vld [vmem:[%s265 + $0x1b8] sm:$0xff]
        %v388 = vld [vmem:[%s265 + $0x1c0] sm:$0xff]
        %v389 = vld [vmem:[%s265 + $0x1c8] sm:$0xff]
        %v390 = vld [vmem:[%s265 + $0x1d0] sm:$0xff]
        %v391 = vld [vmem:[%s265 + $0x1d8] sm:$0xff]
        %v392 = vld [vmem:[%s265 + $0x1e0] sm:$0xff]
        %v393 = vld [vmem:[%s265 + $0x1e8] sm:$0xff]
        %v394 = vld [vmem:[%s265 + $0x1f0] sm:$0xff]
        %v395 = vld [vmem:[%s265 + $0x1f8] sm:$0xff]
        %v396 = vld [vmem:[%s265 + $0x200] sm:$0xff]
        %v397 = vld [vmem:[%s265 + $0x208] sm:$0xff]
        %v398 = vld [vmem:[%s265 + $0x210] sm:$0xff]
        %v399 = vld [vmem:[%s265 + $0x218] sm:$0xff]
        %v400 = vld [vmem:[%s265 + $0x220] sm:$0xff]
        %v401 = vld [vmem:[%s265 + $0x228] sm:$0xff]
        %v402 = vld [vmem:[%s265 + $0x230] sm:$0xff]
        %v403 = vld [vmem:[%s265 + $0x238] sm:$0xff]
        %v404 = vld [vmem:[%s265 + $0x240] sm:$0xff]
        %v405 = vld [vmem:[%s265 + $0x248] sm:$0xff]
        %v406 = vld [vmem:[%s265 + $0x250] sm:$0xff]
        %v407 = vld [vmem:[%s265 + $0x258] sm:$0xff]
        %v408 = vld [vmem:[%s265 + $0x260] sm:$0xff]
        %v409 = vld [vmem:[%s265 + $0x268] sm:$0xff]
        %v410 = vld [vmem:[%s265 + $0x270] sm:$0xff]
        %v411 = vld [vmem:[%s265 + $0x278] sm:$0xff]
        %v412 = vld [vmem:[%s265 + $0x280] sm:$0xff]
        %v413 = vld [vmem:[%s265 + $0x288] sm:$0xff]
        %v414 = vld [vmem:[%s265 + $0x290] sm:$0xff]
        %v415 = vld [vmem:[%s265 + $0x298] sm:$0xff]
        %v416 = vld [vmem:[%s265 + $0x2a0] sm:$0xff]
        %v417 = vld [vmem:[%s265 + $0x2a8] sm:$0xff]
        %v418 = vld [vmem:[%s265 + $0x2b0] sm:$0xff]
        %v419 = vld [vmem:[%s265 + $0x2b8] sm:$0xff]
        %v420 = vld [vmem:[%s265 + $0x2c0] sm:$0xff]
        %v421 = vld [vmem:[%s265 + $0x2c8] sm:$0xff]
        %v422 = vld [vmem:[%s265 + $0x2d0] sm:$0xff]
        %v423 = vld [vmem:[%s265 + $0x2d8] sm:$0xff]
        %v424 = vld [vmem:[%s265 + $0x2e0] sm:$0xff]
        %v425 = vld [vmem:[%s265 + $0x2e8] sm:$0xff]
        %v426 = vld [vmem:[%s265 + $0x2f0] sm:$0xff]
        %v427 = vld [vmem:[%s265 + $0x2f8] sm:$0xff]
        %v428 = vld [vmem:[%s265 + $0x300] sm:$0xff]
        %v429 = vld [vmem:[%s265 + $0x308] sm:$0xff]
        %v430 = vld [vmem:[%s265 + $0x310] sm:$0xff]
        %v431 = vld [vmem:[%s265 + $0x318] sm:$0xff]
        %v432 = vld [vmem:[%s265 + $0x320] sm:$0xff]
        %v433 = vld [vmem:[%s265 + $0x328] sm:$0xff]
        %v434 = vld [vmem:[%s265 + $0x330] sm:$0xff]
        %v435 = vld [vmem:[%s265 + $0x338] sm:$0xff]
        %v436 = vld [vmem:[%s265 + $0x340] sm:$0xff]
        %v437 = vld [vmem:[%s265 + $0x348] sm:$0xff]
        %v438 = vld [vmem:[%s265 + $0x350] sm:$0xff]
        %v439 = vld [vmem:[%s265 + $0x358] sm:$0xff]
        %v440 = vld [vmem:[%s265 + $0x360] sm:$0xff]
        %v441 = vld [vmem:[%s265 + $0x368] sm:$0xff]
        %v442 = vld [vmem:[%s265 + $0x370] sm:$0xff]
        %v443 = vld [vmem:[%s265 + $0x378] sm:$0xff]
        %v444 = vld [vmem:[%s265 + $0x380] sm:$0xff]
        %v445 = vld [vmem:[%s265 + $0x388] sm:$0xff]
        %v446 = vld [vmem:[%s265 + $0x390] sm:$0xff]
        %v447 = vld [vmem:[%s265 + $0x398] sm:$0xff]
        %v448 = vld [vmem:[%s265 + $0x3a0] sm:$0xff]
        %v449 = vld [vmem:[%s265 + $0x3a8] sm:$0xff]
        %v450 = vld [vmem:[%s265 + $0x3b0] sm:$0xff]
        %v451 = vld [vmem:[%s265 + $0x3b8] sm:$0xff]
        %v452 = vld [vmem:[%s265 + $0x3c0] sm:$0xff]
        %v453 = vld [vmem:[%s265 + $0x3c8] sm:$0xff]
        %v454 = vld [vmem:[%s265 + $0x3d0] sm:$0xff]
        %v455 = vld [vmem:[%s265 + $0x3d8] sm:$0xff]
        %v456 = vld [vmem:[%s265 + $0x3e0] sm:$0xff]
        %v457 = vld [vmem:[%s265 + $0x3e8] sm:$0xff]
        %v458 = vld [vmem:[%s265 + $0x3f0] sm:$0xff]
        %v459 = vld [vmem:[%s265 + $0x3f8] sm:$0xff]
        %v460 = vld [vmem:[%s265 + $0x400] sm:$0xff]
        %v461 = vld [vmem:[%s265 + $0x408] sm:$0xff]
        %v462 = vld [vmem:[%s265 + $0x410] sm:$0xff]
        %v463 = vld [vmem:[%s265 + $0x418] sm:$0xff]
        %v464 = vld [vmem:[%s265 + $0x420] sm:$0xff]
        %v465 = vld [vmem:[%s265 + $0x428] sm:$0xff]
        %v466 = vld [vmem:[%s265 + $0x430] sm:$0xff]
        %v467 = vld [vmem:[%s265 + $0x438] sm:$0xff]
        %v468 = vld [vmem:[%s265 + $0x440] sm:$0xff]
        %v469 = vld [vmem:[%s265 + $0x448] sm:$0xff]
        %v470 = vld [vmem:[%s265 + $0x450] sm:$0xff]
        %v471 = vld [vmem:[%s265 + $0x458] sm:$0xff]
        %v472 = vld [vmem:[%s265 + $0x460] sm:$0xff]
        %v473 = vld [vmem:[%s265 + $0x468] sm:$0xff]
        %v474 = vld [vmem:[%s265 + $0x470] sm:$0xff]
        %v475 = vld [vmem:[%s265 + $0x478] sm:$0xff]
        %v476 = vld [vmem:[%s265 + $0x480] sm:$0xff]
        %v477 = vld [vmem:[%s265 + $0x488] sm:$0xff]
        %v478 = vld [vmem:[%s265 + $0x490] sm:$0xff]
        %v479 = vld [vmem:[%s265 + $0x498] sm:$0xff]
        %v480 = vld [vmem:[%s265 + $0x4a0] sm:$0xff]
        %v481 = vld [vmem:[%s265 + $0x4a8] sm:$0xff]
        %v482 = vld [vmem:[%s265 + $0x4b0] sm:$0xff]
        %v483 = vld [vmem:[%s265 + $0x4b8] sm:$0xff]
        %v484 = vld [vmem:[%s265 + $0x4c0] sm:$0xff]
        %v485 = vld [vmem:[%s265 + $0x4c8] sm:$0xff]
        %v486 = vld [vmem:[%s265 + $0x4d0] sm:$0xff]
        %v487 = vld [vmem:[%s265 + $0x4d8] sm:$0xff]
        %v488 = vld [vmem:[%s265 + $0x4e0] sm:$0xff]
        %v489 = vld [vmem:[%s265 + $0x4e8] sm:$0xff]
        %v490 = vld [vmem:[%s265 + $0x4f0] sm:$0xff]
        %v491 = vld [vmem:[%s265 + $0x4f8] sm:$0xff]
        %v492 = vld [vmem:[%s265 + $0x500] sm:$0xff]
        %v493 = vld [vmem:[%s265 + $0x508] sm:$0xff]
        %v494 = vld [vmem:[%s265 + $0x510] sm:$0xff]
        %v495 = vld [vmem:[%s265 + $0x518] sm:$0xff]
        %v496 = vld [vmem:[%s265 + $0x520] sm:$0xff]
        %v497 = vld [vmem:[%s265 + $0x528] sm:$0xff]
        %v498 = vld [vmem:[%s265 + $0x530] sm:$0xff]
        %v499 = vld [vmem:[%s265 + $0x538] sm:$0xff]
        %v500 = vld [vmem:[%s265 + $0x540] sm:$0xff]
        %v501 = vld [vmem:[%s265 + $0x548] sm:$0xff]
        %v502 = vld [vmem:[%s265 + $0x550] sm:$0xff]
        %v503 = vld [vmem:[%s265 + $0x558] sm:$0xff]
        %v504 = vld [vmem:[%s265 + $0x560] sm:$0xff]
        %v505 = vld [vmem:[%s265 + $0x568] sm:$0xff]
        %v506 = vld [vmem:[%s265 + $0x570] sm:$0xff]
        %v507 = vld [vmem:[%s265 + $0x578] sm:$0xff]
        %v508 = vld [vmem:[%s265 + $0x580] sm:$0xff]
        %v509 = vld [vmem:[%s265 + $0x588] sm:$0xff]
        %v510 = vld [vmem:[%s265 + $0x590] sm:$0xff]
        %v511 = vld [vmem:[%s265 + $0x598] sm:$0xff]
        %v512 = vld [vmem:[%s265 + $0x5a0] sm:$0xff]
        %v513 = vld [vmem:[%s265 + $0x5a8] sm:$0xff]
        %v514 = vld [vmem:[%s265 + $0x5b0] sm:$0xff]
        %v515 = vld [vmem:[%s265 + $0x5b8] sm:$0xff]
        %v516 = vld [vmem:[%s265 + $0x5c0] sm:$0xff]
        %v517 = vld [vmem:[%s265 + $0x5c8] sm:$0xff]
        %v518 = vld [vmem:[%s265 + $0x5d0] sm:$0xff]
        %v519 = vld [vmem:[%s265 + $0x5d8] sm:$0xff]
        %v520 = vld [vmem:[%s265 + $0x5e0] sm:$0xff]
        %v521 = vld [vmem:[%s265 + $0x5e8] sm:$0xff]
        %v522 = vld [vmem:[%s265 + $0x5f0] sm:$0xff]
        %v523 = vld [vmem:[%s265 + $0x5f8] sm:$0xff]
        %v524 = vld [vmem:[%s265 + $0x600] sm:$0xff]
        %v525 = vld [vmem:[%s265 + $0x608] sm:$0xff]
        %v526 = vld [vmem:[%s265 + $0x610] sm:$0xff]
        %v527 = vld [vmem:[%s265 + $0x618] sm:$0xff]
        %v528 = vld [vmem:[%s265 + $0x620] sm:$0xff]
        %v529 = vld [vmem:[%s265 + $0x628] sm:$0xff]
        %v530 = vld [vmem:[%s265 + $0x630] sm:$0xff]
        %v531 = vld [vmem:[%s265 + $0x638] sm:$0xff]
        %v532 = vld [vmem:[%s265 + $0x640] sm:$0xff]
        %v533 = vld [vmem:[%s265 + $0x648] sm:$0xff]
        %v534 = vld [vmem:[%s265 + $0x650] sm:$0xff]
        %v535 = vld [vmem:[%s265 + $0x658] sm:$0xff]
        %v536 = vld [vmem:[%s265 + $0x660] sm:$0xff]
        %v537 = vld [vmem:[%s265 + $0x668] sm:$0xff]
        %v538 = vld [vmem:[%s265 + $0x670] sm:$0xff]
        %v539 = vld [vmem:[%s265 + $0x678] sm:$0xff]
        %v540 = vld [vmem:[%s265 + $0x680] sm:$0xff]
        %v541 = vld [vmem:[%s265 + $0x688] sm:$0xff]
        %v542 = vld [vmem:[%s265 + $0x690] sm:$0xff]
        %v543 = vld [vmem:[%s265 + $0x698] sm:$0xff]
        %v544 = vld [vmem:[%s265 + $0x6a0] sm:$0xff]
        %v545 = vld [vmem:[%s265 + $0x6a8] sm:$0xff]
        %v546 = vld [vmem:[%s265 + $0x6b0] sm:$0xff]
        %v547 = vld [vmem:[%s265 + $0x6b8] sm:$0xff]
        %v548 = vld [vmem:[%s265 + $0x6c0] sm:$0xff]
        %v549 = vld [vmem:[%s265 + $0x6c8] sm:$0xff]
        %v550 = vld [vmem:[%s265 + $0x6d0] sm:$0xff]
        %v551 = vld [vmem:[%s265 + $0x6d8] sm:$0xff]
        %v552 = vld [vmem:[%s265 + $0x6e0] sm:$0xff]
        %v553 = vld [vmem:[%s265 + $0x6e8] sm:$0xff]
        %v554 = vld [vmem:[%s265 + $0x6f0] sm:$0xff]
        %v555 = vld [vmem:[%s265 + $0x6f8] sm:$0xff]
        %v556 = vld [vmem:[%s265 + $0x700] sm:$0xff]
        %v557 = vld [vmem:[%s265 + $0x708] sm:$0xff]
        %v558 = vld [vmem:[%s265 + $0x710] sm:$0xff]
        %v559 = vld [vmem:[%s265 + $0x718] sm:$0xff]
        %v560 = vld [vmem:[%s265 + $0x720] sm:$0xff]
        %v561 = vld [vmem:[%s265 + $0x728] sm:$0xff]
        %v562 = vld [vmem:[%s265 + $0x730] sm:$0xff]
        %v563 = vld [vmem:[%s265 + $0x738] sm:$0xff]
        %v564 = vld [vmem:[%s265 + $0x740] sm:$0xff]
        %v565 = vld [vmem:[%s265 + $0x748] sm:$0xff]
        %v566 = vld [vmem:[%s265 + $0x750] sm:$0xff]
        %v567 = vld [vmem:[%s265 + $0x758] sm:$0xff]
        %v568 = vld [vmem:[%s265 + $0x760] sm:$0xff]
        %v569 = vld [vmem:[%s265 + $0x768] sm:$0xff]
        %v570 = vld [vmem:[%s265 + $0x770] sm:$0xff]
        %v571 = vld [vmem:[%s265 + $0x778] sm:$0xff]
        %v572 = vld [vmem:[%s265 + $0x780] sm:$0xff]
        %v573 = vld [vmem:[%s265 + $0x788] sm:$0xff]
        %v574 = vld [vmem:[%s265 + $0x790] sm:$0xff]
        %v575 = vld [vmem:[%s265 + $0x798] sm:$0xff]
        %v576 = vld [vmem:[%s265 + $0x7a0] sm:$0xff]
        %v577 = vld [vmem:[%s265 + $0x7a8] sm:$0xff]
        %v578 = vld [vmem:[%s265 + $0x7b0] sm:$0xff]
        %v579 = vld [vmem:[%s265 + $0x7b8] sm:$0xff]
        %v580 = vld [vmem:[%s265 + $0x7c0] sm:$0xff]
        %v581 = vld [vmem:[%s265 + $0x7c8] sm:$0xff]
        %v582 = vld [vmem:[%s265 + $0x7d0] sm:$0xff]
        %v583 = vld [vmem:[%s265 + $0x7d8] sm:$0xff]
        %v584 = vld [vmem:[%s265 + $0x7e0] sm:$0xff]
        %v585 = vld [vmem:[%s265 + $0x7e8] sm:$0xff]
        %v586 = vld [vmem:[%s265 + $0x7f0] sm:$0xff]
        %v587 = vld [vmem:[%s265 + $0x7f8] sm:$0xff]
        %v588 = vld [vmem:[%s265 + $0x800] sm:$0xff]
        %v589 = vld [vmem:[%s265 + $0x808] sm:$0xff]
        %v590 = vld [vmem:[%s265 + $0x810] sm:$0xff]
        %v591 = vld [vmem:[%s265 + $0x818] sm:$0xff]
        %v592 = vld [vmem:[%s265 + $0x820] sm:$0xff]
        %v593 = vld [vmem:[%s265 + $0x828] sm:$0xff]
        %v594 = vld [vmem:[%s265 + $0x830] sm:$0xff]
        %v595 = vld [vmem:[%s265 + $0x838] sm:$0xff]
        %v596 = vld [vmem:[%s265 + $0x840] sm:$0xff]
        %v597 = vld [vmem:[%s265 + $0x848] sm:$0xff]
        %v598 = vld [vmem:[%s265 + $0x850] sm:$0xff]
        %v599 = vld [vmem:[%s265 + $0x858] sm:$0xff]
        %v600 = vld [vmem:[%s265 + $0x860] sm:$0xff]
        %v601 = vld [vmem:[%s265 + $0x868] sm:$0xff]
        %v602 = vld [vmem:[%s265 + $0x870] sm:$0xff]
        %v603 = vld [vmem:[%s265 + $0x878] sm:$0xff]
        %v604 = vld [vmem:[%s265 + $0x880] sm:$0xff]
        %v605 = vld [vmem:[%s265 + $0x888] sm:$0xff]
        %v606 = vld [vmem:[%s265 + $0x890] sm:$0xff]
        %v607 = vld [vmem:[%s265 + $0x898] sm:$0xff]
        %v608 = vld [vmem:[%s265 + $0x8a0] sm:$0xff]
        %v609 = vld [vmem:[%s265 + $0x8a8] sm:$0xff]
        %v610 = vld [vmem:[%s265 + $0x8b0] sm:$0xff]
        %v611 = vld [vmem:[%s265 + $0x8b8] sm:$0xff]
        %v612 = vld [vmem:[%s265 + $0x8c0] sm:$0xff]
        %v613 = vld [vmem:[%s265 + $0x8c8] sm:$0xff]
        %v614 = vld [vmem:[%s265 + $0x8d0] sm:$0xff]
        %v615 = vld [vmem:[%s265 + $0x8d8] sm:$0xff]
        %v616 = vld [vmem:[%s265 + $0x8e0] sm:$0xff]
        %v617 = vld [vmem:[%s265 + $0x8e8] sm:$0xff]
        %v618 = vld [vmem:[%s265 + $0x8f0] sm:$0xff]
        %v619 = vld [vmem:[%s265 + $0x8f8] sm:$0xff]
        %v620 = vld [vmem:[%s265 + $0x900] sm:$0xff]
        %v621 = vld [vmem:[%s265 + $0x908] sm:$0xff]
        %v622 = vld [vmem:[%s265 + $0x910] sm:$0xff]
        %v623 = vld [vmem:[%s265 + $0x918] sm:$0xff]
        %v624 = vld [vmem:[%s265 + $0x920] sm:$0xff]
        %v625 = vld [vmem:[%s265 + $0x928] sm:$0xff]
        %v626 = vld [vmem:[%s265 + $0x930] sm:$0xff]
        %v627 = vld [vmem:[%s265 + $0x938] sm:$0xff]
        %v628 = vld [vmem:[%s265 + $0x940] sm:$0xff]
        %v629 = vld [vmem:[%s265 + $0x948] sm:$0xff]
        %v630 = vld [vmem:[%s265 + $0x950] sm:$0xff]
        %v631 = vld [vmem:[%s265 + $0x958] sm:$0xff]
        %v632 = vld [vmem:[%s265 + $0x960] sm:$0xff]
        %v633 = vld [vmem:[%s265 + $0x968] sm:$0xff]
        %v634 = vld [vmem:[%s265 + $0x970] sm:$0xff]
        %v635 = vld [vmem:[%s265 + $0x978] sm:$0xff]
        %v636 = vld [vmem:[%s265 + $0x980] sm:$0xff]
        %v637 = vld [vmem:[%s265 + $0x988] sm:$0xff]
        %v638 = vld [vmem:[%s265 + $0x990] sm:$0xff]
        %v639 = vld [vmem:[%s265 + $0x998] sm:$0xff]
        %v640 = vld [vmem:[%s265 + $0x9a0] sm:$0xff]
        %v641 = vld [vmem:[%s265 + $0x9a8] sm:$0xff]
        %v642 = vld [vmem:[%s265 + $0x9b0] sm:$0xff]
        %v643 = vld [vmem:[%s265 + $0x9b8] sm:$0xff]
        %v644 = vld [vmem:[%s265 + $0x9c0] sm:$0xff]
        %v645 = vld [vmem:[%s265 + $0x9c8] sm:$0xff]
        %v646 = vld [vmem:[%s265 + $0x9d0] sm:$0xff]
        %v647 = vld [vmem:[%s265 + $0x9d8] sm:$0xff]
        %v648 = vld [vmem:[%s265 + $0x9e0] sm:$0xff]
        %v649 = vld [vmem:[%s265 + $0x9e8] sm:$0xff]
        %v650 = vld [vmem:[%s265 + $0x9f0] sm:$0xff]
        %v651 = vld [vmem:[%s265 + $0x9f8] sm:$0xff]
        %v652 = vld [vmem:[%s265 + $0xa00] sm:$0xff]
        %v653 = vld [vmem:[%s265 + $0xa08] sm:$0xff]
        %v654 = vld [vmem:[%s265 + $0xa10] sm:$0xff]
        %v655 = vld [vmem:[%s265 + $0xa18] sm:$0xff]
        %v656 = vld [vmem:[%s265 + $0xa20] sm:$0xff]
        %v657 = vld [vmem:[%s265 + $0xa28] sm:$0xff]
        %v658 = vld [vmem:[%s265 + $0xa30] sm:$0xff]
        %v659 = vld [vmem:[%s265 + $0xa38] sm:$0xff]
        %v660 = vld [vmem:[%s265 + $0xa40] sm:$0xff]
        %v661 = vld [vmem:[%s265 + $0xa48] sm:$0xff]
        %v662 = vld [vmem:[%s265 + $0xa50] sm:$0xff]
        %v663 = vld [vmem:[%s265 + $0xa58] sm:$0xff]
        %v664 = vld [vmem:[%s265 + $0xa60] sm:$0xff]
        %v665 = vld [vmem:[%s265 + $0xa68] sm:$0xff]
        %v666 = vld [vmem:[%s265 + $0xa70] sm:$0xff]
        %v667 = vld [vmem:[%s265 + $0xa78] sm:$0xff]
        %v668 = vld [vmem:[%s265 + $0xa80] sm:$0xff]
        %v669 = vld [vmem:[%s265 + $0xa88] sm:$0xff]
        %v670 = vld [vmem:[%s265 + $0xa90] sm:$0xff]
        %v671 = vld [vmem:[%s265 + $0xa98] sm:$0xff]
        %v672 = vld [vmem:[%s265 + $0xaa0] sm:$0xff]
        %v673 = vld [vmem:[%s265 + $0xaa8] sm:$0xff]
        %v674 = vld [vmem:[%s265 + $0xab0] sm:$0xff]
        %v675 = vld [vmem:[%s265 + $0xab8] sm:$0xff]
        %v676 = vld [vmem:[%s265 + $0xac0] sm:$0xff]
        %v677 = vld [vmem:[%s265 + $0xac8] sm:$0xff]
        %v678 = vld [vmem:[%s265 + $0xad0] sm:$0xff]
        %v679 = vld [vmem:[%s265 + $0xad8] sm:$0xff]
        %v680 = vld [vmem:[%s265 + $0xae0] sm:$0xff]
        %v681 = vld [vmem:[%s265 + $0xae8] sm:$0xff]
        %v682 = vld [vmem:[%s265 + $0xaf0] sm:$0xff]
        %v683 = vld [vmem:[%s265 + $0xaf8] sm:$0xff]
        %v684 = vld [vmem:[%s265 + $0xb00] sm:$0xff]
        %v685 = vld [vmem:[%s265 + $0xb08] sm:$0xff]
        %v686 = vld [vmem:[%s265 + $0xb10] sm:$0xff]
        %v687 = vld [vmem:[%s265 + $0xb18] sm:$0xff]
        %v688 = vld [vmem:[%s265 + $0xb20] sm:$0xff]
        %v689 = vld [vmem:[%s265 + $0xb28] sm:$0xff]
        %v690 = vld [vmem:[%s265 + $0xb30] sm:$0xff]
        %v691 = vld [vmem:[%s265 + $0xb38] sm:$0xff]
        %v692 = vld [vmem:[%s265 + $0xb40] sm:$0xff]
        %v693 = vld [vmem:[%s265 + $0xb48] sm:$0xff]
        %v694 = vld [vmem:[%s265 + $0xb50] sm:$0xff]
        %v695 = vld [vmem:[%s265 + $0xb58] sm:$0xff]
        %v696 = vld [vmem:[%s265 + $0xb60] sm:$0xff]
        %v697 = vld [vmem:[%s265 + $0xb68] sm:$0xff]
        %v698 = vld [vmem:[%s265 + $0xb70] sm:$0xff]
        %v699 = vld [vmem:[%s265 + $0xb78] sm:$0xff]
        %v700 = vld [vmem:[%s265 + $0xb80] sm:$0xff]
        %v701 = vld [vmem:[%s265 + $0xb88] sm:$0xff]
        %v702 = vld [vmem:[%s265 + $0xb90] sm:$0xff]
        %v703 = vld [vmem:[%s265 + $0xb98] sm:$0xff]
        %v704 = vld [vmem:[%s265 + $0xba0] sm:$0xff]
        %v705 = vld [vmem:[%s265 + $0xba8] sm:$0xff]
        %v706 = vld [vmem:[%s265 + $0xbb0] sm:$0xff]
        %v707 = vld [vmem:[%s265 + $0xbb8] sm:$0xff]
        %v708 = vld [vmem:[%s265 + $0xbc0] sm:$0xff]
        %v709 = vld [vmem:[%s265 + $0xbc8] sm:$0xff]
        %v710 = vld [vmem:[%s265 + $0xbd0] sm:$0xff]
        %v711 = vld [vmem:[%s265 + $0xbd8] sm:$0xff]
        %v712 = vld [vmem:[%s265 + $0xbe0] sm:$0xff]
        %v713 = vld [vmem:[%s265 + $0xbe8] sm:$0xff]
        %v714 = vld [vmem:[%s265 + $0xbf0] sm:$0xff]
        %v715 = vld [vmem:[%s265 + $0xbf8] sm:$0xff]
        %v716 = vld [vmem:[%s265 + $0xc00] sm:$0xff]
        %v717 = vld [vmem:[%s265 + $0xc08] sm:$0xff]
        %v718 = vld [vmem:[%s265 + $0xc10] sm:$0xff]
        %v719 = vld [vmem:[%s265 + $0xc18] sm:$0xff]
        %v720 = vld [vmem:[%s265 + $0xc20] sm:$0xff]
        %v721 = vld [vmem:[%s265 + $0xc28] sm:$0xff]
        %v722 = vld [vmem:[%s265 + $0xc30] sm:$0xff]
        %v723 = vld [vmem:[%s265 + $0xc38] sm:$0xff]
        %v724 = vld [vmem:[%s265 + $0xc40] sm:$0xff]
        %v725 = vld [vmem:[%s265 + $0xc48] sm:$0xff]
        %v726 = vld [vmem:[%s265 + $0xc50] sm:$0xff]
        %v727 = vld [vmem:[%s265 + $0xc58] sm:$0xff]
        %v728 = vld [vmem:[%s265 + $0xc60] sm:$0xff]
        %v729 = vld [vmem:[%s265 + $0xc68] sm:$0xff]
        %v730 = vld [vmem:[%s265 + $0xc70] sm:$0xff]
        %v731 = vld [vmem:[%s265 + $0xc78] sm:$0xff]
        %v732 = vld [vmem:[%s265 + $0xc80] sm:$0xff]
        %v733 = vld [vmem:[%s265 + $0xc88] sm:$0xff]
        %v734 = vld [vmem:[%s265 + $0xc90] sm:$0xff]
        %v735 = vld [vmem:[%s265 + $0xc98] sm:$0xff]
        %v736 = vld [vmem:[%s265 + $0xca0] sm:$0xff]
        %v737 = vld [vmem:[%s265 + $0xca8] sm:$0xff]
        %v738 = vld [vmem:[%s265 + $0xcb0] sm:$0xff]
        %v739 = vld [vmem:[%s265 + $0xcb8] sm:$0xff]
        %v740 = vld [vmem:[%s265 + $0xcc0] sm:$0xff]
        %v741 = vld [vmem:[%s265 + $0xcc8] sm:$0xff]
        %v742 = vld [vmem:[%s265 + $0xcd0] sm:$0xff]
        %v743 = vld [vmem:[%s265 + $0xcd8] sm:$0xff]
        %v744 = vld [vmem:[%s265 + $0xce0] sm:$0xff]
        %v745 = vld [vmem:[%s265 + $0xce8] sm:$0xff]
        %v746 = vld [vmem:[%s265 + $0xcf0] sm:$0xff]
        %v747 = vld [vmem:[%s265 + $0xcf8] sm:$0xff]
        %v748 = vld [vmem:[%s265 + $0xd00] sm:$0xff]
        %v749 = vld [vmem:[%s265 + $0xd08] sm:$0xff]
        %v750 = vld [vmem:[%s265 + $0xd10] sm:$0xff]
        %v751 = vld [vmem:[%s265 + $0xd18] sm:$0xff]
        %v752 = vld [vmem:[%s265 + $0xd20] sm:$0xff]
        %v753 = vld [vmem:[%s265 + $0xd28] sm:$0xff]
        %v754 = vld [vmem:[%s265 + $0xd30] sm:$0xff]
        %v755 = vld [vmem:[%s265 + $0xd38] sm:$0xff]
        %v756 = vld [vmem:[%s265 + $0xd40] sm:$0xff]
        %v757 = vld [vmem:[%s265 + $0xd48] sm:$0xff]
        %v758 = vld [vmem:[%s265 + $0xd50] sm:$0xff]
        %v759 = vld [vmem:[%s265 + $0xd58] sm:$0xff]
        %v760 = vld [vmem:[%s265 + $0xd60] sm:$0xff]
        %v761 = vld [vmem:[%s265 + $0xd68] sm:$0xff]
        %v762 = vld [vmem:[%s265 + $0xd70] sm:$0xff]
        %v763 = vld [vmem:[%s265 + $0xd78] sm:$0xff]
        %v764 = vld [vmem:[%s265 + $0xd80] sm:$0xff]
        %v765 = vld [vmem:[%s265 + $0xd88] sm:$0xff]
        %v766 = vld [vmem:[%s265 + $0xd90] sm:$0xff]
        %v767 = vld [vmem:[%s265 + $0xd98] sm:$0xff]
        %v768 = vld [vmem:[%s265 + $0xda0] sm:$0xff]
        %v769 = vld [vmem:[%s265 + $0xda8] sm:$0xff]
        %v770 = vld [vmem:[%s265 + $0xdb0] sm:$0xff]
        %v771 = vld [vmem:[%s265 + $0xdb8] sm:$0xff]
        %v772 = vld [vmem:[%s265 + $0xdc0] sm:$0xff]
        %v773 = vld [vmem:[%s265 + $0xdc8] sm:$0xff]
        %v774 = vld [vmem:[%s265 + $0xdd0] sm:$0xff]
        %v775 = vld [vmem:[%s265 + $0xdd8] sm:$0xff]
        %v776 = vld [vmem:[%s265 + $0xde0] sm:$0xff]
        %v777 = vld [vmem:[%s265 + $0xde8] sm:$0xff]
        %v778 = vld [vmem:[%s265 + $0xdf0] sm:$0xff]
        %v779 = vld [vmem:[%s265 + $0xdf8] sm:$0xff]
        %v780 = vld [vmem:[%s265 + $0xe00] sm:$0xff]
        %v781 = vld [vmem:[%s265 + $0xe08] sm:$0xff]
        %v782 = vld [vmem:[%s265 + $0xe10] sm:$0xff]
        %v783 = vld [vmem:[%s265 + $0xe18] sm:$0xff]
        %v784 = vld [vmem:[%s265 + $0xe20] sm:$0xff]
        %v785 = vld [vmem:[%s265 + $0xe28] sm:$0xff]
        %v786 = vld [vmem:[%s265 + $0xe30] sm:$0xff]
        %v787 = vld [vmem:[%s265 + $0xe38] sm:$0xff]
        %v788 = vld [vmem:[%s265 + $0xe40] sm:$0xff]
        %v789 = vld [vmem:[%s265 + $0xe48] sm:$0xff]
        %v790 = vld [vmem:[%s265 + $0xe50] sm:$0xff]
        %v791 = vld [vmem:[%s265 + $0xe58] sm:$0xff]
        %v792 = vld [vmem:[%s265 + $0xe60] sm:$0xff]
        %v793 = vld [vmem:[%s265 + $0xe68] sm:$0xff]
        %v794 = vld [vmem:[%s265 + $0xe70] sm:$0xff]
        %v795 = vld [vmem:[%s265 + $0xe78] sm:$0xff]
        %v796 = vld [vmem:[%s265 + $0xe80] sm:$0xff]
        %v797 = vld [vmem:[%s265 + $0xe88] sm:$0xff]
        %v798 = vld [vmem:[%s265 + $0xe90] sm:$0xff]
        %v799 = vld [vmem:[%s265 + $0xe98] sm:$0xff]
        %v800 = vld [vmem:[%s265 + $0xea0] sm:$0xff]
        %v801 = vld [vmem:[%s265 + $0xea8] sm:$0xff]
        %v802 = vld [vmem:[%s265 + $0xeb0] sm:$0xff]
        %v803 = vld [vmem:[%s265 + $0xeb8] sm:$0xff]
        %v804 = vld [vmem:[%s265 + $0xec0] sm:$0xff]
        %v805 = vld [vmem:[%s265 + $0xec8] sm:$0xff]
        %v806 = vld [vmem:[%s265 + $0xed0] sm:$0xff]
        %v807 = vld [vmem:[%s265 + $0xed8] sm:$0xff]
        %v808 = vld [vmem:[%s265 + $0xee0] sm:$0xff]
        %v809 = vld [vmem:[%s265 + $0xee8] sm:$0xff]
        %v810 = vld [vmem:[%s265 + $0xef0] sm:$0xff]
        %v811 = vld [vmem:[%s265 + $0xef8] sm:$0xff]
        %v812 = vld [vmem:[%s265 + $0xf00] sm:$0xff]
        %v813 = vld [vmem:[%s265 + $0xf08] sm:$0xff]
        %v814 = vld [vmem:[%s265 + $0xf10] sm:$0xff]
        %v815 = vld [vmem:[%s265 + $0xf18] sm:$0xff]
        %v816 = vld [vmem:[%s265 + $0xf20] sm:$0xff]
        %v817 = vld [vmem:[%s265 + $0xf28] sm:$0xff]
        %v818 = vld [vmem:[%s265 + $0xf30] sm:$0xff]
        %v819 = vld [vmem:[%s265 + $0xf38] sm:$0xff]
        %v820 = vld [vmem:[%s265 + $0xf40] sm:$0xff]
        %v821 = vld [vmem:[%s265 + $0xf48] sm:$0xff]
        %v822 = vld [vmem:[%s265 + $0xf50] sm:$0xff]
        %v823 = vld [vmem:[%s265 + $0xf58] sm:$0xff]
        %v824 = vld [vmem:[%s265 + $0xf60] sm:$0xff]
        %v825 = vld [vmem:[%s265 + $0xf68] sm:$0xff]
        %v826 = vld [vmem:[%s265 + $0xf70] sm:$0xff]
        %v827 = vld [vmem:[%s265 + $0xf78] sm:$0xff]
        %v828 = vld [vmem:[%s265 + $0xf80] sm:$0xff]
        %v829 = vld [vmem:[%s265 + $0xf88] sm:$0xff]
        %v830 = vld [vmem:[%s265 + $0xf90] sm:$0xff]
        %v831 = vld [vmem:[%s265 + $0xf98] sm:$0xff]
        %v832 = vld [vmem:[%s265 + $0xfa0] sm:$0xff]
        %v833 = vld [vmem:[%s265 + $0xfa8] sm:$0xff]
        %v834 = vld [vmem:[%s265 + $0xfb0] sm:$0xff]
        %v835 = vld [vmem:[%s265 + $0xfb8] sm:$0xff]
        %v836 = vld [vmem:[%s265 + $0xfc0] sm:$0xff]
        %v837 = vld [vmem:[%s265 + $0xfc8] sm:$0xff]
        %v838 = vld [vmem:[%s265 + $0xfd0] sm:$0xff]
        %v839 = vld [vmem:[%s265 + $0xfd8] sm:$0xff]
        %v840 = vld [vmem:[%s265 + $0xfe0] sm:$0xff]
        %v841 = vld [vmem:[%s265 + $0xfe8] sm:$0xff]
        %v842 = vld [vmem:[%s265 + $0xff0] sm:$0xff]
        %v843 = vld [vmem:[%s265 + $0xff8] sm:$0xff]
        %v844 = vld [vmem:[%s265 + $0x1000] sm:$0xff]
        %v845 = vld [vmem:[%s265 + $0x1008] sm:$0xff]
        %v846 = vld [vmem:[%s265 + $0x1010] sm:$0xff]
        %v847 = vld [vmem:[%s265 + $0x1018] sm:$0xff]
        %v848 = vld [vmem:[%s265 + $0x1020] sm:$0xff]
        %v849 = vld [vmem:[%s265 + $0x1028] sm:$0xff]
        %v850 = vld [vmem:[%s265 + $0x1030] sm:$0xff]
        %v851 = vld [vmem:[%s265 + $0x1038] sm:$0xff]
        %v852 = vld [vmem:[%s265 + $0x1040] sm:$0xff]
        %v853 = vld [vmem:[%s265 + $0x1048] sm:$0xff]
        %v854 = vld [vmem:[%s265 + $0x1050] sm:$0xff]
        %v855 = vld [vmem:[%s265 + $0x1058] sm:$0xff]
        %v856 = vld [vmem:[%s265 + $0x1060] sm:$0xff]
        %v857 = vld [vmem:[%s265 + $0x1068] sm:$0xff]
        %v858 = vld [vmem:[%s265 + $0x1070] sm:$0xff]
        %v859 = vld [vmem:[%s265 + $0x1078] sm:$0xff]
        %v860 = vld [vmem:[%s265 + $0x1080] sm:$0xff]
        %v861 = vld [vmem:[%s265 + $0x1088] sm:$0xff]
        %v862 = vld [vmem:[%s265 + $0x1090] sm:$0xff]
        %v863 = vld [vmem:[%s265 + $0x1098] sm:$0xff]
        %v864 = vld [vmem:[%s265 + $0x10a0] sm:$0xff]
        %v865 = vld [vmem:[%s265 + $0x10a8] sm:$0xff]
        %v866 = vld [vmem:[%s265 + $0x10b0] sm:$0xff]
        %v867 = vld [vmem:[%s265 + $0x10b8] sm:$0xff]
        %v868 = vld [vmem:[%s265 + $0x10c0] sm:$0xff]
        %v869 = vld [vmem:[%s265 + $0x10c8] sm:$0xff]
        %v870 = vld [vmem:[%s265 + $0x10d0] sm:$0xff]
        %v871 = vld [vmem:[%s265 + $0x10d8] sm:$0xff]
        %v872 = vld [vmem:[%s265 + $0x10e0] sm:$0xff]
        %v873 = vld [vmem:[%s265 + $0x10e8] sm:$0xff]
        %v874 = vld [vmem:[%s265 + $0x10f0] sm:$0xff]
        %v875 = vld [vmem:[%s265 + $0x10f8] sm:$0xff]
        %v876 = vld [vmem:[%s265 + $0x1100] sm:$0xff]
        %v877 = vld [vmem:[%s265 + $0x1108] sm:$0xff]
        %v878 = vld [vmem:[%s265 + $0x1110] sm:$0xff]
        %v879 = vld [vmem:[%s265 + $0x1118] sm:$0xff]
        %v880 = vld [vmem:[%s265 + $0x1120] sm:$0xff]
        %v881 = vld [vmem:[%s265 + $0x1128] sm:$0xff]
        %v882 = vld [vmem:[%s265 + $0x1130] sm:$0xff]
        %v883 = vld [vmem:[%s265 + $0x1138] sm:$0xff]
        %v884 = vld [vmem:[%s265 + $0x1140] sm:$0xff]
        %v885 = vld [vmem:[%s265 + $0x1148] sm:$0xff]
        %v886 = vld [vmem:[%s265 + $0x1150] sm:$0xff]
        %v887 = vld [vmem:[%s265 + $0x1158] sm:$0xff]
        %v888 = vld [vmem:[%s265 + $0x1160] sm:$0xff]
        %v889 = vld [vmem:[%s265 + $0x1168] sm:$0xff]
        %v890 = vld [vmem:[%s265 + $0x1170] sm:$0xff]
        %v891 = vld [vmem:[%s265 + $0x1178] sm:$0xff]
        %v892 = vld [vmem:[%s265 + $0x1180] sm:$0xff]
        %v893 = vld [vmem:[%s265 + $0x1188] sm:$0xff]
        %v894 = vld [vmem:[%s265 + $0x1190] sm:$0xff]
        %v895 = vld [vmem:[%s265 + $0x1198] sm:$0xff]
        %v896 = vld [vmem:[%s265 + $0x11a0] sm:$0xff]
        %v897 = vld [vmem:[%s265 + $0x11a8] sm:$0xff]
        %v898 = vld [vmem:[%s265 + $0x11b0] sm:$0xff]
        %v899 = vld [vmem:[%s265 + $0x11b8] sm:$0xff]
        %v900 = vld [vmem:[%s265 + $0x11c0] sm:$0xff]
        %v901 = vld [vmem:[%s265 + $0x11c8] sm:$0xff]
        %v902 = vld [vmem:[%s265 + $0x11d0] sm:$0xff]
        %v903 = vld [vmem:[%s265 + $0x11d8] sm:$0xff]
        %v904 = vld [vmem:[%s265 + $0x11e0] sm:$0xff]
        %v905 = vld [vmem:[%s265 + $0x11e8] sm:$0xff]
        %v906 = vld [vmem:[%s265 + $0x11f0] sm:$0xff]
        %v907 = vld [vmem:[%s265 + $0x11f8] sm:$0xff]
        %v908 = vld [vmem:[%s265 + $0x1200] sm:$0xff]
        %v909 = vld [vmem:[%s265 + $0x1208] sm:$0xff]
        %v910 = vld [vmem:[%s265 + $0x1210] sm:$0xff]
        %v911 = vld [vmem:[%s265 + $0x1218] sm:$0xff]
        %v912 = vld [vmem:[%s265 + $0x1220] sm:$0xff]
        %v913 = vld [vmem:[%s265 + $0x1228] sm:$0xff]
        %v914 = vld [vmem:[%s265 + $0x1230] sm:$0xff]
        %v915 = vld [vmem:[%s265 + $0x1238] sm:$0xff]
        %v916 = vld [vmem:[%s265 + $0x1240] sm:$0xff]
        %v917 = vld [vmem:[%s265 + $0x1248] sm:$0xff]
        %v918 = vld [vmem:[%s265 + $0x1250] sm:$0xff]
        %v919 = vld [vmem:[%s265 + $0x1258] sm:$0xff]
        %v920 = vld [vmem:[%s265 + $0x1260] sm:$0xff]
        %v921 = vld [vmem:[%s265 + $0x1268] sm:$0xff]
        %v922 = vld [vmem:[%s265 + $0x1270] sm:$0xff]
        %v923 = vld [vmem:[%s265 + $0x1278] sm:$0xff]
        %v924 = vld [vmem:[%s265 + $0x1280] sm:$0xff]
        %v925 = vld [vmem:[%s265 + $0x1288] sm:$0xff]
        %v926 = vld [vmem:[%s265 + $0x1290] sm:$0xff]
        %v927 = vld [vmem:[%s265 + $0x1298] sm:$0xff]
        %v928 = vld [vmem:[%s265 + $0x12a0] sm:$0xff]
        %v929 = vld [vmem:[%s265 + $0x12a8] sm:$0xff]
        %v930 = vld [vmem:[%s265 + $0x12b0] sm:$0xff]
        %v931 = vld [vmem:[%s265 + $0x12b8] sm:$0xff]
        %v932 = vld [vmem:[%s265 + $0x12c0] sm:$0xff]
        %v933 = vld [vmem:[%s265 + $0x12c8] sm:$0xff]
        %v934 = vld [vmem:[%s265 + $0x12d0] sm:$0xff]
        %v935 = vld [vmem:[%s265 + $0x12d8] sm:$0xff]
        %v936 = vld [vmem:[%s265 + $0x12e0] sm:$0xff]
        %v937 = vld [vmem:[%s265 + $0x12e8] sm:$0xff]
        %v938 = vld [vmem:[%s265 + $0x12f0] sm:$0xff]
        %v939 = vld [vmem:[%s265 + $0x12f8] sm:$0xff]
        %v940 = vld [vmem:[%s265 + $0x1300] sm:$0xff]
        %v941 = vld [vmem:[%s265 + $0x1308] sm:$0xff]
        %v942 = vld [vmem:[%s265 + $0x1310] sm:$0xff]
        %v943 = vld [vmem:[%s265 + $0x1318] sm:$0xff]
        %v944 = vld [vmem:[%s265 + $0x1320] sm:$0xff]
        %v945 = vld [vmem:[%s265 + $0x1328] sm:$0xff]
        %v946 = vld [vmem:[%s265 + $0x1330] sm:$0xff]
        %v947 = vld [vmem:[%s265 + $0x1338] sm:$0xff]
        %v948 = vld [vmem:[%s265 + $0x1340] sm:$0xff]
        %v949 = vld [vmem:[%s265 + $0x1348] sm:$0xff]
        %v950 = vld [vmem:[%s265 + $0x1350] sm:$0xff]
        %v951 = vld [vmem:[%s265 + $0x1358] sm:$0xff]
        %v952 = vld [vmem:[%s265 + $0x1360] sm:$0xff]
        %v953 = vld [vmem:[%s265 + $0x1368] sm:$0xff]
        %v954 = vld [vmem:[%s265 + $0x1370] sm:$0xff]
        %v955 = vld [vmem:[%s265 + $0x1378] sm:$0xff]
        %v956 = vld [vmem:[%s265 + $0x1380] sm:$0xff]
        %v957 = vld [vmem:[%s265 + $0x1388] sm:$0xff]
        %v958 = vld [vmem:[%s265 + $0x1390] sm:$0xff]
        %v959 = vld [vmem:[%s265 + $0x1398] sm:$0xff]
        %v960 = vld [vmem:[%s265 + $0x13a0] sm:$0xff]
        %v961 = vld [vmem:[%s265 + $0x13a8] sm:$0xff]
        %v962 = vld [vmem:[%s265 + $0x13b0] sm:$0xff]
        %v963 = vld [vmem:[%s265 + $0x13b8] sm:$0xff]
        %v964 = vld [vmem:[%s265 + $0x13c0] sm:$0xff]
        %v965 = vld [vmem:[%s265 + $0x13c8] sm:$0xff]
        %v966 = vld [vmem:[%s265 + $0x13d0] sm:$0xff]
        %v967 = vld [vmem:[%s265 + $0x13d8] sm:$0xff]
        %v968 = vld [vmem:[%s265 + $0x13e0] sm:$0xff]
        %v969 = vld [vmem:[%s265 + $0x13e8] sm:$0xff]
        %v970 = vld [vmem:[%s265 + $0x13f0] sm:$0xff]
        %v971 = vld [vmem:[%s265 + $0x13f8] sm:$0xff]
        %v972 = vld [vmem:[%s265 + $0x1400] sm:$0xff]
        %v973 = vld [vmem:[%s265 + $0x1408] sm:$0xff]
        %v974 = vld [vmem:[%s265 + $0x1410] sm:$0xff]
        %v975 = vld [vmem:[%s265 + $0x1418] sm:$0xff]
        %v976 = vld [vmem:[%s265 + $0x1420] sm:$0xff]
        %v977 = vld [vmem:[%s265 + $0x1428] sm:$0xff]
        %v978 = vld [vmem:[%s265 + $0x1430] sm:$0xff]
        %v979 = vld [vmem:[%s265 + $0x1438] sm:$0xff]
        %v980 = vld [vmem:[%s265 + $0x1440] sm:$0xff]
        %v981 = vld [vmem:[%s265 + $0x1448] sm:$0xff]
        %v982 = vld [vmem:[%s265 + $0x1450] sm:$0xff]
        %v983 = vld [vmem:[%s265 + $0x1458] sm:$0xff]
        %v984 = vld [vmem:[%s265 + $0x1460] sm:$0xff]
        %v985 = vld [vmem:[%s265 + $0x1468] sm:$0xff]
        %v986 = vld [vmem:[%s265 + $0x1470] sm:$0xff]
        %v987 = vld [vmem:[%s265 + $0x1478] sm:$0xff]
        %v988 = vld [vmem:[%s265 + $0x1480] sm:$0xff]
        %v989 = vld [vmem:[%s265 + $0x1488] sm:$0xff]
        %v990 = vld [vmem:[%s265 + $0x1490] sm:$0xff]
        %v991 = vld [vmem:[%s265 + $0x1498] sm:$0xff]
        %v992 = vld [vmem:[%s265 + $0x14a0] sm:$0xff]
        %v993 = vld [vmem:[%s265 + $0x14a8] sm:$0xff]
        %v994 = vld [vmem:[%s265 + $0x14b0] sm:$0xff]
        %v995 = vld [vmem:[%s265 + $0x14b8] sm:$0xff]
        %v996 = vld [vmem:[%s265 + $0x14c0] sm:$0xff]
        %v997 = vld [vmem:[%s265 + $0x14c8] sm:$0xff]
        %v998 = vld [vmem:[%s265 + $0x14d0] sm:$0xff]
        %v999 = vld [vmem:[%s265 + $0x14d8] sm:$0xff]
        %v1000 = vld [vmem:[%s265 + $0x14e0] sm:$0xff]
        %v1001 = vld [vmem:[%s265 + $0x14e8] sm:$0xff]
        %v1002 = vld [vmem:[%s265 + $0x14f0] sm:$0xff]
        %v1003 = vld [vmem:[%s265 + $0x14f8] sm:$0xff]
        %v1004 = vld [vmem:[%s265 + $0x1500] sm:$0xff]
        %v1005 = vld [vmem:[%s265 + $0x1508] sm:$0xff]
        %v1006 = vld [vmem:[%s265 + $0x1510] sm:$0xff]
        %v1007 = vld [vmem:[%s265 + $0x1518] sm:$0xff]
        %v1008 = vld [vmem:[%s265 + $0x1520] sm:$0xff]
        %v1009 = vld [vmem:[%s265 + $0x1528] sm:$0xff]
        %v1010 = vld [vmem:[%s265 + $0x1530] sm:$0xff]
        %v1011 = vld [vmem:[%s265 + $0x1538] sm:$0xff]
        %v1012 = vld [vmem:[%s265 + $0x1540] sm:$0xff]
        %v1013 = vld [vmem:[%s265 + $0x1548] sm:$0xff]
        %v1014 = vld [vmem:[%s265 + $0x1550] sm:$0xff]
        %v1015 = vld [vmem:[%s265 + $0x1558] sm:$0xff]
        %v1016 = vld [vmem:[%s265 + $0x1560] sm:$0xff]
        %v1017 = vld [vmem:[%s265 + $0x1568] sm:$0xff]
        %v1018 = vld [vmem:[%s265 + $0x1570] sm:$0xff]
        %v1019 = vld [vmem:[%s265 + $0x1578] sm:$0xff]
        %v1020 = vld [vmem:[%s265 + $0x1580] sm:$0xff]
        %v1021 = vld [vmem:[%s265 + $0x1588] sm:$0xff]
        %v1022 = vld [vmem:[%s265 + $0x1590] sm:$0xff]
        %v1023 = vld [vmem:[%s265 + $0x1598] sm:$0xff]
        %v1024 = vld [vmem:[%s265 + $0x15a0] sm:$0xff]
        %v1025 = vld [vmem:[%s265 + $0x15a8] sm:$0xff]
        %v1026 = vld [vmem:[%s265 + $0x15b0] sm:$0xff]
        %v1027 = vld [vmem:[%s265 + $0x15b8] sm:$0xff]
        %v1028 = vld [vmem:[%s265 + $0x15c0] sm:$0xff]
        %v1029 = vld [vmem:[%s265 + $0x15c8] sm:$0xff]
        %v1030 = vld [vmem:[%s265 + $0x15d0] sm:$0xff]
        %v1031 = vld [vmem:[%s265 + $0x15d8] sm:$0xff]
        %v1032 = vld [vmem:[%s265 + $0x15e0] sm:$0xff]
        %v1033 = vld [vmem:[%s265 + $0x15e8] sm:$0xff]
        %v1034 = vld [vmem:[%s265 + $0x15f0] sm:$0xff]
        %v1035 = vld [vmem:[%s265 + $0x15f8] sm:$0xff]
        %v1036 = vld [vmem:[%s265 + $0x1600] sm:$0xff]
        %v1037 = vld [vmem:[%s265 + $0x1608] sm:$0xff]
        %v1038 = vld [vmem:[%s265 + $0x1610] sm:$0xff]
        %v1039 = vld [vmem:[%s265 + $0x1618] sm:$0xff]
        %v1040 = vld [vmem:[%s265 + $0x1620] sm:$0xff]
        %v1041 = vld [vmem:[%s265 + $0x1628] sm:$0xff]
        %v1042 = vld [vmem:[%s265 + $0x1630] sm:$0xff]
        %v1043 = vld [vmem:[%s265 + $0x1638] sm:$0xff]
        %v1044 = vld [vmem:[%s265 + $0x1640] sm:$0xff]
        %v1045 = vld [vmem:[%s265 + $0x1648] sm:$0xff]
        %v1046 = vld [vmem:[%s265 + $0x1650] sm:$0xff]
        %v1047 = vld [vmem:[%s265 + $0x1658] sm:$0xff]
        %v1048 = vld [vmem:[%s265 + $0x1660] sm:$0xff]
        %v1049 = vld [vmem:[%s265 + $0x1668] sm:$0xff]
        %v1050 = vld [vmem:[%s265 + $0x1670] sm:$0xff]
        %v1051 = vld [vmem:[%s265 + $0x1678] sm:$0xff]
        %v1052 = vld [vmem:[%s265 + $0x1680] sm:$0xff]
        %v1053 = vld [vmem:[%s265 + $0x1688] sm:$0xff]
        %v1054 = vld [vmem:[%s265 + $0x1690] sm:$0xff]
        %v1055 = vld [vmem:[%s265 + $0x1698] sm:$0xff]
        %v1056 = vld [vmem:[%s265 + $0x16a0] sm:$0xff]
        %v1057 = vld [vmem:[%s265 + $0x16a8] sm:$0xff]
        %v1058 = vld [vmem:[%s265 + $0x16b0] sm:$0xff]
        %v1059 = vld [vmem:[%s265 + $0x16b8] sm:$0xff]
        %v1060 = vld [vmem:[%s265 + $0x16c0] sm:$0xff]
        %v1061 = vld [vmem:[%s265 + $0x16c8] sm:$0xff]
        %v1062 = vld [vmem:[%s265 + $0x16d0] sm:$0xff]
        %v1063 = vld [vmem:[%s265 + $0x16d8] sm:$0xff]
        %v1064 = vld [vmem:[%s265 + $0x16e0] sm:$0xff]
        %v1065 = vld [vmem:[%s265 + $0x16e8] sm:$0xff]
        %v1066 = vld [vmem:[%s265 + $0x16f0] sm:$0xff]
        %v1067 = vld [vmem:[%s265 + $0x16f8] sm:$0xff]
        %v1068 = vld [vmem:[%s265 + $0x1700] sm:$0xff]
        %v1069 = vld [vmem:[%s265 + $0x1708] sm:$0xff]
        %v1070 = vld [vmem:[%s265 + $0x1710] sm:$0xff]
        %v1071 = vld [vmem:[%s265 + $0x1718] sm:$0xff]
        %v1072 = vld [vmem:[%s265 + $0x1720] sm:$0xff]
        %v1073 = vld [vmem:[%s265 + $0x1728] sm:$0xff]
        %v1074 = vld [vmem:[%s265 + $0x1730] sm:$0xff]
        %v1075 = vld [vmem:[%s265 + $0x1738] sm:$0xff]
        %v1076 = vld [vmem:[%s265 + $0x1740] sm:$0xff]
        %v1077 = vld [vmem:[%s265 + $0x1748] sm:$0xff]
        %v1078 = vld [vmem:[%s265 + $0x1750] sm:$0xff]
        %v1079 = vld [vmem:[%s265 + $0x1758] sm:$0xff]
        %v1080 = vld [vmem:[%s265 + $0x1760] sm:$0xff]
        %v1081 = vld [vmem:[%s265 + $0x1768] sm:$0xff]
        %v1082 = vld [vmem:[%s265 + $0x1770] sm:$0xff]
        %v1083 = vld [vmem:[%s265 + $0x1778] sm:$0xff]
        %v1084 = vld [vmem:[%s265 + $0x1780] sm:$0xff]
        %v1085 = vld [vmem:[%s265 + $0x1788] sm:$0xff]
        %v1086 = vld [vmem:[%s265 + $0x1790] sm:$0xff]
        %v1087 = vld [vmem:[%s265 + $0x1798] sm:$0xff]
        %v1088 = vld [vmem:[%s265 + $0x17a0] sm:$0xff]
        %v1089 = vld [vmem:[%s265 + $0x17a8] sm:$0xff]
        %v1090 = vld [vmem:[%s265 + $0x17b0] sm:$0xff]
        %v1091 = vld [vmem:[%s265 + $0x17b8] sm:$0xff]
        %v1092 = vld [vmem:[%s265 + $0x17c0] sm:$0xff]
        %v1093 = vld [vmem:[%s265 + $0x17c8] sm:$0xff]
        %v1094 = vld [vmem:[%s265 + $0x17d0] sm:$0xff]
        %v1095 = vld [vmem:[%s265 + $0x17d8] sm:$0xff]
        %v1096 = vld [vmem:[%s265 + $0x17e0] sm:$0xff]
        %v1097 = vld [vmem:[%s265 + $0x17e8] sm:$0xff]
        %v1098 = vld [vmem:[%s265 + $0x17f0] sm:$0xff]
        %v1099 = vld [vmem:[%s265 + $0x17f8] sm:$0xff]
        %v1100 = vld [vmem:[%s265 + $0x1800] sm:$0xff]
        %v1101 = vld [vmem:[%s265 + $0x1808] sm:$0xff]
        %v1102 = vld [vmem:[%s265 + $0x1810] sm:$0xff]
        %v1103 = vld [vmem:[%s265 + $0x1818] sm:$0xff]
        %v1104 = vld [vmem:[%s265 + $0x1820] sm:$0xff]
        %v1105 = vld [vmem:[%s265 + $0x1828] sm:$0xff]
        %v1106 = vld [vmem:[%s265 + $0x1830] sm:$0xff]
        %v1107 = vld [vmem:[%s265 + $0x1838] sm:$0xff]
        %v1108 = vld [vmem:[%s265 + $0x1840] sm:$0xff]
        %v1109 = vld [vmem:[%s265 + $0x1848] sm:$0xff]
        %v1110 = vld [vmem:[%s265 + $0x1850] sm:$0xff]
        %v1111 = vld [vmem:[%s265 + $0x1858] sm:$0xff]
        %v1112 = vld [vmem:[%s265 + $0x1860] sm:$0xff]
        %v1113 = vld [vmem:[%s265 + $0x1868] sm:$0xff]
        %v1114 = vld [vmem:[%s265 + $0x1870] sm:$0xff]
        %v1115 = vld [vmem:[%s265 + $0x1878] sm:$0xff]
        %v1116 = vld [vmem:[%s274] sm:$0xf]
        %v1118 = vlaneseq
        %v1119 = vshrl.u32 %v1118, 7
        %v1120 = vsub.s32 0, %v1119
        %v1121 = vrot.slane %v1116, %v1120
        %v1122 = vlaneseq
        %v1123 = vshrl.u32 %v1122, 7
        %v1124 = vsub.s32 1, %v1123
        %v1125 = vrot.slane %v1116, %v1124
        %v1126 = vlaneseq
        %v1127 = vshrl.u32 %v1126, 7
        %v1128 = vsub.s32 2, %v1127
        %v1129 = vrot.slane %v1116, %v1128
        %v1130 = vlaneseq
        %v1131 = vshrl.u32 %v1130, 7
        %v1132 = vsub.s32 3, %v1131
        %v1133 = vrot.slane %v1116, %v1132
        %v1142 = vcombine.high %v328, %v328
        %v1144 = vunpack.c.l.s4 1966171168
        %v1145 = vunpack.c.0.s8 %v1144
        %v1146 = vlaneseq
        %v1147 = vshrl.u32 %v1146, 7
        %v1148 = vsub.s32 %v1145, %v1147
        %v1149 = vrot.slane %v328, %v1148
        %v1151 = vunpack.c.l.s4 1966171168
        %v1152 = vunpack.c.0.s8 %v1151
        %v1153 = vlaneseq
        %v1154 = vshrl.u32 %v1153, 7
        %v1155 = vsub.s32 %v1152, %v1154
        %v1156 = vrot.slane %v1142, %v1155
        %v1157 = vcombine.high %v1149, %v1149
        %v1158 = vcombine.high %v1156, %v1156
        %v1160 = vunpack.c.l.s4 1966171168
        %v1161 = vunpack.c.0.s8 %v1160
        %v1162 = vlaneseq
        %v1163 = vshrl.u32 %v1162, 7
        %v1164 = vsub.s32 %v1161, %v1163
        %v1165 = vrot.slane %v1149, %v1164
        %v1167 = vunpack.c.l.s4 1966171168
        %v1168 = vunpack.c.0.s8 %v1167
        %v1169 = vlaneseq
        %v1170 = vshrl.u32 %v1169, 7
        %v1171 = vsub.s32 %v1168, %v1170
        %v1172 = vrot.slane %v1156, %v1171
        %v1174 = vunpack.c.l.s4 1966171168
        %v1175 = vunpack.c.0.s8 %v1174
        %v1176 = vlaneseq
        %v1177 = vshrl.u32 %v1176, 7
        %v1178 = vsub.s32 %v1175, %v1177
        %v1179 = vrot.slane %v1157, %v1178
        %v1181 = vunpack.c.l.s4 1966171168
        %v1182 = vunpack.c.0.s8 %v1181
        %v1183 = vlaneseq
        %v1184 = vshrl.u32 %v1183, 7
        %v1185 = vsub.s32 %v1182, %v1184
        %v1186 = vrot.slane %v1158, %v1185
        %v1187 = vcombine.high %v1165, %v1165
        %v1188 = vcombine.high %v1172, %v1172
        %v1189 = vcombine.high %v1179, %v1179
        %v1190 = vcombine.high %v1186, %v1186
        %v1191 = vcombine.high %v329, %v329
        %v1193 = vunpack.c.l.s4 1966171168
        %v1194 = vunpack.c.0.s8 %v1193
        %v1195 = vlaneseq
        %v1196 = vshrl.u32 %v1195, 7
        %v1197 = vsub.s32 %v1194, %v1196
        %v1198 = vrot.slane %v329, %v1197
        %v1200 = vunpack.c.l.s4 1966171168
        %v1201 = vunpack.c.0.s8 %v1200
        %v1202 = vlaneseq
        %v1203 = vshrl.u32 %v1202, 7
        %v1204 = vsub.s32 %v1201, %v1203
        %v1205 = vrot.slane %v1191, %v1204
        %v1206 = vcombine.high %v1198, %v1198
        %v1207 = vcombine.high %v1205, %v1205
        %v1209 = vunpack.c.l.s4 1966171168
        %v1210 = vunpack.c.0.s8 %v1209
        %v1211 = vlaneseq
        %v1212 = vshrl.u32 %v1211, 7
        %v1213 = vsub.s32 %v1210, %v1212
        %v1214 = vrot.slane %v1198, %v1213
        %v1216 = vunpack.c.l.s4 1966171168
        %v1217 = vunpack.c.0.s8 %v1216
        %v1218 = vlaneseq
        %v1219 = vshrl.u32 %v1218, 7
        %v1220 = vsub.s32 %v1217, %v1219
        %v1221 = vrot.slane %v1205, %v1220
        %v1223 = vunpack.c.l.s4 1966171168
        %v1224 = vunpack.c.0.s8 %v1223
        %v1225 = vlaneseq
        %v1226 = vshrl.u32 %v1225, 7
        %v1227 = vsub.s32 %v1224, %v1226
        %v1228 = vrot.slane %v1206, %v1227
        %v1230 = vunpack.c.l.s4 1966171168
        %v1231 = vunpack.c.0.s8 %v1230
        %v1232 = vlaneseq
        %v1233 = vshrl.u32 %v1232, 7
        %v1234 = vsub.s32 %v1231, %v1233
        %v1235 = vrot.slane %v1207, %v1234
        %v1236 = vcombine.high %v1214, %v1214
        %v1237 = vcombine.high %v1221, %v1221
        %v1238 = vcombine.high %v1228, %v1228
        %v1239 = vcombine.high %v1235, %v1235
        %v1240 = vcombine.high %v330, %v330
        %v1242 = vunpack.c.l.s4 1966171168
        %v1243 = vunpack.c.0.s8 %v1242
        %v1244 = vlaneseq
        %v1245 = vshrl.u32 %v1244, 7
        %v1246 = vsub.s32 %v1243, %v1245
        %v1247 = vrot.slane %v330, %v1246
        %v1249 = vunpack.c.l.s4 1966171168
        %v1250 = vunpack.c.0.s8 %v1249
        %v1251 = vlaneseq
        %v1252 = vshrl.u32 %v1251, 7
        %v1253 = vsub.s32 %v1250, %v1252
        %v1254 = vrot.slane %v1240, %v1253
        %v1255 = vcombine.high %v1247, %v1247
        %v1256 = vcombine.high %v1254, %v1254
        %v1258 = vunpack.c.l.s4 1966171168
        %v1259 = vunpack.c.0.s8 %v1258
        %v1260 = vlaneseq
        %v1261 = vshrl.u32 %v1260, 7
        %v1262 = vsub.s32 %v1259, %v1261
        %v1263 = vrot.slane %v1247, %v1262
        %v1265 = vunpack.c.l.s4 1966171168
        %v1266 = vunpack.c.0.s8 %v1265
        %v1267 = vlaneseq
        %v1268 = vshrl.u32 %v1267, 7
        %v1269 = vsub.s32 %v1266, %v1268
        %v1270 = vrot.slane %v1254, %v1269
        %v1272 = vunpack.c.l.s4 1966171168
        %v1273 = vunpack.c.0.s8 %v1272
        %v1274 = vlaneseq
        %v1275 = vshrl.u32 %v1274, 7
        %v1276 = vsub.s32 %v1273, %v1275
        %v1277 = vrot.slane %v1255, %v1276
        %v1279 = vunpack.c.l.s4 1966171168
        %v1280 = vunpack.c.0.s8 %v1279
        %v1281 = vlaneseq
        %v1282 = vshrl.u32 %v1281, 7
        %v1283 = vsub.s32 %v1280, %v1282
        %v1284 = vrot.slane %v1256, %v1283
        %v1285 = vcombine.high %v1263, %v1263
        %v1286 = vcombine.high %v1270, %v1270
        %v1287 = vcombine.high %v1277, %v1277
        %v1288 = vcombine.high %v1284, %v1284
        %v1290 = vunpack.c.l.s4 1966171168
        %v1291 = vunpack.c.0.s8 %v1290
        %v1292 = vlaneseq
        %v1293 = vshrl.u32 %v1292, 7
        %v1294 = vsub.s32 %v1291, %v1293
        %v1295 = vrot.slane %v331, %v1294
        %v1297 = vunpack.c.l.s4 1966171168
        %v1298 = vunpack.c.0.s8 %v1297
        %v1299 = vlaneseq
        %v1300 = vshrl.u32 %v1299, 7
        %v1301 = vsub.s32 %v1298, %v1300
        %v1302 = vrot.slane %v1295, %v1301
        %v2111 = vunpack.c.l.b16 %v332
        %v2112 = vunpack.c.h.b16 %v332
        %v2113 = vunpack.c.l.b16 %v333
        %v2114 = vunpack.c.h.b16 %v333
        %v2115 = vunpack.c.l.b16 %v334
        %v2116 = vunpack.c.h.b16 %v334
        %v2117 = vunpack.c.l.b16 %v335
        %v2118 = vunpack.c.h.b16 %v335
        %v2119 = vunpack.c.l.b16 %v336
        %v2120 = vunpack.c.h.b16 %v336
        %v2121 = vunpack.c.l.b16 %v337
        %v2122 = vunpack.c.h.b16 %v337
        %v2123 = vunpack.c.l.b16 %v338
        %v2124 = vunpack.c.h.b16 %v338
        %v2125 = vunpack.c.l.b16 %v339
        %v2126 = vunpack.c.h.b16 %v339
        %v2127 = vunpack.c.l.b16 %v340
        %v2128 = vunpack.c.h.b16 %v340
        %v2129 = vunpack.c.l.b16 %v341
        %v2130 = vunpack.c.h.b16 %v341
        %v2131 = vunpack.c.l.b16 %v342
        %v2132 = vunpack.c.h.b16 %v342
        %v2133 = vunpack.c.l.b16 %v343
        %v2134 = vunpack.c.h.b16 %v343
        %v2135 = vunpack.c.l.b16 %v344
        %v2136 = vunpack.c.h.b16 %v344
        %v2137 = vunpack.c.l.b16 %v345
        %v2138 = vunpack.c.h.b16 %v345
        %v2139 = vunpack.c.l.b16 %v346
        %v2140 = vunpack.c.h.b16 %v346
        %v2141 = vunpack.c.l.b16 %v347
        %v2142 = vunpack.c.h.b16 %v347
        %v2143 = vunpack.c.l.b16 %v348
        %v2144 = vunpack.c.h.b16 %v348
        %v2145 = vunpack.c.l.b16 %v349
        %v2146 = vunpack.c.h.b16 %v349
        %v2147 = vunpack.c.l.b16 %v350
        %v2148 = vunpack.c.h.b16 %v350
        %v2149 = vunpack.c.l.b16 %v351
        %v2150 = vunpack.c.h.b16 %v351
        %v2151 = vunpack.c.l.b16 %v352
        %v2152 = vunpack.c.h.b16 %v352
        %v2153 = vunpack.c.l.b16 %v353
        %v2154 = vunpack.c.h.b16 %v353
        %v2155 = vunpack.c.l.b16 %v354
        %v2156 = vunpack.c.h.b16 %v354
        %v2157 = vunpack.c.l.b16 %v355
        %v2158 = vunpack.c.h.b16 %v355
        %v2159 = vunpack.c.l.b16 %v356
        %v2160 = vunpack.c.h.b16 %v356
        %v2161 = vunpack.c.l.b16 %v357
        %v2162 = vunpack.c.h.b16 %v357
        %v2163 = vunpack.c.l.b16 %v358
        %v2164 = vunpack.c.h.b16 %v358
        %v2165 = vunpack.c.l.b16 %v359
        %v2166 = vunpack.c.h.b16 %v359
        %v2167 = vunpack.c.l.b16 %v360
        %v2168 = vunpack.c.h.b16 %v360
        %v2169 = vunpack.c.l.b16 %v361
        %v2170 = vunpack.c.h.b16 %v361
        %v2171 = vunpack.c.l.b16 %v362
        %v2172 = vunpack.c.h.b16 %v362
        %v2173 = vunpack.c.l.b16 %v363
        %v2174 = vunpack.c.h.b16 %v363
        %v2175 = vunpack.c.l.b16 %v364
        %v2176 = vunpack.c.h.b16 %v364
        %v2177 = vunpack.c.l.b16 %v365
        %v2178 = vunpack.c.h.b16 %v365
        %v2179 = vunpack.c.l.b16 %v366
        %v2180 = vunpack.c.h.b16 %v366
        %v2181 = vunpack.c.l.b16 %v367
        %v2182 = vunpack.c.h.b16 %v367
        %v2183 = vunpack.c.l.b16 %v368
        %v2184 = vunpack.c.h.b16 %v368
        %v2185 = vunpack.c.l.b16 %v369
        %v2186 = vunpack.c.h.b16 %v369
        %v2187 = vunpack.c.l.b16 %v370
        %v2188 = vunpack.c.h.b16 %v370
        %v2189 = vunpack.c.l.b16 %v371
        %v2190 = vunpack.c.h.b16 %v371
        %v2191 = vunpack.c.l.b16 %v372
        %v2192 = vunpack.c.h.b16 %v372
        %v2193 = vunpack.c.l.b16 %v373
        %v2194 = vunpack.c.h.b16 %v373
        %v2195 = vunpack.c.l.b16 %v374
        %v2196 = vunpack.c.h.b16 %v374
        %v2197 = vunpack.c.l.b16 %v375
        %v2198 = vunpack.c.h.b16 %v375
        %v2199 = vunpack.c.l.b16 %v376
        %v2200 = vunpack.c.h.b16 %v376
        %v2201 = vunpack.c.l.b16 %v377
        %v2202 = vunpack.c.h.b16 %v377
        %v2203 = vunpack.c.l.b16 %v378
        %v2204 = vunpack.c.h.b16 %v378
        %v2205 = vunpack.c.l.b16 %v379
        %v2206 = vunpack.c.h.b16 %v379
        %v2207 = vunpack.c.l.b16 %v380
        %v2208 = vunpack.c.h.b16 %v380
        %v2209 = vunpack.c.l.b16 %v381
        %v2210 = vunpack.c.h.b16 %v381
        %v2211 = vunpack.c.l.b16 %v382
        %v2212 = vunpack.c.h.b16 %v382
        %v2213 = vunpack.c.l.b16 %v383
        %v2214 = vunpack.c.h.b16 %v383
        %v2215 = vunpack.c.l.b16 %v384
        %v2216 = vunpack.c.h.b16 %v384
        %v2217 = vunpack.c.l.b16 %v385
        %v2218 = vunpack.c.h.b16 %v385
        %v2219 = vunpack.c.l.b16 %v386
        %v2220 = vunpack.c.h.b16 %v386
        %v2221 = vunpack.c.l.b16 %v387
        %v2222 = vunpack.c.h.b16 %v387
        %v2223 = vunpack.c.l.b16 %v388
        %v2224 = vunpack.c.h.b16 %v388
        %v2225 = vunpack.c.l.b16 %v389
        %v2226 = vunpack.c.h.b16 %v389
        %v2227 = vunpack.c.l.b16 %v390
        %v2228 = vunpack.c.h.b16 %v390
        %v2229 = vunpack.c.l.b16 %v391
        %v2230 = vunpack.c.h.b16 %v391
        %v2231 = vunpack.c.l.b16 %v392
        %v2232 = vunpack.c.h.b16 %v392
        %v2233 = vunpack.c.l.b16 %v393
        %v2234 = vunpack.c.h.b16 %v393
        %v2235 = vunpack.c.l.b16 %v394
        %v2236 = vunpack.c.h.b16 %v394
        %v2237 = vunpack.c.l.b16 %v395
        %v2238 = vunpack.c.h.b16 %v395
        %v2239 = vunpack.c.l.b16 %v396
        %v2240 = vunpack.c.h.b16 %v396
        %v2241 = vunpack.c.l.b16 %v397
        %v2242 = vunpack.c.h.b16 %v397
        %v2243 = vunpack.c.l.b16 %v398
        %v2244 = vunpack.c.h.b16 %v398
        %v2245 = vunpack.c.l.b16 %v399
        %v2246 = vunpack.c.h.b16 %v399
        %v2247 = vunpack.c.l.b16 %v400
        %v2248 = vunpack.c.h.b16 %v400
        %v2249 = vunpack.c.l.b16 %v401
        %v2250 = vunpack.c.h.b16 %v401
        %v2251 = vunpack.c.l.b16 %v402
        %v2252 = vunpack.c.h.b16 %v402
        %v2253 = vunpack.c.l.b16 %v403
        %v2254 = vunpack.c.h.b16 %v403
        %v2255 = vunpack.c.l.b16 %v404
        %v2256 = vunpack.c.h.b16 %v404
        %v2257 = vunpack.c.l.b16 %v405
        %v2258 = vunpack.c.h.b16 %v405
        %v2259 = vunpack.c.l.b16 %v406
        %v2260 = vunpack.c.h.b16 %v406
        %v2261 = vunpack.c.l.b16 %v407
        %v2262 = vunpack.c.h.b16 %v407
        %v2263 = vunpack.c.l.b16 %v408
        %v2264 = vunpack.c.h.b16 %v408
        %v2265 = vunpack.c.l.b16 %v409
        %v2266 = vunpack.c.h.b16 %v409
        %v2267 = vunpack.c.l.b16 %v410
        %v2268 = vunpack.c.h.b16 %v410
        %v2269 = vunpack.c.l.b16 %v411
        %v2270 = vunpack.c.h.b16 %v411
        %v2271 = vunpack.c.l.b16 %v412
        %v2272 = vunpack.c.h.b16 %v412
        %v2273 = vunpack.c.l.b16 %v413
        %v2274 = vunpack.c.h.b16 %v413
        %v2275 = vunpack.c.l.b16 %v414
        %v2276 = vunpack.c.h.b16 %v414
        %v2277 = vunpack.c.l.b16 %v415
        %v2278 = vunpack.c.h.b16 %v415
        %v2279 = vunpack.c.l.b16 %v416
        %v2280 = vunpack.c.h.b16 %v416
        %v2281 = vunpack.c.l.b16 %v417
        %v2282 = vunpack.c.h.b16 %v417
        %v2283 = vunpack.c.l.b16 %v418
        %v2284 = vunpack.c.h.b16 %v418
        %v2285 = vunpack.c.l.b16 %v419
        %v2286 = vunpack.c.h.b16 %v419
        %v2287 = vunpack.c.l.b16 %v420
        %v2288 = vunpack.c.h.b16 %v420
        %v2289 = vunpack.c.l.b16 %v421
        %v2290 = vunpack.c.h.b16 %v421
        %v2291 = vunpack.c.l.b16 %v422
        %v2292 = vunpack.c.h.b16 %v422
        %v2293 = vunpack.c.l.b16 %v423
        %v2294 = vunpack.c.h.b16 %v423
        %v2295 = vunpack.c.l.b16 %v424
        %v2296 = vunpack.c.h.b16 %v424
        %v2297 = vunpack.c.l.b16 %v425
        %v2298 = vunpack.c.h.b16 %v425
        %v2299 = vunpack.c.l.b16 %v426
        %v2300 = vunpack.c.h.b16 %v426
        %v2301 = vunpack.c.l.b16 %v427
        %v2302 = vunpack.c.h.b16 %v427
        %v2303 = vunpack.c.l.b16 %v428
        %v2304 = vunpack.c.h.b16 %v428
        %v2305 = vunpack.c.l.b16 %v429
        %v2306 = vunpack.c.h.b16 %v429
        %v2307 = vunpack.c.l.b16 %v430
        %v2308 = vunpack.c.h.b16 %v430
        %v2309 = vunpack.c.l.b16 %v431
        %v2310 = vunpack.c.h.b16 %v431
        %v2311 = vunpack.c.l.b16 %v432
        %v2312 = vunpack.c.h.b16 %v432
        %v2313 = vunpack.c.l.b16 %v433
        %v2314 = vunpack.c.h.b16 %v433
        %v2315 = vunpack.c.l.b16 %v434
        %v2316 = vunpack.c.h.b16 %v434
        %v2317 = vunpack.c.l.b16 %v435
        %v2318 = vunpack.c.h.b16 %v435
        %v2319 = vunpack.c.l.b16 %v436
        %v2320 = vunpack.c.h.b16 %v436
        %v2321 = vunpack.c.l.b16 %v437
        %v2322 = vunpack.c.h.b16 %v437
        %v2323 = vunpack.c.l.b16 %v438
        %v2324 = vunpack.c.h.b16 %v438
        %v2325 = vunpack.c.l.b16 %v439
        %v2326 = vunpack.c.h.b16 %v439
        %v2327 = vunpack.c.l.b16 %v440
        %v2328 = vunpack.c.h.b16 %v440
        %v2329 = vunpack.c.l.b16 %v441
        %v2330 = vunpack.c.h.b16 %v441
        %v2331 = vunpack.c.l.b16 %v442
        %v2332 = vunpack.c.h.b16 %v442
        %v2333 = vunpack.c.l.b16 %v443
        %v2334 = vunpack.c.h.b16 %v443
        %v2335 = vunpack.c.l.b16 %v444
        %v2336 = vunpack.c.h.b16 %v444
        %v2337 = vunpack.c.l.b16 %v445
        %v2338 = vunpack.c.h.b16 %v445
        %v2339 = vunpack.c.l.b16 %v446
        %v2340 = vunpack.c.h.b16 %v446
        %v2341 = vunpack.c.l.b16 %v447
        %v2342 = vunpack.c.h.b16 %v447
        %v2343 = vunpack.c.l.b16 %v448
        %v2344 = vunpack.c.h.b16 %v448
        %v2345 = vunpack.c.l.b16 %v449
        %v2346 = vunpack.c.h.b16 %v449
        %v2347 = vunpack.c.l.b16 %v450
        %v2348 = vunpack.c.h.b16 %v450
        %v2349 = vunpack.c.l.b16 %v451
        %v2350 = vunpack.c.h.b16 %v451
        %v2351 = vunpack.c.l.b16 %v452
        %v2352 = vunpack.c.h.b16 %v452
        %v2353 = vunpack.c.l.b16 %v453
        %v2354 = vunpack.c.h.b16 %v453
        %v2355 = vunpack.c.l.b16 %v454
        %v2356 = vunpack.c.h.b16 %v454
        %v2357 = vunpack.c.l.b16 %v455
        %v2358 = vunpack.c.h.b16 %v455
        %v2359 = vunpack.c.l.b16 %v456
        %v2360 = vunpack.c.h.b16 %v456
        %v2361 = vunpack.c.l.b16 %v457
        %v2362 = vunpack.c.h.b16 %v457
        %v2363 = vunpack.c.l.b16 %v458
        %v2364 = vunpack.c.h.b16 %v458
        %v2365 = vunpack.c.l.b16 %v459
        %v2366 = vunpack.c.h.b16 %v459
        %v2367 = vunpack.c.l.b16 %v460
        %v2368 = vunpack.c.h.b16 %v460
        %v2369 = vunpack.c.l.b16 %v461
        %v2370 = vunpack.c.h.b16 %v461
        %v2371 = vunpack.c.l.b16 %v462
        %v2372 = vunpack.c.h.b16 %v462
        %v2373 = vunpack.c.l.b16 %v463
        %v2374 = vunpack.c.h.b16 %v463
        %v2375 = vunpack.c.l.b16 %v464
        %v2376 = vunpack.c.h.b16 %v464
        %v2377 = vunpack.c.l.b16 %v465
        %v2378 = vunpack.c.h.b16 %v465
        %v2379 = vunpack.c.l.b16 %v466
        %v2380 = vunpack.c.h.b16 %v466
        %v2381 = vunpack.c.l.b16 %v467
        %v2382 = vunpack.c.h.b16 %v467
        %v2383 = vunpack.c.l.b16 %v468
        %v2384 = vunpack.c.h.b16 %v468
        %v2385 = vunpack.c.l.b16 %v469
        %v2386 = vunpack.c.h.b16 %v469
        %v2387 = vunpack.c.l.b16 %v470
        %v2388 = vunpack.c.h.b16 %v470
        %v2389 = vunpack.c.l.b16 %v471
        %v2390 = vunpack.c.h.b16 %v471
        %v2391 = vunpack.c.l.b16 %v472
        %v2392 = vunpack.c.h.b16 %v472
        %v2393 = vunpack.c.l.b16 %v473
        %v2394 = vunpack.c.h.b16 %v473
        %v2395 = vunpack.c.l.b16 %v474
        %v2396 = vunpack.c.h.b16 %v474
        %v2397 = vunpack.c.l.b16 %v475
        %v2398 = vunpack.c.h.b16 %v475
        %v2399 = vunpack.c.l.b16 %v476
        %v2400 = vunpack.c.h.b16 %v476
        %v2401 = vunpack.c.l.b16 %v477
        %v2402 = vunpack.c.h.b16 %v477
        %v2403 = vunpack.c.l.b16 %v478
        %v2404 = vunpack.c.h.b16 %v478
        %v2405 = vunpack.c.l.b16 %v479
        %v2406 = vunpack.c.h.b16 %v479
        %v2407 = vunpack.c.l.b16 %v480
        %v2408 = vunpack.c.h.b16 %v480
        %v2409 = vunpack.c.l.b16 %v481
        %v2410 = vunpack.c.h.b16 %v481
        %v2411 = vunpack.c.l.b16 %v482
        %v2412 = vunpack.c.h.b16 %v482
        %v2413 = vunpack.c.l.b16 %v483
        %v2414 = vunpack.c.h.b16 %v483
        %v2415 = vunpack.c.l.b16 %v484
        %v2416 = vunpack.c.h.b16 %v484
        %v2417 = vunpack.c.l.b16 %v485
        %v2418 = vunpack.c.h.b16 %v485
        %v2419 = vunpack.c.l.b16 %v486
        %v2420 = vunpack.c.h.b16 %v486
        %v2421 = vunpack.c.l.b16 %v487
        %v2422 = vunpack.c.h.b16 %v487
        %v2423 = vunpack.c.l.b16 %v488
        %v2424 = vunpack.c.h.b16 %v488
        %v2425 = vunpack.c.l.b16 %v489
        %v2426 = vunpack.c.h.b16 %v489
        %v2427 = vunpack.c.l.b16 %v490
        %v2428 = vunpack.c.h.b16 %v490
        %v2429 = vunpack.c.l.b16 %v491
        %v2430 = vunpack.c.h.b16 %v491
        %v2431 = vunpack.c.l.b16 %v492
        %v2432 = vunpack.c.h.b16 %v492
        %v2433 = vunpack.c.l.b16 %v493
        %v2434 = vunpack.c.h.b16 %v493
        %v2435 = vunpack.c.l.b16 %v494
        %v2436 = vunpack.c.h.b16 %v494
        %v2437 = vunpack.c.l.b16 %v495
        %v2438 = vunpack.c.h.b16 %v495
        %v2439 = vunpack.c.l.b16 %v496
        %v2440 = vunpack.c.h.b16 %v496
        %v2441 = vunpack.c.l.b16 %v497
        %v2442 = vunpack.c.h.b16 %v497
        %v2443 = vunpack.c.l.b16 %v498
        %v2444 = vunpack.c.h.b16 %v498
        %v2445 = vunpack.c.l.b16 %v499
        %v2446 = vunpack.c.h.b16 %v499
        %v2447 = vunpack.c.l.b16 %v500
        %v2448 = vunpack.c.h.b16 %v500
        %v2449 = vunpack.c.l.b16 %v501
        %v2450 = vunpack.c.h.b16 %v501
        %v2451 = vunpack.c.l.b16 %v502
        %v2452 = vunpack.c.h.b16 %v502
        %v2453 = vunpack.c.l.b16 %v503
        %v2454 = vunpack.c.h.b16 %v503
        %v2455 = vunpack.c.l.b16 %v504
        %v2456 = vunpack.c.h.b16 %v504
        %v2457 = vunpack.c.l.b16 %v505
        %v2458 = vunpack.c.h.b16 %v505
        %v2459 = vunpack.c.l.b16 %v506
        %v2460 = vunpack.c.h.b16 %v506
        %v2461 = vunpack.c.l.b16 %v507
        %v2462 = vunpack.c.h.b16 %v507
        %v2463 = vunpack.c.l.b16 %v508
        %v2464 = vunpack.c.h.b16 %v508
        %v2465 = vunpack.c.l.b16 %v509
        %v2466 = vunpack.c.h.b16 %v509
        %v2467 = vunpack.c.l.b16 %v510
        %v2468 = vunpack.c.h.b16 %v510
        %v2469 = vunpack.c.l.b16 %v511
        %v2470 = vunpack.c.h.b16 %v511
        %v2471 = vunpack.c.l.b16 %v512
        %v2472 = vunpack.c.h.b16 %v512
        %v2473 = vunpack.c.l.b16 %v513
        %v2474 = vunpack.c.h.b16 %v513
        %v2475 = vunpack.c.l.b16 %v514
        %v2476 = vunpack.c.h.b16 %v514
        %v2477 = vunpack.c.l.b16 %v515
        %v2478 = vunpack.c.h.b16 %v515
        %v2479 = vunpack.c.l.b16 %v516
        %v2480 = vunpack.c.h.b16 %v516
        %v2481 = vunpack.c.l.b16 %v517
        %v2482 = vunpack.c.h.b16 %v517
        %v2483 = vunpack.c.l.b16 %v518
        %v2484 = vunpack.c.h.b16 %v518
        %v2485 = vunpack.c.l.b16 %v519
        %v2486 = vunpack.c.h.b16 %v519
        %v2487 = vunpack.c.l.b16 %v520
        %v2488 = vunpack.c.h.b16 %v520
        %v2489 = vunpack.c.l.b16 %v521
        %v2490 = vunpack.c.h.b16 %v521
        %v2491 = vunpack.c.l.b16 %v522
        %v2492 = vunpack.c.h.b16 %v522
        %v2493 = vunpack.c.l.b16 %v523
        %v2494 = vunpack.c.h.b16 %v523
        %v2495 = vunpack.c.l.b16 %v524
        %v2496 = vunpack.c.h.b16 %v524
        %v2497 = vunpack.c.l.b16 %v525
        %v2498 = vunpack.c.h.b16 %v525
        %v2499 = vunpack.c.l.b16 %v526
        %v2500 = vunpack.c.h.b16 %v526
        %v2501 = vunpack.c.l.b16 %v527
        %v2502 = vunpack.c.h.b16 %v527
        %v2503 = vunpack.c.l.b16 %v528
        %v2504 = vunpack.c.h.b16 %v528
        %v2505 = vunpack.c.l.b16 %v529
        %v2506 = vunpack.c.h.b16 %v529
        %v2507 = vunpack.c.l.b16 %v530
        %v2508 = vunpack.c.h.b16 %v530
        %v2509 = vunpack.c.l.b16 %v531
        %v2510 = vunpack.c.h.b16 %v531
        %v2511 = vunpack.c.l.b16 %v532
        %v2512 = vunpack.c.h.b16 %v532
        %v2513 = vunpack.c.l.b16 %v533
        %v2514 = vunpack.c.h.b16 %v533
        %v2515 = vunpack.c.l.b16 %v534
        %v2516 = vunpack.c.h.b16 %v534
        %v2517 = vunpack.c.l.b16 %v535
        %v2518 = vunpack.c.h.b16 %v535
        %v2519 = vunpack.c.l.b16 %v536
        %v2520 = vunpack.c.h.b16 %v536
        %v2521 = vunpack.c.l.b16 %v537
        %v2522 = vunpack.c.h.b16 %v537
        %v2523 = vunpack.c.l.b16 %v538
        %v2524 = vunpack.c.h.b16 %v538
        %v2525 = vunpack.c.l.b16 %v539
        %v2526 = vunpack.c.h.b16 %v539
        %v2527 = vunpack.c.l.b16 %v540
        %v2528 = vunpack.c.h.b16 %v540
        %v2529 = vunpack.c.l.b16 %v541
        %v2530 = vunpack.c.h.b16 %v541
        %v2531 = vunpack.c.l.b16 %v542
        %v2532 = vunpack.c.h.b16 %v542
        %v2533 = vunpack.c.l.b16 %v543
        %v2534 = vunpack.c.h.b16 %v543
        %v2535 = vunpack.c.l.b16 %v544
        %v2536 = vunpack.c.h.b16 %v544
        %v2537 = vunpack.c.l.b16 %v545
        %v2538 = vunpack.c.h.b16 %v545
        %v2539 = vunpack.c.l.b16 %v546
        %v2540 = vunpack.c.h.b16 %v546
        %v2541 = vunpack.c.l.b16 %v547
        %v2542 = vunpack.c.h.b16 %v547
        %v2543 = vunpack.c.l.b16 %v548
        %v2544 = vunpack.c.h.b16 %v548
        %v2545 = vunpack.c.l.b16 %v549
        %v2546 = vunpack.c.h.b16 %v549
        %v2547 = vunpack.c.l.b16 %v550
        %v2548 = vunpack.c.h.b16 %v550
        %v2549 = vunpack.c.l.b16 %v551
        %v2550 = vunpack.c.h.b16 %v551
        %v2551 = vunpack.c.l.b16 %v552
        %v2552 = vunpack.c.h.b16 %v552
        %v2553 = vunpack.c.l.b16 %v553
        %v2554 = vunpack.c.h.b16 %v553
        %v2555 = vunpack.c.l.b16 %v554
        %v2556 = vunpack.c.h.b16 %v554
        %v2557 = vunpack.c.l.b16 %v555
        %v2558 = vunpack.c.h.b16 %v555
        %v2559 = vunpack.c.l.b16 %v556
        %v2560 = vunpack.c.h.b16 %v556
        %v2561 = vunpack.c.l.b16 %v557
        %v2562 = vunpack.c.h.b16 %v557
        %v2563 = vunpack.c.l.b16 %v558
        %v2564 = vunpack.c.h.b16 %v558
        %v2565 = vunpack.c.l.b16 %v559
        %v2566 = vunpack.c.h.b16 %v559
        %v2567 = vunpack.c.l.b16 %v560
        %v2568 = vunpack.c.h.b16 %v560
        %v2569 = vunpack.c.l.b16 %v561
        %v2570 = vunpack.c.h.b16 %v561
        %v2571 = vunpack.c.l.b16 %v562
        %v2572 = vunpack.c.h.b16 %v562
        %v2573 = vunpack.c.l.b16 %v563
        %v2574 = vunpack.c.h.b16 %v563
        %v2575 = vunpack.c.l.b16 %v564
        %v2576 = vunpack.c.h.b16 %v564
        %v2577 = vunpack.c.l.b16 %v565
        %v2578 = vunpack.c.h.b16 %v565
        %v2579 = vunpack.c.l.b16 %v566
        %v2580 = vunpack.c.h.b16 %v566
        %v2581 = vunpack.c.l.b16 %v567
        %v2582 = vunpack.c.h.b16 %v567
        %v2583 = vunpack.c.l.b16 %v568
        %v2584 = vunpack.c.h.b16 %v568
        %v2585 = vunpack.c.l.b16 %v569
        %v2586 = vunpack.c.h.b16 %v569
        %v2587 = vunpack.c.l.b16 %v570
        %v2588 = vunpack.c.h.b16 %v570
        %v2589 = vunpack.c.l.b16 %v571
        %v2590 = vunpack.c.h.b16 %v571
        %v2591 = vunpack.c.l.b16 %v572
        %v2592 = vunpack.c.h.b16 %v572
        %v2593 = vunpack.c.l.b16 %v573
        %v2594 = vunpack.c.h.b16 %v573
        %v2595 = vunpack.c.l.b16 %v574
        %v2596 = vunpack.c.h.b16 %v574
        %v2597 = vunpack.c.l.b16 %v575
        %v2598 = vunpack.c.h.b16 %v575
        %v2599 = vunpack.c.l.b16 %v576
        %v2600 = vunpack.c.h.b16 %v576
        %v2601 = vunpack.c.l.b16 %v577
        %v2602 = vunpack.c.h.b16 %v577
        %v2603 = vunpack.c.l.b16 %v578
        %v2604 = vunpack.c.h.b16 %v578
        %v2605 = vunpack.c.l.b16 %v579
        %v2606 = vunpack.c.h.b16 %v579
        %v2607 = vunpack.c.l.b16 %v580
        %v2608 = vunpack.c.h.b16 %v580
        %v2609 = vunpack.c.l.b16 %v581
        %v2610 = vunpack.c.h.b16 %v581
        %v2611 = vunpack.c.l.b16 %v582
        %v2612 = vunpack.c.h.b16 %v582
        %v2613 = vunpack.c.l.b16 %v583
        %v2614 = vunpack.c.h.b16 %v583
        %v2615 = vunpack.c.l.b16 %v584
        %v2616 = vunpack.c.h.b16 %v584
        %v2617 = vunpack.c.l.b16 %v585
        %v2618 = vunpack.c.h.b16 %v585
        %v2619 = vunpack.c.l.b16 %v586
        %v2620 = vunpack.c.h.b16 %v586
        %v2621 = vunpack.c.l.b16 %v587
        %v2622 = vunpack.c.h.b16 %v587
        %v2623 = vunpack.c.l.b16 %v588
        %v2624 = vunpack.c.h.b16 %v588
        %v2625 = vunpack.c.l.b16 %v589
        %v2626 = vunpack.c.h.b16 %v589
        %v2627 = vunpack.c.l.b16 %v590
        %v2628 = vunpack.c.h.b16 %v590
        %v2629 = vunpack.c.l.b16 %v591
        %v2630 = vunpack.c.h.b16 %v591
        %v2631 = vunpack.c.l.b16 %v592
        %v2632 = vunpack.c.h.b16 %v592
        %v2633 = vunpack.c.l.b16 %v593
        %v2634 = vunpack.c.h.b16 %v593
        %v2635 = vunpack.c.l.b16 %v594
        %v2636 = vunpack.c.h.b16 %v594
        %v2637 = vunpack.c.l.b16 %v595
        %v2638 = vunpack.c.h.b16 %v595
        %v2639 = vunpack.c.l.b16 %v596
        %v2640 = vunpack.c.h.b16 %v596
        %v2641 = vunpack.c.l.b16 %v597
        %v2642 = vunpack.c.h.b16 %v597
        %v2643 = vunpack.c.l.b16 %v598
        %v2644 = vunpack.c.h.b16 %v598
        %v2645 = vunpack.c.l.b16 %v599
        %v2646 = vunpack.c.h.b16 %v599
        %v2647 = vunpack.c.l.b16 %v600
        %v2648 = vunpack.c.h.b16 %v600
        %v2649 = vunpack.c.l.b16 %v601
        %v2650 = vunpack.c.h.b16 %v601
        %v2651 = vunpack.c.l.b16 %v602
        %v2652 = vunpack.c.h.b16 %v602
        %v2653 = vunpack.c.l.b16 %v603
        %v2654 = vunpack.c.h.b16 %v603
        %v2655 = vunpack.c.l.b16 %v604
        %v2656 = vunpack.c.h.b16 %v604
        %v2657 = vunpack.c.l.b16 %v605
        %v2658 = vunpack.c.h.b16 %v605
        %v2659 = vunpack.c.l.b16 %v606
        %v2660 = vunpack.c.h.b16 %v606
        %v2661 = vunpack.c.l.b16 %v607
        %v2662 = vunpack.c.h.b16 %v607
        %v2663 = vunpack.c.l.b16 %v608
        %v2664 = vunpack.c.h.b16 %v608
        %v2665 = vunpack.c.l.b16 %v609
        %v2666 = vunpack.c.h.b16 %v609
        %v2667 = vunpack.c.l.b16 %v610
        %v2668 = vunpack.c.h.b16 %v610
        %v2669 = vunpack.c.l.b16 %v611
        %v2670 = vunpack.c.h.b16 %v611
        %v2671 = vunpack.c.l.b16 %v612
        %v2672 = vunpack.c.h.b16 %v612
        %v2673 = vunpack.c.l.b16 %v613
        %v2674 = vunpack.c.h.b16 %v613
        %v2675 = vunpack.c.l.b16 %v614
        %v2676 = vunpack.c.h.b16 %v614
        %v2677 = vunpack.c.l.b16 %v615
        %v2678 = vunpack.c.h.b16 %v615
        %v2679 = vunpack.c.l.b16 %v616
        %v2680 = vunpack.c.h.b16 %v616
        %v2681 = vunpack.c.l.b16 %v617
        %v2682 = vunpack.c.h.b16 %v617
        %v2683 = vunpack.c.l.b16 %v618
        %v2684 = vunpack.c.h.b16 %v618
        %v2685 = vunpack.c.l.b16 %v619
        %v2686 = vunpack.c.h.b16 %v619
        %v2687 = vunpack.c.l.b16 %v620
        %v2688 = vunpack.c.h.b16 %v620
        %v2689 = vunpack.c.l.b16 %v621
        %v2690 = vunpack.c.h.b16 %v621
        %v2691 = vunpack.c.l.b16 %v622
        %v2692 = vunpack.c.h.b16 %v622
        %v2693 = vunpack.c.l.b16 %v623
        %v2694 = vunpack.c.h.b16 %v623
        %v2695 = vunpack.c.l.b16 %v624
        %v2696 = vunpack.c.h.b16 %v624
        %v2697 = vunpack.c.l.b16 %v625
        %v2698 = vunpack.c.h.b16 %v625
        %v2699 = vunpack.c.l.b16 %v626
        %v2700 = vunpack.c.h.b16 %v626
        %v2701 = vunpack.c.l.b16 %v627
        %v2702 = vunpack.c.h.b16 %v627
        %v2703 = vunpack.c.l.b16 %v628
        %v2704 = vunpack.c.h.b16 %v628
        %v2705 = vunpack.c.l.b16 %v629
        %v2706 = vunpack.c.h.b16 %v629
        %v2707 = vunpack.c.l.b16 %v630
        %v2708 = vunpack.c.h.b16 %v630
        %v2709 = vunpack.c.l.b16 %v631
        %v2710 = vunpack.c.h.b16 %v631
        %v2711 = vunpack.c.l.b16 %v632
        %v2712 = vunpack.c.h.b16 %v632
        %v2713 = vunpack.c.l.b16 %v633
        %v2714 = vunpack.c.h.b16 %v633
        %v2715 = vunpack.c.l.b16 %v634
        %v2716 = vunpack.c.h.b16 %v634
        %v2717 = vunpack.c.l.b16 %v635
        %v2718 = vunpack.c.h.b16 %v635
        %v2719 = vunpack.c.l.b16 %v636
        %v2720 = vunpack.c.h.b16 %v636
        %v2721 = vunpack.c.l.b16 %v637
        %v2722 = vunpack.c.h.b16 %v637
        %v2723 = vunpack.c.l.b16 %v638
        %v2724 = vunpack.c.h.b16 %v638
        %v2725 = vunpack.c.l.b16 %v639
        %v2726 = vunpack.c.h.b16 %v639
        %v2727 = vunpack.c.l.b16 %v640
        %v2728 = vunpack.c.h.b16 %v640
        %v2729 = vunpack.c.l.b16 %v641
        %v2730 = vunpack.c.h.b16 %v641
        %v2731 = vunpack.c.l.b16 %v642
        %v2732 = vunpack.c.h.b16 %v642
        %v2733 = vunpack.c.l.b16 %v643
        %v2734 = vunpack.c.h.b16 %v643
        %v2735 = vunpack.c.l.b16 %v644
        %v2736 = vunpack.c.h.b16 %v644
        %v2737 = vunpack.c.l.b16 %v645
        %v2738 = vunpack.c.h.b16 %v645
        %v2739 = vunpack.c.l.b16 %v646
        %v2740 = vunpack.c.h.b16 %v646
        %v2741 = vunpack.c.l.b16 %v647
        %v2742 = vunpack.c.h.b16 %v647
        %v2743 = vunpack.c.l.b16 %v648
        %v2744 = vunpack.c.h.b16 %v648
        %v2745 = vunpack.c.l.b16 %v649
        %v2746 = vunpack.c.h.b16 %v649
        %v2747 = vunpack.c.l.b16 %v650
        %v2748 = vunpack.c.h.b16 %v650
        %v2749 = vunpack.c.l.b16 %v651
        %v2750 = vunpack.c.h.b16 %v651
        %v2751 = vunpack.c.l.b16 %v652
        %v2752 = vunpack.c.h.b16 %v652
        %v2753 = vunpack.c.l.b16 %v653
        %v2754 = vunpack.c.h.b16 %v653
        %v2755 = vunpack.c.l.b16 %v654
        %v2756 = vunpack.c.h.b16 %v654
        %v2757 = vunpack.c.l.b16 %v655
        %v2758 = vunpack.c.h.b16 %v655
        %v2759 = vunpack.c.l.b16 %v656
        %v2760 = vunpack.c.h.b16 %v656
        %v2761 = vunpack.c.l.b16 %v657
        %v2762 = vunpack.c.h.b16 %v657
        %v2763 = vunpack.c.l.b16 %v658
        %v2764 = vunpack.c.h.b16 %v658
        %v2765 = vunpack.c.l.b16 %v659
        %v2766 = vunpack.c.h.b16 %v659
        %v2767 = vunpack.c.l.b16 %v660
        %v2768 = vunpack.c.h.b16 %v660
        %v2769 = vunpack.c.l.b16 %v661
        %v2770 = vunpack.c.h.b16 %v661
        %v2771 = vunpack.c.l.b16 %v662
        %v2772 = vunpack.c.h.b16 %v662
        %v2773 = vunpack.c.l.b16 %v663
        %v2774 = vunpack.c.h.b16 %v663
        %v2775 = vunpack.c.l.b16 %v664
        %v2776 = vunpack.c.h.b16 %v664
        %v2777 = vunpack.c.l.b16 %v665
        %v2778 = vunpack.c.h.b16 %v665
        %v2779 = vunpack.c.l.b16 %v666
        %v2780 = vunpack.c.h.b16 %v666
        %v2781 = vunpack.c.l.b16 %v667
        %v2782 = vunpack.c.h.b16 %v667
        %v2783 = vunpack.c.l.b16 %v668
        %v2784 = vunpack.c.h.b16 %v668
        %v2785 = vunpack.c.l.b16 %v669
        %v2786 = vunpack.c.h.b16 %v669
        %v2787 = vunpack.c.l.b16 %v670
        %v2788 = vunpack.c.h.b16 %v670
        %v2789 = vunpack.c.l.b16 %v671
        %v2790 = vunpack.c.h.b16 %v671
        %v2791 = vunpack.c.l.b16 %v672
        %v2792 = vunpack.c.h.b16 %v672
        %v2793 = vunpack.c.l.b16 %v673
        %v2794 = vunpack.c.h.b16 %v673
        %v2795 = vunpack.c.l.b16 %v674
        %v2796 = vunpack.c.h.b16 %v674
        %v2797 = vunpack.c.l.b16 %v675
        %v2798 = vunpack.c.h.b16 %v675
        %v2799 = vunpack.c.l.b16 %v676
        %v2800 = vunpack.c.h.b16 %v676
        %v2801 = vunpack.c.l.b16 %v677
        %v2802 = vunpack.c.h.b16 %v677
        %v2803 = vunpack.c.l.b16 %v678
        %v2804 = vunpack.c.h.b16 %v678
        %v2805 = vunpack.c.l.b16 %v679
        %v2806 = vunpack.c.h.b16 %v679
        %v2807 = vunpack.c.l.b16 %v680
        %v2808 = vunpack.c.h.b16 %v680
        %v2809 = vunpack.c.l.b16 %v681
        %v2810 = vunpack.c.h.b16 %v681
        %v2811 = vunpack.c.l.b16 %v682
        %v2812 = vunpack.c.h.b16 %v682
        %v2813 = vunpack.c.l.b16 %v683
        %v2814 = vunpack.c.h.b16 %v683
        %v2815 = vunpack.c.l.b16 %v684
        %v2816 = vunpack.c.h.b16 %v684
        %v2817 = vunpack.c.l.b16 %v685
        %v2818 = vunpack.c.h.b16 %v685
        %v2819 = vunpack.c.l.b16 %v686
        %v2820 = vunpack.c.h.b16 %v686
        %v2821 = vunpack.c.l.b16 %v687
        %v2822 = vunpack.c.h.b16 %v687
        %v2823 = vunpack.c.l.b16 %v688
        %v2824 = vunpack.c.h.b16 %v688
        %v2825 = vunpack.c.l.b16 %v689
        %v2826 = vunpack.c.h.b16 %v689
        %v2827 = vunpack.c.l.b16 %v690
        %v2828 = vunpack.c.h.b16 %v690
        %v2829 = vunpack.c.l.b16 %v691
        %v2830 = vunpack.c.h.b16 %v691
        %v2831 = vunpack.c.l.b16 %v692
        %v2832 = vunpack.c.h.b16 %v692
        %v2833 = vunpack.c.l.b16 %v693
        %v2834 = vunpack.c.h.b16 %v693
        %v2835 = vunpack.c.l.b16 %v694
        %v2836 = vunpack.c.h.b16 %v694
        %v2837 = vunpack.c.l.b16 %v695
        %v2838 = vunpack.c.h.b16 %v695
        %v2839 = vunpack.c.l.b16 %v696
        %v2840 = vunpack.c.h.b16 %v696
        %v2841 = vunpack.c.l.b16 %v697
        %v2842 = vunpack.c.h.b16 %v697
        %v2843 = vunpack.c.l.b16 %v698
        %v2844 = vunpack.c.h.b16 %v698
        %v2845 = vunpack.c.l.b16 %v699
        %v2846 = vunpack.c.h.b16 %v699
        %v2847 = vunpack.c.l.b16 %v700
        %v2848 = vunpack.c.h.b16 %v700
        %v2849 = vunpack.c.l.b16 %v701
        %v2850 = vunpack.c.h.b16 %v701
        %v2851 = vunpack.c.l.b16 %v702
        %v2852 = vunpack.c.h.b16 %v702
        %v2853 = vunpack.c.l.b16 %v703
        %v2854 = vunpack.c.h.b16 %v703
        %v2855 = vunpack.c.l.b16 %v704
        %v2856 = vunpack.c.h.b16 %v704
        %v2857 = vunpack.c.l.b16 %v705
        %v2858 = vunpack.c.h.b16 %v705
        %v2859 = vunpack.c.l.b16 %v706
        %v2860 = vunpack.c.h.b16 %v706
        %v2861 = vunpack.c.l.b16 %v707
        %v2862 = vunpack.c.h.b16 %v707
        %v2863 = vunpack.c.l.b16 %v708
        %v2864 = vunpack.c.h.b16 %v708
        %v2865 = vunpack.c.l.b16 %v709
        %v2866 = vunpack.c.h.b16 %v709
        %v2867 = vunpack.c.l.b16 %v710
        %v2868 = vunpack.c.h.b16 %v710
        %v2869 = vunpack.c.l.b16 %v711
        %v2870 = vunpack.c.h.b16 %v711
        %v2871 = vunpack.c.l.b16 %v712
        %v2872 = vunpack.c.h.b16 %v712
        %v2873 = vunpack.c.l.b16 %v713
        %v2874 = vunpack.c.h.b16 %v713
        %v2875 = vunpack.c.l.b16 %v714
        %v2876 = vunpack.c.h.b16 %v714
        %v2877 = vunpack.c.l.b16 %v715
        %v2878 = vunpack.c.h.b16 %v715
        %v2879 = vunpack.c.l.b16 %v716
        %v2880 = vunpack.c.h.b16 %v716
        %v2881 = vunpack.c.l.b16 %v717
        %v2882 = vunpack.c.h.b16 %v717
        %v2883 = vunpack.c.l.b16 %v718
        %v2884 = vunpack.c.h.b16 %v718
        %v2885 = vunpack.c.l.b16 %v719
        %v2886 = vunpack.c.h.b16 %v719
        %v2887 = vunpack.c.l.b16 %v720
        %v2888 = vunpack.c.h.b16 %v720
        %v2889 = vunpack.c.l.b16 %v721
        %v2890 = vunpack.c.h.b16 %v721
        %v2891 = vunpack.c.l.b16 %v722
        %v2892 = vunpack.c.h.b16 %v722
        %v2893 = vunpack.c.l.b16 %v723
        %v2894 = vunpack.c.h.b16 %v723
        %v2895 = vunpack.c.l.b16 %v724
        %v2896 = vunpack.c.h.b16 %v724
        %v2897 = vunpack.c.l.b16 %v725
        %v2898 = vunpack.c.h.b16 %v725
        %v2899 = vunpack.c.l.b16 %v726
        %v2900 = vunpack.c.h.b16 %v726
        %v2901 = vunpack.c.l.b16 %v727
        %v2902 = vunpack.c.h.b16 %v727
        %v2903 = vunpack.c.l.b16 %v728
        %v2904 = vunpack.c.h.b16 %v728
        %v2905 = vunpack.c.l.b16 %v729
        %v2906 = vunpack.c.h.b16 %v729
        %v2907 = vunpack.c.l.b16 %v730
        %v2908 = vunpack.c.h.b16 %v730
        %v2909 = vunpack.c.l.b16 %v731
        %v2910 = vunpack.c.h.b16 %v731
        %v2911 = vunpack.c.l.b16 %v732
        %v2912 = vunpack.c.h.b16 %v732
        %v2913 = vunpack.c.l.b16 %v733
        %v2914 = vunpack.c.h.b16 %v733
        %v2915 = vunpack.c.l.b16 %v734
        %v2916 = vunpack.c.h.b16 %v734
        %v2917 = vunpack.c.l.b16 %v735
        %v2918 = vunpack.c.h.b16 %v735
        %v2919 = vunpack.c.l.b16 %v736
        %v2920 = vunpack.c.h.b16 %v736
        %v2921 = vunpack.c.l.b16 %v737
        %v2922 = vunpack.c.h.b16 %v737
        %v2923 = vunpack.c.l.b16 %v738
        %v2924 = vunpack.c.h.b16 %v738
        %v2925 = vunpack.c.l.b16 %v739
        %v2926 = vunpack.c.h.b16 %v739
        %v2927 = vunpack.c.l.b16 %v740
        %v2928 = vunpack.c.h.b16 %v740
        %v2929 = vunpack.c.l.b16 %v741
        %v2930 = vunpack.c.h.b16 %v741
        %v2931 = vunpack.c.l.b16 %v742
        %v2932 = vunpack.c.h.b16 %v742
        %v2933 = vunpack.c.l.b16 %v743
        %v2934 = vunpack.c.h.b16 %v743
        %v2935 = vunpack.c.l.b16 %v744
        %v2936 = vunpack.c.h.b16 %v744
        %v2937 = vunpack.c.l.b16 %v745
        %v2938 = vunpack.c.h.b16 %v745
        %v2939 = vunpack.c.l.b16 %v746
        %v2940 = vunpack.c.h.b16 %v746
        %v2941 = vunpack.c.l.b16 %v747
        %v2942 = vunpack.c.h.b16 %v747
        %v2943 = vunpack.c.l.b16 %v748
        %v2944 = vunpack.c.h.b16 %v748
        %v2945 = vunpack.c.l.b16 %v749
        %v2946 = vunpack.c.h.b16 %v749
        %v2947 = vunpack.c.l.b16 %v750
        %v2948 = vunpack.c.h.b16 %v750
        %v2949 = vunpack.c.l.b16 %v751
        %v2950 = vunpack.c.h.b16 %v751
        %v2951 = vunpack.c.l.b16 %v752
        %v2952 = vunpack.c.h.b16 %v752
        %v2953 = vunpack.c.l.b16 %v753
        %v2954 = vunpack.c.h.b16 %v753
        %v2955 = vunpack.c.l.b16 %v754
        %v2956 = vunpack.c.h.b16 %v754
        %v2957 = vunpack.c.l.b16 %v755
        %v2958 = vunpack.c.h.b16 %v755
        %v2959 = vunpack.c.l.b16 %v756
        %v2960 = vunpack.c.h.b16 %v756
        %v2961 = vunpack.c.l.b16 %v757
        %v2962 = vunpack.c.h.b16 %v757
        %v2963 = vunpack.c.l.b16 %v758
        %v2964 = vunpack.c.h.b16 %v758
        %v2965 = vunpack.c.l.b16 %v759
        %v2966 = vunpack.c.h.b16 %v759
        %v2967 = vunpack.c.l.b16 %v760
        %v2968 = vunpack.c.h.b16 %v760
        %v2969 = vunpack.c.l.b16 %v761
        %v2970 = vunpack.c.h.b16 %v761
        %v2971 = vunpack.c.l.b16 %v762
        %v2972 = vunpack.c.h.b16 %v762
        %v2973 = vunpack.c.l.b16 %v763
        %v2974 = vunpack.c.h.b16 %v763
        %v2975 = vunpack.c.l.b16 %v764
        %v2976 = vunpack.c.h.b16 %v764
        %v2977 = vunpack.c.l.b16 %v765
        %v2978 = vunpack.c.h.b16 %v765
        %v2979 = vunpack.c.l.b16 %v766
        %v2980 = vunpack.c.h.b16 %v766
        %v2981 = vunpack.c.l.b16 %v767
        %v2982 = vunpack.c.h.b16 %v767
        %v2983 = vunpack.c.l.b16 %v768
        %v2984 = vunpack.c.h.b16 %v768
        %v2985 = vunpack.c.l.b16 %v769
        %v2986 = vunpack.c.h.b16 %v769
        %v2987 = vunpack.c.l.b16 %v770
        %v2988 = vunpack.c.h.b16 %v770
        %v2989 = vunpack.c.l.b16 %v771
        %v2990 = vunpack.c.h.b16 %v771
        %v2991 = vunpack.c.l.b16 %v772
        %v2992 = vunpack.c.h.b16 %v772
        %v2993 = vunpack.c.l.b16 %v773
        %v2994 = vunpack.c.h.b16 %v773
        %v2995 = vunpack.c.l.b16 %v774
        %v2996 = vunpack.c.h.b16 %v774
        %v2997 = vunpack.c.l.b16 %v775
        %v2998 = vunpack.c.h.b16 %v775
        %v2999 = vunpack.c.l.b16 %v776
        %v3000 = vunpack.c.h.b16 %v776
        %v3001 = vunpack.c.l.b16 %v777
        %v3002 = vunpack.c.h.b16 %v777
        %v3003 = vunpack.c.l.b16 %v778
        %v3004 = vunpack.c.h.b16 %v778
        %v3005 = vunpack.c.l.b16 %v779
        %v3006 = vunpack.c.h.b16 %v779
        %v3007 = vunpack.c.l.b16 %v780
        %v3008 = vunpack.c.h.b16 %v780
        %v3009 = vunpack.c.l.b16 %v781
        %v3010 = vunpack.c.h.b16 %v781
        %v3011 = vunpack.c.l.b16 %v782
        %v3012 = vunpack.c.h.b16 %v782
        %v3013 = vunpack.c.l.b16 %v783
        %v3014 = vunpack.c.h.b16 %v783
        %v3015 = vunpack.c.l.b16 %v784
        %v3016 = vunpack.c.h.b16 %v784
        %v3017 = vunpack.c.l.b16 %v785
        %v3018 = vunpack.c.h.b16 %v785
        %v3019 = vunpack.c.l.b16 %v786
        %v3020 = vunpack.c.h.b16 %v786
        %v3021 = vunpack.c.l.b16 %v787
        %v3022 = vunpack.c.h.b16 %v787
        %v3023 = vunpack.c.l.b16 %v788
        %v3024 = vunpack.c.h.b16 %v788
        %v3025 = vunpack.c.l.b16 %v789
        %v3026 = vunpack.c.h.b16 %v789
        %v3027 = vunpack.c.l.b16 %v790
        %v3028 = vunpack.c.h.b16 %v790
        %v3029 = vunpack.c.l.b16 %v791
        %v3030 = vunpack.c.h.b16 %v791
        %v3031 = vunpack.c.l.b16 %v792
        %v3032 = vunpack.c.h.b16 %v792
        %v3033 = vunpack.c.l.b16 %v793
        %v3034 = vunpack.c.h.b16 %v793
        %v3035 = vunpack.c.l.b16 %v794
        %v3036 = vunpack.c.h.b16 %v794
        %v3037 = vunpack.c.l.b16 %v795
        %v3038 = vunpack.c.h.b16 %v795
        %v3039 = vunpack.c.l.b16 %v796
        %v3040 = vunpack.c.h.b16 %v796
        %v3041 = vunpack.c.l.b16 %v797
        %v3042 = vunpack.c.h.b16 %v797
        %v3043 = vunpack.c.l.b16 %v798
        %v3044 = vunpack.c.h.b16 %v798
        %v3045 = vunpack.c.l.b16 %v799
        %v3046 = vunpack.c.h.b16 %v799
        %v3047 = vunpack.c.l.b16 %v800
        %v3048 = vunpack.c.h.b16 %v800
        %v3049 = vunpack.c.l.b16 %v801
        %v3050 = vunpack.c.h.b16 %v801
        %v3051 = vunpack.c.l.b16 %v802
        %v3052 = vunpack.c.h.b16 %v802
        %v3053 = vunpack.c.l.b16 %v803
        %v3054 = vunpack.c.h.b16 %v803
        %v3055 = vunpack.c.l.b16 %v804
        %v3056 = vunpack.c.h.b16 %v804
        %v3057 = vunpack.c.l.b16 %v805
        %v3058 = vunpack.c.h.b16 %v805
        %v3059 = vunpack.c.l.b16 %v806
        %v3060 = vunpack.c.h.b16 %v806
        %v3061 = vunpack.c.l.b16 %v807
        %v3062 = vunpack.c.h.b16 %v807
        %v3063 = vunpack.c.l.b16 %v808
        %v3064 = vunpack.c.h.b16 %v808
        %v3065 = vunpack.c.l.b16 %v809
        %v3066 = vunpack.c.h.b16 %v809
        %v3067 = vunpack.c.l.b16 %v810
        %v3068 = vunpack.c.h.b16 %v810
        %v3069 = vunpack.c.l.b16 %v811
        %v3070 = vunpack.c.h.b16 %v811
        %v3071 = vunpack.c.l.b16 %v812
        %v3072 = vunpack.c.h.b16 %v812
        %v3073 = vunpack.c.l.b16 %v813
        %v3074 = vunpack.c.h.b16 %v813
        %v3075 = vunpack.c.l.b16 %v814
        %v3076 = vunpack.c.h.b16 %v814
        %v3077 = vunpack.c.l.b16 %v815
        %v3078 = vunpack.c.h.b16 %v815
        %v3079 = vunpack.c.l.b16 %v816
        %v3080 = vunpack.c.h.b16 %v816
        %v3081 = vunpack.c.l.b16 %v817
        %v3082 = vunpack.c.h.b16 %v817
        %v3083 = vunpack.c.l.b16 %v818
        %v3084 = vunpack.c.h.b16 %v818
        %v3085 = vunpack.c.l.b16 %v819
        %v3086 = vunpack.c.h.b16 %v819
        %v3087 = vunpack.c.l.b16 %v820
        %v3088 = vunpack.c.h.b16 %v820
        %v3089 = vunpack.c.l.b16 %v821
        %v3090 = vunpack.c.h.b16 %v821
        %v3091 = vunpack.c.l.b16 %v822
        %v3092 = vunpack.c.h.b16 %v822
        %v3093 = vunpack.c.l.b16 %v823
        %v3094 = vunpack.c.h.b16 %v823
        %v3095 = vunpack.c.l.b16 %v824
        %v3096 = vunpack.c.h.b16 %v824
        %v3097 = vunpack.c.l.b16 %v825
        %v3098 = vunpack.c.h.b16 %v825
        %v3099 = vunpack.c.l.b16 %v826
        %v3100 = vunpack.c.h.b16 %v826
        %v3101 = vunpack.c.l.b16 %v827
        %v3102 = vunpack.c.h.b16 %v827
        %v3103 = vunpack.c.l.b16 %v828
        %v3104 = vunpack.c.h.b16 %v828
        %v3105 = vunpack.c.l.b16 %v829
        %v3106 = vunpack.c.h.b16 %v829
        %v3107 = vunpack.c.l.b16 %v830
        %v3108 = vunpack.c.h.b16 %v830
        %v3109 = vunpack.c.l.b16 %v831
        %v3110 = vunpack.c.h.b16 %v831
        %v3111 = vunpack.c.l.b16 %v832
        %v3112 = vunpack.c.h.b16 %v832
        %v3113 = vunpack.c.l.b16 %v833
        %v3114 = vunpack.c.h.b16 %v833
        %v3115 = vunpack.c.l.b16 %v834
        %v3116 = vunpack.c.h.b16 %v834
        %v3117 = vunpack.c.l.b16 %v835
        %v3118 = vunpack.c.h.b16 %v835
        %v3119 = vunpack.c.l.b16 %v836
        %v3120 = vunpack.c.h.b16 %v836
        %v3121 = vunpack.c.l.b16 %v837
        %v3122 = vunpack.c.h.b16 %v837
        %v3123 = vunpack.c.l.b16 %v838
        %v3124 = vunpack.c.h.b16 %v838
        %v3125 = vunpack.c.l.b16 %v839
        %v3126 = vunpack.c.h.b16 %v839
        %v3127 = vunpack.c.l.b16 %v840
        %v3128 = vunpack.c.h.b16 %v840
        %v3129 = vunpack.c.l.b16 %v841
        %v3130 = vunpack.c.h.b16 %v841
        %v3131 = vunpack.c.l.b16 %v842
        %v3132 = vunpack.c.h.b16 %v842
        %v3133 = vunpack.c.l.b16 %v843
        %v3134 = vunpack.c.h.b16 %v843
        %v3135 = vunpack.c.l.b16 %v844
        %v3136 = vunpack.c.h.b16 %v844
        %v3137 = vunpack.c.l.b16 %v845
        %v3138 = vunpack.c.h.b16 %v845
        %v3139 = vunpack.c.l.b16 %v846
        %v3140 = vunpack.c.h.b16 %v846
        %v3141 = vunpack.c.l.b16 %v847
        %v3142 = vunpack.c.h.b16 %v847
        %v3143 = vunpack.c.l.b16 %v848
        %v3144 = vunpack.c.h.b16 %v848
        %v3145 = vunpack.c.l.b16 %v849
        %v3146 = vunpack.c.h.b16 %v849
        %v3147 = vunpack.c.l.b16 %v850
        %v3148 = vunpack.c.h.b16 %v850
        %v3149 = vunpack.c.l.b16 %v851
        %v3150 = vunpack.c.h.b16 %v851
        %v3151 = vunpack.c.l.b16 %v852
        %v3152 = vunpack.c.h.b16 %v852
        %v3153 = vunpack.c.l.b16 %v853
        %v3154 = vunpack.c.h.b16 %v853
        %v3155 = vunpack.c.l.b16 %v854
        %v3156 = vunpack.c.h.b16 %v854
        %v3157 = vunpack.c.l.b16 %v855
        %v3158 = vunpack.c.h.b16 %v855
        %v3159 = vunpack.c.l.b16 %v856
        %v3160 = vunpack.c.h.b16 %v856
        %v3161 = vunpack.c.l.b16 %v857
        %v3162 = vunpack.c.h.b16 %v857
        %v3163 = vunpack.c.l.b16 %v858
        %v3164 = vunpack.c.h.b16 %v858
        %v3165 = vunpack.c.l.b16 %v859
        %v3166 = vunpack.c.h.b16 %v859
        %v3167 = vunpack.c.l.b16 %v860
        %v3168 = vunpack.c.h.b16 %v860
        %v3169 = vunpack.c.l.b16 %v861
        %v3170 = vunpack.c.h.b16 %v861
        %v3171 = vunpack.c.l.b16 %v862
        %v3172 = vunpack.c.h.b16 %v862
        %v3173 = vunpack.c.l.b16 %v863
        %v3174 = vunpack.c.h.b16 %v863
        %v3175 = vunpack.c.l.b16 %v864
        %v3176 = vunpack.c.h.b16 %v864
        %v3177 = vunpack.c.l.b16 %v865
        %v3178 = vunpack.c.h.b16 %v865
        %v3179 = vunpack.c.l.b16 %v866
        %v3180 = vunpack.c.h.b16 %v866
        %v3181 = vunpack.c.l.b16 %v867
        %v3182 = vunpack.c.h.b16 %v867
        %v3183 = vunpack.c.l.b16 %v868
        %v3184 = vunpack.c.h.b16 %v868
        %v3185 = vunpack.c.l.b16 %v869
        %v3186 = vunpack.c.h.b16 %v869
        %v3187 = vunpack.c.l.b16 %v870
        %v3188 = vunpack.c.h.b16 %v870
        %v3189 = vunpack.c.l.b16 %v871
        %v3190 = vunpack.c.h.b16 %v871
        %v3191 = vunpack.c.l.b16 %v872
        %v3192 = vunpack.c.h.b16 %v872
        %v3193 = vunpack.c.l.b16 %v873
        %v3194 = vunpack.c.h.b16 %v873
        %v3195 = vunpack.c.l.b16 %v874
        %v3196 = vunpack.c.h.b16 %v874
        %v3197 = vunpack.c.l.b16 %v875
        %v3198 = vunpack.c.h.b16 %v875
        %v3199 = vunpack.c.l.b16 %v876
        %v3200 = vunpack.c.h.b16 %v876
        %v3201 = vunpack.c.l.b16 %v877
        %v3202 = vunpack.c.h.b16 %v877
        %v3203 = vunpack.c.l.b16 %v878
        %v3204 = vunpack.c.h.b16 %v878
        %v3205 = vunpack.c.l.b16 %v879
        %v3206 = vunpack.c.h.b16 %v879
        %v3207 = vunpack.c.l.b16 %v880
        %v3208 = vunpack.c.h.b16 %v880
        %v3209 = vunpack.c.l.b16 %v881
        %v3210 = vunpack.c.h.b16 %v881
        %v3211 = vunpack.c.l.b16 %v882
        %v3212 = vunpack.c.h.b16 %v882
        %v3213 = vunpack.c.l.b16 %v883
        %v3214 = vunpack.c.h.b16 %v883
        %v3215 = vunpack.c.l.b16 %v884
        %v3216 = vunpack.c.h.b16 %v884
        %v3217 = vunpack.c.l.b16 %v885
        %v3218 = vunpack.c.h.b16 %v885
        %v3219 = vunpack.c.l.b16 %v886
        %v3220 = vunpack.c.h.b16 %v886
        %v3221 = vunpack.c.l.b16 %v887
        %v3222 = vunpack.c.h.b16 %v887
        %v3223 = vunpack.c.l.b16 %v888
        %v3224 = vunpack.c.h.b16 %v888
        %v3225 = vunpack.c.l.b16 %v889
        %v3226 = vunpack.c.h.b16 %v889
        %v3227 = vunpack.c.l.b16 %v890
        %v3228 = vunpack.c.h.b16 %v890
        %v3229 = vunpack.c.l.b16 %v891
        %v3230 = vunpack.c.h.b16 %v891
        %v3231 = vunpack.c.l.b16 %v892
        %v3232 = vunpack.c.h.b16 %v892
        %v3233 = vunpack.c.l.b16 %v893
        %v3234 = vunpack.c.h.b16 %v893
        %v3235 = vunpack.c.l.b16 %v894
        %v3236 = vunpack.c.h.b16 %v894
        %v3237 = vunpack.c.l.b16 %v895
        %v3238 = vunpack.c.h.b16 %v895
        %v3239 = vunpack.c.l.b16 %v896
        %v3240 = vunpack.c.h.b16 %v896
        %v3241 = vunpack.c.l.b16 %v897
        %v3242 = vunpack.c.h.b16 %v897
        %v3243 = vunpack.c.l.b16 %v898
        %v3244 = vunpack.c.h.b16 %v898
        %v3245 = vunpack.c.l.b16 %v899
        %v3246 = vunpack.c.h.b16 %v899
        %v3247 = vunpack.c.l.b16 %v900
        %v3248 = vunpack.c.h.b16 %v900
        %v3249 = vunpack.c.l.b16 %v901
        %v3250 = vunpack.c.h.b16 %v901
        %v3251 = vunpack.c.l.b16 %v902
        %v3252 = vunpack.c.h.b16 %v902
        %v3253 = vunpack.c.l.b16 %v903
        %v3254 = vunpack.c.h.b16 %v903
        %v3255 = vunpack.c.l.b16 %v904
        %v3256 = vunpack.c.h.b16 %v904
        %v3257 = vunpack.c.l.b16 %v905
        %v3258 = vunpack.c.h.b16 %v905
        %v3259 = vunpack.c.l.b16 %v906
        %v3260 = vunpack.c.h.b16 %v906
        %v3261 = vunpack.c.l.b16 %v907
        %v3262 = vunpack.c.h.b16 %v907
        %v3263 = vunpack.c.l.b16 %v908
        %v3264 = vunpack.c.h.b16 %v908
        %v3265 = vunpack.c.l.b16 %v909
        %v3266 = vunpack.c.h.b16 %v909
        %v3267 = vunpack.c.l.b16 %v910
        %v3268 = vunpack.c.h.b16 %v910
        %v3269 = vunpack.c.l.b16 %v911
        %v3270 = vunpack.c.h.b16 %v911
        %v3271 = vunpack.c.l.b16 %v912
        %v3272 = vunpack.c.h.b16 %v912
        %v3273 = vunpack.c.l.b16 %v913
        %v3274 = vunpack.c.h.b16 %v913
        %v3275 = vunpack.c.l.b16 %v914
        %v3276 = vunpack.c.h.b16 %v914
        %v3277 = vunpack.c.l.b16 %v915
        %v3278 = vunpack.c.h.b16 %v915
        %v3279 = vunpack.c.l.b16 %v916
        %v3280 = vunpack.c.h.b16 %v916
        %v3281 = vunpack.c.l.b16 %v917
        %v3282 = vunpack.c.h.b16 %v917
        %v3283 = vunpack.c.l.b16 %v918
        %v3284 = vunpack.c.h.b16 %v918
        %v3285 = vunpack.c.l.b16 %v919
        %v3286 = vunpack.c.h.b16 %v919
        %v3287 = vunpack.c.l.b16 %v920
        %v3288 = vunpack.c.h.b16 %v920
        %v3289 = vunpack.c.l.b16 %v921
        %v3290 = vunpack.c.h.b16 %v921
        %v3291 = vunpack.c.l.b16 %v922
        %v3292 = vunpack.c.h.b16 %v922
        %v3293 = vunpack.c.l.b16 %v923
        %v3294 = vunpack.c.h.b16 %v923
        %v3295 = vunpack.c.l.b16 %v924
        %v3296 = vunpack.c.h.b16 %v924
        %v3297 = vunpack.c.l.b16 %v925
        %v3298 = vunpack.c.h.b16 %v925
        %v3299 = vunpack.c.l.b16 %v926
        %v3300 = vunpack.c.h.b16 %v926
        %v3301 = vunpack.c.l.b16 %v927
        %v3302 = vunpack.c.h.b16 %v927
        %v3303 = vunpack.c.l.b16 %v928
        %v3304 = vunpack.c.h.b16 %v928
        %v3305 = vunpack.c.l.b16 %v929
        %v3306 = vunpack.c.h.b16 %v929
        %v3307 = vunpack.c.l.b16 %v930
        %v3308 = vunpack.c.h.b16 %v930
        %v3309 = vunpack.c.l.b16 %v931
        %v3310 = vunpack.c.h.b16 %v931
        %v3311 = vunpack.c.l.b16 %v932
        %v3312 = vunpack.c.h.b16 %v932
        %v3313 = vunpack.c.l.b16 %v933
        %v3314 = vunpack.c.h.b16 %v933
        %v3315 = vunpack.c.l.b16 %v934
        %v3316 = vunpack.c.h.b16 %v934
        %v3317 = vunpack.c.l.b16 %v935
        %v3318 = vunpack.c.h.b16 %v935
        %v3319 = vunpack.c.l.b16 %v936
        %v3320 = vunpack.c.h.b16 %v936
        %v3321 = vunpack.c.l.b16 %v937
        %v3322 = vunpack.c.h.b16 %v937
        %v3323 = vunpack.c.l.b16 %v938
        %v3324 = vunpack.c.h.b16 %v938
        %v3325 = vunpack.c.l.b16 %v939
        %v3326 = vunpack.c.h.b16 %v939
        %v3327 = vunpack.c.l.b16 %v940
        %v3328 = vunpack.c.h.b16 %v940
        %v3329 = vunpack.c.l.b16 %v941
        %v3330 = vunpack.c.h.b16 %v941
        %v3331 = vunpack.c.l.b16 %v942
        %v3332 = vunpack.c.h.b16 %v942
        %v3333 = vunpack.c.l.b16 %v943
        %v3334 = vunpack.c.h.b16 %v943
        %v3335 = vunpack.c.l.b16 %v944
        %v3336 = vunpack.c.h.b16 %v944
        %v3337 = vunpack.c.l.b16 %v945
        %v3338 = vunpack.c.h.b16 %v945
        %v3339 = vunpack.c.l.b16 %v946
        %v3340 = vunpack.c.h.b16 %v946
        %v3341 = vunpack.c.l.b16 %v947
        %v3342 = vunpack.c.h.b16 %v947
        %v3343 = vunpack.c.l.b16 %v948
        %v3344 = vunpack.c.h.b16 %v948
        %v3345 = vunpack.c.l.b16 %v949
        %v3346 = vunpack.c.h.b16 %v949
        %v3347 = vunpack.c.l.b16 %v950
        %v3348 = vunpack.c.h.b16 %v950
        %v3349 = vunpack.c.l.b16 %v951
        %v3350 = vunpack.c.h.b16 %v951
        %v3351 = vunpack.c.l.b16 %v952
        %v3352 = vunpack.c.h.b16 %v952
        %v3353 = vunpack.c.l.b16 %v953
        %v3354 = vunpack.c.h.b16 %v953
        %v3355 = vunpack.c.l.b16 %v954
        %v3356 = vunpack.c.h.b16 %v954
        %v3357 = vunpack.c.l.b16 %v955
        %v3358 = vunpack.c.h.b16 %v955
        %v3359 = vunpack.c.l.b16 %v956
        %v3360 = vunpack.c.h.b16 %v956
        %v3361 = vunpack.c.l.b16 %v957
        %v3362 = vunpack.c.h.b16 %v957
        %v3363 = vunpack.c.l.b16 %v958
        %v3364 = vunpack.c.h.b16 %v958
        %v3365 = vunpack.c.l.b16 %v959
        %v3366 = vunpack.c.h.b16 %v959
        %v3367 = vunpack.c.l.b16 %v960
        %v3368 = vunpack.c.h.b16 %v960
        %v3369 = vunpack.c.l.b16 %v961
        %v3370 = vunpack.c.h.b16 %v961
        %v3371 = vunpack.c.l.b16 %v962
        %v3372 = vunpack.c.h.b16 %v962
        %v3373 = vunpack.c.l.b16 %v963
        %v3374 = vunpack.c.h.b16 %v963
        %v3375 = vunpack.c.l.b16 %v964
        %v3376 = vunpack.c.h.b16 %v964
        %v3377 = vunpack.c.l.b16 %v965
        %v3378 = vunpack.c.h.b16 %v965
        %v3379 = vunpack.c.l.b16 %v966
        %v3380 = vunpack.c.h.b16 %v966
        %v3381 = vunpack.c.l.b16 %v967
        %v3382 = vunpack.c.h.b16 %v967
        %v3383 = vunpack.c.l.b16 %v968
        %v3384 = vunpack.c.h.b16 %v968
        %v3385 = vunpack.c.l.b16 %v969
        %v3386 = vunpack.c.h.b16 %v969
        %v3387 = vunpack.c.l.b16 %v970
        %v3388 = vunpack.c.h.b16 %v970
        %v3389 = vunpack.c.l.b16 %v971
        %v3390 = vunpack.c.h.b16 %v971
        %v3391 = vunpack.c.l.b16 %v972
        %v3392 = vunpack.c.h.b16 %v972
        %v3393 = vunpack.c.l.b16 %v973
        %v3394 = vunpack.c.h.b16 %v973
        %v3395 = vunpack.c.l.b16 %v974
        %v3396 = vunpack.c.h.b16 %v974
        %v3397 = vunpack.c.l.b16 %v975
        %v3398 = vunpack.c.h.b16 %v975
        %v3399 = vunpack.c.l.b16 %v976
        %v3400 = vunpack.c.h.b16 %v976
        %v3401 = vunpack.c.l.b16 %v977
        %v3402 = vunpack.c.h.b16 %v977
        %v3403 = vunpack.c.l.b16 %v978
        %v3404 = vunpack.c.h.b16 %v978
        %v3405 = vunpack.c.l.b16 %v979
        %v3406 = vunpack.c.h.b16 %v979
        %v3407 = vunpack.c.l.b16 %v980
        %v3408 = vunpack.c.h.b16 %v980
        %v3409 = vunpack.c.l.b16 %v981
        %v3410 = vunpack.c.h.b16 %v981
        %v3411 = vunpack.c.l.b16 %v982
        %v3412 = vunpack.c.h.b16 %v982
        %v3413 = vunpack.c.l.b16 %v983
        %v3414 = vunpack.c.h.b16 %v983
        %v3415 = vunpack.c.l.b16 %v984
        %v3416 = vunpack.c.h.b16 %v984
        %v3417 = vunpack.c.l.b16 %v985
        %v3418 = vunpack.c.h.b16 %v985
        %v3419 = vunpack.c.l.b16 %v986
        %v3420 = vunpack.c.h.b16 %v986
        %v3421 = vunpack.c.l.b16 %v987
        %v3422 = vunpack.c.h.b16 %v987
        %v3423 = vunpack.c.l.b16 %v988
        %v3424 = vunpack.c.h.b16 %v988
        %v3425 = vunpack.c.l.b16 %v989
        %v3426 = vunpack.c.h.b16 %v989
        %v3427 = vunpack.c.l.b16 %v990
        %v3428 = vunpack.c.h.b16 %v990
        %v3429 = vunpack.c.l.b16 %v991
        %v3430 = vunpack.c.h.b16 %v991
        %v3431 = vunpack.c.l.b16 %v992
        %v3432 = vunpack.c.h.b16 %v992
        %v3433 = vunpack.c.l.b16 %v993
        %v3434 = vunpack.c.h.b16 %v993
        %v3435 = vunpack.c.l.b16 %v994
        %v3436 = vunpack.c.h.b16 %v994
        %v3437 = vunpack.c.l.b16 %v995
        %v3438 = vunpack.c.h.b16 %v995
        %v3439 = vunpack.c.l.b16 %v996
        %v3440 = vunpack.c.h.b16 %v996
        %v3441 = vunpack.c.l.b16 %v997
        %v3442 = vunpack.c.h.b16 %v997
        %v3443 = vunpack.c.l.b16 %v998
        %v3444 = vunpack.c.h.b16 %v998
        %v3445 = vunpack.c.l.b16 %v999
        %v3446 = vunpack.c.h.b16 %v999
        %v3447 = vunpack.c.l.b16 %v1000
        %v3448 = vunpack.c.h.b16 %v1000
        %v3449 = vunpack.c.l.b16 %v1001
        %v3450 = vunpack.c.h.b16 %v1001
        %v3451 = vunpack.c.l.b16 %v1002
        %v3452 = vunpack.c.h.b16 %v1002
        %v3453 = vunpack.c.l.b16 %v1003
        %v3454 = vunpack.c.h.b16 %v1003
        %v3455 = vunpack.c.l.b16 %v1004
        %v3456 = vunpack.c.h.b16 %v1004
        %v3457 = vunpack.c.l.b16 %v1005
        %v3458 = vunpack.c.h.b16 %v1005
        %v3459 = vunpack.c.l.b16 %v1006
        %v3460 = vunpack.c.h.b16 %v1006
        %v3461 = vunpack.c.l.b16 %v1007
        %v3462 = vunpack.c.h.b16 %v1007
        %v3463 = vunpack.c.l.b16 %v1008
        %v3464 = vunpack.c.h.b16 %v1008
        %v3465 = vunpack.c.l.b16 %v1009
        %v3466 = vunpack.c.h.b16 %v1009
        %v3467 = vunpack.c.l.b16 %v1010
        %v3468 = vunpack.c.h.b16 %v1010
        %v3469 = vunpack.c.l.b16 %v1011
        %v3470 = vunpack.c.h.b16 %v1011
        %v3471 = vunpack.c.l.b16 %v1012
        %v3472 = vunpack.c.h.b16 %v1012
        %v3473 = vunpack.c.l.b16 %v1013
        %v3474 = vunpack.c.h.b16 %v1013
        %v3475 = vunpack.c.l.b16 %v1014
        %v3476 = vunpack.c.h.b16 %v1014
        %v3477 = vunpack.c.l.b16 %v1015
        %v3478 = vunpack.c.h.b16 %v1015
        %v3479 = vunpack.c.l.b16 %v1016
        %v3480 = vunpack.c.h.b16 %v1016
        %v3481 = vunpack.c.l.b16 %v1017
        %v3482 = vunpack.c.h.b16 %v1017
        %v3483 = vunpack.c.l.b16 %v1018
        %v3484 = vunpack.c.h.b16 %v1018
        %v3485 = vunpack.c.l.b16 %v1019
        %v3486 = vunpack.c.h.b16 %v1019
        %v3487 = vunpack.c.l.b16 %v1020
        %v3488 = vunpack.c.h.b16 %v1020
        %v3489 = vunpack.c.l.b16 %v1021
        %v3490 = vunpack.c.h.b16 %v1021
        %v3491 = vunpack.c.l.b16 %v1022
        %v3492 = vunpack.c.h.b16 %v1022
        %v3493 = vunpack.c.l.b16 %v1023
        %v3494 = vunpack.c.h.b16 %v1023
        %v3495 = vunpack.c.l.b16 %v1024
        %v3496 = vunpack.c.h.b16 %v1024
        %v3497 = vunpack.c.l.b16 %v1025
        %v3498 = vunpack.c.h.b16 %v1025
        %v3499 = vunpack.c.l.b16 %v1026
        %v3500 = vunpack.c.h.b16 %v1026
        %v3501 = vunpack.c.l.b16 %v1027
        %v3502 = vunpack.c.h.b16 %v1027
        %v3503 = vunpack.c.l.b16 %v1028
        %v3504 = vunpack.c.h.b16 %v1028
        %v3505 = vunpack.c.l.b16 %v1029
        %v3506 = vunpack.c.h.b16 %v1029
        %v3507 = vunpack.c.l.b16 %v1030
        %v3508 = vunpack.c.h.b16 %v1030
        %v3509 = vunpack.c.l.b16 %v1031
        %v3510 = vunpack.c.h.b16 %v1031
        %v3511 = vunpack.c.l.b16 %v1032
        %v3512 = vunpack.c.h.b16 %v1032
        %v3513 = vunpack.c.l.b16 %v1033
        %v3514 = vunpack.c.h.b16 %v1033
        %v3515 = vunpack.c.l.b16 %v1034
        %v3516 = vunpack.c.h.b16 %v1034
        %v3517 = vunpack.c.l.b16 %v1035
        %v3518 = vunpack.c.h.b16 %v1035
        %v3519 = vunpack.c.l.b16 %v1036
        %v3520 = vunpack.c.h.b16 %v1036
        %v3521 = vunpack.c.l.b16 %v1037
        %v3522 = vunpack.c.h.b16 %v1037
        %v3523 = vunpack.c.l.b16 %v1038
        %v3524 = vunpack.c.h.b16 %v1038
        %v3525 = vunpack.c.l.b16 %v1039
        %v3526 = vunpack.c.h.b16 %v1039
        %v3527 = vunpack.c.l.b16 %v1040
        %v3528 = vunpack.c.h.b16 %v1040
        %v3529 = vunpack.c.l.b16 %v1041
        %v3530 = vunpack.c.h.b16 %v1041
        %v3531 = vunpack.c.l.b16 %v1042
        %v3532 = vunpack.c.h.b16 %v1042
        %v3533 = vunpack.c.l.b16 %v1043
        %v3534 = vunpack.c.h.b16 %v1043
        %v3535 = vunpack.c.l.b16 %v1044
        %v3536 = vunpack.c.h.b16 %v1044
        %v3537 = vunpack.c.l.b16 %v1045
        %v3538 = vunpack.c.h.b16 %v1045
        %v3539 = vunpack.c.l.b16 %v1046
        %v3540 = vunpack.c.h.b16 %v1046
        %v3541 = vunpack.c.l.b16 %v1047
        %v3542 = vunpack.c.h.b16 %v1047
        %v3543 = vunpack.c.l.b16 %v1048
        %v3544 = vunpack.c.h.b16 %v1048
        %v3545 = vunpack.c.l.b16 %v1049
        %v3546 = vunpack.c.h.b16 %v1049
        %v3547 = vunpack.c.l.b16 %v1050
        %v3548 = vunpack.c.h.b16 %v1050
        %v3549 = vunpack.c.l.b16 %v1051
        %v3550 = vunpack.c.h.b16 %v1051
        %v3551 = vunpack.c.l.b16 %v1052
        %v3552 = vunpack.c.h.b16 %v1052
        %v3553 = vunpack.c.l.b16 %v1053
        %v3554 = vunpack.c.h.b16 %v1053
        %v3555 = vunpack.c.l.b16 %v1054
        %v3556 = vunpack.c.h.b16 %v1054
        %v3557 = vunpack.c.l.b16 %v1055
        %v3558 = vunpack.c.h.b16 %v1055
        %v3559 = vunpack.c.l.b16 %v1056
        %v3560 = vunpack.c.h.b16 %v1056
        %v3561 = vunpack.c.l.b16 %v1057
        %v3562 = vunpack.c.h.b16 %v1057
        %v3563 = vunpack.c.l.b16 %v1058
        %v3564 = vunpack.c.h.b16 %v1058
        %v3565 = vunpack.c.l.b16 %v1059
        %v3566 = vunpack.c.h.b16 %v1059
        %v3567 = vunpack.c.l.b16 %v1060
        %v3568 = vunpack.c.h.b16 %v1060
        %v3569 = vunpack.c.l.b16 %v1061
        %v3570 = vunpack.c.h.b16 %v1061
        %v3571 = vunpack.c.l.b16 %v1062
        %v3572 = vunpack.c.h.b16 %v1062
        %v3573 = vunpack.c.l.b16 %v1063
        %v3574 = vunpack.c.h.b16 %v1063
        %v3575 = vunpack.c.l.b16 %v1064
        %v3576 = vunpack.c.h.b16 %v1064
        %v3577 = vunpack.c.l.b16 %v1065
        %v3578 = vunpack.c.h.b16 %v1065
        %v3579 = vunpack.c.l.b16 %v1066
        %v3580 = vunpack.c.h.b16 %v1066
        %v3581 = vunpack.c.l.b16 %v1067
        %v3582 = vunpack.c.h.b16 %v1067
        %v3583 = vunpack.c.l.b16 %v1068
        %v3584 = vunpack.c.h.b16 %v1068
        %v3585 = vunpack.c.l.b16 %v1069
        %v3586 = vunpack.c.h.b16 %v1069
        %v3587 = vunpack.c.l.b16 %v1070
        %v3588 = vunpack.c.h.b16 %v1070
        %v3589 = vunpack.c.l.b16 %v1071
        %v3590 = vunpack.c.h.b16 %v1071
        %v3591 = vunpack.c.l.b16 %v1072
        %v3592 = vunpack.c.h.b16 %v1072
        %v3593 = vunpack.c.l.b16 %v1073
        %v3594 = vunpack.c.h.b16 %v1073
        %v3595 = vunpack.c.l.b16 %v1074
        %v3596 = vunpack.c.h.b16 %v1074
        %v3597 = vunpack.c.l.b16 %v1075
        %v3598 = vunpack.c.h.b16 %v1075
        %v3599 = vunpack.c.l.b16 %v1076
        %v3600 = vunpack.c.h.b16 %v1076
        %v3601 = vunpack.c.l.b16 %v1077
        %v3602 = vunpack.c.h.b16 %v1077
        %v3603 = vunpack.c.l.b16 %v1078
        %v3604 = vunpack.c.h.b16 %v1078
        %v3605 = vunpack.c.l.b16 %v1079
        %v3606 = vunpack.c.h.b16 %v1079
        %v3607 = vunpack.c.l.b16 %v1080
        %v3608 = vunpack.c.h.b16 %v1080
        %v3609 = vunpack.c.l.b16 %v1081
        %v3610 = vunpack.c.h.b16 %v1081
        %v3611 = vunpack.c.l.b16 %v1082
        %v3612 = vunpack.c.h.b16 %v1082
        %v3613 = vunpack.c.l.b16 %v1083
        %v3614 = vunpack.c.h.b16 %v1083
        %v3615 = vunpack.c.l.b16 %v1084
        %v3616 = vunpack.c.h.b16 %v1084
        %v3617 = vunpack.c.l.b16 %v1085
        %v3618 = vunpack.c.h.b16 %v1085
        %v3619 = vunpack.c.l.b16 %v1086
        %v3620 = vunpack.c.h.b16 %v1086
        %v3621 = vunpack.c.l.b16 %v1087
        %v3622 = vunpack.c.h.b16 %v1087
        %v3623 = vunpack.c.l.b16 %v1088
        %v3624 = vunpack.c.h.b16 %v1088
        %v3625 = vunpack.c.l.b16 %v1089
        %v3626 = vunpack.c.h.b16 %v1089
        %v3627 = vunpack.c.l.b16 %v1090
        %v3628 = vunpack.c.h.b16 %v1090
        %v3629 = vunpack.c.l.b16 %v1091
        %v3630 = vunpack.c.h.b16 %v1091
        %v3631 = vunpack.c.l.b16 %v1092
        %v3632 = vunpack.c.h.b16 %v1092
        %v3633 = vunpack.c.l.b16 %v1093
        %v3634 = vunpack.c.h.b16 %v1093
        %v3635 = vunpack.c.l.b16 %v1094
        %v3636 = vunpack.c.h.b16 %v1094
        %v3637 = vunpack.c.l.b16 %v1095
        %v3638 = vunpack.c.h.b16 %v1095
        %v3639 = vunpack.c.l.b16 %v1096
        %v3640 = vunpack.c.h.b16 %v1096
        %v3641 = vunpack.c.l.b16 %v1097
        %v3642 = vunpack.c.h.b16 %v1097
        %v3643 = vunpack.c.l.b16 %v1098
        %v3644 = vunpack.c.h.b16 %v1098
        %v3645 = vunpack.c.l.b16 %v1099
        %v3646 = vunpack.c.h.b16 %v1099
        %v3647 = vunpack.c.l.b16 %v1100
        %v3648 = vunpack.c.h.b16 %v1100
        %v3649 = vunpack.c.l.b16 %v1101
        %v3650 = vunpack.c.h.b16 %v1101
        %v3651 = vunpack.c.l.b16 %v1102
        %v3652 = vunpack.c.h.b16 %v1102
        %v3653 = vunpack.c.l.b16 %v1103
        %v3654 = vunpack.c.h.b16 %v1103
        %v3655 = vunpack.c.l.b16 %v1104
        %v3656 = vunpack.c.h.b16 %v1104
        %v3657 = vunpack.c.l.b16 %v1105
        %v3658 = vunpack.c.h.b16 %v1105
        %v3659 = vunpack.c.l.b16 %v1106
        %v3660 = vunpack.c.h.b16 %v1106
        %v3661 = vunpack.c.l.b16 %v1107
        %v3662 = vunpack.c.h.b16 %v1107
        %v3663 = vunpack.c.l.b16 %v1108
        %v3664 = vunpack.c.h.b16 %v1108
        %v3665 = vunpack.c.l.b16 %v1109
        %v3666 = vunpack.c.h.b16 %v1109
        %v3667 = vunpack.c.l.b16 %v1110
        %v3668 = vunpack.c.h.b16 %v1110
        %v3669 = vunpack.c.l.b16 %v1111
        %v3670 = vunpack.c.h.b16 %v1111
        %v3671 = vunpack.c.l.b16 %v1112
        %v3672 = vunpack.c.h.b16 %v1112
        %v3673 = vunpack.c.l.b16 %v1113
        %v3674 = vunpack.c.h.b16 %v1113
        %v3675 = vunpack.c.l.b16 %v1114
        %v3676 = vunpack.c.h.b16 %v1114
        %v3677 = vunpack.c.l.b16 %v1115
        %v3678 = vunpack.c.h.b16 %v1115
        %v3679 = vpack.c.b16 %v2115, %v2111
        %v3680 = vpack.c.b16 %v2116, %v2112
        %v3681 = vpack.c.b16 %v2117, %v2113
        %v3682 = vpack.c.b16 %v2118, %v2114
        %v3683 = vpack.c.b16 %v2123, %v2119
        %v3684 = vpack.c.b16 %v2124, %v2120
        %v3685 = vpack.c.b16 %v2125, %v2121
        %v3686 = vpack.c.b16 %v2126, %v2122
        %v3687 = vpack.c.b16 %v2131, %v2127
        %v3688 = vpack.c.b16 %v2132, %v2128
        %v3689 = vpack.c.b16 %v2133, %v2129
        %v3690 = vpack.c.b16 %v2134, %v2130
        %v3691 = vpack.c.b16 %v2139, %v2135
        %v3692 = vpack.c.b16 %v2140, %v2136
        %v3693 = vpack.c.b16 %v2141, %v2137
        %v3694 = vpack.c.b16 %v2142, %v2138
        %v3695 = vpack.c.b16 %v2147, %v2143
        %v3696 = vpack.c.b16 %v2148, %v2144
        %v3697 = vpack.c.b16 %v2149, %v2145
        %v3698 = vpack.c.b16 %v2150, %v2146
        %v3699 = vpack.c.b16 %v2155, %v2151
        %v3700 = vpack.c.b16 %v2156, %v2152
        %v3701 = vpack.c.b16 %v2157, %v2153
        %v3702 = vpack.c.b16 %v2158, %v2154
        %v3703 = vpack.c.b16 %v2163, %v2159
        %v3704 = vpack.c.b16 %v2164, %v2160
        %v3705 = vpack.c.b16 %v2165, %v2161
        %v3706 = vpack.c.b16 %v2166, %v2162
        %v3707 = vpack.c.b16 %v2171, %v2167
        %v3708 = vpack.c.b16 %v2172, %v2168
        %v3709 = vpack.c.b16 %v2173, %v2169
        %v3710 = vpack.c.b16 %v2174, %v2170
        %v3711 = vpack.c.b16 %v2179, %v2175
        %v3712 = vpack.c.b16 %v2180, %v2176
        %v3713 = vpack.c.b16 %v2181, %v2177
        %v3714 = vpack.c.b16 %v2182, %v2178
        %v3715 = vpack.c.b16 %v2187, %v2183
        %v3716 = vpack.c.b16 %v2188, %v2184
        %v3717 = vpack.c.b16 %v2189, %v2185
        %v3718 = vpack.c.b16 %v2190, %v2186
        %v3719 = vpack.c.b16 %v2195, %v2191
        %v3720 = vpack.c.b16 %v2196, %v2192
        %v3721 = vpack.c.b16 %v2197, %v2193
        %v3722 = vpack.c.b16 %v2198, %v2194
        %v3723 = vpack.c.b16 %v2203, %v2199
        %v3724 = vpack.c.b16 %v2204, %v2200
        %v3725 = vpack.c.b16 %v2205, %v2201
        %v3726 = vpack.c.b16 %v2206, %v2202
        %v3727 = vpack.c.b16 %v2211, %v2207
        %v3728 = vpack.c.b16 %v2212, %v2208
        %v3729 = vpack.c.b16 %v2213, %v2209
        %v3730 = vpack.c.b16 %v2214, %v2210
        %v3731 = vpack.c.b16 %v2219, %v2215
        %v3732 = vpack.c.b16 %v2220, %v2216
        %v3733 = vpack.c.b16 %v2221, %v2217
        %v3734 = vpack.c.b16 %v2222, %v2218
        %v3735 = vpack.c.b16 %v2227, %v2223
        %v3736 = vpack.c.b16 %v2228, %v2224
        %v3737 = vpack.c.b16 %v2229, %v2225
        %v3738 = vpack.c.b16 %v2230, %v2226
        %v3739 = vpack.c.b16 %v2235, %v2231
        %v3740 = vpack.c.b16 %v2236, %v2232
        %v3741 = vpack.c.b16 %v2237, %v2233
        %v3742 = vpack.c.b16 %v2238, %v2234
        %v3743 = vpack.c.b16 %v2243, %v2239
        %v3744 = vpack.c.b16 %v2244, %v2240
        %v3745 = vpack.c.b16 %v2245, %v2241
        %v3746 = vpack.c.b16 %v2246, %v2242
        %v3747 = vpack.c.b16 %v2251, %v2247
        %v3748 = vpack.c.b16 %v2252, %v2248
        %v3749 = vpack.c.b16 %v2253, %v2249
        %v3750 = vpack.c.b16 %v2254, %v2250
        %v3751 = vpack.c.b16 %v2259, %v2255
        %v3752 = vpack.c.b16 %v2260, %v2256
        %v3753 = vpack.c.b16 %v2261, %v2257
        %v3754 = vpack.c.b16 %v2262, %v2258
        %v3755 = vpack.c.b16 %v2267, %v2263
        %v3756 = vpack.c.b16 %v2268, %v2264
        %v3757 = vpack.c.b16 %v2269, %v2265
        %v3758 = vpack.c.b16 %v2270, %v2266
        %v3759 = vpack.c.b16 %v2275, %v2271
        %v3760 = vpack.c.b16 %v2276, %v2272
        %v3761 = vpack.c.b16 %v2277, %v2273
        %v3762 = vpack.c.b16 %v2278, %v2274
        %v3763 = vpack.c.b16 %v2283, %v2279
        %v3764 = vpack.c.b16 %v2284, %v2280
        %v3765 = vpack.c.b16 %v2285, %v2281
        %v3766 = vpack.c.b16 %v2286, %v2282
        %v3767 = vpack.c.b16 %v2291, %v2287
        %v3768 = vpack.c.b16 %v2292, %v2288
        %v3769 = vpack.c.b16 %v2293, %v2289
        %v3770 = vpack.c.b16 %v2294, %v2290
        %v3771 = vpack.c.b16 %v2299, %v2295
        %v3772 = vpack.c.b16 %v2300, %v2296
        %v3773 = vpack.c.b16 %v2301, %v2297
        %v3774 = vpack.c.b16 %v2302, %v2298
        %v3775 = vpack.c.b16 %v2307, %v2303
        %v3776 = vpack.c.b16 %v2308, %v2304
        %v3777 = vpack.c.b16 %v2309, %v2305
        %v3778 = vpack.c.b16 %v2310, %v2306
        %v3779 = vpack.c.b16 %v2315, %v2311
        %v3780 = vpack.c.b16 %v2316, %v2312
        %v3781 = vpack.c.b16 %v2317, %v2313
        %v3782 = vpack.c.b16 %v2318, %v2314
        %v3783 = vpack.c.b16 %v2323, %v2319
        %v3784 = vpack.c.b16 %v2324, %v2320
        %v3785 = vpack.c.b16 %v2325, %v2321
        %v3786 = vpack.c.b16 %v2326, %v2322
        %v3787 = vpack.c.b16 %v2331, %v2327
        %v3788 = vpack.c.b16 %v2332, %v2328
        %v3789 = vpack.c.b16 %v2333, %v2329
        %v3790 = vpack.c.b16 %v2334, %v2330
        %v3791 = vpack.c.b16 %v2339, %v2335
        %v3792 = vpack.c.b16 %v2340, %v2336
        %v3793 = vpack.c.b16 %v2341, %v2337
        %v3794 = vpack.c.b16 %v2342, %v2338
        %v3795 = vpack.c.b16 %v2347, %v2343
        %v3796 = vpack.c.b16 %v2348, %v2344
        %v3797 = vpack.c.b16 %v2349, %v2345
        %v3798 = vpack.c.b16 %v2350, %v2346
        %v3799 = vpack.c.b16 %v2355, %v2351
        %v3800 = vpack.c.b16 %v2356, %v2352
        %v3801 = vpack.c.b16 %v2357, %v2353
        %v3802 = vpack.c.b16 %v2358, %v2354
        %v3803 = vpack.c.b16 %v2363, %v2359
        %v3804 = vpack.c.b16 %v2364, %v2360
        %v3805 = vpack.c.b16 %v2365, %v2361
        %v3806 = vpack.c.b16 %v2366, %v2362
        %v3807 = vpack.c.b16 %v2371, %v2367
        %v3808 = vpack.c.b16 %v2372, %v2368
        %v3809 = vpack.c.b16 %v2373, %v2369
        %v3810 = vpack.c.b16 %v2374, %v2370
        %v3811 = vpack.c.b16 %v2379, %v2375
        %v3812 = vpack.c.b16 %v2380, %v2376
        %v3813 = vpack.c.b16 %v2381, %v2377
        %v3814 = vpack.c.b16 %v2382, %v2378
        %v3815 = vpack.c.b16 %v2387, %v2383
        %v3816 = vpack.c.b16 %v2388, %v2384
        %v3817 = vpack.c.b16 %v2389, %v2385
        %v3818 = vpack.c.b16 %v2390, %v2386
        %v3819 = vpack.c.b16 %v2395, %v2391
        %v3820 = vpack.c.b16 %v2396, %v2392
        %v3821 = vpack.c.b16 %v2397, %v2393
        %v3822 = vpack.c.b16 %v2398, %v2394
        %v3823 = vpack.c.b16 %v2403, %v2399
        %v3824 = vpack.c.b16 %v2404, %v2400
        %v3825 = vpack.c.b16 %v2405, %v2401
        %v3826 = vpack.c.b16 %v2406, %v2402
        %v3827 = vpack.c.b16 %v2411, %v2407
        %v3828 = vpack.c.b16 %v2412, %v2408
        %v3829 = vpack.c.b16 %v2413, %v2409
        %v3830 = vpack.c.b16 %v2414, %v2410
        %v3831 = vpack.c.b16 %v2419, %v2415
        %v3832 = vpack.c.b16 %v2420, %v2416
        %v3833 = vpack.c.b16 %v2421, %v2417
        %v3834 = vpack.c.b16 %v2422, %v2418
        %v3835 = vpack.c.b16 %v2427, %v2423
        %v3836 = vpack.c.b16 %v2428, %v2424
        %v3837 = vpack.c.b16 %v2429, %v2425
        %v3838 = vpack.c.b16 %v2430, %v2426
        %v3839 = vpack.c.b16 %v2435, %v2431
        %v3840 = vpack.c.b16 %v2436, %v2432
        %v3841 = vpack.c.b16 %v2437, %v2433
        %v3842 = vpack.c.b16 %v2438, %v2434
        %v3843 = vpack.c.b16 %v2443, %v2439
        %v3844 = vpack.c.b16 %v2444, %v2440
        %v3845 = vpack.c.b16 %v2445, %v2441
        %v3846 = vpack.c.b16 %v2446, %v2442
        %v3847 = vpack.c.b16 %v2451, %v2447
        %v3848 = vpack.c.b16 %v2452, %v2448
        %v3849 = vpack.c.b16 %v2453, %v2449
        %v3850 = vpack.c.b16 %v2454, %v2450
        %v3851 = vpack.c.b16 %v2459, %v2455
        %v3852 = vpack.c.b16 %v2460, %v2456
        %v3853 = vpack.c.b16 %v2461, %v2457
        %v3854 = vpack.c.b16 %v2462, %v2458
        %v3855 = vpack.c.b16 %v2467, %v2463
        %v3856 = vpack.c.b16 %v2468, %v2464
        %v3857 = vpack.c.b16 %v2469, %v2465
        %v3858 = vpack.c.b16 %v2470, %v2466
        %v3859 = vpack.c.b16 %v2475, %v2471
        %v3860 = vpack.c.b16 %v2476, %v2472
        %v3861 = vpack.c.b16 %v2477, %v2473
        %v3862 = vpack.c.b16 %v2478, %v2474
        %v3863 = vpack.c.b16 %v2483, %v2479
        %v3864 = vpack.c.b16 %v2484, %v2480
        %v3865 = vpack.c.b16 %v2485, %v2481
        %v3866 = vpack.c.b16 %v2486, %v2482
        %v3867 = vpack.c.b16 %v2491, %v2487
        %v3868 = vpack.c.b16 %v2492, %v2488
        %v3869 = vpack.c.b16 %v2493, %v2489
        %v3870 = vpack.c.b16 %v2494, %v2490
        %v3871 = vpack.c.b16 %v2499, %v2495
        %v3872 = vpack.c.b16 %v2500, %v2496
        %v3873 = vpack.c.b16 %v2501, %v2497
        %v3874 = vpack.c.b16 %v2502, %v2498
        %v3875 = vpack.c.b16 %v2507, %v2503
        %v3876 = vpack.c.b16 %v2508, %v2504
        %v3877 = vpack.c.b16 %v2509, %v2505
        %v3878 = vpack.c.b16 %v2510, %v2506
        %v3879 = vpack.c.b16 %v2515, %v2511
        %v3880 = vpack.c.b16 %v2516, %v2512
        %v3881 = vpack.c.b16 %v2517, %v2513
        %v3882 = vpack.c.b16 %v2518, %v2514
        %v3883 = vpack.c.b16 %v2523, %v2519
        %v3884 = vpack.c.b16 %v2524, %v2520
        %v3885 = vpack.c.b16 %v2525, %v2521
        %v3886 = vpack.c.b16 %v2526, %v2522
        %v3887 = vpack.c.b16 %v2531, %v2527
        %v3888 = vpack.c.b16 %v2532, %v2528
        %v3889 = vpack.c.b16 %v2533, %v2529
        %v3890 = vpack.c.b16 %v2534, %v2530
        %v3891 = vpack.c.b16 %v2539, %v2535
        %v3892 = vpack.c.b16 %v2540, %v2536
        %v3893 = vpack.c.b16 %v2541, %v2537
        %v3894 = vpack.c.b16 %v2542, %v2538
        %v3895 = vpack.c.b16 %v2547, %v2543
        %v3896 = vpack.c.b16 %v2548, %v2544
        %v3897 = vpack.c.b16 %v2549, %v2545
        %v3898 = vpack.c.b16 %v2550, %v2546
        %v3899 = vpack.c.b16 %v2555, %v2551
        %v3900 = vpack.c.b16 %v2556, %v2552
        %v3901 = vpack.c.b16 %v2557, %v2553
        %v3902 = vpack.c.b16 %v2558, %v2554
        %v3903 = vpack.c.b16 %v2563, %v2559
        %v3904 = vpack.c.b16 %v2564, %v2560
        %v3905 = vpack.c.b16 %v2565, %v2561
        %v3906 = vpack.c.b16 %v2566, %v2562
        %v3907 = vpack.c.b16 %v2571, %v2567
        %v3908 = vpack.c.b16 %v2572, %v2568
        %v3909 = vpack.c.b16 %v2573, %v2569
        %v3910 = vpack.c.b16 %v2574, %v2570
        %v3911 = vpack.c.b16 %v2579, %v2575
        %v3912 = vpack.c.b16 %v2580, %v2576
        %v3913 = vpack.c.b16 %v2581, %v2577
        %v3914 = vpack.c.b16 %v2582, %v2578
        %v3915 = vpack.c.b16 %v2587, %v2583
        %v3916 = vpack.c.b16 %v2588, %v2584
        %v3917 = vpack.c.b16 %v2589, %v2585
        %v3918 = vpack.c.b16 %v2590, %v2586
        %v3919 = vpack.c.b16 %v2595, %v2591
        %v3920 = vpack.c.b16 %v2596, %v2592
        %v3921 = vpack.c.b16 %v2597, %v2593
        %v3922 = vpack.c.b16 %v2598, %v2594
        %v3923 = vpack.c.b16 %v2603, %v2599
        %v3924 = vpack.c.b16 %v2604, %v2600
        %v3925 = vpack.c.b16 %v2605, %v2601
        %v3926 = vpack.c.b16 %v2606, %v2602
        %v3927 = vpack.c.b16 %v2611, %v2607
        %v3928 = vpack.c.b16 %v2612, %v2608
        %v3929 = vpack.c.b16 %v2613, %v2609
        %v3930 = vpack.c.b16 %v2614, %v2610
        %v3931 = vpack.c.b16 %v2619, %v2615
        %v3932 = vpack.c.b16 %v2620, %v2616
        %v3933 = vpack.c.b16 %v2621, %v2617
        %v3934 = vpack.c.b16 %v2622, %v2618
        %v3935 = vpack.c.b16 %v2627, %v2623
        %v3936 = vpack.c.b16 %v2628, %v2624
        %v3937 = vpack.c.b16 %v2629, %v2625
        %v3938 = vpack.c.b16 %v2630, %v2626
        %v3939 = vpack.c.b16 %v2635, %v2631
        %v3940 = vpack.c.b16 %v2636, %v2632
        %v3941 = vpack.c.b16 %v2637, %v2633
        %v3942 = vpack.c.b16 %v2638, %v2634
        %v3943 = vpack.c.b16 %v2643, %v2639
        %v3944 = vpack.c.b16 %v2644, %v2640
        %v3945 = vpack.c.b16 %v2645, %v2641
        %v3946 = vpack.c.b16 %v2646, %v2642
        %v3947 = vpack.c.b16 %v2651, %v2647
        %v3948 = vpack.c.b16 %v2652, %v2648
        %v3949 = vpack.c.b16 %v2653, %v2649
        %v3950 = vpack.c.b16 %v2654, %v2650
        %v3951 = vpack.c.b16 %v2659, %v2655
        %v3952 = vpack.c.b16 %v2660, %v2656
        %v3953 = vpack.c.b16 %v2661, %v2657
        %v3954 = vpack.c.b16 %v2662, %v2658
        %v3955 = vpack.c.b16 %v2667, %v2663
        %v3956 = vpack.c.b16 %v2668, %v2664
        %v3957 = vpack.c.b16 %v2669, %v2665
        %v3958 = vpack.c.b16 %v2670, %v2666
        %v3959 = vpack.c.b16 %v2675, %v2671
        %v3960 = vpack.c.b16 %v2676, %v2672
        %v3961 = vpack.c.b16 %v2677, %v2673
        %v3962 = vpack.c.b16 %v2678, %v2674
        %v3963 = vpack.c.b16 %v2683, %v2679
        %v3964 = vpack.c.b16 %v2684, %v2680
        %v3965 = vpack.c.b16 %v2685, %v2681
        %v3966 = vpack.c.b16 %v2686, %v2682
        %v3967 = vpack.c.b16 %v2691, %v2687
        %v3968 = vpack.c.b16 %v2692, %v2688
        %v3969 = vpack.c.b16 %v2693, %v2689
        %v3970 = vpack.c.b16 %v2694, %v2690
        %v3971 = vpack.c.b16 %v2699, %v2695
        %v3972 = vpack.c.b16 %v2700, %v2696
        %v3973 = vpack.c.b16 %v2701, %v2697
        %v3974 = vpack.c.b16 %v2702, %v2698
        %v3975 = vpack.c.b16 %v2707, %v2703
        %v3976 = vpack.c.b16 %v2708, %v2704
        %v3977 = vpack.c.b16 %v2709, %v2705
        %v3978 = vpack.c.b16 %v2710, %v2706
        %v3979 = vpack.c.b16 %v2715, %v2711
        %v3980 = vpack.c.b16 %v2716, %v2712
        %v3981 = vpack.c.b16 %v2717, %v2713
        %v3982 = vpack.c.b16 %v2718, %v2714
        %v3983 = vpack.c.b16 %v2723, %v2719
        %v3984 = vpack.c.b16 %v2724, %v2720
        %v3985 = vpack.c.b16 %v2725, %v2721
        %v3986 = vpack.c.b16 %v2726, %v2722
        %v3987 = vpack.c.b16 %v2731, %v2727
        %v3988 = vpack.c.b16 %v2732, %v2728
        %v3989 = vpack.c.b16 %v2733, %v2729
        %v3990 = vpack.c.b16 %v2734, %v2730
        %v3991 = vpack.c.b16 %v2739, %v2735
        %v3992 = vpack.c.b16 %v2740, %v2736
        %v3993 = vpack.c.b16 %v2741, %v2737
        %v3994 = vpack.c.b16 %v2742, %v2738
        %v3995 = vpack.c.b16 %v2747, %v2743
        %v3996 = vpack.c.b16 %v2748, %v2744
        %v3997 = vpack.c.b16 %v2749, %v2745
        %v3998 = vpack.c.b16 %v2750, %v2746
        %v3999 = vpack.c.b16 %v2755, %v2751
        %v4000 = vpack.c.b16 %v2756, %v2752
        %v4001 = vpack.c.b16 %v2757, %v2753
        %v4002 = vpack.c.b16 %v2758, %v2754
        %v4003 = vpack.c.b16 %v2763, %v2759
        %v4004 = vpack.c.b16 %v2764, %v2760
        %v4005 = vpack.c.b16 %v2765, %v2761
        %v4006 = vpack.c.b16 %v2766, %v2762
        %v4007 = vpack.c.b16 %v2771, %v2767
        %v4008 = vpack.c.b16 %v2772, %v2768
        %v4009 = vpack.c.b16 %v2773, %v2769
        %v4010 = vpack.c.b16 %v2774, %v2770
        %v4011 = vpack.c.b16 %v2779, %v2775
        %v4012 = vpack.c.b16 %v2780, %v2776
        %v4013 = vpack.c.b16 %v2781, %v2777
        %v4014 = vpack.c.b16 %v2782, %v2778
        %v4015 = vpack.c.b16 %v2787, %v2783
        %v4016 = vpack.c.b16 %v2788, %v2784
        %v4017 = vpack.c.b16 %v2789, %v2785
        %v4018 = vpack.c.b16 %v2790, %v2786
        %v4019 = vpack.c.b16 %v2795, %v2791
        %v4020 = vpack.c.b16 %v2796, %v2792
        %v4021 = vpack.c.b16 %v2797, %v2793
        %v4022 = vpack.c.b16 %v2798, %v2794
        %v4023 = vpack.c.b16 %v2803, %v2799
        %v4024 = vpack.c.b16 %v2804, %v2800
        %v4025 = vpack.c.b16 %v2805, %v2801
        %v4026 = vpack.c.b16 %v2806, %v2802
        %v4027 = vpack.c.b16 %v2811, %v2807
        %v4028 = vpack.c.b16 %v2812, %v2808
        %v4029 = vpack.c.b16 %v2813, %v2809
        %v4030 = vpack.c.b16 %v2814, %v2810
        %v4031 = vpack.c.b16 %v2819, %v2815
        %v4032 = vpack.c.b16 %v2820, %v2816
        %v4033 = vpack.c.b16 %v2821, %v2817
        %v4034 = vpack.c.b16 %v2822, %v2818
        %v4035 = vpack.c.b16 %v2827, %v2823
        %v4036 = vpack.c.b16 %v2828, %v2824
        %v4037 = vpack.c.b16 %v2829, %v2825
        %v4038 = vpack.c.b16 %v2830, %v2826
        %v4039 = vpack.c.b16 %v2835, %v2831
        %v4040 = vpack.c.b16 %v2836, %v2832
        %v4041 = vpack.c.b16 %v2837, %v2833
        %v4042 = vpack.c.b16 %v2838, %v2834
        %v4043 = vpack.c.b16 %v2843, %v2839
        %v4044 = vpack.c.b16 %v2844, %v2840
        %v4045 = vpack.c.b16 %v2845, %v2841
        %v4046 = vpack.c.b16 %v2846, %v2842
        %v4047 = vpack.c.b16 %v2851, %v2847
        %v4048 = vpack.c.b16 %v2852, %v2848
        %v4049 = vpack.c.b16 %v2853, %v2849
        %v4050 = vpack.c.b16 %v2854, %v2850
        %v4051 = vpack.c.b16 %v2859, %v2855
        %v4052 = vpack.c.b16 %v2860, %v2856
        %v4053 = vpack.c.b16 %v2861, %v2857
        %v4054 = vpack.c.b16 %v2862, %v2858
        %v4055 = vpack.c.b16 %v2867, %v2863
        %v4056 = vpack.c.b16 %v2868, %v2864
        %v4057 = vpack.c.b16 %v2869, %v2865
        %v4058 = vpack.c.b16 %v2870, %v2866
        %v4059 = vpack.c.b16 %v2875, %v2871
        %v4060 = vpack.c.b16 %v2876, %v2872
        %v4061 = vpack.c.b16 %v2877, %v2873
        %v4062 = vpack.c.b16 %v2878, %v2874
        %v4063 = vpack.c.b16 %v2883, %v2879
        %v4064 = vpack.c.b16 %v2884, %v2880
        %v4065 = vpack.c.b16 %v2885, %v2881
        %v4066 = vpack.c.b16 %v2886, %v2882
        %v4067 = vpack.c.b16 %v2891, %v2887
        %v4068 = vpack.c.b16 %v2892, %v2888
        %v4069 = vpack.c.b16 %v2893, %v2889
        %v4070 = vpack.c.b16 %v2894, %v2890
        %v4071 = vpack.c.b16 %v2899, %v2895
        %v4072 = vpack.c.b16 %v2900, %v2896
        %v4073 = vpack.c.b16 %v2901, %v2897
        %v4074 = vpack.c.b16 %v2902, %v2898
        %v4075 = vpack.c.b16 %v2907, %v2903
        %v4076 = vpack.c.b16 %v2908, %v2904
        %v4077 = vpack.c.b16 %v2909, %v2905
        %v4078 = vpack.c.b16 %v2910, %v2906
        %v4079 = vpack.c.b16 %v2915, %v2911
        %v4080 = vpack.c.b16 %v2916, %v2912
        %v4081 = vpack.c.b16 %v2917, %v2913
        %v4082 = vpack.c.b16 %v2918, %v2914
        %v4083 = vpack.c.b16 %v2923, %v2919
        %v4084 = vpack.c.b16 %v2924, %v2920
        %v4085 = vpack.c.b16 %v2925, %v2921
        %v4086 = vpack.c.b16 %v2926, %v2922
        %v4087 = vpack.c.b16 %v2931, %v2927
        %v4088 = vpack.c.b16 %v2932, %v2928
        %v4089 = vpack.c.b16 %v2933, %v2929
        %v4090 = vpack.c.b16 %v2934, %v2930
        %v4091 = vpack.c.b16 %v2939, %v2935
        %v4092 = vpack.c.b16 %v2940, %v2936
        %v4093 = vpack.c.b16 %v2941, %v2937
        %v4094 = vpack.c.b16 %v2942, %v2938
        %v4095 = vpack.c.b16 %v2947, %v2943
        %v4096 = vpack.c.b16 %v2948, %v2944
        %v4097 = vpack.c.b16 %v2949, %v2945
        %v4098 = vpack.c.b16 %v2950, %v2946
        %v4099 = vpack.c.b16 %v2955, %v2951
        %v4100 = vpack.c.b16 %v2956, %v2952
        %v4101 = vpack.c.b16 %v2957, %v2953
        %v4102 = vpack.c.b16 %v2958, %v2954
        %v4103 = vpack.c.b16 %v2963, %v2959
        %v4104 = vpack.c.b16 %v2964, %v2960
        %v4105 = vpack.c.b16 %v2965, %v2961
        %v4106 = vpack.c.b16 %v2966, %v2962
        %v4107 = vpack.c.b16 %v2971, %v2967
        %v4108 = vpack.c.b16 %v2972, %v2968
        %v4109 = vpack.c.b16 %v2973, %v2969
        %v4110 = vpack.c.b16 %v2974, %v2970
        %v4111 = vpack.c.b16 %v2979, %v2975
        %v4112 = vpack.c.b16 %v2980, %v2976
        %v4113 = vpack.c.b16 %v2981, %v2977
        %v4114 = vpack.c.b16 %v2982, %v2978
        %v4115 = vpack.c.b16 %v2987, %v2983
        %v4116 = vpack.c.b16 %v2988, %v2984
        %v4117 = vpack.c.b16 %v2989, %v2985
        %v4118 = vpack.c.b16 %v2990, %v2986
        %v4119 = vpack.c.b16 %v2995, %v2991
        %v4120 = vpack.c.b16 %v2996, %v2992
        %v4121 = vpack.c.b16 %v2997, %v2993
        %v4122 = vpack.c.b16 %v2998, %v2994
        %v4123 = vpack.c.b16 %v3003, %v2999
        %v4124 = vpack.c.b16 %v3004, %v3000
        %v4125 = vpack.c.b16 %v3005, %v3001
        %v4126 = vpack.c.b16 %v3006, %v3002
        %v4127 = vpack.c.b16 %v3011, %v3007
        %v4128 = vpack.c.b16 %v3012, %v3008
        %v4129 = vpack.c.b16 %v3013, %v3009
        %v4130 = vpack.c.b16 %v3014, %v3010
        %v4131 = vpack.c.b16 %v3019, %v3015
        %v4132 = vpack.c.b16 %v3020, %v3016
        %v4133 = vpack.c.b16 %v3021, %v3017
        %v4134 = vpack.c.b16 %v3022, %v3018
        %v4135 = vpack.c.b16 %v3027, %v3023
        %v4136 = vpack.c.b16 %v3028, %v3024
        %v4137 = vpack.c.b16 %v3029, %v3025
        %v4138 = vpack.c.b16 %v3030, %v3026
        %v4139 = vpack.c.b16 %v3035, %v3031
        %v4140 = vpack.c.b16 %v3036, %v3032
        %v4141 = vpack.c.b16 %v3037, %v3033
        %v4142 = vpack.c.b16 %v3038, %v3034
        %v4143 = vpack.c.b16 %v3043, %v3039
        %v4144 = vpack.c.b16 %v3044, %v3040
        %v4145 = vpack.c.b16 %v3045, %v3041
        %v4146 = vpack.c.b16 %v3046, %v3042
        %v4147 = vpack.c.b16 %v3051, %v3047
        %v4148 = vpack.c.b16 %v3052, %v3048
        %v4149 = vpack.c.b16 %v3053, %v3049
        %v4150 = vpack.c.b16 %v3054, %v3050
        %v4151 = vpack.c.b16 %v3059, %v3055
        %v4152 = vpack.c.b16 %v3060, %v3056
        %v4153 = vpack.c.b16 %v3061, %v3057
        %v4154 = vpack.c.b16 %v3062, %v3058
        %v4155 = vpack.c.b16 %v3067, %v3063
        %v4156 = vpack.c.b16 %v3068, %v3064
        %v4157 = vpack.c.b16 %v3069, %v3065
        %v4158 = vpack.c.b16 %v3070, %v3066
        %v4159 = vpack.c.b16 %v3075, %v3071
        %v4160 = vpack.c.b16 %v3076, %v3072
        %v4161 = vpack.c.b16 %v3077, %v3073
        %v4162 = vpack.c.b16 %v3078, %v3074
        %v4163 = vpack.c.b16 %v3083, %v3079
        %v4164 = vpack.c.b16 %v3084, %v3080
        %v4165 = vpack.c.b16 %v3085, %v3081
        %v4166 = vpack.c.b16 %v3086, %v3082
        %v4167 = vpack.c.b16 %v3091, %v3087
        %v4168 = vpack.c.b16 %v3092, %v3088
        %v4169 = vpack.c.b16 %v3093, %v3089
        %v4170 = vpack.c.b16 %v3094, %v3090
        %v4171 = vpack.c.b16 %v3099, %v3095
        %v4172 = vpack.c.b16 %v3100, %v3096
        %v4173 = vpack.c.b16 %v3101, %v3097
        %v4174 = vpack.c.b16 %v3102, %v3098
        %v4175 = vpack.c.b16 %v3107, %v3103
        %v4176 = vpack.c.b16 %v3108, %v3104
        %v4177 = vpack.c.b16 %v3109, %v3105
        %v4178 = vpack.c.b16 %v3110, %v3106
        %v4179 = vpack.c.b16 %v3115, %v3111
        %v4180 = vpack.c.b16 %v3116, %v3112
        %v4181 = vpack.c.b16 %v3117, %v3113
        %v4182 = vpack.c.b16 %v3118, %v3114
        %v4183 = vpack.c.b16 %v3123, %v3119
        %v4184 = vpack.c.b16 %v3124, %v3120
        %v4185 = vpack.c.b16 %v3125, %v3121
        %v4186 = vpack.c.b16 %v3126, %v3122
        %v4187 = vpack.c.b16 %v3131, %v3127
        %v4188 = vpack.c.b16 %v3132, %v3128
        %v4189 = vpack.c.b16 %v3133, %v3129
        %v4190 = vpack.c.b16 %v3134, %v3130
        %v4191 = vpack.c.b16 %v3139, %v3135
        %v4192 = vpack.c.b16 %v3140, %v3136
        %v4193 = vpack.c.b16 %v3141, %v3137
        %v4194 = vpack.c.b16 %v3142, %v3138
        %v4195 = vpack.c.b16 %v3147, %v3143
        %v4196 = vpack.c.b16 %v3148, %v3144
        %v4197 = vpack.c.b16 %v3149, %v3145
        %v4198 = vpack.c.b16 %v3150, %v3146
        %v4199 = vpack.c.b16 %v3155, %v3151
        %v4200 = vpack.c.b16 %v3156, %v3152
        %v4201 = vpack.c.b16 %v3157, %v3153
        %v4202 = vpack.c.b16 %v3158, %v3154
        %v4203 = vpack.c.b16 %v3163, %v3159
        %v4204 = vpack.c.b16 %v3164, %v3160
        %v4205 = vpack.c.b16 %v3165, %v3161
        %v4206 = vpack.c.b16 %v3166, %v3162
        %v4207 = vpack.c.b16 %v3171, %v3167
        %v4208 = vpack.c.b16 %v3172, %v3168
        %v4209 = vpack.c.b16 %v3173, %v3169
        %v4210 = vpack.c.b16 %v3174, %v3170
        %v4211 = vpack.c.b16 %v3179, %v3175
        %v4212 = vpack.c.b16 %v3180, %v3176
        %v4213 = vpack.c.b16 %v3181, %v3177
        %v4214 = vpack.c.b16 %v3182, %v3178
        %v4215 = vpack.c.b16 %v3187, %v3183
        %v4216 = vpack.c.b16 %v3188, %v3184
        %v4217 = vpack.c.b16 %v3189, %v3185
        %v4218 = vpack.c.b16 %v3190, %v3186
        %v4219 = vpack.c.b16 %v3195, %v3191
        %v4220 = vpack.c.b16 %v3196, %v3192
        %v4221 = vpack.c.b16 %v3197, %v3193
        %v4222 = vpack.c.b16 %v3198, %v3194
        %v4223 = vpack.c.b16 %v3203, %v3199
        %v4224 = vpack.c.b16 %v3204, %v3200
        %v4225 = vpack.c.b16 %v3205, %v3201
        %v4226 = vpack.c.b16 %v3206, %v3202
        %v4227 = vpack.c.b16 %v3211, %v3207
        %v4228 = vpack.c.b16 %v3212, %v3208
        %v4229 = vpack.c.b16 %v3213, %v3209
        %v4230 = vpack.c.b16 %v3214, %v3210
        %v4231 = vpack.c.b16 %v3219, %v3215
        %v4232 = vpack.c.b16 %v3220, %v3216
        %v4233 = vpack.c.b16 %v3221, %v3217
        %v4234 = vpack.c.b16 %v3222, %v3218
        %v4235 = vpack.c.b16 %v3227, %v3223
        %v4236 = vpack.c.b16 %v3228, %v3224
        %v4237 = vpack.c.b16 %v3229, %v3225
        %v4238 = vpack.c.b16 %v3230, %v3226
        %v4239 = vpack.c.b16 %v3235, %v3231
        %v4240 = vpack.c.b16 %v3236, %v3232
        %v4241 = vpack.c.b16 %v3237, %v3233
        %v4242 = vpack.c.b16 %v3238, %v3234
        %v4243 = vpack.c.b16 %v3243, %v3239
        %v4244 = vpack.c.b16 %v3244, %v3240
        %v4245 = vpack.c.b16 %v3245, %v3241
        %v4246 = vpack.c.b16 %v3246, %v3242
        %v4247 = vpack.c.b16 %v3251, %v3247
        %v4248 = vpack.c.b16 %v3252, %v3248
        %v4249 = vpack.c.b16 %v3253, %v3249
        %v4250 = vpack.c.b16 %v3254, %v3250
        %v4251 = vpack.c.b16 %v3259, %v3255
        %v4252 = vpack.c.b16 %v3260, %v3256
        %v4253 = vpack.c.b16 %v3261, %v3257
        %v4254 = vpack.c.b16 %v3262, %v3258
        %v4255 = vpack.c.b16 %v3267, %v3263
        %v4256 = vpack.c.b16 %v3268, %v3264
        %v4257 = vpack.c.b16 %v3269, %v3265
        %v4258 = vpack.c.b16 %v3270, %v3266
        %v4259 = vpack.c.b16 %v3275, %v3271
        %v4260 = vpack.c.b16 %v3276, %v3272
        %v4261 = vpack.c.b16 %v3277, %v3273
        %v4262 = vpack.c.b16 %v3278, %v3274
        %v4263 = vpack.c.b16 %v3283, %v3279
        %v4264 = vpack.c.b16 %v3284, %v3280
        %v4265 = vpack.c.b16 %v3285, %v3281
        %v4266 = vpack.c.b16 %v3286, %v3282
        %v4267 = vpack.c.b16 %v3291, %v3287
        %v4268 = vpack.c.b16 %v3292, %v3288
        %v4269 = vpack.c.b16 %v3293, %v3289
        %v4270 = vpack.c.b16 %v3294, %v3290
        %v4271 = vpack.c.b16 %v3299, %v3295
        %v4272 = vpack.c.b16 %v3300, %v3296
        %v4273 = vpack.c.b16 %v3301, %v3297
        %v4274 = vpack.c.b16 %v3302, %v3298
        %v4275 = vpack.c.b16 %v3307, %v3303
        %v4276 = vpack.c.b16 %v3308, %v3304
        %v4277 = vpack.c.b16 %v3309, %v3305
        %v4278 = vpack.c.b16 %v3310, %v3306
        %v4279 = vpack.c.b16 %v3315, %v3311
        %v4280 = vpack.c.b16 %v3316, %v3312
        %v4281 = vpack.c.b16 %v3317, %v3313
        %v4282 = vpack.c.b16 %v3318, %v3314
        %v4283 = vpack.c.b16 %v3323, %v3319
        %v4284 = vpack.c.b16 %v3324, %v3320
        %v4285 = vpack.c.b16 %v3325, %v3321
        %v4286 = vpack.c.b16 %v3326, %v3322
        %v4287 = vpack.c.b16 %v3331, %v3327
        %v4288 = vpack.c.b16 %v3332, %v3328
        %v4289 = vpack.c.b16 %v3333, %v3329
        %v4290 = vpack.c.b16 %v3334, %v3330
        %v4291 = vpack.c.b16 %v3339, %v3335
        %v4292 = vpack.c.b16 %v3340, %v3336
        %v4293 = vpack.c.b16 %v3341, %v3337
        %v4294 = vpack.c.b16 %v3342, %v3338
        %v4295 = vpack.c.b16 %v3347, %v3343
        %v4296 = vpack.c.b16 %v3348, %v3344
        %v4297 = vpack.c.b16 %v3349, %v3345
        %v4298 = vpack.c.b16 %v3350, %v3346
        %v4299 = vpack.c.b16 %v3355, %v3351
        %v4300 = vpack.c.b16 %v3356, %v3352
        %v4301 = vpack.c.b16 %v3357, %v3353
        %v4302 = vpack.c.b16 %v3358, %v3354
        %v4303 = vpack.c.b16 %v3363, %v3359
        %v4304 = vpack.c.b16 %v3364, %v3360
        %v4305 = vpack.c.b16 %v3365, %v3361
        %v4306 = vpack.c.b16 %v3366, %v3362
        %v4307 = vpack.c.b16 %v3371, %v3367
        %v4308 = vpack.c.b16 %v3372, %v3368
        %v4309 = vpack.c.b16 %v3373, %v3369
        %v4310 = vpack.c.b16 %v3374, %v3370
        %v4311 = vpack.c.b16 %v3379, %v3375
        %v4312 = vpack.c.b16 %v3380, %v3376
        %v4313 = vpack.c.b16 %v3381, %v3377
        %v4314 = vpack.c.b16 %v3382, %v3378
        %v4315 = vpack.c.b16 %v3387, %v3383
        %v4316 = vpack.c.b16 %v3388, %v3384
        %v4317 = vpack.c.b16 %v3389, %v3385
        %v4318 = vpack.c.b16 %v3390, %v3386
        %v4319 = vpack.c.b16 %v3395, %v3391
        %v4320 = vpack.c.b16 %v3396, %v3392
        %v4321 = vpack.c.b16 %v3397, %v3393
        %v4322 = vpack.c.b16 %v3398, %v3394
        %v4323 = vpack.c.b16 %v3403, %v3399
        %v4324 = vpack.c.b16 %v3404, %v3400
        %v4325 = vpack.c.b16 %v3405, %v3401
        %v4326 = vpack.c.b16 %v3406, %v3402
        %v4327 = vpack.c.b16 %v3411, %v3407
        %v4328 = vpack.c.b16 %v3412, %v3408
        %v4329 = vpack.c.b16 %v3413, %v3409
        %v4330 = vpack.c.b16 %v3414, %v3410
        %v4331 = vpack.c.b16 %v3419, %v3415
        %v4332 = vpack.c.b16 %v3420, %v3416
        %v4333 = vpack.c.b16 %v3421, %v3417
        %v4334 = vpack.c.b16 %v3422, %v3418
        %v4335 = vpack.c.b16 %v3427, %v3423
        %v4336 = vpack.c.b16 %v3428, %v3424
        %v4337 = vpack.c.b16 %v3429, %v3425
        %v4338 = vpack.c.b16 %v3430, %v3426
        %v4339 = vpack.c.b16 %v3435, %v3431
        %v4340 = vpack.c.b16 %v3436, %v3432
        %v4341 = vpack.c.b16 %v3437, %v3433
        %v4342 = vpack.c.b16 %v3438, %v3434
        %v4343 = vpack.c.b16 %v3443, %v3439
        %v4344 = vpack.c.b16 %v3444, %v3440
        %v4345 = vpack.c.b16 %v3445, %v3441
        %v4346 = vpack.c.b16 %v3446, %v3442
        %v4347 = vpack.c.b16 %v3451, %v3447
        %v4348 = vpack.c.b16 %v3452, %v3448
        %v4349 = vpack.c.b16 %v3453, %v3449
        %v4350 = vpack.c.b16 %v3454, %v3450
        %v4351 = vpack.c.b16 %v3459, %v3455
        %v4352 = vpack.c.b16 %v3460, %v3456
        %v4353 = vpack.c.b16 %v3461, %v3457
        %v4354 = vpack.c.b16 %v3462, %v3458
        %v4355 = vpack.c.b16 %v3467, %v3463
        %v4356 = vpack.c.b16 %v3468, %v3464
        %v4357 = vpack.c.b16 %v3469, %v3465
        %v4358 = vpack.c.b16 %v3470, %v3466
        %v4359 = vpack.c.b16 %v3475, %v3471
        %v4360 = vpack.c.b16 %v3476, %v3472
        %v4361 = vpack.c.b16 %v3477, %v3473
        %v4362 = vpack.c.b16 %v3478, %v3474
        %v4363 = vpack.c.b16 %v3483, %v3479
        %v4364 = vpack.c.b16 %v3484, %v3480
        %v4365 = vpack.c.b16 %v3485, %v3481
        %v4366 = vpack.c.b16 %v3486, %v3482
        %v4367 = vpack.c.b16 %v3491, %v3487
        %v4368 = vpack.c.b16 %v3492, %v3488
        %v4369 = vpack.c.b16 %v3493, %v3489
        %v4370 = vpack.c.b16 %v3494, %v3490
        %v4371 = vpack.c.b16 %v3499, %v3495
        %v4372 = vpack.c.b16 %v3500, %v3496
        %v4373 = vpack.c.b16 %v3501, %v3497
        %v4374 = vpack.c.b16 %v3502, %v3498
        %v4375 = vpack.c.b16 %v3507, %v3503
        %v4376 = vpack.c.b16 %v3508, %v3504
        %v4377 = vpack.c.b16 %v3509, %v3505
        %v4378 = vpack.c.b16 %v3510, %v3506
        %v4379 = vpack.c.b16 %v3515, %v3511
        %v4380 = vpack.c.b16 %v3516, %v3512
        %v4381 = vpack.c.b16 %v3517, %v3513
        %v4382 = vpack.c.b16 %v3518, %v3514
        %v4383 = vpack.c.b16 %v3523, %v3519
        %v4384 = vpack.c.b16 %v3524, %v3520
        %v4385 = vpack.c.b16 %v3525, %v3521
        %v4386 = vpack.c.b16 %v3526, %v3522
        %v4387 = vpack.c.b16 %v3531, %v3527
        %v4388 = vpack.c.b16 %v3532, %v3528
        %v4389 = vpack.c.b16 %v3533, %v3529
        %v4390 = vpack.c.b16 %v3534, %v3530
        %v4391 = vpack.c.b16 %v3539, %v3535
        %v4392 = vpack.c.b16 %v3540, %v3536
        %v4393 = vpack.c.b16 %v3541, %v3537
        %v4394 = vpack.c.b16 %v3542, %v3538
        %v4395 = vpack.c.b16 %v3547, %v3543
        %v4396 = vpack.c.b16 %v3548, %v3544
        %v4397 = vpack.c.b16 %v3549, %v3545
        %v4398 = vpack.c.b16 %v3550, %v3546
        %v4399 = vpack.c.b16 %v3555, %v3551
        %v4400 = vpack.c.b16 %v3556, %v3552
        %v4401 = vpack.c.b16 %v3557, %v3553
        %v4402 = vpack.c.b16 %v3558, %v3554
        %v4403 = vpack.c.b16 %v3563, %v3559
        %v4404 = vpack.c.b16 %v3564, %v3560
        %v4405 = vpack.c.b16 %v3565, %v3561
        %v4406 = vpack.c.b16 %v3566, %v3562
        %v4407 = vpack.c.b16 %v3571, %v3567
        %v4408 = vpack.c.b16 %v3572, %v3568
        %v4409 = vpack.c.b16 %v3573, %v3569
        %v4410 = vpack.c.b16 %v3574, %v3570
        %v4411 = vpack.c.b16 %v3579, %v3575
        %v4412 = vpack.c.b16 %v3580, %v3576
        %v4413 = vpack.c.b16 %v3581, %v3577
        %v4414 = vpack.c.b16 %v3582, %v3578
        %v4415 = vpack.c.b16 %v3587, %v3583
        %v4416 = vpack.c.b16 %v3588, %v3584
        %v4417 = vpack.c.b16 %v3589, %v3585
        %v4418 = vpack.c.b16 %v3590, %v3586
        %v4419 = vpack.c.b16 %v3595, %v3591
        %v4420 = vpack.c.b16 %v3596, %v3592
        %v4421 = vpack.c.b16 %v3597, %v3593
        %v4422 = vpack.c.b16 %v3598, %v3594
        %v4423 = vpack.c.b16 %v3603, %v3599
        %v4424 = vpack.c.b16 %v3604, %v3600
        %v4425 = vpack.c.b16 %v3605, %v3601
        %v4426 = vpack.c.b16 %v3606, %v3602
        %v4427 = vpack.c.b16 %v3611, %v3607
        %v4428 = vpack.c.b16 %v3612, %v3608
        %v4429 = vpack.c.b16 %v3613, %v3609
        %v4430 = vpack.c.b16 %v3614, %v3610
        %v4431 = vpack.c.b16 %v3619, %v3615
        %v4432 = vpack.c.b16 %v3620, %v3616
        %v4433 = vpack.c.b16 %v3621, %v3617
        %v4434 = vpack.c.b16 %v3622, %v3618
        %v4435 = vpack.c.b16 %v3627, %v3623
        %v4436 = vpack.c.b16 %v3628, %v3624
        %v4437 = vpack.c.b16 %v3629, %v3625
        %v4438 = vpack.c.b16 %v3630, %v3626
        %v4439 = vpack.c.b16 %v3635, %v3631
        %v4440 = vpack.c.b16 %v3636, %v3632
        %v4441 = vpack.c.b16 %v3637, %v3633
        %v4442 = vpack.c.b16 %v3638, %v3634
        %v4443 = vpack.c.b16 %v3643, %v3639
        %v4444 = vpack.c.b16 %v3644, %v3640
        %v4445 = vpack.c.b16 %v3645, %v3641
        %v4446 = vpack.c.b16 %v3646, %v3642
        %v4447 = vpack.c.b16 %v3651, %v3647
        %v4448 = vpack.c.b16 %v3652, %v3648
        %v4449 = vpack.c.b16 %v3653, %v3649
        %v4450 = vpack.c.b16 %v3654, %v3650
        %v4451 = vpack.c.b16 %v3659, %v3655
        %v4452 = vpack.c.b16 %v3660, %v3656
        %v4453 = vpack.c.b16 %v3661, %v3657
        %v4454 = vpack.c.b16 %v3662, %v3658
        %v4455 = vpack.c.b16 %v3667, %v3663
        %v4456 = vpack.c.b16 %v3668, %v3664
        %v4457 = vpack.c.b16 %v3669, %v3665
        %v4458 = vpack.c.b16 %v3670, %v3666
        %v4459 = vpack.c.b16 %v3675, %v3671
        %v4460 = vpack.c.b16 %v3676, %v3672
        %v4461 = vpack.c.b16 %v3677, %v3673
        %v4462 = vpack.c.b16 %v3678, %v3674
        %vm5247 = vcmask 523264
        %v5249 = vsel %vm5247, %v1302, 0
        %5251 = vmatprep.subr.bf16.mxu0 %v3708
        %5252 = vmatpush1.bf16.msra.mxu0 %v3707
        %5253 = vmatprep.subr.bf16.mxu0 %v3704
        %5254 = vmatpush1.bf16.msra.mxu0 %v3703
        %5255 = vmatprep.subr.bf16.mxu0 %v3700
        %5256 = vmatpush1.bf16.msra.mxu0 %v3699
        %5257 = vmatprep.subr.bf16.mxu0 %v3696
        %5258 = vmatpush1.bf16.msra.mxu0 %v3695
        %5259 = vmatprep.subr.bf16.mxu0 %v3692
        %5260 = vmatpush1.bf16.msra.mxu0 %v3691
        %5261 = vmatprep.subr.bf16.mxu0 %v3688
        %5262 = vmatpush1.bf16.msra.mxu0 %v3687
        %5263 = vmatprep.subr.bf16.mxu0 %v3684
        %5264 = vmatpush1.bf16.msra.mxu0 %v3683
        %5265 = vmatprep.subr.bf16.mxu0 %v3680
        %5266 = vmatpush1.bf16.msra.mxu0 %v3679
        %5267 = vmatprep.subr.bf16.mxu0 %v3740
        %5268 = vmatpush2.bf16.msra.mxu0 %v3739
        %5269 = vmatprep.subr.bf16.mxu0 %v3736
        %5270 = vmatpush2.bf16.msra.mxu0 %v3735
        %5271 = vmatprep.subr.bf16.mxu0 %v3732
        %5272 = vmatpush2.bf16.msra.mxu0 %v3731
        %5273 = vmatprep.subr.bf16.mxu0 %v3728
        %5274 = vmatpush2.bf16.msra.mxu0 %v3727
        %5275 = vmatprep.subr.bf16.mxu0 %v3724
        %5276 = vmatpush2.bf16.msra.mxu0 %v3723
        %5277 = vmatprep.subr.bf16.mxu0 %v3720
        %5278 = vmatpush2.bf16.msra.mxu0 %v3719
        %5279 = vmatprep.subr.bf16.mxu0 %v3716
        %5280 = vmatpush2.bf16.msra.mxu0 %v3715
        %5281 = vmatprep.subr.bf16.mxu0 %v3712
        %5282 = vmatpush2.bf16.msra.mxu0 %v3711
        %5283 = vmatprep.mubr.bf16.mxu0 %v1179
        %5284 = vmatmul.mubr.bf16.gmra.mxu0 %v1165
        %v5285 = vpop.f32.mrf.mxu0
        %v5286 = vadd.f32 %v1121, %v5285
        %v5287 = vpop.f32.mrf.mxu0
        %v5288 = vadd.f32 %v1125, %v5287
        %v5289 = vpop.f32.mrf.mxu0
        %v5290 = vpop.f32.mrf.mxu0
        %5291 = vdwg.mxu0
        %5292 = vmatprep.subr.bf16.mxu0 %v3772
        %5293 = vmatpush1.bf16.msra.mxu0 %v3771
        %5294 = vmatprep.subr.bf16.mxu0 %v3768
        %5295 = vmatpush1.bf16.msra.mxu0 %v3767
        %5296 = vmatprep.subr.bf16.mxu0 %v3764
        %5297 = vmatpush1.bf16.msra.mxu0 %v3763
        %5298 = vmatprep.subr.bf16.mxu0 %v3760
        %5299 = vmatpush1.bf16.msra.mxu0 %v3759
        %5300 = vmatprep.subr.bf16.mxu0 %v3756
        %5301 = vmatpush1.bf16.msra.mxu0 %v3755
        %5302 = vmatprep.subr.bf16.mxu0 %v3752
        %5303 = vmatpush1.bf16.msra.mxu0 %v3751
        %5304 = vmatprep.subr.bf16.mxu0 %v3748
        %5305 = vmatpush1.bf16.msra.mxu0 %v3747
        %5306 = vmatprep.subr.bf16.mxu0 %v3744
        %5307 = vmatpush1.bf16.msra.mxu0 %v3743
        %5308 = vmatprep.subr.bf16.mxu0 %v3804
        %5309 = vmatpush2.bf16.msra.mxu0 %v3803
        %5310 = vmatprep.subr.bf16.mxu0 %v3800
        %5311 = vmatpush2.bf16.msra.mxu0 %v3799
        %5312 = vmatprep.subr.bf16.mxu0 %v3796
        %5313 = vmatpush2.bf16.msra.mxu0 %v3795
        %5314 = vmatprep.subr.bf16.mxu0 %v3792
        %5315 = vmatpush2.bf16.msra.mxu0 %v3791
        %5316 = vmatprep.subr.bf16.mxu0 %v3788
        %5317 = vmatpush2.bf16.msra.mxu0 %v3787
        %5318 = vmatprep.subr.bf16.mxu0 %v3784
        %5319 = vmatpush2.bf16.msra.mxu0 %v3783
        %5320 = vmatprep.subr.bf16.mxu0 %v3780
        %5321 = vmatpush2.bf16.msra.mxu0 %v3779
        %5322 = vmatprep.subr.bf16.mxu0 %v3776
        %5323 = vmatpush2.bf16.msra.mxu0 %v3775
        %5324 = vmatprep.mubr.bf16.mxu0 %v1189
        %5325 = vmatmul.mubr.bf16.gmra.mxu0 %v1187
        %v5326 = vpop.f32.mrf.mxu0
        %v5327 = vadd.f32 %v5286, %v5326
        %v5328 = vpop.f32.mrf.mxu0
        %v5329 = vadd.f32 %v5288, %v5328
        %v5330 = vpop.f32.mrf.mxu0
        %v5331 = vpop.f32.mrf.mxu0
        %5332 = vdwg.mxu0
        %5333 = vmatprep.subr.bf16.mxu0 %v3836
        %5334 = vmatpush1.bf16.msra.mxu0 %v3835
        %5335 = vmatprep.subr.bf16.mxu0 %v3832
        %5336 = vmatpush1.bf16.msra.mxu0 %v3831
        %5337 = vmatprep.subr.bf16.mxu0 %v3828
        %5338 = vmatpush1.bf16.msra.mxu0 %v3827
        %5339 = vmatprep.subr.bf16.mxu0 %v3824
        %5340 = vmatpush1.bf16.msra.mxu0 %v3823
        %5341 = vmatprep.subr.bf16.mxu0 %v3820
        %5342 = vmatpush1.bf16.msra.mxu0 %v3819
        %5343 = vmatprep.subr.bf16.mxu0 %v3816
        %5344 = vmatpush1.bf16.msra.mxu0 %v3815
        %5345 = vmatprep.subr.bf16.mxu0 %v3812
        %5346 = vmatpush1.bf16.msra.mxu0 %v3811
        %5347 = vmatprep.subr.bf16.mxu0 %v3808
        %5348 = vmatpush1.bf16.msra.mxu0 %v3807
        %5349 = vmatprep.subr.bf16.mxu0 %v3868
        %5350 = vmatpush2.bf16.msra.mxu0 %v3867
        %5351 = vmatprep.subr.bf16.mxu0 %v3864
        %5352 = vmatpush2.bf16.msra.mxu0 %v3863
        %5353 = vmatprep.subr.bf16.mxu0 %v3860
        %5354 = vmatpush2.bf16.msra.mxu0 %v3859
        %5355 = vmatprep.subr.bf16.mxu0 %v3856
        %5356 = vmatpush2.bf16.msra.mxu0 %v3855
        %5357 = vmatprep.subr.bf16.mxu0 %v3852
        %5358 = vmatpush2.bf16.msra.mxu0 %v3851
        %5359 = vmatprep.subr.bf16.mxu0 %v3848
        %5360 = vmatpush2.bf16.msra.mxu0 %v3847
        %5361 = vmatprep.subr.bf16.mxu0 %v3844
        %5362 = vmatpush2.bf16.msra.mxu0 %v3843
        %5363 = vmatprep.subr.bf16.mxu0 %v3840
        %5364 = vmatpush2.bf16.msra.mxu0 %v3839
        %5365 = vmatprep.mubr.bf16.mxu0 %v1186
        %5366 = vmatmul.mubr.bf16.gmra.mxu0 %v1172
        %v5367 = vpop.f32.mrf.mxu0
        %v5368 = vadd.f32 %v5327, %v5367
        %v5369 = vpop.f32.mrf.mxu0
        %v5370 = vadd.f32 %v5329, %v5369
        %v5371 = vpop.f32.mrf.mxu0
        %v5372 = vpop.f32.mrf.mxu0
        %5373 = vdwg.mxu0
        %5374 = vmatprep.subr.bf16.mxu0 %v3900
        %5375 = vmatpush1.bf16.msra.mxu0 %v3899
        %5376 = vmatprep.subr.bf16.mxu0 %v3896
        %5377 = vmatpush1.bf16.msra.mxu0 %v3895
        %5378 = vmatprep.subr.bf16.mxu0 %v3892
        %5379 = vmatpush1.bf16.msra.mxu0 %v3891
        %5380 = vmatprep.subr.bf16.mxu0 %v3888
        %5381 = vmatpush1.bf16.msra.mxu0 %v3887
        %5382 = vmatprep.subr.bf16.mxu0 %v3884
        %5383 = vmatpush1.bf16.msra.mxu0 %v3883
        %5384 = vmatprep.subr.bf16.mxu0 %v3880
        %5385 = vmatpush1.bf16.msra.mxu0 %v3879
        %5386 = vmatprep.subr.bf16.mxu0 %v3876
        %5387 = vmatpush1.bf16.msra.mxu0 %v3875
        %5388 = vmatprep.subr.bf16.mxu0 %v3872
        %5389 = vmatpush1.bf16.msra.mxu0 %v3871
        %5390 = vmatprep.subr.bf16.mxu0 %v3932
        %5391 = vmatpush2.bf16.msra.mxu0 %v3931
        %5392 = vmatprep.subr.bf16.mxu0 %v3928
        %5393 = vmatpush2.bf16.msra.mxu0 %v3927
        %5394 = vmatprep.subr.bf16.mxu0 %v3924
        %5395 = vmatpush2.bf16.msra.mxu0 %v3923
        %5396 = vmatprep.subr.bf16.mxu0 %v3920
        %5397 = vmatpush2.bf16.msra.mxu0 %v3919
        %5398 = vmatprep.subr.bf16.mxu0 %v3916
        %5399 = vmatpush2.bf16.msra.mxu0 %v3915
        %5400 = vmatprep.subr.bf16.mxu0 %v3912
        %5401 = vmatpush2.bf16.msra.mxu0 %v3911
        %5402 = vmatprep.subr.bf16.mxu0 %v3908
        %5403 = vmatpush2.bf16.msra.mxu0 %v3907
        %5404 = vmatprep.subr.bf16.mxu0 %v3904
        %5405 = vmatpush2.bf16.msra.mxu0 %v3903
        %5406 = vmatprep.mubr.bf16.mxu0 %v1190
        %5407 = vmatmul.mubr.bf16.gmra.mxu0 %v1188
        %v5408 = vpop.f32.mrf.mxu0
        %v5409 = vadd.f32 %v5368, %v5408
        %v5410 = vpop.f32.mrf.mxu0
        %v5411 = vadd.f32 %v5370, %v5410
        %v5412 = vpop.f32.mrf.mxu0
        %v5413 = vpop.f32.mrf.mxu0
        %5414 = vdwg.mxu0
        %5415 = vmatprep.subr.bf16.mxu0 %v3964
        %5416 = vmatpush1.bf16.msra.mxu0 %v3963
        %5417 = vmatprep.subr.bf16.mxu0 %v3960
        %5418 = vmatpush1.bf16.msra.mxu0 %v3959
        %5419 = vmatprep.subr.bf16.mxu0 %v3956
        %5420 = vmatpush1.bf16.msra.mxu0 %v3955
        %5421 = vmatprep.subr.bf16.mxu0 %v3952
        %5422 = vmatpush1.bf16.msra.mxu0 %v3951
        %5423 = vmatprep.subr.bf16.mxu0 %v3948
        %5424 = vmatpush1.bf16.msra.mxu0 %v3947
        %5425 = vmatprep.subr.bf16.mxu0 %v3944
        %5426 = vmatpush1.bf16.msra.mxu0 %v3943
        %5427 = vmatprep.subr.bf16.mxu0 %v3940
        %5428 = vmatpush1.bf16.msra.mxu0 %v3939
        %5429 = vmatprep.subr.bf16.mxu0 %v3936
        %5430 = vmatpush1.bf16.msra.mxu0 %v3935
        %5431 = vmatprep.subr.bf16.mxu0 %v3996
        %5432 = vmatpush2.bf16.msra.mxu0 %v3995
        %5433 = vmatprep.subr.bf16.mxu0 %v3992
        %5434 = vmatpush2.bf16.msra.mxu0 %v3991
        %5435 = vmatprep.subr.bf16.mxu0 %v3988
        %5436 = vmatpush2.bf16.msra.mxu0 %v3987
        %5437 = vmatprep.subr.bf16.mxu0 %v3984
        %5438 = vmatpush2.bf16.msra.mxu0 %v3983
        %5439 = vmatprep.subr.bf16.mxu0 %v3980
        %5440 = vmatpush2.bf16.msra.mxu0 %v3979
        %5441 = vmatprep.subr.bf16.mxu0 %v3976
        %5442 = vmatpush2.bf16.msra.mxu0 %v3975
        %5443 = vmatprep.subr.bf16.mxu0 %v3972
        %5444 = vmatpush2.bf16.msra.mxu0 %v3971
        %5445 = vmatprep.subr.bf16.mxu0 %v3968
        %5446 = vmatpush2.bf16.msra.mxu0 %v3967
        %5447 = vmatprep.mubr.bf16.mxu0 %v1228
        %5448 = vmatmul.mubr.bf16.gmra.mxu0 %v1214
        %v5449 = vpop.f32.mrf.mxu0
        %v5450 = vadd.f32 %v5409, %v5449
        %v5451 = vpop.f32.mrf.mxu0
        %v5452 = vadd.f32 %v5411, %v5451
        %v5453 = vpop.f32.mrf.mxu0
        %v5454 = vpop.f32.mrf.mxu0
        %5455 = vdwg.mxu0
        %5456 = vmatprep.subr.bf16.mxu0 %v4028
        %5457 = vmatpush1.bf16.msra.mxu0 %v4027
        %5458 = vmatprep.subr.bf16.mxu0 %v4024
        %5459 = vmatpush1.bf16.msra.mxu0 %v4023
        %5460 = vmatprep.subr.bf16.mxu0 %v4020
        %5461 = vmatpush1.bf16.msra.mxu0 %v4019
        %5462 = vmatprep.subr.bf16.mxu0 %v4016
        %5463 = vmatpush1.bf16.msra.mxu0 %v4015
        %5464 = vmatprep.subr.bf16.mxu0 %v4012
        %5465 = vmatpush1.bf16.msra.mxu0 %v4011
        %5466 = vmatprep.subr.bf16.mxu0 %v4008
        %5467 = vmatpush1.bf16.msra.mxu0 %v4007
        %5468 = vmatprep.subr.bf16.mxu0 %v4004
        %5469 = vmatpush1.bf16.msra.mxu0 %v4003
        %5470 = vmatprep.subr.bf16.mxu0 %v4000
        %5471 = vmatpush1.bf16.msra.mxu0 %v3999
        %5472 = vmatprep.subr.bf16.mxu0 %v4060
        %5473 = vmatpush2.bf16.msra.mxu0 %v4059
        %5474 = vmatprep.subr.bf16.mxu0 %v4056
        %5475 = vmatpush2.bf16.msra.mxu0 %v4055
        %5476 = vmatprep.subr.bf16.mxu0 %v4052
        %5477 = vmatpush2.bf16.msra.mxu0 %v4051
        %5478 = vmatprep.subr.bf16.mxu0 %v4048
        %5479 = vmatpush2.bf16.msra.mxu0 %v4047
        %5480 = vmatprep.subr.bf16.mxu0 %v4044
        %5481 = vmatpush2.bf16.msra.mxu0 %v4043
        %5482 = vmatprep.subr.bf16.mxu0 %v4040
        %5483 = vmatpush2.bf16.msra.mxu0 %v4039
        %5484 = vmatprep.subr.bf16.mxu0 %v4036
        %5485 = vmatpush2.bf16.msra.mxu0 %v4035
        %5486 = vmatprep.subr.bf16.mxu0 %v4032
        %5487 = vmatpush2.bf16.msra.mxu0 %v4031
        %5488 = vmatprep.mubr.bf16.mxu0 %v1238
        %5489 = vmatmul.mubr.bf16.gmra.mxu0 %v1236
        %v5490 = vpop.f32.mrf.mxu0
        %v5491 = vadd.f32 %v5450, %v5490
        %v5492 = vpop.f32.mrf.mxu0
        %v5493 = vadd.f32 %v5452, %v5492
        %v5494 = vpop.f32.mrf.mxu0
        %v5495 = vpop.f32.mrf.mxu0
        %5496 = vdwg.mxu0
        %5497 = vmatprep.subr.bf16.mxu0 %v4092
        %5498 = vmatpush1.bf16.msra.mxu0 %v4091
        %5499 = vmatprep.subr.bf16.mxu0 %v4088
        %5500 = vmatpush1.bf16.msra.mxu0 %v4087
        %5501 = vmatprep.subr.bf16.mxu0 %v4084
        %5502 = vmatpush1.bf16.msra.mxu0 %v4083
        %5503 = vmatprep.subr.bf16.mxu0 %v4080
        %5504 = vmatpush1.bf16.msra.mxu0 %v4079
        %5505 = vmatprep.subr.bf16.mxu0 %v4076
        %5506 = vmatpush1.bf16.msra.mxu0 %v4075
        %5507 = vmatprep.subr.bf16.mxu0 %v4072
        %5508 = vmatpush1.bf16.msra.mxu0 %v4071
        %5509 = vmatprep.subr.bf16.mxu0 %v4068
        %5510 = vmatpush1.bf16.msra.mxu0 %v4067
        %5511 = vmatprep.subr.bf16.mxu0 %v4064
        %5512 = vmatpush1.bf16.msra.mxu0 %v4063
        %5513 = vmatprep.subr.bf16.mxu0 %v4124
        %5514 = vmatpush2.bf16.msra.mxu0 %v4123
        %5515 = vmatprep.subr.bf16.mxu0 %v4120
        %5516 = vmatpush2.bf16.msra.mxu0 %v4119
        %5517 = vmatprep.subr.bf16.mxu0 %v4116
        %5518 = vmatpush2.bf16.msra.mxu0 %v4115
        %5519 = vmatprep.subr.bf16.mxu0 %v4112
        %5520 = vmatpush2.bf16.msra.mxu0 %v4111
        %5521 = vmatprep.subr.bf16.mxu0 %v4108
        %5522 = vmatpush2.bf16.msra.mxu0 %v4107
        %5523 = vmatprep.subr.bf16.mxu0 %v4104
        %5524 = vmatpush2.bf16.msra.mxu0 %v4103
        %5525 = vmatprep.subr.bf16.mxu0 %v4100
        %5526 = vmatpush2.bf16.msra.mxu0 %v4099
        %5527 = vmatprep.subr.bf16.mxu0 %v4096
        %5528 = vmatpush2.bf16.msra.mxu0 %v4095
        %5529 = vmatprep.mubr.bf16.mxu0 %v1235
        %5530 = vmatmul.mubr.bf16.gmra.mxu0 %v1221
        %v5531 = vpop.f32.mrf.mxu0
        %v5532 = vadd.f32 %v5491, %v5531
        %v5533 = vpop.f32.mrf.mxu0
        %v5534 = vadd.f32 %v5493, %v5533
        %v5535 = vpop.f32.mrf.mxu0
        %v5536 = vpop.f32.mrf.mxu0
        %5537 = vdwg.mxu0
        %5538 = vmatprep.subr.bf16.mxu0 %v4156
        %5539 = vmatpush1.bf16.msra.mxu0 %v4155
        %5540 = vmatprep.subr.bf16.mxu0 %v4152
        %5541 = vmatpush1.bf16.msra.mxu0 %v4151
        %5542 = vmatprep.subr.bf16.mxu0 %v4148
        %5543 = vmatpush1.bf16.msra.mxu0 %v4147
        %5544 = vmatprep.subr.bf16.mxu0 %v4144
        %5545 = vmatpush1.bf16.msra.mxu0 %v4143
        %5546 = vmatprep.subr.bf16.mxu0 %v4140
        %5547 = vmatpush1.bf16.msra.mxu0 %v4139
        %5548 = vmatprep.subr.bf16.mxu0 %v4136
        %5549 = vmatpush1.bf16.msra.mxu0 %v4135
        %5550 = vmatprep.subr.bf16.mxu0 %v4132
        %5551 = vmatpush1.bf16.msra.mxu0 %v4131
        %5552 = vmatprep.subr.bf16.mxu0 %v4128
        %5553 = vmatpush1.bf16.msra.mxu0 %v4127
        %5554 = vmatprep.subr.bf16.mxu0 %v4188
        %5555 = vmatpush2.bf16.msra.mxu0 %v4187
        %5556 = vmatprep.subr.bf16.mxu0 %v4184
        %5557 = vmatpush2.bf16.msra.mxu0 %v4183
        %5558 = vmatprep.subr.bf16.mxu0 %v4180
        %5559 = vmatpush2.bf16.msra.mxu0 %v4179
        %5560 = vmatprep.subr.bf16.mxu0 %v4176
        %5561 = vmatpush2.bf16.msra.mxu0 %v4175
        %5562 = vmatprep.subr.bf16.mxu0 %v4172
        %5563 = vmatpush2.bf16.msra.mxu0 %v4171
        %5564 = vmatprep.subr.bf16.mxu0 %v4168
        %5565 = vmatpush2.bf16.msra.mxu0 %v4167
        %5566 = vmatprep.subr.bf16.mxu0 %v4164
        %5567 = vmatpush2.bf16.msra.mxu0 %v4163
        %5568 = vmatprep.subr.bf16.mxu0 %v4160
        %5569 = vmatpush2.bf16.msra.mxu0 %v4159
        %5570 = vmatprep.mubr.bf16.mxu0 %v1239
        %5571 = vmatmul.mubr.bf16.gmra.mxu0 %v1237
        %v5572 = vpop.f32.mrf.mxu0
        %v5573 = vadd.f32 %v5532, %v5572
        %v5574 = vpop.f32.mrf.mxu0
        %v5575 = vadd.f32 %v5534, %v5574
        %v5576 = vpop.f32.mrf.mxu0
        %v5577 = vpop.f32.mrf.mxu0
        %5578 = vdwg.mxu0
        %5579 = vmatprep.subr.bf16.mxu0 %v4220
        %5580 = vmatpush1.bf16.msra.mxu0 %v4219
        %5581 = vmatprep.subr.bf16.mxu0 %v4216
        %5582 = vmatpush1.bf16.msra.mxu0 %v4215
        %5583 = vmatprep.subr.bf16.mxu0 %v4212
        %5584 = vmatpush1.bf16.msra.mxu0 %v4211
        %5585 = vmatprep.subr.bf16.mxu0 %v4208
        %5586 = vmatpush1.bf16.msra.mxu0 %v4207
        %5587 = vmatprep.subr.bf16.mxu0 %v4204
        %5588 = vmatpush1.bf16.msra.mxu0 %v4203
        %5589 = vmatprep.subr.bf16.mxu0 %v4200
        %5590 = vmatpush1.bf16.msra.mxu0 %v4199
        %5591 = vmatprep.subr.bf16.mxu0 %v4196
        %5592 = vmatpush1.bf16.msra.mxu0 %v4195
        %5593 = vmatprep.subr.bf16.mxu0 %v4192
        %5594 = vmatpush1.bf16.msra.mxu0 %v4191
        %5595 = vmatprep.subr.bf16.mxu0 %v4252
        %5596 = vmatpush2.bf16.msra.mxu0 %v4251
        %5597 = vmatprep.subr.bf16.mxu0 %v4248
        %5598 = vmatpush2.bf16.msra.mxu0 %v4247
        %5599 = vmatprep.subr.bf16.mxu0 %v4244
        %5600 = vmatpush2.bf16.msra.mxu0 %v4243
        %5601 = vmatprep.subr.bf16.mxu0 %v4240
        %5602 = vmatpush2.bf16.msra.mxu0 %v4239
        %5603 = vmatprep.subr.bf16.mxu0 %v4236
        %5604 = vmatpush2.bf16.msra.mxu0 %v4235
        %5605 = vmatprep.subr.bf16.mxu0 %v4232
        %5606 = vmatpush2.bf16.msra.mxu0 %v4231
        %5607 = vmatprep.subr.bf16.mxu0 %v4228
        %5608 = vmatpush2.bf16.msra.mxu0 %v4227
        %5609 = vmatprep.subr.bf16.mxu0 %v4224
        %5610 = vmatpush2.bf16.msra.mxu0 %v4223
        %5611 = vmatprep.mubr.bf16.mxu0 %v1277
        %5612 = vmatmul.mubr.bf16.gmra.mxu0 %v1263
        %v5613 = vpop.f32.mrf.mxu0
        %v5614 = vadd.f32 %v5573, %v5613
        %v5615 = vpop.f32.mrf.mxu0
        %v5616 = vadd.f32 %v5575, %v5615
        %v5617 = vpop.f32.mrf.mxu0
        %v5618 = vpop.f32.mrf.mxu0
        %5619 = vdwg.mxu0
        %5620 = vmatprep.subr.bf16.mxu0 %v4284
        %5621 = vmatpush1.bf16.msra.mxu0 %v4283
        %5622 = vmatprep.subr.bf16.mxu0 %v4280
        %5623 = vmatpush1.bf16.msra.mxu0 %v4279
        %5624 = vmatprep.subr.bf16.mxu0 %v4276
        %5625 = vmatpush1.bf16.msra.mxu0 %v4275
        %5626 = vmatprep.subr.bf16.mxu0 %v4272
        %5627 = vmatpush1.bf16.msra.mxu0 %v4271
        %5628 = vmatprep.subr.bf16.mxu0 %v4268
        %5629 = vmatpush1.bf16.msra.mxu0 %v4267
        %5630 = vmatprep.subr.bf16.mxu0 %v4264
        %5631 = vmatpush1.bf16.msra.mxu0 %v4263
        %5632 = vmatprep.subr.bf16.mxu0 %v4260
        %5633 = vmatpush1.bf16.msra.mxu0 %v4259
        %5634 = vmatprep.subr.bf16.mxu0 %v4256
        %5635 = vmatpush1.bf16.msra.mxu0 %v4255
        %5636 = vmatprep.subr.bf16.mxu0 %v4316
        %5637 = vmatpush2.bf16.msra.mxu0 %v4315
        %5638 = vmatprep.subr.bf16.mxu0 %v4312
        %5639 = vmatpush2.bf16.msra.mxu0 %v4311
        %5640 = vmatprep.subr.bf16.mxu0 %v4308
        %5641 = vmatpush2.bf16.msra.mxu0 %v4307
        %5642 = vmatprep.subr.bf16.mxu0 %v4304
        %5643 = vmatpush2.bf16.msra.mxu0 %v4303
        %5644 = vmatprep.subr.bf16.mxu0 %v4300
        %5645 = vmatpush2.bf16.msra.mxu0 %v4299
        %5646 = vmatprep.subr.bf16.mxu0 %v4296
        %5647 = vmatpush2.bf16.msra.mxu0 %v4295
        %5648 = vmatprep.subr.bf16.mxu0 %v4292
        %5649 = vmatpush2.bf16.msra.mxu0 %v4291
        %5650 = vmatprep.subr.bf16.mxu0 %v4288
        %5651 = vmatpush2.bf16.msra.mxu0 %v4287
        %5652 = vmatprep.mubr.bf16.mxu0 %v1287
        %5653 = vmatmul.mubr.bf16.gmra.mxu0 %v1285
        %v5654 = vpop.f32.mrf.mxu0
        %v5655 = vadd.f32 %v5614, %v5654
        %v5656 = vpop.f32.mrf.mxu0
        %v5657 = vadd.f32 %v5616, %v5656
        %v5658 = vpop.f32.mrf.mxu0
        %v5659 = vpop.f32.mrf.mxu0
        %5660 = vdwg.mxu0
        %5661 = vmatprep.subr.bf16.mxu0 %v4348
        %5662 = vmatpush1.bf16.msra.mxu0 %v4347
        %5663 = vmatprep.subr.bf16.mxu0 %v4344
        %5664 = vmatpush1.bf16.msra.mxu0 %v4343
        %5665 = vmatprep.subr.bf16.mxu0 %v4340
        %5666 = vmatpush1.bf16.msra.mxu0 %v4339
        %5667 = vmatprep.subr.bf16.mxu0 %v4336
        %5668 = vmatpush1.bf16.msra.mxu0 %v4335
        %5669 = vmatprep.subr.bf16.mxu0 %v4332
        %5670 = vmatpush1.bf16.msra.mxu0 %v4331
        %5671 = vmatprep.subr.bf16.mxu0 %v4328
        %5672 = vmatpush1.bf16.msra.mxu0 %v4327
        %5673 = vmatprep.subr.bf16.mxu0 %v4324
        %5674 = vmatpush1.bf16.msra.mxu0 %v4323
        %5675 = vmatprep.subr.bf16.mxu0 %v4320
        %5676 = vmatpush1.bf16.msra.mxu0 %v4319
        %5677 = vmatprep.subr.bf16.mxu0 %v4380
        %5678 = vmatpush2.bf16.msra.mxu0 %v4379
        %5679 = vmatprep.subr.bf16.mxu0 %v4376
        %5680 = vmatpush2.bf16.msra.mxu0 %v4375
        %5681 = vmatprep.subr.bf16.mxu0 %v4372
        %5682 = vmatpush2.bf16.msra.mxu0 %v4371
        %5683 = vmatprep.subr.bf16.mxu0 %v4368
        %5684 = vmatpush2.bf16.msra.mxu0 %v4367
        %5685 = vmatprep.subr.bf16.mxu0 %v4364
        %5686 = vmatpush2.bf16.msra.mxu0 %v4363
        %5687 = vmatprep.subr.bf16.mxu0 %v4360
        %5688 = vmatpush2.bf16.msra.mxu0 %v4359
        %5689 = vmatprep.subr.bf16.mxu0 %v4356
        %5690 = vmatpush2.bf16.msra.mxu0 %v4355
        %5691 = vmatprep.subr.bf16.mxu0 %v4352
        %5692 = vmatpush2.bf16.msra.mxu0 %v4351
        %5693 = vmatprep.mubr.bf16.mxu0 %v1284
        %5694 = vmatmul.mubr.bf16.gmra.mxu0 %v1270
        %v5695 = vpop.f32.mrf.mxu0
        %v5696 = vadd.f32 %v5655, %v5695
        %v5697 = vpop.f32.mrf.mxu0
        %v5698 = vadd.f32 %v5657, %v5697
        %v5699 = vpop.f32.mrf.mxu0
        %v5700 = vpop.f32.mrf.mxu0
        %5701 = vdwg.mxu0
        %5702 = vmatprep.subr.bf16.mxu0 %v4412
        %5703 = vmatpush1.bf16.msra.mxu0 %v4411
        %5704 = vmatprep.subr.bf16.mxu0 %v4408
        %5705 = vmatpush1.bf16.msra.mxu0 %v4407
        %5706 = vmatprep.subr.bf16.mxu0 %v4404
        %5707 = vmatpush1.bf16.msra.mxu0 %v4403
        %5708 = vmatprep.subr.bf16.mxu0 %v4400
        %5709 = vmatpush1.bf16.msra.mxu0 %v4399
        %5710 = vmatprep.subr.bf16.mxu0 %v4396
        %5711 = vmatpush1.bf16.msra.mxu0 %v4395
        %5712 = vmatprep.subr.bf16.mxu0 %v4392
        %5713 = vmatpush1.bf16.msra.mxu0 %v4391
        %5714 = vmatprep.subr.bf16.mxu0 %v4388
        %5715 = vmatpush1.bf16.msra.mxu0 %v4387
        %5716 = vmatprep.subr.bf16.mxu0 %v4384
        %5717 = vmatpush1.bf16.msra.mxu0 %v4383
        %5718 = vmatprep.subr.bf16.mxu0 %v4444
        %5719 = vmatpush2.bf16.msra.mxu0 %v4443
        %5720 = vmatprep.subr.bf16.mxu0 %v4440
        %5721 = vmatpush2.bf16.msra.mxu0 %v4439
        %5722 = vmatprep.subr.bf16.mxu0 %v4436
        %5723 = vmatpush2.bf16.msra.mxu0 %v4435
        %5724 = vmatprep.subr.bf16.mxu0 %v4432
        %5725 = vmatpush2.bf16.msra.mxu0 %v4431
        %5726 = vmatprep.subr.bf16.mxu0 %v4428
        %5727 = vmatpush2.bf16.msra.mxu0 %v4427
        %5728 = vmatprep.subr.bf16.mxu0 %v4424
        %5729 = vmatpush2.bf16.msra.mxu0 %v4423
        %5730 = vmatprep.subr.bf16.mxu0 %v4420
        %5731 = vmatpush2.bf16.msra.mxu0 %v4419
        %5732 = vmatprep.subr.bf16.mxu0 %v4416
        %5733 = vmatpush2.bf16.msra.mxu0 %v4415
        %5734 = vmatprep.mubr.bf16.mxu0 %v1288
        %5735 = vmatmul.mubr.bf16.gmra.mxu0 %v1286
        %v5736 = vpop.f32.mrf.mxu0
        %v5737 = vadd.f32 %v5696, %v5736
        %v5738 = vpop.f32.mrf.mxu0
        %v5739 = vadd.f32 %v5698, %v5738
        %v5740 = vpop.f32.mrf.mxu0
        %v5741 = vpop.f32.mrf.mxu0
        %5742 = vdwg.mxu0
        %5743 = vmatprep.subr.bf16.mxu0 0
        %5744 = vmatpush1.bf16.msra.mxu0 0
        %5745 = vmatprep.subr.bf16.mxu0 0
        %5746 = vmatpush1.bf16.msra.mxu0 0
        %5747 = vmatprep.subr.bf16.mxu0 0
        %5748 = vmatpush1.bf16.msra.mxu0 0
        %5749 = vmatprep.subr.bf16.mxu0 0
        %5750 = vmatpush1.bf16.msra.mxu0 0
        %5751 = vmatprep.subr.bf16.mxu0 %v4460
        %5752 = vmatpush1.bf16.msra.mxu0 %v4459
        %5753 = vmatprep.subr.bf16.mxu0 %v4456
        %5754 = vmatpush1.bf16.msra.mxu0 %v4455
        %5755 = vmatprep.subr.bf16.mxu0 %v4452
        %5756 = vmatpush1.bf16.msra.mxu0 %v4451
        %5757 = vmatprep.subr.bf16.mxu0 %v4448
        %5758 = vmatpush1.bf16.msra.mxu0 %v4447
        %5759 = vmatprep.subr.bf16.mxu0 0
        %5760 = vmatpush2.bf16.msra.mxu0 0
        %5761 = vmatprep.subr.bf16.mxu0 0
        %5762 = vmatpush2.bf16.msra.mxu0 0
        %5763 = vmatprep.subr.bf16.mxu0 0
        %5764 = vmatpush2.bf16.msra.mxu0 0
        %5765 = vmatprep.subr.bf16.mxu0 0
        %5766 = vmatpush2.bf16.msra.mxu0 0
        %5767 = vmatprep.subr.bf16.mxu0 0
        %5768 = vmatpush2.bf16.msra.mxu0 0
        %5769 = vmatprep.subr.bf16.mxu0 0
        %5770 = vmatpush2.bf16.msra.mxu0 0
        %5771 = vmatprep.subr.bf16.mxu0 0
        %5772 = vmatpush2.bf16.msra.mxu0 0
        %5773 = vmatprep.subr.bf16.mxu0 0
        %5774 = vmatpush2.bf16.msra.mxu0 0
        %5775 = vmatprep.mubr.bf16.mxu0 0
        %5776 = vmatmul.mubr.bf16.gmra.mxu0 %v5249
        %v5777 = vpop.f32.mrf.mxu0
        %v5778 = vadd.f32 %v5737, %v5777
        %v5779 = vpop.f32.mrf.mxu0
        %v5780 = vadd.f32 %v5739, %v5779
        %v5781 = vpop.f32.mrf.mxu0
        %v5782 = vpop.f32.mrf.mxu0
        %5783 = vdwg.mxu0
        %5784 = vmatprep.subr.bf16.mxu0 %v3710
        %5785 = vmatpush1.bf16.msra.mxu0 %v3709
        %5786 = vmatprep.subr.bf16.mxu0 %v3706
        %5787 = vmatpush1.bf16.msra.mxu0 %v3705
        %5788 = vmatprep.subr.bf16.mxu0 %v3702
        %5789 = vmatpush1.bf16.msra.mxu0 %v3701
        %5790 = vmatprep.subr.bf16.mxu0 %v3698
        %5791 = vmatpush1.bf16.msra.mxu0 %v3697
        %5792 = vmatprep.subr.bf16.mxu0 %v3694
        %5793 = vmatpush1.bf16.msra.mxu0 %v3693
        %5794 = vmatprep.subr.bf16.mxu0 %v3690
        %5795 = vmatpush1.bf16.msra.mxu0 %v3689
        %5796 = vmatprep.subr.bf16.mxu0 %v3686
        %5797 = vmatpush1.bf16.msra.mxu0 %v3685
        %5798 = vmatprep.subr.bf16.mxu0 %v3682
        %5799 = vmatpush1.bf16.msra.mxu0 %v3681
        %5800 = vmatprep.subr.bf16.mxu0 %v3742
        %5801 = vmatpush2.bf16.msra.mxu0 %v3741
        %5802 = vmatprep.subr.bf16.mxu0 %v3738
        %5803 = vmatpush2.bf16.msra.mxu0 %v3737
        %5804 = vmatprep.subr.bf16.mxu0 %v3734
        %5805 = vmatpush2.bf16.msra.mxu0 %v3733
        %5806 = vmatprep.subr.bf16.mxu0 %v3730
        %5807 = vmatpush2.bf16.msra.mxu0 %v3729
        %5808 = vmatprep.subr.bf16.mxu0 %v3726
        %5809 = vmatpush2.bf16.msra.mxu0 %v3725
        %5810 = vmatprep.subr.bf16.mxu0 %v3722
        %5811 = vmatpush2.bf16.msra.mxu0 %v3721
        %5812 = vmatprep.subr.bf16.mxu0 %v3718
        %5813 = vmatpush2.bf16.msra.mxu0 %v3717
        %5814 = vmatprep.subr.bf16.mxu0 %v3714
        %5815 = vmatpush2.bf16.msra.mxu0 %v3713
        %5816 = vmatprep.mubr.bf16.mxu0 %v1179
        %5817 = vmatmul.mubr.bf16.gmra.mxu0 %v1165
        %v5818 = vpop.f32.mrf.mxu0
        %v5819 = vadd.f32 %v1129, %v5818
        %v5820 = vpop.f32.mrf.mxu0
        %v5821 = vadd.f32 %v1133, %v5820
        %v5822 = vpop.f32.mrf.mxu0
        %v5823 = vpop.f32.mrf.mxu0
        %5824 = vdwg.mxu0
        %5825 = vmatprep.subr.bf16.mxu0 %v3774
        %5826 = vmatpush1.bf16.msra.mxu0 %v3773
        %5827 = vmatprep.subr.bf16.mxu0 %v3770
        %5828 = vmatpush1.bf16.msra.mxu0 %v3769
        %5829 = vmatprep.subr.bf16.mxu0 %v3766
        %5830 = vmatpush1.bf16.msra.mxu0 %v3765
        %5831 = vmatprep.subr.bf16.mxu0 %v3762
        %5832 = vmatpush1.bf16.msra.mxu0 %v3761
        %5833 = vmatprep.subr.bf16.mxu0 %v3758
        %5834 = vmatpush1.bf16.msra.mxu0 %v3757
        %5835 = vmatprep.subr.bf16.mxu0 %v3754
        %5836 = vmatpush1.bf16.msra.mxu0 %v3753
        %5837 = vmatprep.subr.bf16.mxu0 %v3750
        %5838 = vmatpush1.bf16.msra.mxu0 %v3749
        %5839 = vmatprep.subr.bf16.mxu0 %v3746
        %5840 = vmatpush1.bf16.msra.mxu0 %v3745
        %5841 = vmatprep.subr.bf16.mxu0 %v3806
        %5842 = vmatpush2.bf16.msra.mxu0 %v3805
        %5843 = vmatprep.subr.bf16.mxu0 %v3802
        %5844 = vmatpush2.bf16.msra.mxu0 %v3801
        %5845 = vmatprep.subr.bf16.mxu0 %v3798
        %5846 = vmatpush2.bf16.msra.mxu0 %v3797
        %5847 = vmatprep.subr.bf16.mxu0 %v3794
        %5848 = vmatpush2.bf16.msra.mxu0 %v3793
        %5849 = vmatprep.subr.bf16.mxu0 %v3790
        %5850 = vmatpush2.bf16.msra.mxu0 %v3789
        %5851 = vmatprep.subr.bf16.mxu0 %v3786
        %5852 = vmatpush2.bf16.msra.mxu0 %v3785
        %5853 = vmatprep.subr.bf16.mxu0 %v3782
        %5854 = vmatpush2.bf16.msra.mxu0 %v3781
        %5855 = vmatprep.subr.bf16.mxu0 %v3778
        %5856 = vmatpush2.bf16.msra.mxu0 %v3777
        %5857 = vmatprep.mubr.bf16.mxu0 %v1189
        %5858 = vmatmul.mubr.bf16.gmra.mxu0 %v1187
        %v5859 = vpop.f32.mrf.mxu0
        %v5860 = vadd.f32 %v5819, %v5859
        %v5861 = vpop.f32.mrf.mxu0
        %v5862 = vadd.f32 %v5821, %v5861
        %v5863 = vpop.f32.mrf.mxu0
        %v5864 = vpop.f32.mrf.mxu0
        %5865 = vdwg.mxu0
        %5866 = vmatprep.subr.bf16.mxu0 %v3838
        %5867 = vmatpush1.bf16.msra.mxu0 %v3837
        %5868 = vmatprep.subr.bf16.mxu0 %v3834
        %5869 = vmatpush1.bf16.msra.mxu0 %v3833
        %5870 = vmatprep.subr.bf16.mxu0 %v3830
        %5871 = vmatpush1.bf16.msra.mxu0 %v3829
        %5872 = vmatprep.subr.bf16.mxu0 %v3826
        %5873 = vmatpush1.bf16.msra.mxu0 %v3825
        %5874 = vmatprep.subr.bf16.mxu0 %v3822
        %5875 = vmatpush1.bf16.msra.mxu0 %v3821
        %5876 = vmatprep.subr.bf16.mxu0 %v3818
        %5877 = vmatpush1.bf16.msra.mxu0 %v3817
        %5878 = vmatprep.subr.bf16.mxu0 %v3814
        %5879 = vmatpush1.bf16.msra.mxu0 %v3813
        %5880 = vmatprep.subr.bf16.mxu0 %v3810
        %5881 = vmatpush1.bf16.msra.mxu0 %v3809
        %5882 = vmatprep.subr.bf16.mxu0 %v3870
        %5883 = vmatpush2.bf16.msra.mxu0 %v3869
        %5884 = vmatprep.subr.bf16.mxu0 %v3866
        %5885 = vmatpush2.bf16.msra.mxu0 %v3865
        %5886 = vmatprep.subr.bf16.mxu0 %v3862
        %5887 = vmatpush2.bf16.msra.mxu0 %v3861
        %5888 = vmatprep.subr.bf16.mxu0 %v3858
        %5889 = vmatpush2.bf16.msra.mxu0 %v3857
        %5890 = vmatprep.subr.bf16.mxu0 %v3854
        %5891 = vmatpush2.bf16.msra.mxu0 %v3853
        %5892 = vmatprep.subr.bf16.mxu0 %v3850
        %5893 = vmatpush2.bf16.msra.mxu0 %v3849
        %5894 = vmatprep.subr.bf16.mxu0 %v3846
        %5895 = vmatpush2.bf16.msra.mxu0 %v3845
        %5896 = vmatprep.subr.bf16.mxu0 %v3842
        %5897 = vmatpush2.bf16.msra.mxu0 %v3841
        %5898 = vmatprep.mubr.bf16.mxu0 %v1186
        %5899 = vmatmul.mubr.bf16.gmra.mxu0 %v1172
        %v5900 = vpop.f32.mrf.mxu0
        %v5901 = vadd.f32 %v5860, %v5900
        %v5902 = vpop.f32.mrf.mxu0
        %v5903 = vadd.f32 %v5862, %v5902
        %v5904 = vpop.f32.mrf.mxu0
        %v5905 = vpop.f32.mrf.mxu0
        %5906 = vdwg.mxu0
        %5907 = vmatprep.subr.bf16.mxu0 %v3902
        %5908 = vmatpush1.bf16.msra.mxu0 %v3901
        %5909 = vmatprep.subr.bf16.mxu0 %v3898
        %5910 = vmatpush1.bf16.msra.mxu0 %v3897
        %5911 = vmatprep.subr.bf16.mxu0 %v3894
        %5912 = vmatpush1.bf16.msra.mxu0 %v3893
        %5913 = vmatprep.subr.bf16.mxu0 %v3890
        %5914 = vmatpush1.bf16.msra.mxu0 %v3889
        %5915 = vmatprep.subr.bf16.mxu0 %v3886
        %5916 = vmatpush1.bf16.msra.mxu0 %v3885
        %5917 = vmatprep.subr.bf16.mxu0 %v3882
        %5918 = vmatpush1.bf16.msra.mxu0 %v3881
        %5919 = vmatprep.subr.bf16.mxu0 %v3878
        %5920 = vmatpush1.bf16.msra.mxu0 %v3877
        %5921 = vmatprep.subr.bf16.mxu0 %v3874
        %5922 = vmatpush1.bf16.msra.mxu0 %v3873
        %5923 = vmatprep.subr.bf16.mxu0 %v3934
        %5924 = vmatpush2.bf16.msra.mxu0 %v3933
        %5925 = vmatprep.subr.bf16.mxu0 %v3930
        %5926 = vmatpush2.bf16.msra.mxu0 %v3929
        %5927 = vmatprep.subr.bf16.mxu0 %v3926
        %5928 = vmatpush2.bf16.msra.mxu0 %v3925
        %5929 = vmatprep.subr.bf16.mxu0 %v3922
        %5930 = vmatpush2.bf16.msra.mxu0 %v3921
        %5931 = vmatprep.subr.bf16.mxu0 %v3918
        %5932 = vmatpush2.bf16.msra.mxu0 %v3917
        %5933 = vmatprep.subr.bf16.mxu0 %v3914
        %5934 = vmatpush2.bf16.msra.mxu0 %v3913
        %5935 = vmatprep.subr.bf16.mxu0 %v3910
        %5936 = vmatpush2.bf16.msra.mxu0 %v3909
        %5937 = vmatprep.subr.bf16.mxu0 %v3906
        %5938 = vmatpush2.bf16.msra.mxu0 %v3905
        %5939 = vmatprep.mubr.bf16.mxu0 %v1190
        %5940 = vmatmul.mubr.bf16.gmra.mxu0 %v1188
        %v5941 = vpop.f32.mrf.mxu0
        %v5942 = vadd.f32 %v5901, %v5941
        %v5943 = vpop.f32.mrf.mxu0
        %v5944 = vadd.f32 %v5903, %v5943
        %v5945 = vpop.f32.mrf.mxu0
        %v5946 = vpop.f32.mrf.mxu0
        %5947 = vdwg.mxu0
        %5948 = vmatprep.subr.bf16.mxu0 %v3966
        %5949 = vmatpush1.bf16.msra.mxu0 %v3965
        %5950 = vmatprep.subr.bf16.mxu0 %v3962
        %5951 = vmatpush1.bf16.msra.mxu0 %v3961
        %5952 = vmatprep.subr.bf16.mxu0 %v3958
        %5953 = vmatpush1.bf16.msra.mxu0 %v3957
        %5954 = vmatprep.subr.bf16.mxu0 %v3954
        %5955 = vmatpush1.bf16.msra.mxu0 %v3953
        %5956 = vmatprep.subr.bf16.mxu0 %v3950
        %5957 = vmatpush1.bf16.msra.mxu0 %v3949
        %5958 = vmatprep.subr.bf16.mxu0 %v3946
        %5959 = vmatpush1.bf16.msra.mxu0 %v3945
        %5960 = vmatprep.subr.bf16.mxu0 %v3942
        %5961 = vmatpush1.bf16.msra.mxu0 %v3941
        %5962 = vmatprep.subr.bf16.mxu0 %v3938
        %5963 = vmatpush1.bf16.msra.mxu0 %v3937
        %5964 = vmatprep.subr.bf16.mxu0 %v3998
        %5965 = vmatpush2.bf16.msra.mxu0 %v3997
        %5966 = vmatprep.subr.bf16.mxu0 %v3994
        %5967 = vmatpush2.bf16.msra.mxu0 %v3993
        %5968 = vmatprep.subr.bf16.mxu0 %v3990
        %5969 = vmatpush2.bf16.msra.mxu0 %v3989
        %5970 = vmatprep.subr.bf16.mxu0 %v3986
        %5971 = vmatpush2.bf16.msra.mxu0 %v3985
        %5972 = vmatprep.subr.bf16.mxu0 %v3982
        %5973 = vmatpush2.bf16.msra.mxu0 %v3981
        %5974 = vmatprep.subr.bf16.mxu0 %v3978
        %5975 = vmatpush2.bf16.msra.mxu0 %v3977
        %5976 = vmatprep.subr.bf16.mxu0 %v3974
        %5977 = vmatpush2.bf16.msra.mxu0 %v3973
        %5978 = vmatprep.subr.bf16.mxu0 %v3970
        %5979 = vmatpush2.bf16.msra.mxu0 %v3969
        %5980 = vmatprep.mubr.bf16.mxu0 %v1228
        %5981 = vmatmul.mubr.bf16.gmra.mxu0 %v1214
        %v5982 = vpop.f32.mrf.mxu0
        %v5983 = vadd.f32 %v5942, %v5982
        %v5984 = vpop.f32.mrf.mxu0
        %v5985 = vadd.f32 %v5944, %v5984
        %v5986 = vpop.f32.mrf.mxu0
        %v5987 = vpop.f32.mrf.mxu0
        %5988 = vdwg.mxu0
        %5989 = vmatprep.subr.bf16.mxu0 %v4030
        %5990 = vmatpush1.bf16.msra.mxu0 %v4029
        %5991 = vmatprep.subr.bf16.mxu0 %v4026
        %5992 = vmatpush1.bf16.msra.mxu0 %v4025
        %5993 = vmatprep.subr.bf16.mxu0 %v4022
        %5994 = vmatpush1.bf16.msra.mxu0 %v4021
        %5995 = vmatprep.subr.bf16.mxu0 %v4018
        %5996 = vmatpush1.bf16.msra.mxu0 %v4017
        %5997 = vmatprep.subr.bf16.mxu0 %v4014
        %5998 = vmatpush1.bf16.msra.mxu0 %v4013
        %5999 = vmatprep.subr.bf16.mxu0 %v4010
        %6000 = vmatpush1.bf16.msra.mxu0 %v4009
        %6001 = vmatprep.subr.bf16.mxu0 %v4006
        %6002 = vmatpush1.bf16.msra.mxu0 %v4005
        %6003 = vmatprep.subr.bf16.mxu0 %v4002
        %6004 = vmatpush1.bf16.msra.mxu0 %v4001
        %6005 = vmatprep.subr.bf16.mxu0 %v4062
        %6006 = vmatpush2.bf16.msra.mxu0 %v4061
        %6007 = vmatprep.subr.bf16.mxu0 %v4058
        %6008 = vmatpush2.bf16.msra.mxu0 %v4057
        %6009 = vmatprep.subr.bf16.mxu0 %v4054
        %6010 = vmatpush2.bf16.msra.mxu0 %v4053
        %6011 = vmatprep.subr.bf16.mxu0 %v4050
        %6012 = vmatpush2.bf16.msra.mxu0 %v4049
        %6013 = vmatprep.subr.bf16.mxu0 %v4046
        %6014 = vmatpush2.bf16.msra.mxu0 %v4045
        %6015 = vmatprep.subr.bf16.mxu0 %v4042
        %6016 = vmatpush2.bf16.msra.mxu0 %v4041
        %6017 = vmatprep.subr.bf16.mxu0 %v4038
        %6018 = vmatpush2.bf16.msra.mxu0 %v4037
        %6019 = vmatprep.subr.bf16.mxu0 %v4034
        %6020 = vmatpush2.bf16.msra.mxu0 %v4033
        %6021 = vmatprep.mubr.bf16.mxu0 %v1238
        %6022 = vmatmul.mubr.bf16.gmra.mxu0 %v1236
        %v6023 = vpop.f32.mrf.mxu0
        %v6024 = vadd.f32 %v5983, %v6023
        %v6025 = vpop.f32.mrf.mxu0
        %v6026 = vadd.f32 %v5985, %v6025
        %v6027 = vpop.f32.mrf.mxu0
        %v6028 = vpop.f32.mrf.mxu0
        %6029 = vdwg.mxu0
        %6030 = vmatprep.subr.bf16.mxu0 %v4094
        %6031 = vmatpush1.bf16.msra.mxu0 %v4093
        %6032 = vmatprep.subr.bf16.mxu0 %v4090
        %6033 = vmatpush1.bf16.msra.mxu0 %v4089
        %6034 = vmatprep.subr.bf16.mxu0 %v4086
        %6035 = vmatpush1.bf16.msra.mxu0 %v4085
        %6036 = vmatprep.subr.bf16.mxu0 %v4082
        %6037 = vmatpush1.bf16.msra.mxu0 %v4081
        %6038 = vmatprep.subr.bf16.mxu0 %v4078
        %6039 = vmatpush1.bf16.msra.mxu0 %v4077
        %6040 = vmatprep.subr.bf16.mxu0 %v4074
        %6041 = vmatpush1.bf16.msra.mxu0 %v4073
        %6042 = vmatprep.subr.bf16.mxu0 %v4070
        %6043 = vmatpush1.bf16.msra.mxu0 %v4069
        %6044 = vmatprep.subr.bf16.mxu0 %v4066
        %6045 = vmatpush1.bf16.msra.mxu0 %v4065
        %6046 = vmatprep.subr.bf16.mxu0 %v4126
        %6047 = vmatpush2.bf16.msra.mxu0 %v4125
        %6048 = vmatprep.subr.bf16.mxu0 %v4122
        %6049 = vmatpush2.bf16.msra.mxu0 %v4121
        %6050 = vmatprep.subr.bf16.mxu0 %v4118
        %6051 = vmatpush2.bf16.msra.mxu0 %v4117
        %6052 = vmatprep.subr.bf16.mxu0 %v4114
        %6053 = vmatpush2.bf16.msra.mxu0 %v4113
        %6054 = vmatprep.subr.bf16.mxu0 %v4110
        %6055 = vmatpush2.bf16.msra.mxu0 %v4109
        %6056 = vmatprep.subr.bf16.mxu0 %v4106
        %6057 = vmatpush2.bf16.msra.mxu0 %v4105
        %6058 = vmatprep.subr.bf16.mxu0 %v4102
        %6059 = vmatpush2.bf16.msra.mxu0 %v4101
        %6060 = vmatprep.subr.bf16.mxu0 %v4098
        %6061 = vmatpush2.bf16.msra.mxu0 %v4097
        %6062 = vmatprep.mubr.bf16.mxu0 %v1235
        %6063 = vmatmul.mubr.bf16.gmra.mxu0 %v1221
        %v6064 = vpop.f32.mrf.mxu0
        %v6065 = vadd.f32 %v6024, %v6064
        %v6066 = vpop.f32.mrf.mxu0
        %v6067 = vadd.f32 %v6026, %v6066
        %v6068 = vpop.f32.mrf.mxu0
        %v6069 = vpop.f32.mrf.mxu0
        %6070 = vdwg.mxu0
        %6071 = vmatprep.subr.bf16.mxu0 %v4158
        %6072 = vmatpush1.bf16.msra.mxu0 %v4157
        %6073 = vmatprep.subr.bf16.mxu0 %v4154
        %6074 = vmatpush1.bf16.msra.mxu0 %v4153
        %6075 = vmatprep.subr.bf16.mxu0 %v4150
        %6076 = vmatpush1.bf16.msra.mxu0 %v4149
        %6077 = vmatprep.subr.bf16.mxu0 %v4146
        %6078 = vmatpush1.bf16.msra.mxu0 %v4145
        %6079 = vmatprep.subr.bf16.mxu0 %v4142
        %6080 = vmatpush1.bf16.msra.mxu0 %v4141
        %6081 = vmatprep.subr.bf16.mxu0 %v4138
        %6082 = vmatpush1.bf16.msra.mxu0 %v4137
        %6083 = vmatprep.subr.bf16.mxu0 %v4134
        %6084 = vmatpush1.bf16.msra.mxu0 %v4133
        %6085 = vmatprep.subr.bf16.mxu0 %v4130
        %6086 = vmatpush1.bf16.msra.mxu0 %v4129
        %6087 = vmatprep.subr.bf16.mxu0 %v4190
        %6088 = vmatpush2.bf16.msra.mxu0 %v4189
        %6089 = vmatprep.subr.bf16.mxu0 %v4186
        %6090 = vmatpush2.bf16.msra.mxu0 %v4185
        %6091 = vmatprep.subr.bf16.mxu0 %v4182
        %6092 = vmatpush2.bf16.msra.mxu0 %v4181
        %6093 = vmatprep.subr.bf16.mxu0 %v4178
        %6094 = vmatpush2.bf16.msra.mxu0 %v4177
        %6095 = vmatprep.subr.bf16.mxu0 %v4174
        %6096 = vmatpush2.bf16.msra.mxu0 %v4173
        %6097 = vmatprep.subr.bf16.mxu0 %v4170
        %6098 = vmatpush2.bf16.msra.mxu0 %v4169
        %6099 = vmatprep.subr.bf16.mxu0 %v4166
        %6100 = vmatpush2.bf16.msra.mxu0 %v4165
        %6101 = vmatprep.subr.bf16.mxu0 %v4162
        %6102 = vmatpush2.bf16.msra.mxu0 %v4161
        %6103 = vmatprep.mubr.bf16.mxu0 %v1239
        %6104 = vmatmul.mubr.bf16.gmra.mxu0 %v1237
        %v6105 = vpop.f32.mrf.mxu0
        %v6106 = vadd.f32 %v6065, %v6105
        %v6107 = vpop.f32.mrf.mxu0
        %v6108 = vadd.f32 %v6067, %v6107
        %v6109 = vpop.f32.mrf.mxu0
        %v6110 = vpop.f32.mrf.mxu0
        %6111 = vdwg.mxu0
        %6112 = vmatprep.subr.bf16.mxu0 %v4222
        %6113 = vmatpush1.bf16.msra.mxu0 %v4221
        %6114 = vmatprep.subr.bf16.mxu0 %v4218
        %6115 = vmatpush1.bf16.msra.mxu0 %v4217
        %6116 = vmatprep.subr.bf16.mxu0 %v4214
        %6117 = vmatpush1.bf16.msra.mxu0 %v4213
        %6118 = vmatprep.subr.bf16.mxu0 %v4210
        %6119 = vmatpush1.bf16.msra.mxu0 %v4209
        %6120 = vmatprep.subr.bf16.mxu0 %v4206
        %6121 = vmatpush1.bf16.msra.mxu0 %v4205
        %6122 = vmatprep.subr.bf16.mxu0 %v4202
        %6123 = vmatpush1.bf16.msra.mxu0 %v4201
        %6124 = vmatprep.subr.bf16.mxu0 %v4198
        %6125 = vmatpush1.bf16.msra.mxu0 %v4197
        %6126 = vmatprep.subr.bf16.mxu0 %v4194
        %6127 = vmatpush1.bf16.msra.mxu0 %v4193
        %6128 = vmatprep.subr.bf16.mxu0 %v4254
        %6129 = vmatpush2.bf16.msra.mxu0 %v4253
        %6130 = vmatprep.subr.bf16.mxu0 %v4250
        %6131 = vmatpush2.bf16.msra.mxu0 %v4249
        %6132 = vmatprep.subr.bf16.mxu0 %v4246
        %6133 = vmatpush2.bf16.msra.mxu0 %v4245
        %6134 = vmatprep.subr.bf16.mxu0 %v4242
        %6135 = vmatpush2.bf16.msra.mxu0 %v4241
        %6136 = vmatprep.subr.bf16.mxu0 %v4238
        %6137 = vmatpush2.bf16.msra.mxu0 %v4237
        %6138 = vmatprep.subr.bf16.mxu0 %v4234
        %6139 = vmatpush2.bf16.msra.mxu0 %v4233
        %6140 = vmatprep.subr.bf16.mxu0 %v4230
        %6141 = vmatpush2.bf16.msra.mxu0 %v4229
        %6142 = vmatprep.subr.bf16.mxu0 %v4226
        %6143 = vmatpush2.bf16.msra.mxu0 %v4225
        %6144 = vmatprep.mubr.bf16.mxu0 %v1277
        %6145 = vmatmul.mubr.bf16.gmra.mxu0 %v1263
        %v6146 = vpop.f32.mrf.mxu0
        %v6147 = vadd.f32 %v6106, %v6146
        %v6148 = vpop.f32.mrf.mxu0
        %v6149 = vadd.f32 %v6108, %v6148
        %v6150 = vpop.f32.mrf.mxu0
        %v6151 = vpop.f32.mrf.mxu0
        %6152 = vdwg.mxu0
        %6153 = vmatprep.subr.bf16.mxu0 %v4286
        %6154 = vmatpush1.bf16.msra.mxu0 %v4285
        %6155 = vmatprep.subr.bf16.mxu0 %v4282
        %6156 = vmatpush1.bf16.msra.mxu0 %v4281
        %6157 = vmatprep.subr.bf16.mxu0 %v4278
        %6158 = vmatpush1.bf16.msra.mxu0 %v4277
        %6159 = vmatprep.subr.bf16.mxu0 %v4274
        %6160 = vmatpush1.bf16.msra.mxu0 %v4273
        %6161 = vmatprep.subr.bf16.mxu0 %v4270
        %6162 = vmatpush1.bf16.msra.mxu0 %v4269
        %6163 = vmatprep.subr.bf16.mxu0 %v4266
        %6164 = vmatpush1.bf16.msra.mxu0 %v4265
        %6165 = vmatprep.subr.bf16.mxu0 %v4262
        %6166 = vmatpush1.bf16.msra.mxu0 %v4261
        %6167 = vmatprep.subr.bf16.mxu0 %v4258
        %6168 = vmatpush1.bf16.msra.mxu0 %v4257
        %6169 = vmatprep.subr.bf16.mxu0 %v4318
        %6170 = vmatpush2.bf16.msra.mxu0 %v4317
        %6171 = vmatprep.subr.bf16.mxu0 %v4314
        %6172 = vmatpush2.bf16.msra.mxu0 %v4313
        %6173 = vmatprep.subr.bf16.mxu0 %v4310
        %6174 = vmatpush2.bf16.msra.mxu0 %v4309
        %6175 = vmatprep.subr.bf16.mxu0 %v4306
        %6176 = vmatpush2.bf16.msra.mxu0 %v4305
        %6177 = vmatprep.subr.bf16.mxu0 %v4302
        %6178 = vmatpush2.bf16.msra.mxu0 %v4301
        %6179 = vmatprep.subr.bf16.mxu0 %v4298
        %6180 = vmatpush2.bf16.msra.mxu0 %v4297
        %6181 = vmatprep.subr.bf16.mxu0 %v4294
        %6182 = vmatpush2.bf16.msra.mxu0 %v4293
        %6183 = vmatprep.subr.bf16.mxu0 %v4290
        %6184 = vmatpush2.bf16.msra.mxu0 %v4289
        %6185 = vmatprep.mubr.bf16.mxu0 %v1287
        %6186 = vmatmul.mubr.bf16.gmra.mxu0 %v1285
        %v6187 = vpop.f32.mrf.mxu0
        %v6188 = vadd.f32 %v6147, %v6187
        %v6189 = vpop.f32.mrf.mxu0
        %v6190 = vadd.f32 %v6149, %v6189
        %v6191 = vpop.f32.mrf.mxu0
        %v6192 = vpop.f32.mrf.mxu0
        %6193 = vdwg.mxu0
        %6194 = vmatprep.subr.bf16.mxu0 %v4350
        %6195 = vmatpush1.bf16.msra.mxu0 %v4349
        %6196 = vmatprep.subr.bf16.mxu0 %v4346
        %6197 = vmatpush1.bf16.msra.mxu0 %v4345
        %6198 = vmatprep.subr.bf16.mxu0 %v4342
        %6199 = vmatpush1.bf16.msra.mxu0 %v4341
        %6200 = vmatprep.subr.bf16.mxu0 %v4338
        %6201 = vmatpush1.bf16.msra.mxu0 %v4337
        %6202 = vmatprep.subr.bf16.mxu0 %v4334
        %6203 = vmatpush1.bf16.msra.mxu0 %v4333
        %6204 = vmatprep.subr.bf16.mxu0 %v4330
        %6205 = vmatpush1.bf16.msra.mxu0 %v4329
        %6206 = vmatprep.subr.bf16.mxu0 %v4326
        %6207 = vmatpush1.bf16.msra.mxu0 %v4325
        %6208 = vmatprep.subr.bf16.mxu0 %v4322
        %6209 = vmatpush1.bf16.msra.mxu0 %v4321
        %6210 = vmatprep.subr.bf16.mxu0 %v4382
        %6211 = vmatpush2.bf16.msra.mxu0 %v4381
        %6212 = vmatprep.subr.bf16.mxu0 %v4378
        %6213 = vmatpush2.bf16.msra.mxu0 %v4377
        %6214 = vmatprep.subr.bf16.mxu0 %v4374
        %6215 = vmatpush2.bf16.msra.mxu0 %v4373
        %6216 = vmatprep.subr.bf16.mxu0 %v4370
        %6217 = vmatpush2.bf16.msra.mxu0 %v4369
        %6218 = vmatprep.subr.bf16.mxu0 %v4366
        %6219 = vmatpush2.bf16.msra.mxu0 %v4365
        %6220 = vmatprep.subr.bf16.mxu0 %v4362
        %6221 = vmatpush2.bf16.msra.mxu0 %v4361
        %6222 = vmatprep.subr.bf16.mxu0 %v4358
        %6223 = vmatpush2.bf16.msra.mxu0 %v4357
        %6224 = vmatprep.subr.bf16.mxu0 %v4354
        %6225 = vmatpush2.bf16.msra.mxu0 %v4353
        %6226 = vmatprep.mubr.bf16.mxu0 %v1284
        %6227 = vmatmul.mubr.bf16.gmra.mxu0 %v1270
        %v6228 = vpop.f32.mrf.mxu0
        %v6229 = vadd.f32 %v6188, %v6228
        %v6230 = vpop.f32.mrf.mxu0
        %v6231 = vadd.f32 %v6190, %v6230
        %v6232 = vpop.f32.mrf.mxu0
        %v6233 = vpop.f32.mrf.mxu0
        %6234 = vdwg.mxu0
        %6235 = vmatprep.subr.bf16.mxu0 %v4414
        %6236 = vmatpush1.bf16.msra.mxu0 %v4413
        %6237 = vmatprep.subr.bf16.mxu0 %v4410
        %6238 = vmatpush1.bf16.msra.mxu0 %v4409
        %6239 = vmatprep.subr.bf16.mxu0 %v4406
        %6240 = vmatpush1.bf16.msra.mxu0 %v4405
        %6241 = vmatprep.subr.bf16.mxu0 %v4402
        %6242 = vmatpush1.bf16.msra.mxu0 %v4401
        %6243 = vmatprep.subr.bf16.mxu0 %v4398
        %6244 = vmatpush1.bf16.msra.mxu0 %v4397
        %6245 = vmatprep.subr.bf16.mxu0 %v4394
        %6246 = vmatpush1.bf16.msra.mxu0 %v4393
        %6247 = vmatprep.subr.bf16.mxu0 %v4390
        %6248 = vmatpush1.bf16.msra.mxu0 %v4389
        %6249 = vmatprep.subr.bf16.mxu0 %v4386
        %6250 = vmatpush1.bf16.msra.mxu0 %v4385
        %6251 = vmatprep.subr.bf16.mxu0 %v4446
        %6252 = vmatpush2.bf16.msra.mxu0 %v4445
        %6253 = vmatprep.subr.bf16.mxu0 %v4442
        %6254 = vmatpush2.bf16.msra.mxu0 %v4441
        %6255 = vmatprep.subr.bf16.mxu0 %v4438
        %6256 = vmatpush2.bf16.msra.mxu0 %v4437
        %6257 = vmatprep.subr.bf16.mxu0 %v4434
        %6258 = vmatpush2.bf16.msra.mxu0 %v4433
        %6259 = vmatprep.subr.bf16.mxu0 %v4430
        %6260 = vmatpush2.bf16.msra.mxu0 %v4429
        %6261 = vmatprep.subr.bf16.mxu0 %v4426
        %6262 = vmatpush2.bf16.msra.mxu0 %v4425
        %6263 = vmatprep.subr.bf16.mxu0 %v4422
        %6264 = vmatpush2.bf16.msra.mxu0 %v4421
        %6265 = vmatprep.subr.bf16.mxu0 %v4418
        %6266 = vmatpush2.bf16.msra.mxu0 %v4417
        %6267 = vmatprep.mubr.bf16.mxu0 %v1288
        %6268 = vmatmul.mubr.bf16.gmra.mxu0 %v1286
        %v6269 = vpop.f32.mrf.mxu0
        %v6270 = vadd.f32 %v6229, %v6269
        %v6271 = vpop.f32.mrf.mxu0
        %v6272 = vadd.f32 %v6231, %v6271
        %v6273 = vpop.f32.mrf.mxu0
        %v6274 = vpop.f32.mrf.mxu0
        %6275 = vdwg.mxu0
        %6276 = vmatprep.subr.bf16.mxu0 0
        %6277 = vmatpush1.bf16.msra.mxu0 0
        %6278 = vmatprep.subr.bf16.mxu0 0
        %6279 = vmatpush1.bf16.msra.mxu0 0
        %6280 = vmatprep.subr.bf16.mxu0 0
        %6281 = vmatpush1.bf16.msra.mxu0 0
        %6282 = vmatprep.subr.bf16.mxu0 0
        %6283 = vmatpush1.bf16.msra.mxu0 0
        %6284 = vmatprep.subr.bf16.mxu0 %v4462
        %6285 = vmatpush1.bf16.msra.mxu0 %v4461
        %6286 = vmatprep.subr.bf16.mxu0 %v4458
        %6287 = vmatpush1.bf16.msra.mxu0 %v4457
        %6288 = vmatprep.subr.bf16.mxu0 %v4454
        %6289 = vmatpush1.bf16.msra.mxu0 %v4453
        %6290 = vmatprep.subr.bf16.mxu0 %v4450
        %6291 = vmatpush1.bf16.msra.mxu0 %v4449
        %6292 = vmatprep.subr.bf16.mxu0 0
        %6293 = vmatpush2.bf16.msra.mxu0 0
        %6294 = vmatprep.subr.bf16.mxu0 0
        %6295 = vmatpush2.bf16.msra.mxu0 0
        %6296 = vmatprep.subr.bf16.mxu0 0
        %6297 = vmatpush2.bf16.msra.mxu0 0
        %6298 = vmatprep.subr.bf16.mxu0 0
        %6299 = vmatpush2.bf16.msra.mxu0 0
        %6300 = vmatprep.subr.bf16.mxu0 0
        %6301 = vmatpush2.bf16.msra.mxu0 0
        %6302 = vmatprep.subr.bf16.mxu0 0
        %6303 = vmatpush2.bf16.msra.mxu0 0
        %6304 = vmatprep.subr.bf16.mxu0 0
        %6305 = vmatpush2.bf16.msra.mxu0 0
        %6306 = vmatprep.subr.bf16.mxu0 0
        %6307 = vmatpush2.bf16.msra.mxu0 0
        %6308 = vmatprep.mubr.bf16.mxu0 0
        %6309 = vmatmul.mubr.bf16.gmra.mxu0 %v5249
        %v6310 = vpop.f32.mrf.mxu0
        %v6311 = vadd.f32 %v6270, %v6310
        %v6312 = vpop.f32.mrf.mxu0
        %v6313 = vadd.f32 %v6272, %v6312
        %v6314 = vpop.f32.mrf.mxu0
        %v6315 = vpop.f32.mrf.mxu0
        %6316 = vdwg.mxu0
        %v6317 = vmax.f32 %v5778, 0.0
        %v6318 = vmax.f32 %v5780, 0.0
        %v6319 = vmax.f32 %v6311, 0.0
        %v6320 = vmax.f32 %v6313, 0.0
        %v6321 = vld [vmem:[#allocation2] sm:$0x3]
        %v6322 = vld [vmem:[%s283] sm:$0xf]
        %v6323 = vld [vmem:[%s283 + $0x4] sm:$0xf]
        %v6324 = vld [vmem:[%s283 + $0x8] sm:$0xf]
        %v6325 = vld [vmem:[%s283 + $0xc] sm:$0xf]
        %v6326 = vld [vmem:[%s283 + $0x10] sm:$0xf]
        %v6327 = vld [vmem:[%s283 + $0x14] sm:$0xf]
        %v6328 = vld [vmem:[%s283 + $0x18] sm:$0xf]
        %v6329 = vld [vmem:[%s283 + $0x1c] sm:$0xf]
        %v6330 = vld [vmem:[%s283 + $0x20] sm:$0xf]
        %v6331 = vld [vmem:[%s283 + $0x24] sm:$0xf]
        %v6332 = vld [vmem:[%s283 + $0x28] sm:$0xf]
        %v6333 = vld [vmem:[%s283 + $0x2c] sm:$0xf]
        %v6334 = vld [vmem:[%s283 + $0x30] sm:$0xf]
        %v6335 = vld [vmem:[%s283 + $0x34] sm:$0xf]
        %v6336 = vld [vmem:[%s283 + $0x38] sm:$0xf]
        %v6337 = vld [vmem:[%s283 + $0x3c] sm:$0xf]
        %v6338 = vld [vmem:[%s283 + $0x40] sm:$0xf]
        %v6339 = vld [vmem:[%s283 + $0x44] sm:$0xf]
        %v6340 = vld [vmem:[%s283 + $0x48] sm:$0xf]
        %v6341 = vld [vmem:[%s283 + $0x4c] sm:$0xf]
        %v6342 = vld [vmem:[%s283 + $0x50] sm:$0xf]
        %v6343 = vld [vmem:[%s283 + $0x54] sm:$0xf]
        %v6344 = vld [vmem:[%s283 + $0x58] sm:$0xf]
        %v6345 = vld [vmem:[%s283 + $0x5c] sm:$0xf]
        %v6346 = vld [vmem:[%s283 + $0x60] sm:$0xf]
        %v6347 = vld [vmem:[%s283 + $0x64] sm:$0xf]
        %v6348 = vld [vmem:[%s283 + $0x68] sm:$0xf]
        %v6349 = vld [vmem:[%s283 + $0x6c] sm:$0xf]
        %v6350 = vld [vmem:[%s283 + $0x70] sm:$0xf]
        %v6351 = vld [vmem:[%s283 + $0x74] sm:$0xf]
        %v6352 = vld [vmem:[%s283 + $0x78] sm:$0xf]
        %v6353 = vld [vmem:[%s283 + $0x7c] sm:$0xf]
        %v6354 = vld [vmem:[%s283 + $0x80] sm:$0xf]
        %v6355 = vld [vmem:[%s283 + $0x84] sm:$0xf]
        %v6356 = vld [vmem:[%s283 + $0x88] sm:$0xf]
        %v6357 = vld [vmem:[%s283 + $0x8c] sm:$0xf]
        %v6358 = vld [vmem:[%s283 + $0x90] sm:$0xf]
        %v6359 = vld [vmem:[%s283 + $0x94] sm:$0xf]
        %v6360 = vld [vmem:[%s283 + $0x98] sm:$0xf]
        %v6361 = vld [vmem:[%s283 + $0x9c] sm:$0xf]
        %v6362 = vld [vmem:[%s283 + $0xa0] sm:$0xf]
        %v6363 = vld [vmem:[%s283 + $0xa4] sm:$0xf]
        %v6364 = vld [vmem:[%s283 + $0xa8] sm:$0xf]
        %v6365 = vld [vmem:[%s283 + $0xac] sm:$0xf]
        %v6366 = vld [vmem:[%s283 + $0xb0] sm:$0xf]
        %v6367 = vld [vmem:[%s283 + $0xb4] sm:$0xf]
        %v6368 = vld [vmem:[%s283 + $0xb8] sm:$0xf]
        %v6369 = vld [vmem:[%s283 + $0xbc] sm:$0xf]
        %v6370 = vld [vmem:[%s283 + $0xc0] sm:$0xf]
        %v6371 = vld [vmem:[%s283 + $0xc4] sm:$0xf]
        %v6372 = vld [vmem:[%s283 + $0xc8] sm:$0xf]
        %v6373 = vld [vmem:[%s283 + $0xcc] sm:$0xf]
        %v6374 = vld [vmem:[%s283 + $0xd0] sm:$0xf]
        %v6375 = vld [vmem:[%s283 + $0xd4] sm:$0xf]
        %v6376 = vld [vmem:[%s283 + $0xd8] sm:$0xf]
        %v6377 = vld [vmem:[%s283 + $0xdc] sm:$0xf]
        %v6378 = vld [vmem:[%s283 + $0xe0] sm:$0xf]
        %v6379 = vld [vmem:[%s283 + $0xe4] sm:$0xf]
        %v6380 = vld [vmem:[%s283 + $0xe8] sm:$0xf]
        %v6381 = vld [vmem:[%s283 + $0xec] sm:$0xf]
        %v6382 = vld [vmem:[%s283 + $0xf0] sm:$0xf]
        %v6383 = vld [vmem:[%s283 + $0xf4] sm:$0xf]
        %v6384 = vld [vmem:[%s283 + $0xf8] sm:$0xf]
        %v6385 = vld [vmem:[%s283 + $0xfc] sm:$0xf]
        %v6386 = vunpack.c.l.bf16 %v6322
        %v6387 = vunpack.c.l.bf16 %v6323
        %v6388 = vunpack.c.l.bf16 %v6324
        %v6389 = vunpack.c.l.bf16 %v6325
        %v6390 = vunpack.c.l.bf16 %v6326
        %v6391 = vunpack.c.l.bf16 %v6327
        %v6392 = vunpack.c.l.bf16 %v6328
        %v6393 = vunpack.c.l.bf16 %v6329
        %v6394 = vunpack.c.l.bf16 %v6330
        %v6395 = vunpack.c.l.bf16 %v6331
        %v6396 = vunpack.c.l.bf16 %v6332
        %v6397 = vunpack.c.l.bf16 %v6333
        %v6398 = vunpack.c.l.bf16 %v6334
        %v6399 = vunpack.c.l.bf16 %v6335
        %v6400 = vunpack.c.l.bf16 %v6336
        %v6401 = vunpack.c.l.bf16 %v6337
        %v6402 = vunpack.c.l.bf16 %v6338
        %v6403 = vunpack.c.l.bf16 %v6339
        %v6404 = vunpack.c.l.bf16 %v6340
        %v6405 = vunpack.c.l.bf16 %v6341
        %v6406 = vunpack.c.l.bf16 %v6342
        %v6407 = vunpack.c.l.bf16 %v6343
        %v6408 = vunpack.c.l.bf16 %v6344
        %v6409 = vunpack.c.l.bf16 %v6345
        %v6410 = vunpack.c.l.bf16 %v6346
        %v6411 = vunpack.c.l.bf16 %v6347
        %v6412 = vunpack.c.l.bf16 %v6348
        %v6413 = vunpack.c.l.bf16 %v6349
        %v6414 = vunpack.c.l.bf16 %v6350
        %v6415 = vunpack.c.l.bf16 %v6351
        %v6416 = vunpack.c.l.bf16 %v6352
        %v6417 = vunpack.c.l.bf16 %v6353
        %v6418 = vunpack.c.l.bf16 %v6354
        %v6419 = vunpack.c.l.bf16 %v6355
        %v6420 = vunpack.c.l.bf16 %v6356
        %v6421 = vunpack.c.l.bf16 %v6357
        %v6422 = vunpack.c.l.bf16 %v6358
        %v6423 = vunpack.c.l.bf16 %v6359
        %v6424 = vunpack.c.l.bf16 %v6360
        %v6425 = vunpack.c.l.bf16 %v6361
        %v6426 = vunpack.c.l.bf16 %v6362
        %v6427 = vunpack.c.l.bf16 %v6363
        %v6428 = vunpack.c.l.bf16 %v6364
        %v6429 = vunpack.c.l.bf16 %v6365
        %v6430 = vunpack.c.l.bf16 %v6366
        %v6431 = vunpack.c.l.bf16 %v6367
        %v6432 = vunpack.c.l.bf16 %v6368
        %v6433 = vunpack.c.l.bf16 %v6369
        %v6434 = vunpack.c.l.bf16 %v6370
        %v6435 = vunpack.c.l.bf16 %v6371
        %v6436 = vunpack.c.l.bf16 %v6372
        %v6437 = vunpack.c.l.bf16 %v6373
        %v6438 = vunpack.c.l.bf16 %v6374
        %v6439 = vunpack.c.l.bf16 %v6375
        %v6440 = vunpack.c.l.bf16 %v6376
        %v6441 = vunpack.c.l.bf16 %v6377
        %v6442 = vunpack.c.l.bf16 %v6378
        %v6443 = vunpack.c.l.bf16 %v6379
        %v6444 = vunpack.c.l.bf16 %v6380
        %v6445 = vunpack.c.l.bf16 %v6381
        %v6446 = vunpack.c.l.bf16 %v6382
        %v6447 = vunpack.c.l.bf16 %v6383
        %v6448 = vunpack.c.l.bf16 %v6384
        %v6449 = vunpack.c.l.bf16 %v6385
        %6450 = vmatprep.subr.mxu0 0.0
        %6451 = vmatpush1.msra.mxu0 %v6401
        %6452 = vmatprep.subr.mxu0 0.0
        %6453 = vmatpush1.msra.mxu0 %v6400
        %6454 = vmatprep.subr.mxu0 0.0
        %6455 = vmatpush1.msra.mxu0 %v6399
        %6456 = vmatprep.subr.mxu0 0.0
        %6457 = vmatpush1.msra.mxu0 %v6398
        %6458 = vmatprep.subr.mxu0 0.0
        %6459 = vmatpush1.msra.mxu0 %v6397
        %6460 = vmatprep.subr.mxu0 0.0
        %6461 = vmatpush1.msra.mxu0 %v6396
        %6462 = vmatprep.subr.mxu0 0.0
        %6463 = vmatpush1.msra.mxu0 %v6395
        %6464 = vmatprep.subr.mxu0 0.0
        %6465 = vmatpush1.msra.mxu0 %v6394
        %6466 = vmatprep.subr.mxu0 0.0
        %6467 = vmatpush1.msra.mxu0 %v6393
        %6468 = vmatprep.subr.mxu0 0.0
        %6469 = vmatpush1.msra.mxu0 %v6392
        %6470 = vmatprep.subr.mxu0 0.0
        %6471 = vmatpush1.msra.mxu0 %v6391
        %6472 = vmatprep.subr.mxu0 0.0
        %6473 = vmatpush1.msra.mxu0 %v6390
        %6474 = vmatprep.subr.mxu0 0.0
        %6475 = vmatpush1.msra.mxu0 %v6389
        %6476 = vmatprep.subr.mxu0 0.0
        %6477 = vmatpush1.msra.mxu0 %v6388
        %6478 = vmatprep.subr.mxu0 0.0
        %6479 = vmatpush1.msra.mxu0 %v6387
        %6480 = vmatprep.subr.mxu0 0.0
        %6481 = vmatpush1.msra.mxu0 %v6386
        %6482 = vmatprep.subr.mxu0 0.0
        %6483 = vmatpush2.msra.mxu0 %v6417
        %6484 = vmatprep.subr.mxu0 0.0
        %6485 = vmatpush2.msra.mxu0 %v6416
        %6486 = vmatprep.subr.mxu0 0.0
        %6487 = vmatpush2.msra.mxu0 %v6415
        %6488 = vmatprep.subr.mxu0 0.0
        %6489 = vmatpush2.msra.mxu0 %v6414
        %6490 = vmatprep.subr.mxu0 0.0
        %6491 = vmatpush2.msra.mxu0 %v6413
        %6492 = vmatprep.subr.mxu0 0.0
        %6493 = vmatpush2.msra.mxu0 %v6412
        %6494 = vmatprep.subr.mxu0 0.0
        %6495 = vmatpush2.msra.mxu0 %v6411
        %6496 = vmatprep.subr.mxu0 0.0
        %6497 = vmatpush2.msra.mxu0 %v6410
        %6498 = vmatprep.subr.mxu0 0.0
        %6499 = vmatpush2.msra.mxu0 %v6409
        %6500 = vmatprep.subr.mxu0 0.0
        %6501 = vmatpush2.msra.mxu0 %v6408
        %6502 = vmatprep.subr.mxu0 0.0
        %6503 = vmatpush2.msra.mxu0 %v6407
        %6504 = vmatprep.subr.mxu0 0.0
        %6505 = vmatpush2.msra.mxu0 %v6406
        %6506 = vmatprep.subr.mxu0 0.0
        %6507 = vmatpush2.msra.mxu0 %v6405
        %6508 = vmatprep.subr.mxu0 0.0
        %6509 = vmatpush2.msra.mxu0 %v6404
        %6510 = vmatprep.subr.mxu0 0.0
        %6511 = vmatpush2.msra.mxu0 %v6403
        %6512 = vmatprep.subr.mxu0 0.0
        %6513 = vmatpush2.msra.mxu0 %v6402
        %6514 = vmatprep.mubr.f32.mxu0 %v6318
        %6515 = vmatmul.mubr.f32.gmra.mxu0 %v6317
        %v6516 = vpop.f32.mrf.mxu0
        %v6517 = vadd.f32 0.0, %v6516
        %v6518 = vpop.f32.mrf.mxu0
        %6519 = vdwg.mxu0
        %6520 = vmatprep.subr.mxu0 0.0
        %6521 = vmatpush1.msra.mxu0 %v6433
        %6522 = vmatprep.subr.mxu0 0.0
        %6523 = vmatpush1.msra.mxu0 %v6432
        %6524 = vmatprep.subr.mxu0 0.0
        %6525 = vmatpush1.msra.mxu0 %v6431
        %6526 = vmatprep.subr.mxu0 0.0
        %6527 = vmatpush1.msra.mxu0 %v6430
        %6528 = vmatprep.subr.mxu0 0.0
        %6529 = vmatpush1.msra.mxu0 %v6429
        %6530 = vmatprep.subr.mxu0 0.0
        %6531 = vmatpush1.msra.mxu0 %v6428
        %6532 = vmatprep.subr.mxu0 0.0
        %6533 = vmatpush1.msra.mxu0 %v6427
        %6534 = vmatprep.subr.mxu0 0.0
        %6535 = vmatpush1.msra.mxu0 %v6426
        %6536 = vmatprep.subr.mxu0 0.0
        %6537 = vmatpush1.msra.mxu0 %v6425
        %6538 = vmatprep.subr.mxu0 0.0
        %6539 = vmatpush1.msra.mxu0 %v6424
        %6540 = vmatprep.subr.mxu0 0.0
        %6541 = vmatpush1.msra.mxu0 %v6423
        %6542 = vmatprep.subr.mxu0 0.0
        %6543 = vmatpush1.msra.mxu0 %v6422
        %6544 = vmatprep.subr.mxu0 0.0
        %6545 = vmatpush1.msra.mxu0 %v6421
        %6546 = vmatprep.subr.mxu0 0.0
        %6547 = vmatpush1.msra.mxu0 %v6420
        %6548 = vmatprep.subr.mxu0 0.0
        %6549 = vmatpush1.msra.mxu0 %v6419
        %6550 = vmatprep.subr.mxu0 0.0
        %6551 = vmatpush1.msra.mxu0 %v6418
        %6552 = vmatprep.subr.mxu0 0.0
        %6553 = vmatpush2.msra.mxu0 %v6449
        %6554 = vmatprep.subr.mxu0 0.0
        %6555 = vmatpush2.msra.mxu0 %v6448
        %6556 = vmatprep.subr.mxu0 0.0
        %6557 = vmatpush2.msra.mxu0 %v6447
        %6558 = vmatprep.subr.mxu0 0.0
        %6559 = vmatpush2.msra.mxu0 %v6446
        %6560 = vmatprep.subr.mxu0 0.0
        %6561 = vmatpush2.msra.mxu0 %v6445
        %6562 = vmatprep.subr.mxu0 0.0
        %6563 = vmatpush2.msra.mxu0 %v6444
        %6564 = vmatprep.subr.mxu0 0.0
        %6565 = vmatpush2.msra.mxu0 %v6443
        %6566 = vmatprep.subr.mxu0 0.0
        %6567 = vmatpush2.msra.mxu0 %v6442
        %6568 = vmatprep.subr.mxu0 0.0
        %6569 = vmatpush2.msra.mxu0 %v6441
        %6570 = vmatprep.subr.mxu0 0.0
        %6571 = vmatpush2.msra.mxu0 %v6440
        %6572 = vmatprep.subr.mxu0 0.0
        %6573 = vmatpush2.msra.mxu0 %v6439
        %6574 = vmatprep.subr.mxu0 0.0
        %6575 = vmatpush2.msra.mxu0 %v6438
        %6576 = vmatprep.subr.mxu0 0.0
        %6577 = vmatpush2.msra.mxu0 %v6437
        %6578 = vmatprep.subr.mxu0 0.0
        %6579 = vmatpush2.msra.mxu0 %v6436
        %6580 = vmatprep.subr.mxu0 0.0
        %6581 = vmatpush2.msra.mxu0 %v6435
        %6582 = vmatprep.subr.mxu0 0.0
        %6583 = vmatpush2.msra.mxu0 %v6434
        %6584 = vmatprep.mubr.f32.mxu0 %v6320
        %6585 = vmatmul.mubr.f32.gmra.mxu0 %v6319
        %v6586 = vpop.f32.mrf.mxu0
        %v6587 = vadd.f32 %v6517, %v6586
        %v6588 = vpop.f32.mrf.mxu0
        %6589 = vdwg.mxu0
        %v6590 = vadd.f32 %v6321, %v6587
        %6591 = vst [vmem:[#allocation2] sm:$0x3] %v6590
        %p6592 = scmp.eq.s32.totalorder %s24, 1
        // Predicated region
        $region61: #{lenet_forward.3} parent=39 // pred_check
          %p6593 = pneg %p6592
        $region62: #{lenet_forward.3} parent=39 // pred_check_branch
          %6595 = sbr.rel (%p6593) target = $region64
        $region63: #{lenet_forward.3} parent=39 // pred_region
          %v6596 = vld [vmem:[#allocation2] sm:$0x3]
          %v6597 = vld [vmem:[#allocation9] sm:$0x1]
          %v6599 = vlaneseq
          %v6600 = vshrl.u32 %v6599, 7
          %v6601 = vsub.s32 0, %v6600
          %v6602 = vrot.slane %v6597, %v6601
          %v6604 = vadd.f32 %v6596, %v6602
          %vm6605 = vcmask 1041408
          %v6606 = vsel %vm6605, %v6604, -inf
          %6607 = vmax.xlane.f32.xlu0 %v6606
          %v6608 = vpop.xlane.xlu0 %6607
          %v6609 = vsub.f32 %v6604, %v6608
          %v6610 = vmul.f32 %v6609, 1.442695
          %v6611 = vpow.pop %v6610
          %v6612 = vsel %vm6605, %v6611, 0.0
          %6613 = vadd.xlane.f32.xlu0 %v6612
          %v6614 = vpop.xlane.xlu0 %6613
          %v6615 = vlog2.pop %v6614
          %v6616 = vmul.f32 %v6615, 0.6931472
          %v6617 = vadd.f32 %v6616, %v6608
          %v6618 = vsub.f32 %v6604, %v6617
          %vm6619 = vcmask 74752
          %6620 = vst.msk [vmem:[#allocation11] sm:$0x3] %vm6619, %v6618
        $region64: #{lenet_forward.3} parent=39 // pred_fallthru
          _
        // Predicated region
        $region65: #{lenet_forward.3} parent=39 // pred_check
          %p6621 = pneg %p157
        $region66: #{lenet_forward.3} parent=39 // pred_check_branch
          %6623 = sbr.rel (%p6621) target = $region68
        $region67: #{lenet_forward.3} parent=39 // pred_region
          %s6625 = ssub.s32 32, 32
          %6626 = vsyncadd [#allocation5], %s6625
          %s6628 = sshll.u32 [#allocation11], 4
          %s6629 = int_to_ptr.vmem [resolvable:$true] %s6628
          %6631 = dma.vmem_to_hbm [thread:$0]  %s6629, 32, %s5, [#allocation5]
        $region68: #{lenet_forward.3} parent=39 // pred_fallthru
          _
        // Predicated region
        $region69: #{lenet_forward.3} parent=39 // pred_check
          %p6632 = pneg %p157
        $region70: #{lenet_forward.3} parent=39 // pred_check_branch
          %6634 = sbr.rel (%p6632) target = $region72
        $region71: #{lenet_forward.3} parent=39 // pred_region
          %6635 = dma.done [#allocation5], 32
        $region72: #{lenet_forward.3} parent=39 // pred_fallthru
          _
      $region40: #{lenet_forward.3} parent=5 // pred_fallthru
        _
      %p6636 = scmp.le.s32.totalorder 2, %s19
      // Predicated region
      $region73: #{lenet_forward.3} parent=5 // pred_check
        %p6637 = pneg %p6636
      $region74: #{lenet_forward.3} parent=5 // pred_check_branch
        %6639 = sbr.rel (%p6637) target = $region76
      $region75: #{lenet_forward.3} parent=5 // pred_region
        %s6640 = ssub.s32 %s19, 2
      $region76: #{lenet_forward.3} parent=5 // pred_fallthru
        _
    $region6: #{lenet_forward.3} parent=1 // loop_footer
      %s23 = sadd.s32 1, %s19
    $region7: #{lenet_forward.3} parent=1 // loop_footer_branch
      %18 = sbr.rel target = $region3
    $region8: #{lenet_forward.3} parent=1 // loop_exit
      _
    %6641 = vsyncpa [#allocation4], 1
    %s6642 = scalar_lea.sflag [#allocation4], 1
    %6643 = vsyncpa %s6642, 1
    %6644 = vsyncpa [#allocation7], 1
    %s6645 = scalar_lea.sflag [#allocation7], 1
    %6646 = vsyncpa %s6645, 1
    %6647 = vsyncpa [#allocation10], 1
    %6648 = vsyncpa [#allocation5], 1
    %s6649 = scalar_lea.sflag [#allocation5], 1
    %6650 = vsyncpa %s6649, 1

</llo_original>
